<compile_context>
chip_gen: v7x
topology: tpu7x:2x2x1
jax: 0.10.0
libtpu: 0.0.40
codegen_flags: <defaults>
</compile_context>

<pallas_src>
import jax
import jax.numpy as jnp
from jax import lax
from jax.experimental import pallas as pl
from jax.experimental.pallas import tpu as pltpu


Z_DIM = 400                    # z_dim
H_DIM = 1000                   # h_dim
OUT_C, OUT_H, OUT_W = 3, 240, 320
OUT_DIM = OUT_C * OUT_H * OUT_W  # 230400


# ----------------------------------------------------------------------------
# Pallas kernels
# ----------------------------------------------------------------------------
def _fc1_relu_kernel(x_ref, w_ref, b_ref, o_ref):
    """hidden = relu(x @ W1^T + b1); emitted in bf16 for the layer-2 MXU path."""
    h = jnp.dot(x_ref[...], w_ref[...], preferred_element_type=jnp.float32)
    h = jnp.maximum(h + b_ref[...], 0.0)          # bias + ReLU in f32 (VPU)
    o_ref[...] = h.astype(o_ref.dtype)


def _fc2_kernel(h_ref, w_ref, b_ref, o_ref):
    """out_tile = hidden @ W2_tile + b2_tile (no activation on the last Linear)."""
    acc = jnp.dot(h_ref[...], w_ref[...], preferred_element_type=jnp.float32)
    o_ref[...] = (acc + b_ref[...]).astype(o_ref.dtype)


# ----------------------------------------------------------------------------
# Forward pass (2 pallas_call launches total)
# ----------------------------------------------------------------------------
def decoder_forward(x, packed, *, tn=2304):
    """x: (B, Z_DIM) f32 -> (B, 3, 240, 320) f32.  tn must divide OUT_DIM and be
    a multiple of 128 (2304 = 128*18, 230400/2304 = 100 grid steps)."""
    B = x.shape[0]
    w1t = packed["w1t"]            # (Z_DIM, H_DIM)   f32
    b1 = packed["b1"]              # (1, H_DIM)       f32
    w2t = packed["w2t_bf16"]       # (H_DIM, OUT_DIM) bf16
    b2 = packed["b2"]              # (1, OUT_DIM)     f32

    # --- layer 1: Linear(400 -> 1000) + ReLU, single VMEM block ---
    h = pl.pallas_call(
        _fc1_relu_kernel,
        out_shape=jax.ShapeDtypeStruct((B, H_DIM), jnp.bfloat16),
    )(x, w1t, b1)

    # --- layer 2: Linear(1000 -> 230400), tiled over the output columns ---
    grid = (OUT_DIM // tn,)
    out = pl.pallas_call(
        _fc2_kernel,
        out_shape=jax.ShapeDtypeStruct((B, OUT_DIM), jnp.float32),
        grid=grid,
        in_specs=[
            pl.BlockSpec((B, H_DIM), lambda j: (0, 0)),   # hidden: resident, fetched once
            pl.BlockSpec((H_DIM, tn), lambda j: (0, j)),  # streamed bf16 weight slab
            pl.BlockSpec((1, tn), lambda j: (0, j)),      # bias tile (f32)
        ],
        out_specs=pl.BlockSpec((B, tn), lambda j: (0, j)),  # lane-dense output tile
        compiler_params=pltpu.CompilerParams(
            dimension_semantics=("parallel",)),             # megacore-splittable on v7x
    )(h, w2t, b2)

    return out.reshape(B, OUT_C, OUT_H, OUT_W)


# ----------------------------------------------------------------------------
# Deterministic parameter init + one-time packing into kernel-friendly layout
# ----------------------------------------------------------------------------
def make_params(key):
    k1, k2, k3, k4 = jax.random.split(key, 4)
    P = {}
    # nn.Linear(z_dim, h_dim): weight (h_dim, z_dim), bias (h_dim,)
    P["w1"] = (jnp.sqrt(2.0 / Z_DIM)
               * jax.random.normal(k1, (H_DIM, Z_DIM))).astype(jnp.float32)
    P["b1"] = (0.1 * jax.random.normal(k2, (H_DIM,))).astype(jnp.float32)
    # nn.Linear(h_dim, out_dim): weight is (out_dim, h_dim) in PyTorch; we store
    # its transpose (h_dim, out_dim) directly (equivalent random init, and it is
    # the layout both the kernel and the reference consume).
    P["w2t"] = (jnp.sqrt(2.0 / H_DIM)
                * jax.random.normal(k3, (H_DIM, OUT_DIM))).astype(jnp.float32)
    P["b2"] = (0.1 * jax.random.normal(k4, (OUT_DIM,))).astype(jnp.float32)
    return P


def pack_params(P):
    """One-time repack (outside jit): transpose W1, reshape biases, cast the big
    weight to bf16 so the per-forward HBM read is halved."""
    return {
        "w1t": jnp.asarray(P["w1"].T, jnp.float32),            # (Z_DIM, H_DIM)
        "b1": P["b1"].reshape(1, H_DIM).astype(jnp.float32),
        "w2t_bf16": P["w2t"].astype(jnp.bfloat16),              # (H_DIM, OUT_DIM)
        "b2": P["b2"].reshape(1, OUT_DIM).astype(jnp.float32),
    }


# ----------------------------------------------------------------------------
# Pure-JAX f32 reference for correctness checking
# ----------------------------------------------------------------------------
def reference_forward(x, P):
    h = jnp.maximum(
        jnp.dot(x, P["w1"].T, precision=lax.Precision.HIGHEST) + P["b1"], 0.0)
    y = jnp.dot(h, P["w2t"], precision=lax.Precision.HIGHEST) + P["b2"]
    return y.reshape(-1, OUT_C, OUT_H, OUT_W)


# ----------------------------------------------------------------------------
if __name__ == "__main__":
    key = jax.random.PRNGKey(0)
    pkey, xkey = jax.random.split(key)
    params = make_params(pkey)
    packed = pack_params(params)

    B = 2
    x = jax.random.normal(xkey, (B, Z_DIM), jnp.float32)

    fwd = jax.jit(lambda inp, p: decoder_forward(inp, p))
    out = jax.block_until_ready(fwd(x, packed))
    assert out.shape == (B, OUT_C, OUT_H, OUT_W), out.shape
    assert out.dtype == jnp.float32

    ref = reference_forward(x, params)
    err = float(jnp.max(jnp.abs(out - ref)))
    scale = float(jnp.max(jnp.abs(ref)))
    # tolerance accounts for the bf16 weight/activation path of layer 2
    assert err <= 5e-2 * max(1.0, scale), f"mismatch vs reference: {err} (scale {scale})"

    print("KERNEL_OK")
</pallas_src>

<mosaic_0001>
module attributes {stable_mosaic.version = 11 : i64} {
  func.func @_fc1_relu_kernel(%arg0: memref<2x400xf32, #tpu.memory_space<vmem>>, %arg1: memref<400x1000xf32, #tpu.memory_space<vmem>>, %arg2: memref<1x1000xf32, #tpu.memory_space<vmem>>, %arg3: memref<2x1000xbf16, #tpu.memory_space<vmem>>) attributes {dimension_semantics = [], scalar_prefetch = 0 : i64, scratch_operands = 0 : i64, tpu.core_type = #tpu.core_type<tc>} {
    %c0 = arith.constant 0 : index
    %c0_0 = arith.constant 0 : index
    %0 = vector.load %arg0[%c0, %c0_0] : memref<2x400xf32, #tpu.memory_space<vmem>>, vector<2x400xf32>
    %c0_1 = arith.constant 0 : index
    %c0_2 = arith.constant 0 : index
    %1 = vector.load %arg1[%c0_1, %c0_2] : memref<400x1000xf32, #tpu.memory_space<vmem>>, vector<400x1000xf32>
    %cst = arith.constant dense<0.000000e+00> : vector<2x1000xf32>
    %2 = tpu.matmul %0, %1, %cst {dimension_numbers = #tpu.dot_dimension_numbers<[1], [0], [0], [1], [0, 0, 1, 1], [], []>} : vector<2x400xf32>, vector<400x1000xf32>, vector<2x1000xf32> -> vector<2x1000xf32>
    %c0_3 = arith.constant 0 : index
    %c0_4 = arith.constant 0 : index
    %3 = vector.load %arg2[%c0_3, %c0_4] : memref<1x1000xf32, #tpu.memory_space<vmem>>, vector<1x1000xf32>
    %4 = vector.broadcast %3 : vector<1x1000xf32> to vector<2x1000xf32>
    %5 = arith.addf %2, %4 : vector<2x1000xf32>
    %cst_5 = arith.constant 0.000000e+00 : f32
    %6 = vector.broadcast %cst_5 : f32 to vector<2x1000xf32>
    %7 = arith.maximumf %5, %6 : vector<2x1000xf32>
    %8 = arith.truncf %7 : vector<2x1000xf32> to vector<2x1000xbf16>
    %c0_6 = arith.constant 0 : index
    %c0_7 = arith.constant 0 : index
    %9 = vector.load %arg3[%c0_6, %c0_7] : memref<2x1000xbf16, #tpu.memory_space<vmem>>, vector<2x1000xbf16>
    tpu.vector_store %arg3[%c0_6, %c0_7], %8 {strides = array<i32>} : memref<2x1000xbf16, #tpu.memory_space<vmem>>, vector<2x1000xbf16>,
    return
  }
}

module attributes {stable_mosaic.version = 11 : i64} {
  func.func @_fc2_kernel(%arg0: i32, %arg1: memref<2x1000xbf16, #tpu.memory_space<vmem>>, %arg2: memref<1000x2304xbf16, #tpu.memory_space<vmem>>, %arg3: memref<1x2304xf32, #tpu.memory_space<vmem>>, %arg4: memref<2x2304xf32, #tpu.memory_space<vmem>>) attributes {dimension_semantics = [#tpu.dimension_semantics<parallel>], iteration_bounds = array<i64: 100>, scalar_prefetch = 0 : i64, scratch_operands = 0 : i64, tpu.core_type = #tpu.core_type<tc>, window_params = [{pipeline_mode = #tpu.pipeline_mode<synchronous>, transform_indices = @transform_0, window_bounds = array<i64: 2, 1000>}, {transform_indices = @transform_1, window_bounds = array<i64: 1000, 2304>}, {transform_indices = @transform_2, window_bounds = array<i64: 1, 2304>}, {transform_indices = @transform_3, window_bounds = array<i64: 2, 2304>}]} {
    %c0 = arith.constant 0 : index
    %c0_0 = arith.constant 0 : index
    %0 = vector.load %arg1[%c0, %c0_0] : memref<2x1000xbf16, #tpu.memory_space<vmem>>, vector<2x1000xbf16>
    %c0_1 = arith.constant 0 : index
    %c0_2 = arith.constant 0 : index
    %1 = vector.load %arg2[%c0_1, %c0_2] : memref<1000x2304xbf16, #tpu.memory_space<vmem>>, vector<1000x2304xbf16>
    %cst = arith.constant dense<0.000000e+00> : vector<2x2304xf32>
    %2 = tpu.matmul %0, %1, %cst {dimension_numbers = #tpu.dot_dimension_numbers<[1], [0], [0], [1], [0, 0, 1, 1], [], []>} : vector<2x1000xbf16>, vector<1000x2304xbf16>, vector<2x2304xf32> -> vector<2x2304xf32>
    %c0_3 = arith.constant 0 : index
    %c0_4 = arith.constant 0 : index
    %3 = vector.load %arg3[%c0_3, %c0_4] : memref<1x2304xf32, #tpu.memory_space<vmem>>, vector<1x2304xf32>
    %4 = vector.broadcast %3 : vector<1x2304xf32> to vector<2x2304xf32>
    %5 = arith.addf %2, %4 : vector<2x2304xf32>
    %c0_5 = arith.constant 0 : index
    %c0_6 = arith.constant 0 : index
    %6 = vector.load %arg4[%c0_5, %c0_6] : memref<2x2304xf32, #tpu.memory_space<vmem>>, vector<2x2304xf32>
    tpu.vector_store %arg4[%c0_5, %c0_6], %5 {strides = array<i32>} : memref<2x2304xf32, #tpu.memory_space<vmem>>, vector<2x2304xf32>,
    return
  }
  func.func @transform_0(%arg0: i32) -> (i32, i32) {
    %c0_i32 = arith.constant 0 : i32
    %c0_i32_0 = arith.constant 0 : i32
    %c0_i32_1 = arith.constant 0 : i32
    return %c0_i32, %c0_i32_0 : i32, i32
  }
  func.func @transform_1(%arg0: i32) -> (i32, i32) {
    %c0_i32 = arith.constant 0 : i32
    %c0_i32_0 = arith.constant 0 : i32
    return %c0_i32, %arg0 : i32, i32
  }
  func.func @transform_2(%arg0: i32) -> (i32, i32) {
    %c0_i32 = arith.constant 0 : i32
    %c0_i32_0 = arith.constant 0 : i32
    return %c0_i32, %arg0 : i32, i32
  }
  func.func @transform_3(%arg0: i32) -> (i32, i32) {
    %c0_i32 = arith.constant 0 : i32
    %c0_i32_0 = arith.constant 0 : i32
    return %c0_i32, %arg0 : i32, i32
  }
}

</mosaic_0001>

<llo_original>
// kernel: _lambda_.2
$region0: #{_lambda_.2}
  #allocation0 [shape = 'u32[]', space=smem, size = 0x4, offset = 0x4, fixed_abs, tag = 'smem constant byte address 0x4 - core index']
  #allocation1 [shape = 'u32[144,128]{1,0:T(1,128)}', space=vmem, size = 0x12000, scoped, tag = 'internal scratch']
  %s0 = inlined_call_operand.hbm [shape: f32[2,400], index: 0, kind: input, shape index: {}]
  %s1 = inlined_call_operand.hbm [shape: f32[400,1000], index: 1, kind: input, shape index: {}]
  %s2 = inlined_call_operand.hbm [shape: f32[1,1000], index: 2, kind: input, shape index: {}]
  %s3 = inlined_call_operand.vmem [shape: bf16[2,1000], index: 3, kind: output, shape index: {}]
  %s4 = sld [smem:[#allocation0]]
  $region34: #{_lambda_.2} parent=0
    _
  %s6 = ssub.s32 1, %s4
  %s7 = scalar_select 0, %s6, %s4
  $region1: #{_lambda_.2} parent=0
    #allocation2 [shape = 'u8[4096]{0}', space=vmem, size = 0x1000, scoped, tag = 'input window, operand 0, single buffered']
    #allocation3 [shape = 's32[1]{0}', space=sflag, size = 0x4, scoped, tag = 'scoped memory for _lambda_.2']
    #allocation4 [shape = 'u8[1638400]{0}', space=vmem, size = 0x190000, scoped, tag = 'input window, operand 1, single buffered']
    #allocation5 [shape = 's32[1]{0}', space=sflag, size = 0x4, scoped, tag = 'scoped memory for _lambda_.2']
    #allocation6 [shape = 'u8[4096]{0}', space=vmem, size = 0x1000, scoped, tag = 'input window, operand 2, single buffered']
    %8 = vsyncpa [#allocation3], 0
    %9 = vsyncpa [#allocation5], 0
    // Predicated region
    $region2: #{_lambda_.2} parent=1 // pred_check
      _
    $region3: #{_lambda_.2} parent=1 // pred_check_branch
      %11 = sbr.rel (0) target = $region5
    $region4: #{_lambda_.2} parent=1 // pred_region
      %s13 = ssub.s32 128, 128
      %14 = vsyncadd [#allocation3], %s13
      %s16 = sshll.u32 [#allocation2], 4
      %s17 = int_to_ptr.vmem [resolvable:$true] %s16
      %19 = dma.hbm_to_vmem [thread:$0]  %s0, 128, %s17, [#allocation3]
    $region5: #{_lambda_.2} parent=1 // pred_fallthru
      _
    // Predicated region
    $region6: #{_lambda_.2} parent=1 // pred_check
      _
    $region7: #{_lambda_.2} parent=1 // pred_check_branch
      %21 = sbr.rel (0) target = $region9
    $region8: #{_lambda_.2} parent=1 // pred_region
      %s23 = ssub.s32 51200, 51200
      %24 = vsyncadd [#allocation5], %s23
      %s25 = sshll.u32 [#allocation4], 4
      %s26 = int_to_ptr.vmem [resolvable:$true] %s25
      %31 = dma.hbm_to_vmem [thread:$0]  %s1, 51200, %s26, [#allocation5], 1024, 1024, 64
    $region9: #{_lambda_.2} parent=1 // pred_fallthru
      _
    // Predicated region
    $region10: #{_lambda_.2} parent=1 // pred_check
      _
    $region11: #{_lambda_.2} parent=1 // pred_check_branch
      %33 = sbr.rel (0) target = $region13
    $region12: #{_lambda_.2} parent=1 // pred_region
      %s35 = ssub.s32 128, 128
      %36 = vsyncadd [#allocation5], %s35
      %s38 = sshll.u32 [#allocation6], 4
      %s39 = int_to_ptr.vmem [resolvable:$true] %s38
      %41 = dma.hbm_to_vmem [thread:$0]  %s2, 128, %s39, [#allocation5]
    $region13: #{_lambda_.2} parent=1 // pred_fallthru
      _
    // Predicated region
    $region14: #{_lambda_.2} parent=1 // pred_check
      _
    $region15: #{_lambda_.2} parent=1 // pred_check_branch
      %43 = sbr.rel (0) target = $region17
    $region16: #{_lambda_.2} parent=1 // pred_region
      %44 = dma.done [#allocation3], 128
    $region17: #{_lambda_.2} parent=1 // pred_fallthru
      _
    // Predicated region
    $region18: #{_lambda_.2} parent=1 // pred_check
      _
    $region19: #{_lambda_.2} parent=1 // pred_check_branch
      %46 = sbr.rel (0) target = $region21
    $region20: #{_lambda_.2} parent=1 // pred_region
      %47 = dma.done [#allocation5], 51200
    $region21: #{_lambda_.2} parent=1 // pred_fallthru
      _
    // Predicated region
    $region22: #{_lambda_.2} parent=1 // pred_check
      _
    $region23: #{_lambda_.2} parent=1 // pred_check_branch
      %49 = sbr.rel (0) target = $region25
    $region24: #{_lambda_.2} parent=1 // pred_region
      %50 = dma.done [#allocation5], 128
    $region25: #{_lambda_.2} parent=1 // pred_fallthru
      _
    %v51 = vld [vmem:[#allocation2] sm:$0xff]
    %v52 = vld [vmem:[#allocation4] sm:$0xff]
    %v53 = vld [vmem:[#allocation4 + $0x8] sm:$0xff]
    %v54 = vld [vmem:[#allocation4 + $0x10] sm:$0xff]
    %v55 = vld [vmem:[#allocation4 + $0x18] sm:$0xff]
    %v56 = vld [vmem:[#allocation4 + $0x20] sm:$0xff]
    %v57 = vld [vmem:[#allocation4 + $0x28] sm:$0xff]
    %v58 = vld [vmem:[#allocation4 + $0x30] sm:$0xff]
    %v59 = vld [vmem:[#allocation4 + $0x38] sm:$0xff]
    %v60 = vld [vmem:[#allocation4 + $0x40] sm:$0xff]
    %v61 = vld [vmem:[#allocation4 + $0x48] sm:$0xff]
    %v62 = vld [vmem:[#allocation4 + $0x50] sm:$0xff]
    %v63 = vld [vmem:[#allocation4 + $0x58] sm:$0xff]
    %v64 = vld [vmem:[#allocation4 + $0x60] sm:$0xff]
    %v65 = vld [vmem:[#allocation4 + $0x68] sm:$0xff]
    %v66 = vld [vmem:[#allocation4 + $0x70] sm:$0xff]
    %v67 = vld [vmem:[#allocation4 + $0x78] sm:$0xff]
    %v68 = vld [vmem:[#allocation4 + $0x80] sm:$0xff]
    %v69 = vld [vmem:[#allocation4 + $0x88] sm:$0xff]
    %v70 = vld [vmem:[#allocation4 + $0x90] sm:$0xff]
    %v71 = vld [vmem:[#allocation4 + $0x98] sm:$0xff]
    %v72 = vld [vmem:[#allocation4 + $0xa0] sm:$0xff]
    %v73 = vld [vmem:[#allocation4 + $0xa8] sm:$0xff]
    %v74 = vld [vmem:[#allocation4 + $0xb0] sm:$0xff]
    %v75 = vld [vmem:[#allocation4 + $0xb8] sm:$0xff]
    %v76 = vld [vmem:[#allocation4 + $0xc0] sm:$0xff]
    %v77 = vld [vmem:[#allocation4 + $0xc8] sm:$0xff]
    %v78 = vld [vmem:[#allocation4 + $0xd0] sm:$0xff]
    %v79 = vld [vmem:[#allocation4 + $0xd8] sm:$0xff]
    %v80 = vld [vmem:[#allocation4 + $0xe0] sm:$0xff]
    %v81 = vld [vmem:[#allocation4 + $0xe8] sm:$0xff]
    %v82 = vld [vmem:[#allocation4 + $0xf0] sm:$0xff]
    %v83 = vld [vmem:[#allocation4 + $0xf8] sm:$0xff]
    %v84 = vld [vmem:[#allocation4 + $0x100] sm:$0xff]
    %v85 = vld [vmem:[#allocation4 + $0x108] sm:$0xff]
    %v86 = vld [vmem:[#allocation4 + $0x110] sm:$0xff]
    %v87 = vld [vmem:[#allocation4 + $0x118] sm:$0xff]
    %v88 = vld [vmem:[#allocation4 + $0x120] sm:$0xff]
    %v89 = vld [vmem:[#allocation4 + $0x128] sm:$0xff]
    %v90 = vld [vmem:[#allocation4 + $0x130] sm:$0xff]
    %v91 = vld [vmem:[#allocation4 + $0x138] sm:$0xff]
    %v92 = vld [vmem:[#allocation4 + $0x140] sm:$0xff]
    %v93 = vld [vmem:[#allocation4 + $0x148] sm:$0xff]
    %v94 = vld [vmem:[#allocation4 + $0x150] sm:$0xff]
    %v95 = vld [vmem:[#allocation4 + $0x158] sm:$0xff]
    %v96 = vld [vmem:[#allocation4 + $0x160] sm:$0xff]
    %v97 = vld [vmem:[#allocation4 + $0x168] sm:$0xff]
    %v98 = vld [vmem:[#allocation4 + $0x170] sm:$0xff]
    %v99 = vld [vmem:[#allocation4 + $0x178] sm:$0xff]
    %v100 = vld [vmem:[#allocation4 + $0x180] sm:$0xff]
    %v101 = vld [vmem:[#allocation4 + $0x188] sm:$0xff]
    %v102 = vld [vmem:[#allocation4 + $0x190] sm:$0xff]
    %v103 = vld [vmem:[#allocation4 + $0x198] sm:$0xff]
    %v104 = vld [vmem:[#allocation4 + $0x1a0] sm:$0xff]
    %v105 = vld [vmem:[#allocation4 + $0x1a8] sm:$0xff]
    %v106 = vld [vmem:[#allocation4 + $0x1b0] sm:$0xff]
    %v107 = vld [vmem:[#allocation4 + $0x1b8] sm:$0xff]
    %v108 = vld [vmem:[#allocation4 + $0x1c0] sm:$0xff]
    %v109 = vld [vmem:[#allocation4 + $0x1c8] sm:$0xff]
    %v110 = vld [vmem:[#allocation4 + $0x1d0] sm:$0xff]
    %v111 = vld [vmem:[#allocation4 + $0x1d8] sm:$0xff]
    %v112 = vld [vmem:[#allocation4 + $0x1e0] sm:$0xff]
    %v113 = vld [vmem:[#allocation4 + $0x1e8] sm:$0xff]
    %v114 = vld [vmem:[#allocation4 + $0x1f0] sm:$0xff]
    %v115 = vld [vmem:[#allocation4 + $0x1f8] sm:$0xff]
    %v116 = vld [vmem:[#allocation4 + $0x200] sm:$0xff]
    %v117 = vld [vmem:[#allocation4 + $0x208] sm:$0xff]
    %v118 = vld [vmem:[#allocation4 + $0x210] sm:$0xff]
    %v119 = vld [vmem:[#allocation4 + $0x218] sm:$0xff]
    %v120 = vld [vmem:[#allocation4 + $0x220] sm:$0xff]
    %v121 = vld [vmem:[#allocation4 + $0x228] sm:$0xff]
    %v122 = vld [vmem:[#allocation4 + $0x230] sm:$0xff]
    %v123 = vld [vmem:[#allocation4 + $0x238] sm:$0xff]
    %v124 = vld [vmem:[#allocation4 + $0x240] sm:$0xff]
    %v125 = vld [vmem:[#allocation4 + $0x248] sm:$0xff]
    %v126 = vld [vmem:[#allocation4 + $0x250] sm:$0xff]
    %v127 = vld [vmem:[#allocation4 + $0x258] sm:$0xff]
    %v128 = vld [vmem:[#allocation4 + $0x260] sm:$0xff]
    %v129 = vld [vmem:[#allocation4 + $0x268] sm:$0xff]
    %v130 = vld [vmem:[#allocation4 + $0x270] sm:$0xff]
    %v131 = vld [vmem:[#allocation4 + $0x278] sm:$0xff]
    %v132 = vld [vmem:[#allocation4 + $0x280] sm:$0xff]
    %v133 = vld [vmem:[#allocation4 + $0x288] sm:$0xff]
    %v134 = vld [vmem:[#allocation4 + $0x290] sm:$0xff]
    %v135 = vld [vmem:[#allocation4 + $0x298] sm:$0xff]
    %v136 = vld [vmem:[#allocation4 + $0x2a0] sm:$0xff]
    %v137 = vld [vmem:[#allocation4 + $0x2a8] sm:$0xff]
    %v138 = vld [vmem:[#allocation4 + $0x2b0] sm:$0xff]
    %v139 = vld [vmem:[#allocation4 + $0x2b8] sm:$0xff]
    %v140 = vld [vmem:[#allocation4 + $0x2c0] sm:$0xff]
    %v141 = vld [vmem:[#allocation4 + $0x2c8] sm:$0xff]
    %v142 = vld [vmem:[#allocation4 + $0x2d0] sm:$0xff]
    %v143 = vld [vmem:[#allocation4 + $0x2d8] sm:$0xff]
    %v144 = vld [vmem:[#allocation4 + $0x2e0] sm:$0xff]
    %v145 = vld [vmem:[#allocation4 + $0x2e8] sm:$0xff]
    %v146 = vld [vmem:[#allocation4 + $0x2f0] sm:$0xff]
    %v147 = vld [vmem:[#allocation4 + $0x2f8] sm:$0xff]
    %v148 = vld [vmem:[#allocation4 + $0x300] sm:$0xff]
    %v149 = vld [vmem:[#allocation4 + $0x308] sm:$0xff]
    %v150 = vld [vmem:[#allocation4 + $0x310] sm:$0xff]
    %v151 = vld [vmem:[#allocation4 + $0x318] sm:$0xff]
    %v152 = vld [vmem:[#allocation4 + $0x320] sm:$0xff]
    %v153 = vld [vmem:[#allocation4 + $0x328] sm:$0xff]
    %v154 = vld [vmem:[#allocation4 + $0x330] sm:$0xff]
    %v155 = vld [vmem:[#allocation4 + $0x338] sm:$0xff]
    %v156 = vld [vmem:[#allocation4 + $0x340] sm:$0xff]
    %v157 = vld [vmem:[#allocation4 + $0x348] sm:$0xff]
    %v158 = vld [vmem:[#allocation4 + $0x350] sm:$0xff]
    %v159 = vld [vmem:[#allocation4 + $0x358] sm:$0xff]
    %v160 = vld [vmem:[#allocation4 + $0x360] sm:$0xff]
    %v161 = vld [vmem:[#allocation4 + $0x368] sm:$0xff]
    %v162 = vld [vmem:[#allocation4 + $0x370] sm:$0xff]
    %v163 = vld [vmem:[#allocation4 + $0x378] sm:$0xff]
    %v164 = vld [vmem:[#allocation4 + $0x380] sm:$0xff]
    %v165 = vld [vmem:[#allocation4 + $0x388] sm:$0xff]
    %v166 = vld [vmem:[#allocation4 + $0x390] sm:$0xff]
    %v167 = vld [vmem:[#allocation4 + $0x398] sm:$0xff]
    %v168 = vld [vmem:[#allocation4 + $0x3a0] sm:$0xff]
    %v169 = vld [vmem:[#allocation4 + $0x3a8] sm:$0xff]
    %v170 = vld [vmem:[#allocation4 + $0x3b0] sm:$0xff]
    %v171 = vld [vmem:[#allocation4 + $0x3b8] sm:$0xff]
    %v172 = vld [vmem:[#allocation4 + $0x3c0] sm:$0xff]
    %v173 = vld [vmem:[#allocation4 + $0x3c8] sm:$0xff]
    %v174 = vld [vmem:[#allocation4 + $0x3d0] sm:$0xff]
    %v175 = vld [vmem:[#allocation4 + $0x3d8] sm:$0xff]
    %v176 = vld [vmem:[#allocation4 + $0x3e0] sm:$0xff]
    %v177 = vld [vmem:[#allocation4 + $0x3e8] sm:$0xff]
    %v178 = vld [vmem:[#allocation4 + $0x3f0] sm:$0xff]
    %v179 = vld [vmem:[#allocation4 + $0x3f8] sm:$0xff]
    %v180 = vld [vmem:[#allocation4 + $0x400] sm:$0xff]
    %v181 = vld [vmem:[#allocation4 + $0x408] sm:$0xff]
    %v182 = vld [vmem:[#allocation4 + $0x410] sm:$0xff]
    %v183 = vld [vmem:[#allocation4 + $0x418] sm:$0xff]
    %v184 = vld [vmem:[#allocation4 + $0x420] sm:$0xff]
    %v185 = vld [vmem:[#allocation4 + $0x428] sm:$0xff]
    %v186 = vld [vmem:[#allocation4 + $0x430] sm:$0xff]
    %v187 = vld [vmem:[#allocation4 + $0x438] sm:$0xff]
    %v188 = vld [vmem:[#allocation4 + $0x440] sm:$0xff]
    %v189 = vld [vmem:[#allocation4 + $0x448] sm:$0xff]
    %v190 = vld [vmem:[#allocation4 + $0x450] sm:$0xff]
    %v191 = vld [vmem:[#allocation4 + $0x458] sm:$0xff]
    %v192 = vld [vmem:[#allocation4 + $0x460] sm:$0xff]
    %v193 = vld [vmem:[#allocation4 + $0x468] sm:$0xff]
    %v194 = vld [vmem:[#allocation4 + $0x470] sm:$0xff]
    %v195 = vld [vmem:[#allocation4 + $0x478] sm:$0xff]
    %v196 = vld [vmem:[#allocation4 + $0x480] sm:$0xff]
    %v197 = vld [vmem:[#allocation4 + $0x488] sm:$0xff]
    %v198 = vld [vmem:[#allocation4 + $0x490] sm:$0xff]
    %v199 = vld [vmem:[#allocation4 + $0x498] sm:$0xff]
    %v200 = vld [vmem:[#allocation4 + $0x4a0] sm:$0xff]
    %v201 = vld [vmem:[#allocation4 + $0x4a8] sm:$0xff]
    %v202 = vld [vmem:[#allocation4 + $0x4b0] sm:$0xff]
    %v203 = vld [vmem:[#allocation4 + $0x4b8] sm:$0xff]
    %v204 = vld [vmem:[#allocation4 + $0x4c0] sm:$0xff]
    %v205 = vld [vmem:[#allocation4 + $0x4c8] sm:$0xff]
    %v206 = vld [vmem:[#allocation4 + $0x4d0] sm:$0xff]
    %v207 = vld [vmem:[#allocation4 + $0x4d8] sm:$0xff]
    %v208 = vld [vmem:[#allocation4 + $0x4e0] sm:$0xff]
    %v209 = vld [vmem:[#allocation4 + $0x4e8] sm:$0xff]
    %v210 = vld [vmem:[#allocation4 + $0x4f0] sm:$0xff]
    %v211 = vld [vmem:[#allocation4 + $0x4f8] sm:$0xff]
    %v212 = vld [vmem:[#allocation4 + $0x500] sm:$0xff]
    %v213 = vld [vmem:[#allocation4 + $0x508] sm:$0xff]
    %v214 = vld [vmem:[#allocation4 + $0x510] sm:$0xff]
    %v215 = vld [vmem:[#allocation4 + $0x518] sm:$0xff]
    %v216 = vld [vmem:[#allocation4 + $0x520] sm:$0xff]
    %v217 = vld [vmem:[#allocation4 + $0x528] sm:$0xff]
    %v218 = vld [vmem:[#allocation4 + $0x530] sm:$0xff]
    %v219 = vld [vmem:[#allocation4 + $0x538] sm:$0xff]
    %v220 = vld [vmem:[#allocation4 + $0x540] sm:$0xff]
    %v221 = vld [vmem:[#allocation4 + $0x548] sm:$0xff]
    %v222 = vld [vmem:[#allocation4 + $0x550] sm:$0xff]
    %v223 = vld [vmem:[#allocation4 + $0x558] sm:$0xff]
    %v224 = vld [vmem:[#allocation4 + $0x560] sm:$0xff]
    %v225 = vld [vmem:[#allocation4 + $0x568] sm:$0xff]
    %v226 = vld [vmem:[#allocation4 + $0x570] sm:$0xff]
    %v227 = vld [vmem:[#allocation4 + $0x578] sm:$0xff]
    %v228 = vld [vmem:[#allocation4 + $0x580] sm:$0xff]
    %v229 = vld [vmem:[#allocation4 + $0x588] sm:$0xff]
    %v230 = vld [vmem:[#allocation4 + $0x590] sm:$0xff]
    %v231 = vld [vmem:[#allocation4 + $0x598] sm:$0xff]
    %v232 = vld [vmem:[#allocation4 + $0x5a0] sm:$0xff]
    %v233 = vld [vmem:[#allocation4 + $0x5a8] sm:$0xff]
    %v234 = vld [vmem:[#allocation4 + $0x5b0] sm:$0xff]
    %v235 = vld [vmem:[#allocation4 + $0x5b8] sm:$0xff]
    %v236 = vld [vmem:[#allocation4 + $0x5c0] sm:$0xff]
    %v237 = vld [vmem:[#allocation4 + $0x5c8] sm:$0xff]
    %v238 = vld [vmem:[#allocation4 + $0x5d0] sm:$0xff]
    %v239 = vld [vmem:[#allocation4 + $0x5d8] sm:$0xff]
    %v240 = vld [vmem:[#allocation4 + $0x5e0] sm:$0xff]
    %v241 = vld [vmem:[#allocation4 + $0x5e8] sm:$0xff]
    %v242 = vld [vmem:[#allocation4 + $0x5f0] sm:$0xff]
    %v243 = vld [vmem:[#allocation4 + $0x5f8] sm:$0xff]
    %v244 = vld [vmem:[#allocation4 + $0x600] sm:$0xff]
    %v245 = vld [vmem:[#allocation4 + $0x608] sm:$0xff]
    %v246 = vld [vmem:[#allocation4 + $0x610] sm:$0xff]
    %v247 = vld [vmem:[#allocation4 + $0x618] sm:$0xff]
    %v248 = vld [vmem:[#allocation4 + $0x620] sm:$0xff]
    %v249 = vld [vmem:[#allocation4 + $0x628] sm:$0xff]
    %v250 = vld [vmem:[#allocation4 + $0x630] sm:$0xff]
    %v251 = vld [vmem:[#allocation4 + $0x638] sm:$0xff]
    %v252 = vld [vmem:[#allocation4 + $0x640] sm:$0xff]
    %v253 = vld [vmem:[#allocation4 + $0x648] sm:$0xff]
    %v254 = vld [vmem:[#allocation4 + $0x650] sm:$0xff]
    %v255 = vld [vmem:[#allocation4 + $0x658] sm:$0xff]
    %v256 = vld [vmem:[#allocation4 + $0x660] sm:$0xff]
    %v257 = vld [vmem:[#allocation4 + $0x668] sm:$0xff]
    %v258 = vld [vmem:[#allocation4 + $0x670] sm:$0xff]
    %v259 = vld [vmem:[#allocation4 + $0x678] sm:$0xff]
    %v260 = vld [vmem:[#allocation4 + $0x680] sm:$0xff]
    %v261 = vld [vmem:[#allocation4 + $0x688] sm:$0xff]
    %v262 = vld [vmem:[#allocation4 + $0x690] sm:$0xff]
    %v263 = vld [vmem:[#allocation4 + $0x698] sm:$0xff]
    %v264 = vld [vmem:[#allocation4 + $0x6a0] sm:$0xff]
    %v265 = vld [vmem:[#allocation4 + $0x6a8] sm:$0xff]
    %v266 = vld [vmem:[#allocation4 + $0x6b0] sm:$0xff]
    %v267 = vld [vmem:[#allocation4 + $0x6b8] sm:$0xff]
    %v268 = vld [vmem:[#allocation4 + $0x6c0] sm:$0xff]
    %v269 = vld [vmem:[#allocation4 + $0x6c8] sm:$0xff]
    %v270 = vld [vmem:[#allocation4 + $0x6d0] sm:$0xff]
    %v271 = vld [vmem:[#allocation4 + $0x6d8] sm:$0xff]
    %v272 = vld [vmem:[#allocation4 + $0x6e0] sm:$0xff]
    %v273 = vld [vmem:[#allocation4 + $0x6e8] sm:$0xff]
    %v274 = vld [vmem:[#allocation4 + $0x6f0] sm:$0xff]
    %v275 = vld [vmem:[#allocation4 + $0x6f8] sm:$0xff]
    %v276 = vld [vmem:[#allocation4 + $0x700] sm:$0xff]
    %v277 = vld [vmem:[#allocation4 + $0x708] sm:$0xff]
    %v278 = vld [vmem:[#allocation4 + $0x710] sm:$0xff]
    %v279 = vld [vmem:[#allocation4 + $0x718] sm:$0xff]
    %v280 = vld [vmem:[#allocation4 + $0x720] sm:$0xff]
    %v281 = vld [vmem:[#allocation4 + $0x728] sm:$0xff]
    %v282 = vld [vmem:[#allocation4 + $0x730] sm:$0xff]
    %v283 = vld [vmem:[#allocation4 + $0x738] sm:$0xff]
    %v284 = vld [vmem:[#allocation4 + $0x740] sm:$0xff]
    %v285 = vld [vmem:[#allocation4 + $0x748] sm:$0xff]
    %v286 = vld [vmem:[#allocation4 + $0x750] sm:$0xff]
    %v287 = vld [vmem:[#allocation4 + $0x758] sm:$0xff]
    %v288 = vld [vmem:[#allocation4 + $0x760] sm:$0xff]
    %v289 = vld [vmem:[#allocation4 + $0x768] sm:$0xff]
    %v290 = vld [vmem:[#allocation4 + $0x770] sm:$0xff]
    %v291 = vld [vmem:[#allocation4 + $0x778] sm:$0xff]
    %v292 = vld [vmem:[#allocation4 + $0x780] sm:$0xff]
    %v293 = vld [vmem:[#allocation4 + $0x788] sm:$0xff]
    %v294 = vld [vmem:[#allocation4 + $0x790] sm:$0xff]
    %v295 = vld [vmem:[#allocation4 + $0x798] sm:$0xff]
    %v296 = vld [vmem:[#allocation4 + $0x7a0] sm:$0xff]
    %v297 = vld [vmem:[#allocation4 + $0x7a8] sm:$0xff]
    %v298 = vld [vmem:[#allocation4 + $0x7b0] sm:$0xff]
    %v299 = vld [vmem:[#allocation4 + $0x7b8] sm:$0xff]
    %v300 = vld [vmem:[#allocation4 + $0x7c0] sm:$0xff]
    %v301 = vld [vmem:[#allocation4 + $0x7c8] sm:$0xff]
    %v302 = vld [vmem:[#allocation4 + $0x7d0] sm:$0xff]
    %v303 = vld [vmem:[#allocation4 + $0x7d8] sm:$0xff]
    %v304 = vld [vmem:[#allocation4 + $0x7e0] sm:$0xff]
    %v305 = vld [vmem:[#allocation4 + $0x7e8] sm:$0xff]
    %v306 = vld [vmem:[#allocation4 + $0x7f0] sm:$0xff]
    %v307 = vld [vmem:[#allocation4 + $0x7f8] sm:$0xff]
    %v308 = vld [vmem:[#allocation4 + $0x800] sm:$0xff]
    %v309 = vld [vmem:[#allocation4 + $0x808] sm:$0xff]
    %v310 = vld [vmem:[#allocation4 + $0x810] sm:$0xff]
    %v311 = vld [vmem:[#allocation4 + $0x818] sm:$0xff]
    %v312 = vld [vmem:[#allocation4 + $0x820] sm:$0xff]
    %v313 = vld [vmem:[#allocation4 + $0x828] sm:$0xff]
    %v314 = vld [vmem:[#allocation4 + $0x830] sm:$0xff]
    %v315 = vld [vmem:[#allocation4 + $0x838] sm:$0xff]
    %v316 = vld [vmem:[#allocation4 + $0x840] sm:$0xff]
    %v317 = vld [vmem:[#allocation4 + $0x848] sm:$0xff]
    %v318 = vld [vmem:[#allocation4 + $0x850] sm:$0xff]
    %v319 = vld [vmem:[#allocation4 + $0x858] sm:$0xff]
    %v320 = vld [vmem:[#allocation4 + $0x860] sm:$0xff]
    %v321 = vld [vmem:[#allocation4 + $0x868] sm:$0xff]
    %v322 = vld [vmem:[#allocation4 + $0x870] sm:$0xff]
    %v323 = vld [vmem:[#allocation4 + $0x878] sm:$0xff]
    %v324 = vld [vmem:[#allocation4 + $0x880] sm:$0xff]
    %v325 = vld [vmem:[#allocation4 + $0x888] sm:$0xff]
    %v326 = vld [vmem:[#allocation4 + $0x890] sm:$0xff]
    %v327 = vld [vmem:[#allocation4 + $0x898] sm:$0xff]
    %v328 = vld [vmem:[#allocation4 + $0x8a0] sm:$0xff]
    %v329 = vld [vmem:[#allocation4 + $0x8a8] sm:$0xff]
    %v330 = vld [vmem:[#allocation4 + $0x8b0] sm:$0xff]
    %v331 = vld [vmem:[#allocation4 + $0x8b8] sm:$0xff]
    %v332 = vld [vmem:[#allocation4 + $0x8c0] sm:$0xff]
    %v333 = vld [vmem:[#allocation4 + $0x8c8] sm:$0xff]
    %v334 = vld [vmem:[#allocation4 + $0x8d0] sm:$0xff]
    %v335 = vld [vmem:[#allocation4 + $0x8d8] sm:$0xff]
    %v336 = vld [vmem:[#allocation4 + $0x8e0] sm:$0xff]
    %v337 = vld [vmem:[#allocation4 + $0x8e8] sm:$0xff]
    %v338 = vld [vmem:[#allocation4 + $0x8f0] sm:$0xff]
    %v339 = vld [vmem:[#allocation4 + $0x8f8] sm:$0xff]
    %v340 = vld [vmem:[#allocation4 + $0x900] sm:$0xff]
    %v341 = vld [vmem:[#allocation4 + $0x908] sm:$0xff]
    %v342 = vld [vmem:[#allocation4 + $0x910] sm:$0xff]
    %v343 = vld [vmem:[#allocation4 + $0x918] sm:$0xff]
    %v344 = vld [vmem:[#allocation4 + $0x920] sm:$0xff]
    %v345 = vld [vmem:[#allocation4 + $0x928] sm:$0xff]
    %v346 = vld [vmem:[#allocation4 + $0x930] sm:$0xff]
    %v347 = vld [vmem:[#allocation4 + $0x938] sm:$0xff]
    %v348 = vld [vmem:[#allocation4 + $0x940] sm:$0xff]
    %v349 = vld [vmem:[#allocation4 + $0x948] sm:$0xff]
    %v350 = vld [vmem:[#allocation4 + $0x950] sm:$0xff]
    %v351 = vld [vmem:[#allocation4 + $0x958] sm:$0xff]
    %v352 = vld [vmem:[#allocation4 + $0x960] sm:$0xff]
    %v353 = vld [vmem:[#allocation4 + $0x968] sm:$0xff]
    %v354 = vld [vmem:[#allocation4 + $0x970] sm:$0xff]
    %v355 = vld [vmem:[#allocation4 + $0x978] sm:$0xff]
    %v356 = vld [vmem:[#allocation4 + $0x980] sm:$0xff]
    %v357 = vld [vmem:[#allocation4 + $0x988] sm:$0xff]
    %v358 = vld [vmem:[#allocation4 + $0x990] sm:$0xff]
    %v359 = vld [vmem:[#allocation4 + $0x998] sm:$0xff]
    %v360 = vld [vmem:[#allocation4 + $0x9a0] sm:$0xff]
    %v361 = vld [vmem:[#allocation4 + $0x9a8] sm:$0xff]
    %v362 = vld [vmem:[#allocation4 + $0x9b0] sm:$0xff]
    %v363 = vld [vmem:[#allocation4 + $0x9b8] sm:$0xff]
    %v364 = vld [vmem:[#allocation4 + $0x9c0] sm:$0xff]
    %v365 = vld [vmem:[#allocation4 + $0x9c8] sm:$0xff]
    %v366 = vld [vmem:[#allocation4 + $0x9d0] sm:$0xff]
    %v367 = vld [vmem:[#allocation4 + $0x9d8] sm:$0xff]
    %v368 = vld [vmem:[#allocation4 + $0x9e0] sm:$0xff]
    %v369 = vld [vmem:[#allocation4 + $0x9e8] sm:$0xff]
    %v370 = vld [vmem:[#allocation4 + $0x9f0] sm:$0xff]
    %v371 = vld [vmem:[#allocation4 + $0x9f8] sm:$0xff]
    %v372 = vld [vmem:[#allocation4 + $0xa00] sm:$0xff]
    %v373 = vld [vmem:[#allocation4 + $0xa08] sm:$0xff]
    %v374 = vld [vmem:[#allocation4 + $0xa10] sm:$0xff]
    %v375 = vld [vmem:[#allocation4 + $0xa18] sm:$0xff]
    %v376 = vld [vmem:[#allocation4 + $0xa20] sm:$0xff]
    %v377 = vld [vmem:[#allocation4 + $0xa28] sm:$0xff]
    %v378 = vld [vmem:[#allocation4 + $0xa30] sm:$0xff]
    %v379 = vld [vmem:[#allocation4 + $0xa38] sm:$0xff]
    %v380 = vld [vmem:[#allocation4 + $0xa40] sm:$0xff]
    %v381 = vld [vmem:[#allocation4 + $0xa48] sm:$0xff]
    %v382 = vld [vmem:[#allocation4 + $0xa50] sm:$0xff]
    %v383 = vld [vmem:[#allocation4 + $0xa58] sm:$0xff]
    %v384 = vld [vmem:[#allocation4 + $0xa60] sm:$0xff]
    %v385 = vld [vmem:[#allocation4 + $0xa68] sm:$0xff]
    %v386 = vld [vmem:[#allocation4 + $0xa70] sm:$0xff]
    %v387 = vld [vmem:[#allocation4 + $0xa78] sm:$0xff]
    %v388 = vld [vmem:[#allocation4 + $0xa80] sm:$0xff]
    %v389 = vld [vmem:[#allocation4 + $0xa88] sm:$0xff]
    %v390 = vld [vmem:[#allocation4 + $0xa90] sm:$0xff]
    %v391 = vld [vmem:[#allocation4 + $0xa98] sm:$0xff]
    %v392 = vld [vmem:[#allocation4 + $0xaa0] sm:$0xff]
    %v393 = vld [vmem:[#allocation4 + $0xaa8] sm:$0xff]
    %v394 = vld [vmem:[#allocation4 + $0xab0] sm:$0xff]
    %v395 = vld [vmem:[#allocation4 + $0xab8] sm:$0xff]
    %v396 = vld [vmem:[#allocation4 + $0xac0] sm:$0xff]
    %v397 = vld [vmem:[#allocation4 + $0xac8] sm:$0xff]
    %v398 = vld [vmem:[#allocation4 + $0xad0] sm:$0xff]
    %v399 = vld [vmem:[#allocation4 + $0xad8] sm:$0xff]
    %v400 = vld [vmem:[#allocation4 + $0xae0] sm:$0xff]
    %v401 = vld [vmem:[#allocation4 + $0xae8] sm:$0xff]
    %v402 = vld [vmem:[#allocation4 + $0xaf0] sm:$0xff]
    %v403 = vld [vmem:[#allocation4 + $0xaf8] sm:$0xff]
    %v404 = vld [vmem:[#allocation4 + $0xb00] sm:$0xff]
    %v405 = vld [vmem:[#allocation4 + $0xb08] sm:$0xff]
    %v406 = vld [vmem:[#allocation4 + $0xb10] sm:$0xff]
    %v407 = vld [vmem:[#allocation4 + $0xb18] sm:$0xff]
    %v408 = vld [vmem:[#allocation4 + $0xb20] sm:$0xff]
    %v409 = vld [vmem:[#allocation4 + $0xb28] sm:$0xff]
    %v410 = vld [vmem:[#allocation4 + $0xb30] sm:$0xff]
    %v411 = vld [vmem:[#allocation4 + $0xb38] sm:$0xff]
    %v412 = vld [vmem:[#allocation4 + $0xb40] sm:$0xff]
    %v413 = vld [vmem:[#allocation4 + $0xb48] sm:$0xff]
    %v414 = vld [vmem:[#allocation4 + $0xb50] sm:$0xff]
    %v415 = vld [vmem:[#allocation4 + $0xb58] sm:$0xff]
    %v416 = vld [vmem:[#allocation4 + $0xb60] sm:$0xff]
    %v417 = vld [vmem:[#allocation4 + $0xb68] sm:$0xff]
    %v418 = vld [vmem:[#allocation4 + $0xb70] sm:$0xff]
    %v419 = vld [vmem:[#allocation4 + $0xb78] sm:$0xff]
    %v420 = vld [vmem:[#allocation4 + $0xb80] sm:$0xff]
    %v421 = vld [vmem:[#allocation4 + $0xb88] sm:$0xff]
    %v422 = vld [vmem:[#allocation4 + $0xb90] sm:$0xff]
    %v423 = vld [vmem:[#allocation4 + $0xb98] sm:$0xff]
    %v424 = vld [vmem:[#allocation4 + $0xba0] sm:$0xff]
    %v425 = vld [vmem:[#allocation4 + $0xba8] sm:$0xff]
    %v426 = vld [vmem:[#allocation4 + $0xbb0] sm:$0xff]
    %v427 = vld [vmem:[#allocation4 + $0xbb8] sm:$0xff]
    %v428 = vld [vmem:[#allocation4 + $0xbc0] sm:$0xff]
    %v429 = vld [vmem:[#allocation4 + $0xbc8] sm:$0xff]
    %v430 = vld [vmem:[#allocation4 + $0xbd0] sm:$0xff]
    %v431 = vld [vmem:[#allocation4 + $0xbd8] sm:$0xff]
    %v432 = vld [vmem:[#allocation4 + $0xbe0] sm:$0xff]
    %v433 = vld [vmem:[#allocation4 + $0xbe8] sm:$0xff]
    %v434 = vld [vmem:[#allocation4 + $0xbf0] sm:$0xff]
    %v435 = vld [vmem:[#allocation4 + $0xbf8] sm:$0xff]
    %v436 = vld [vmem:[#allocation4 + $0xc00] sm:$0xff]
    %v437 = vld [vmem:[#allocation4 + $0xc08] sm:$0xff]
    %v438 = vld [vmem:[#allocation4 + $0xc10] sm:$0xff]
    %v439 = vld [vmem:[#allocation4 + $0xc18] sm:$0xff]
    %v440 = vld [vmem:[#allocation4 + $0xc20] sm:$0xff]
    %v441 = vld [vmem:[#allocation4 + $0xc28] sm:$0xff]
    %v442 = vld [vmem:[#allocation4 + $0xc30] sm:$0xff]
    %v443 = vld [vmem:[#allocation4 + $0xc38] sm:$0xff]
    %v444 = vld [vmem:[#allocation4 + $0xc40] sm:$0xff]
    %v445 = vld [vmem:[#allocation4 + $0xc48] sm:$0xff]
    %v446 = vld [vmem:[#allocation4 + $0xc50] sm:$0xff]
    %v447 = vld [vmem:[#allocation4 + $0xc58] sm:$0xff]
    %v448 = vld [vmem:[#allocation4 + $0xc60] sm:$0xff]
    %v449 = vld [vmem:[#allocation4 + $0xc68] sm:$0xff]
    %v450 = vld [vmem:[#allocation4 + $0xc70] sm:$0xff]
    %v451 = vld [vmem:[#allocation4 + $0xc78] sm:$0xff]
    %v452 = vld [vmem:[#allocation6] sm:$0xff]
    %v454 = vlaneseq
    %v455 = vshrl.u32 %v454, 7
    %v456 = vsub.s32 0, %v455
    %v457 = vrot.slane %v452, %v456
    %v458 = vlaneseq
    %v459 = vshrl.u32 %v458, 7
    %v460 = vsub.s32 1, %v459
    %v461 = vrot.slane %v452, %v460
    %v462 = vlaneseq
    %v463 = vshrl.u32 %v462, 7
    %v464 = vsub.s32 2, %v463
    %v465 = vrot.slane %v452, %v464
    %v466 = vlaneseq
    %v467 = vshrl.u32 %v466, 7
    %v468 = vsub.s32 3, %v467
    %v469 = vrot.slane %v452, %v468
    %v470 = vlaneseq
    %v471 = vshrl.u32 %v470, 7
    %v472 = vsub.s32 4, %v471
    %v473 = vrot.slane %v452, %v472
    %v474 = vlaneseq
    %v475 = vshrl.u32 %v474, 7
    %v476 = vsub.s32 5, %v475
    %v477 = vrot.slane %v452, %v476
    %v478 = vlaneseq
    %v479 = vshrl.u32 %v478, 7
    %v480 = vsub.s32 6, %v479
    %v481 = vrot.slane %v452, %v480
    %v482 = vlaneseq
    %v483 = vshrl.u32 %v482, 7
    %v484 = vsub.s32 7, %v483
    %v485 = vrot.slane %v452, %v484
    %v495 = vcombine.high %v51, %v51
    %v497 = vunpack.c.l.s4 1983009808
    %v498 = vunpack.c.0.s8 %v497
    %v499 = vlaneseq
    %v500 = vshrl.u32 %v499, 7
    %v501 = vsub.s32 %v498, %v500
    %v502 = vrot.slane %v51, %v501
    %v504 = vunpack.c.l.s4 1983009808
    %v505 = vunpack.c.0.s8 %v504
    %v506 = vlaneseq
    %v507 = vshrl.u32 %v506, 7
    %v508 = vsub.s32 %v505, %v507
    %v509 = vrot.slane %v495, %v508
    %v510 = vcombine.high %v502, %v502
    %v511 = vcombine.high %v509, %v509
    %vm515 = vcmask 130048
    %v516 = vsel %vm515, %v511, 0
    %518 = vmatprep.subr.mxu0 %v53
    %519 = vmatpush1.msra.mxu0 %v52
    %520 = vmatprep.subr.mxu0 %v61
    %521 = vmatpush1.msra.mxu0 %v60
    %522 = vmatprep.subr.mxu0 %v69
    %523 = vmatpush1.msra.mxu0 %v68
    %524 = vmatprep.subr.mxu0 %v77
    %525 = vmatpush1.msra.mxu0 %v76
    %526 = vmatprep.subr.mxu0 %v85
    %527 = vmatpush1.msra.mxu0 %v84
    %528 = vmatprep.subr.mxu0 %v93
    %529 = vmatpush1.msra.mxu0 %v92
    %530 = vmatprep.subr.mxu0 %v101
    %531 = vmatpush1.msra.mxu0 %v100
    %532 = vmatprep.subr.mxu0 %v109
    %533 = vmatpush1.msra.mxu0 %v108
    %534 = vmatprep.subr.mxu0 %v117
    %535 = vmatpush1.msra.mxu0 %v116
    %536 = vmatprep.subr.mxu0 %v125
    %537 = vmatpush1.msra.mxu0 %v124
    %538 = vmatprep.subr.mxu0 %v133
    %539 = vmatpush1.msra.mxu0 %v132
    %540 = vmatprep.subr.mxu0 %v141
    %541 = vmatpush1.msra.mxu0 %v140
    %542 = vmatprep.subr.mxu0 %v149
    %543 = vmatpush1.msra.mxu0 %v148
    %544 = vmatprep.subr.mxu0 %v157
    %545 = vmatpush1.msra.mxu0 %v156
    %546 = vmatprep.subr.mxu0 %v165
    %547 = vmatpush1.msra.mxu0 %v164
    %548 = vmatprep.subr.mxu0 %v173
    %549 = vmatpush1.msra.mxu0 %v172
    %550 = vmatprep.subr.mxu0 %v181
    %551 = vmatpush1.msra.mxu0 %v180
    %552 = vmatprep.subr.mxu0 %v189
    %553 = vmatpush1.msra.mxu0 %v188
    %554 = vmatprep.subr.mxu0 %v197
    %555 = vmatpush1.msra.mxu0 %v196
    %556 = vmatprep.subr.mxu0 %v205
    %557 = vmatpush1.msra.mxu0 %v204
    %558 = vmatprep.subr.mxu0 %v213
    %559 = vmatpush1.msra.mxu0 %v212
    %560 = vmatprep.subr.mxu0 %v221
    %561 = vmatpush1.msra.mxu0 %v220
    %562 = vmatprep.subr.mxu0 %v229
    %563 = vmatpush1.msra.mxu0 %v228
    %564 = vmatprep.subr.mxu0 %v237
    %565 = vmatpush1.msra.mxu0 %v236
    %566 = vmatprep.subr.mxu0 %v245
    %567 = vmatpush1.msra.mxu0 %v244
    %568 = vmatprep.subr.mxu0 %v253
    %569 = vmatpush1.msra.mxu0 %v252
    %570 = vmatprep.subr.mxu0 %v261
    %571 = vmatpush1.msra.mxu0 %v260
    %572 = vmatprep.subr.mxu0 %v269
    %573 = vmatpush1.msra.mxu0 %v268
    %574 = vmatprep.subr.mxu0 %v277
    %575 = vmatpush1.msra.mxu0 %v276
    %576 = vmatprep.subr.mxu0 %v285
    %577 = vmatpush1.msra.mxu0 %v284
    %578 = vmatprep.subr.mxu0 %v293
    %579 = vmatpush1.msra.mxu0 %v292
    %580 = vmatprep.subr.mxu0 %v301
    %581 = vmatpush1.msra.mxu0 %v300
    %582 = vmatprep.mubr.f32.mxu0 %v510
    %583 = vmatmul.mubr.f32.gmra.mrb[0].mxu0 %v502
    %v584 = vpop.f32.mrb[0].mxu0
    %v585 = vadd.f32 %v457, %v584
    %v586 = vpop.f32.mrb[0].mxu0
    %v587 = vadd.f32 %v461, %v586
    %588 = vdwg.mxu0
    %589 = vmatprep.subr.mxu0 %v309
    %590 = vmatpush1.msra.mxu0 %v308
    %591 = vmatprep.subr.mxu0 %v317
    %592 = vmatpush1.msra.mxu0 %v316
    %593 = vmatprep.subr.mxu0 %v325
    %594 = vmatpush1.msra.mxu0 %v324
    %595 = vmatprep.subr.mxu0 %v333
    %596 = vmatpush1.msra.mxu0 %v332
    %597 = vmatprep.subr.mxu0 %v341
    %598 = vmatpush1.msra.mxu0 %v340
    %599 = vmatprep.subr.mxu0 %v349
    %600 = vmatpush1.msra.mxu0 %v348
    %601 = vmatprep.subr.mxu0 %v357
    %602 = vmatpush1.msra.mxu0 %v356
    %603 = vmatprep.subr.mxu0 %v365
    %604 = vmatpush1.msra.mxu0 %v364
    %605 = vmatprep.subr.mxu0 %v373
    %606 = vmatpush1.msra.mxu0 %v372
    %607 = vmatprep.subr.mxu0 %v381
    %608 = vmatpush1.msra.mxu0 %v380
    %609 = vmatprep.subr.mxu0 %v389
    %610 = vmatpush1.msra.mxu0 %v388
    %611 = vmatprep.subr.mxu0 %v397
    %612 = vmatpush1.msra.mxu0 %v396
    %613 = vmatprep.subr.mxu0 %v405
    %614 = vmatpush1.msra.mxu0 %v404
    %615 = vmatprep.subr.mxu0 %v413
    %616 = vmatpush1.msra.mxu0 %v412
    %617 = vmatprep.subr.mxu0 %v421
    %618 = vmatpush1.msra.mxu0 %v420
    %619 = vmatprep.subr.mxu0 %v429
    %620 = vmatpush1.msra.mxu0 %v428
    %621 = vmatprep.subr.mxu0 %v437
    %622 = vmatpush1.msra.mxu0 %v436
    %623 = vmatprep.subr.mxu0 %v445
    %624 = vmatpush1.msra.mxu0 %v444
    %625 = vmatprep.subr.mxu0 0.0
    %626 = vmatpush1.msra.mxu0 0.0
    %627 = vmatprep.subr.mxu0 0.0
    %628 = vmatpush1.msra.mxu0 0.0
    %629 = vmatprep.subr.mxu0 0.0
    %630 = vmatpush1.msra.mxu0 0.0
    %631 = vmatprep.subr.mxu0 0.0
    %632 = vmatpush1.msra.mxu0 0.0
    %633 = vmatprep.subr.mxu0 0.0
    %634 = vmatpush1.msra.mxu0 0.0
    %635 = vmatprep.subr.mxu0 0.0
    %636 = vmatpush1.msra.mxu0 0.0
    %637 = vmatprep.subr.mxu0 0.0
    %638 = vmatpush1.msra.mxu0 0.0
    %639 = vmatprep.subr.mxu0 0.0
    %640 = vmatpush1.msra.mxu0 0.0
    %641 = vmatprep.subr.mxu0 0.0
    %642 = vmatpush1.msra.mxu0 0.0
    %643 = vmatprep.subr.mxu0 0.0
    %644 = vmatpush1.msra.mxu0 0.0
    %645 = vmatprep.subr.mxu0 0.0
    %646 = vmatpush1.msra.mxu0 0.0
    %647 = vmatprep.subr.mxu0 0.0
    %648 = vmatpush1.msra.mxu0 0.0
    %649 = vmatprep.subr.mxu0 0.0
    %650 = vmatpush1.msra.mxu0 0.0
    %651 = vmatprep.subr.mxu0 0.0
    %652 = vmatpush1.msra.mxu0 0.0
    %653 = vmatprep.mubr.f32.mxu0 %v516
    %654 = vmatmul.mubr.f32.gmra.mrb[0].mxu0 %v509
    %v655 = vpop.f32.mrb[0].mxu0
    %v656 = vadd.f32 %v585, %v655
    %v657 = vpop.f32.mrb[0].mxu0
    %v658 = vadd.f32 %v587, %v657
    %659 = vdwg.mxu0
    %660 = vmatprep.subr.mxu0 %v55
    %661 = vmatpush1.msra.mxu0 %v54
    %662 = vmatprep.subr.mxu0 %v63
    %663 = vmatpush1.msra.mxu0 %v62
    %664 = vmatprep.subr.mxu0 %v71
    %665 = vmatpush1.msra.mxu0 %v70
    %666 = vmatprep.subr.mxu0 %v79
    %667 = vmatpush1.msra.mxu0 %v78
    %668 = vmatprep.subr.mxu0 %v87
    %669 = vmatpush1.msra.mxu0 %v86
    %670 = vmatprep.subr.mxu0 %v95
    %671 = vmatpush1.msra.mxu0 %v94
    %672 = vmatprep.subr.mxu0 %v103
    %673 = vmatpush1.msra.mxu0 %v102
    %674 = vmatprep.subr.mxu0 %v111
    %675 = vmatpush1.msra.mxu0 %v110
    %676 = vmatprep.subr.mxu0 %v119
    %677 = vmatpush1.msra.mxu0 %v118
    %678 = vmatprep.subr.mxu0 %v127
    %679 = vmatpush1.msra.mxu0 %v126
    %680 = vmatprep.subr.mxu0 %v135
    %681 = vmatpush1.msra.mxu0 %v134
    %682 = vmatprep.subr.mxu0 %v143
    %683 = vmatpush1.msra.mxu0 %v142
    %684 = vmatprep.subr.mxu0 %v151
    %685 = vmatpush1.msra.mxu0 %v150
    %686 = vmatprep.subr.mxu0 %v159
    %687 = vmatpush1.msra.mxu0 %v158
    %688 = vmatprep.subr.mxu0 %v167
    %689 = vmatpush1.msra.mxu0 %v166
    %690 = vmatprep.subr.mxu0 %v175
    %691 = vmatpush1.msra.mxu0 %v174
    %692 = vmatprep.subr.mxu0 %v183
    %693 = vmatpush1.msra.mxu0 %v182
    %694 = vmatprep.subr.mxu0 %v191
    %695 = vmatpush1.msra.mxu0 %v190
    %696 = vmatprep.subr.mxu0 %v199
    %697 = vmatpush1.msra.mxu0 %v198
    %698 = vmatprep.subr.mxu0 %v207
    %699 = vmatpush1.msra.mxu0 %v206
    %700 = vmatprep.subr.mxu0 %v215
    %701 = vmatpush1.msra.mxu0 %v214
    %702 = vmatprep.subr.mxu0 %v223
    %703 = vmatpush1.msra.mxu0 %v222
    %704 = vmatprep.subr.mxu0 %v231
    %705 = vmatpush1.msra.mxu0 %v230
    %706 = vmatprep.subr.mxu0 %v239
    %707 = vmatpush1.msra.mxu0 %v238
    %708 = vmatprep.subr.mxu0 %v247
    %709 = vmatpush1.msra.mxu0 %v246
    %710 = vmatprep.subr.mxu0 %v255
    %711 = vmatpush1.msra.mxu0 %v254
    %712 = vmatprep.subr.mxu0 %v263
    %713 = vmatpush1.msra.mxu0 %v262
    %714 = vmatprep.subr.mxu0 %v271
    %715 = vmatpush1.msra.mxu0 %v270
    %716 = vmatprep.subr.mxu0 %v279
    %717 = vmatpush1.msra.mxu0 %v278
    %718 = vmatprep.subr.mxu0 %v287
    %719 = vmatpush1.msra.mxu0 %v286
    %720 = vmatprep.subr.mxu0 %v295
    %721 = vmatpush1.msra.mxu0 %v294
    %722 = vmatprep.subr.mxu0 %v303
    %723 = vmatpush1.msra.mxu0 %v302
    %724 = vmatprep.mubr.f32.mxu0 %v510
    %725 = vmatmul.mubr.f32.gmra.mrb[0].mxu0 %v502
    %v726 = vpop.f32.mrb[0].mxu0
    %v727 = vadd.f32 %v465, %v726
    %v728 = vpop.f32.mrb[0].mxu0
    %v729 = vadd.f32 %v469, %v728
    %730 = vdwg.mxu0
    %731 = vmatprep.subr.mxu0 %v311
    %732 = vmatpush1.msra.mxu0 %v310
    %733 = vmatprep.subr.mxu0 %v319
    %734 = vmatpush1.msra.mxu0 %v318
    %735 = vmatprep.subr.mxu0 %v327
    %736 = vmatpush1.msra.mxu0 %v326
    %737 = vmatprep.subr.mxu0 %v335
    %738 = vmatpush1.msra.mxu0 %v334
    %739 = vmatprep.subr.mxu0 %v343
    %740 = vmatpush1.msra.mxu0 %v342
    %741 = vmatprep.subr.mxu0 %v351
    %742 = vmatpush1.msra.mxu0 %v350
    %743 = vmatprep.subr.mxu0 %v359
    %744 = vmatpush1.msra.mxu0 %v358
    %745 = vmatprep.subr.mxu0 %v367
    %746 = vmatpush1.msra.mxu0 %v366
    %747 = vmatprep.subr.mxu0 %v375
    %748 = vmatpush1.msra.mxu0 %v374
    %749 = vmatprep.subr.mxu0 %v383
    %750 = vmatpush1.msra.mxu0 %v382
    %751 = vmatprep.subr.mxu0 %v391
    %752 = vmatpush1.msra.mxu0 %v390
    %753 = vmatprep.subr.mxu0 %v399
    %754 = vmatpush1.msra.mxu0 %v398
    %755 = vmatprep.subr.mxu0 %v407
    %756 = vmatpush1.msra.mxu0 %v406
    %757 = vmatprep.subr.mxu0 %v415
    %758 = vmatpush1.msra.mxu0 %v414
    %759 = vmatprep.subr.mxu0 %v423
    %760 = vmatpush1.msra.mxu0 %v422
    %761 = vmatprep.subr.mxu0 %v431
    %762 = vmatpush1.msra.mxu0 %v430
    %763 = vmatprep.subr.mxu0 %v439
    %764 = vmatpush1.msra.mxu0 %v438
    %765 = vmatprep.subr.mxu0 %v447
    %766 = vmatpush1.msra.mxu0 %v446
    %767 = vmatprep.subr.mxu0 0.0
    %768 = vmatpush1.msra.mxu0 0.0
    %769 = vmatprep.subr.mxu0 0.0
    %770 = vmatpush1.msra.mxu0 0.0
    %771 = vmatprep.subr.mxu0 0.0
    %772 = vmatpush1.msra.mxu0 0.0
    %773 = vmatprep.subr.mxu0 0.0
    %774 = vmatpush1.msra.mxu0 0.0
    %775 = vmatprep.subr.mxu0 0.0
    %776 = vmatpush1.msra.mxu0 0.0
    %777 = vmatprep.subr.mxu0 0.0
    %778 = vmatpush1.msra.mxu0 0.0
    %779 = vmatprep.subr.mxu0 0.0
    %780 = vmatpush1.msra.mxu0 0.0
    %781 = vmatprep.subr.mxu0 0.0
    %782 = vmatpush1.msra.mxu0 0.0
    %783 = vmatprep.subr.mxu0 0.0
    %784 = vmatpush1.msra.mxu0 0.0
    %785 = vmatprep.subr.mxu0 0.0
    %786 = vmatpush1.msra.mxu0 0.0
    %787 = vmatprep.subr.mxu0 0.0
    %788 = vmatpush1.msra.mxu0 0.0
    %789 = vmatprep.subr.mxu0 0.0
    %790 = vmatpush1.msra.mxu0 0.0
    %791 = vmatprep.subr.mxu0 0.0
    %792 = vmatpush1.msra.mxu0 0.0
    %793 = vmatprep.subr.mxu0 0.0
    %794 = vmatpush1.msra.mxu0 0.0
    %795 = vmatprep.mubr.f32.mxu0 %v516
    %796 = vmatmul.mubr.f32.gmra.mrb[0].mxu0 %v509
    %v797 = vpop.f32.mrb[0].mxu0
    %v798 = vadd.f32 %v727, %v797
    %v799 = vpop.f32.mrb[0].mxu0
    %v800 = vadd.f32 %v729, %v799
    %801 = vdwg.mxu0
    %802 = vmatprep.subr.mxu0 %v57
    %803 = vmatpush1.msra.mxu0 %v56
    %804 = vmatprep.subr.mxu0 %v65
    %805 = vmatpush1.msra.mxu0 %v64
    %806 = vmatprep.subr.mxu0 %v73
    %807 = vmatpush1.msra.mxu0 %v72
    %808 = vmatprep.subr.mxu0 %v81
    %809 = vmatpush1.msra.mxu0 %v80
    %810 = vmatprep.subr.mxu0 %v89
    %811 = vmatpush1.msra.mxu0 %v88
    %812 = vmatprep.subr.mxu0 %v97
    %813 = vmatpush1.msra.mxu0 %v96
    %814 = vmatprep.subr.mxu0 %v105
    %815 = vmatpush1.msra.mxu0 %v104
    %816 = vmatprep.subr.mxu0 %v113
    %817 = vmatpush1.msra.mxu0 %v112
    %818 = vmatprep.subr.mxu0 %v121
    %819 = vmatpush1.msra.mxu0 %v120
    %820 = vmatprep.subr.mxu0 %v129
    %821 = vmatpush1.msra.mxu0 %v128
    %822 = vmatprep.subr.mxu0 %v137
    %823 = vmatpush1.msra.mxu0 %v136
    %824 = vmatprep.subr.mxu0 %v145
    %825 = vmatpush1.msra.mxu0 %v144
    %826 = vmatprep.subr.mxu0 %v153
    %827 = vmatpush1.msra.mxu0 %v152
    %828 = vmatprep.subr.mxu0 %v161
    %829 = vmatpush1.msra.mxu0 %v160
    %830 = vmatprep.subr.mxu0 %v169
    %831 = vmatpush1.msra.mxu0 %v168
    %832 = vmatprep.subr.mxu0 %v177
    %833 = vmatpush1.msra.mxu0 %v176
    %834 = vmatprep.subr.mxu0 %v185
    %835 = vmatpush1.msra.mxu0 %v184
    %836 = vmatprep.subr.mxu0 %v193
    %837 = vmatpush1.msra.mxu0 %v192
    %838 = vmatprep.subr.mxu0 %v201
    %839 = vmatpush1.msra.mxu0 %v200
    %840 = vmatprep.subr.mxu0 %v209
    %841 = vmatpush1.msra.mxu0 %v208
    %842 = vmatprep.subr.mxu0 %v217
    %843 = vmatpush1.msra.mxu0 %v216
    %844 = vmatprep.subr.mxu0 %v225
    %845 = vmatpush1.msra.mxu0 %v224
    %846 = vmatprep.subr.mxu0 %v233
    %847 = vmatpush1.msra.mxu0 %v232
    %848 = vmatprep.subr.mxu0 %v241
    %849 = vmatpush1.msra.mxu0 %v240
    %850 = vmatprep.subr.mxu0 %v249
    %851 = vmatpush1.msra.mxu0 %v248
    %852 = vmatprep.subr.mxu0 %v257
    %853 = vmatpush1.msra.mxu0 %v256
    %854 = vmatprep.subr.mxu0 %v265
    %855 = vmatpush1.msra.mxu0 %v264
    %856 = vmatprep.subr.mxu0 %v273
    %857 = vmatpush1.msra.mxu0 %v272
    %858 = vmatprep.subr.mxu0 %v281
    %859 = vmatpush1.msra.mxu0 %v280
    %860 = vmatprep.subr.mxu0 %v289
    %861 = vmatpush1.msra.mxu0 %v288
    %862 = vmatprep.subr.mxu0 %v297
    %863 = vmatpush1.msra.mxu0 %v296
    %864 = vmatprep.subr.mxu0 %v305
    %865 = vmatpush1.msra.mxu0 %v304
    %866 = vmatprep.mubr.f32.mxu0 %v510
    %867 = vmatmul.mubr.f32.gmra.mrb[0].mxu0 %v502
    %v868 = vpop.f32.mrb[0].mxu0
    %v869 = vadd.f32 %v473, %v868
    %v870 = vpop.f32.mrb[0].mxu0
    %v871 = vadd.f32 %v477, %v870
    %872 = vdwg.mxu0
    %873 = vmatprep.subr.mxu0 %v313
    %874 = vmatpush1.msra.mxu0 %v312
    %875 = vmatprep.subr.mxu0 %v321
    %876 = vmatpush1.msra.mxu0 %v320
    %877 = vmatprep.subr.mxu0 %v329
    %878 = vmatpush1.msra.mxu0 %v328
    %879 = vmatprep.subr.mxu0 %v337
    %880 = vmatpush1.msra.mxu0 %v336
    %881 = vmatprep.subr.mxu0 %v345
    %882 = vmatpush1.msra.mxu0 %v344
    %883 = vmatprep.subr.mxu0 %v353
    %884 = vmatpush1.msra.mxu0 %v352
    %885 = vmatprep.subr.mxu0 %v361
    %886 = vmatpush1.msra.mxu0 %v360
    %887 = vmatprep.subr.mxu0 %v369
    %888 = vmatpush1.msra.mxu0 %v368
    %889 = vmatprep.subr.mxu0 %v377
    %890 = vmatpush1.msra.mxu0 %v376
    %891 = vmatprep.subr.mxu0 %v385
    %892 = vmatpush1.msra.mxu0 %v384
    %893 = vmatprep.subr.mxu0 %v393
    %894 = vmatpush1.msra.mxu0 %v392
    %895 = vmatprep.subr.mxu0 %v401
    %896 = vmatpush1.msra.mxu0 %v400
    %897 = vmatprep.subr.mxu0 %v409
    %898 = vmatpush1.msra.mxu0 %v408
    %899 = vmatprep.subr.mxu0 %v417
    %900 = vmatpush1.msra.mxu0 %v416
    %901 = vmatprep.subr.mxu0 %v425
    %902 = vmatpush1.msra.mxu0 %v424
    %903 = vmatprep.subr.mxu0 %v433
    %904 = vmatpush1.msra.mxu0 %v432
    %905 = vmatprep.subr.mxu0 %v441
    %906 = vmatpush1.msra.mxu0 %v440
    %907 = vmatprep.subr.mxu0 %v449
    %908 = vmatpush1.msra.mxu0 %v448
    %909 = vmatprep.subr.mxu0 0.0
    %910 = vmatpush1.msra.mxu0 0.0
    %911 = vmatprep.subr.mxu0 0.0
    %912 = vmatpush1.msra.mxu0 0.0
    %913 = vmatprep.subr.mxu0 0.0
    %914 = vmatpush1.msra.mxu0 0.0
    %915 = vmatprep.subr.mxu0 0.0
    %916 = vmatpush1.msra.mxu0 0.0
    %917 = vmatprep.subr.mxu0 0.0
    %918 = vmatpush1.msra.mxu0 0.0
    %919 = vmatprep.subr.mxu0 0.0
    %920 = vmatpush1.msra.mxu0 0.0
    %921 = vmatprep.subr.mxu0 0.0
    %922 = vmatpush1.msra.mxu0 0.0
    %923 = vmatprep.subr.mxu0 0.0
    %924 = vmatpush1.msra.mxu0 0.0
    %925 = vmatprep.subr.mxu0 0.0
    %926 = vmatpush1.msra.mxu0 0.0
    %927 = vmatprep.subr.mxu0 0.0
    %928 = vmatpush1.msra.mxu0 0.0
    %929 = vmatprep.subr.mxu0 0.0
    %930 = vmatpush1.msra.mxu0 0.0
    %931 = vmatprep.subr.mxu0 0.0
    %932 = vmatpush1.msra.mxu0 0.0
    %933 = vmatprep.subr.mxu0 0.0
    %934 = vmatpush1.msra.mxu0 0.0
    %935 = vmatprep.subr.mxu0 0.0
    %936 = vmatpush1.msra.mxu0 0.0
    %937 = vmatprep.mubr.f32.mxu0 %v516
    %938 = vmatmul.mubr.f32.gmra.mrb[0].mxu0 %v509
    %v939 = vpop.f32.mrb[0].mxu0
    %v940 = vadd.f32 %v869, %v939
    %v941 = vpop.f32.mrb[0].mxu0
    %v942 = vadd.f32 %v871, %v941
    %943 = vdwg.mxu0
    %944 = vmatprep.subr.mxu0 %v59
    %945 = vmatpush1.msra.mxu0 %v58
    %946 = vmatprep.subr.mxu0 %v67
    %947 = vmatpush1.msra.mxu0 %v66
    %948 = vmatprep.subr.mxu0 %v75
    %949 = vmatpush1.msra.mxu0 %v74
    %950 = vmatprep.subr.mxu0 %v83
    %951 = vmatpush1.msra.mxu0 %v82
    %952 = vmatprep.subr.mxu0 %v91
    %953 = vmatpush1.msra.mxu0 %v90
    %954 = vmatprep.subr.mxu0 %v99
    %955 = vmatpush1.msra.mxu0 %v98
    %956 = vmatprep.subr.mxu0 %v107
    %957 = vmatpush1.msra.mxu0 %v106
    %958 = vmatprep.subr.mxu0 %v115
    %959 = vmatpush1.msra.mxu0 %v114
    %960 = vmatprep.subr.mxu0 %v123
    %961 = vmatpush1.msra.mxu0 %v122
    %962 = vmatprep.subr.mxu0 %v131
    %963 = vmatpush1.msra.mxu0 %v130
    %964 = vmatprep.subr.mxu0 %v139
    %965 = vmatpush1.msra.mxu0 %v138
    %966 = vmatprep.subr.mxu0 %v147
    %967 = vmatpush1.msra.mxu0 %v146
    %968 = vmatprep.subr.mxu0 %v155
    %969 = vmatpush1.msra.mxu0 %v154
    %970 = vmatprep.subr.mxu0 %v163
    %971 = vmatpush1.msra.mxu0 %v162
    %972 = vmatprep.subr.mxu0 %v171
    %973 = vmatpush1.msra.mxu0 %v170
    %974 = vmatprep.subr.mxu0 %v179
    %975 = vmatpush1.msra.mxu0 %v178
    %976 = vmatprep.subr.mxu0 %v187
    %977 = vmatpush1.msra.mxu0 %v186
    %978 = vmatprep.subr.mxu0 %v195
    %979 = vmatpush1.msra.mxu0 %v194
    %980 = vmatprep.subr.mxu0 %v203
    %981 = vmatpush1.msra.mxu0 %v202
    %982 = vmatprep.subr.mxu0 %v211
    %983 = vmatpush1.msra.mxu0 %v210
    %984 = vmatprep.subr.mxu0 %v219
    %985 = vmatpush1.msra.mxu0 %v218
    %986 = vmatprep.subr.mxu0 %v227
    %987 = vmatpush1.msra.mxu0 %v226
    %988 = vmatprep.subr.mxu0 %v235
    %989 = vmatpush1.msra.mxu0 %v234
    %990 = vmatprep.subr.mxu0 %v243
    %991 = vmatpush1.msra.mxu0 %v242
    %992 = vmatprep.subr.mxu0 %v251
    %993 = vmatpush1.msra.mxu0 %v250
    %994 = vmatprep.subr.mxu0 %v259
    %995 = vmatpush1.msra.mxu0 %v258
    %996 = vmatprep.subr.mxu0 %v267
    %997 = vmatpush1.msra.mxu0 %v266
    %998 = vmatprep.subr.mxu0 %v275
    %999 = vmatpush1.msra.mxu0 %v274
    %1000 = vmatprep.subr.mxu0 %v283
    %1001 = vmatpush1.msra.mxu0 %v282
    %1002 = vmatprep.subr.mxu0 %v291
    %1003 = vmatpush1.msra.mxu0 %v290
    %1004 = vmatprep.subr.mxu0 %v299
    %1005 = vmatpush1.msra.mxu0 %v298
    %1006 = vmatprep.subr.mxu0 %v307
    %1007 = vmatpush1.msra.mxu0 %v306
    %1008 = vmatprep.mubr.f32.mxu0 %v510
    %1009 = vmatmul.mubr.f32.gmra.mrb[0].mxu0 %v502
    %v1010 = vpop.f32.mrb[0].mxu0
    %v1011 = vadd.f32 %v481, %v1010
    %v1012 = vpop.f32.mrb[0].mxu0
    %v1013 = vadd.f32 %v485, %v1012
    %1014 = vdwg.mxu0
    %1015 = vmatprep.subr.mxu0 %v315
    %1016 = vmatpush1.msra.mxu0 %v314
    %1017 = vmatprep.subr.mxu0 %v323
    %1018 = vmatpush1.msra.mxu0 %v322
    %1019 = vmatprep.subr.mxu0 %v331
    %1020 = vmatpush1.msra.mxu0 %v330
    %1021 = vmatprep.subr.mxu0 %v339
    %1022 = vmatpush1.msra.mxu0 %v338
    %1023 = vmatprep.subr.mxu0 %v347
    %1024 = vmatpush1.msra.mxu0 %v346
    %1025 = vmatprep.subr.mxu0 %v355
    %1026 = vmatpush1.msra.mxu0 %v354
    %1027 = vmatprep.subr.mxu0 %v363
    %1028 = vmatpush1.msra.mxu0 %v362
    %1029 = vmatprep.subr.mxu0 %v371
    %1030 = vmatpush1.msra.mxu0 %v370
    %1031 = vmatprep.subr.mxu0 %v379
    %1032 = vmatpush1.msra.mxu0 %v378
    %1033 = vmatprep.subr.mxu0 %v387
    %1034 = vmatpush1.msra.mxu0 %v386
    %1035 = vmatprep.subr.mxu0 %v395
    %1036 = vmatpush1.msra.mxu0 %v394
    %1037 = vmatprep.subr.mxu0 %v403
    %1038 = vmatpush1.msra.mxu0 %v402
    %1039 = vmatprep.subr.mxu0 %v411
    %1040 = vmatpush1.msra.mxu0 %v410
    %1041 = vmatprep.subr.mxu0 %v419
    %1042 = vmatpush1.msra.mxu0 %v418
    %1043 = vmatprep.subr.mxu0 %v427
    %1044 = vmatpush1.msra.mxu0 %v426
    %1045 = vmatprep.subr.mxu0 %v435
    %1046 = vmatpush1.msra.mxu0 %v434
    %1047 = vmatprep.subr.mxu0 %v443
    %1048 = vmatpush1.msra.mxu0 %v442
    %1049 = vmatprep.subr.mxu0 %v451
    %1050 = vmatpush1.msra.mxu0 %v450
    %1051 = vmatprep.subr.mxu0 0.0
    %1052 = vmatpush1.msra.mxu0 0.0
    %1053 = vmatprep.subr.mxu0 0.0
    %1054 = vmatpush1.msra.mxu0 0.0
    %1055 = vmatprep.subr.mxu0 0.0
    %1056 = vmatpush1.msra.mxu0 0.0
    %1057 = vmatprep.subr.mxu0 0.0
    %1058 = vmatpush1.msra.mxu0 0.0
    %1059 = vmatprep.subr.mxu0 0.0
    %1060 = vmatpush1.msra.mxu0 0.0
    %1061 = vmatprep.subr.mxu0 0.0
    %1062 = vmatpush1.msra.mxu0 0.0
    %1063 = vmatprep.subr.mxu0 0.0
    %1064 = vmatpush1.msra.mxu0 0.0
    %1065 = vmatprep.subr.mxu0 0.0
    %1066 = vmatpush1.msra.mxu0 0.0
    %1067 = vmatprep.subr.mxu0 0.0
    %1068 = vmatpush1.msra.mxu0 0.0
    %1069 = vmatprep.subr.mxu0 0.0
    %1070 = vmatpush1.msra.mxu0 0.0
    %1071 = vmatprep.subr.mxu0 0.0
    %1072 = vmatpush1.msra.mxu0 0.0
    %1073 = vmatprep.subr.mxu0 0.0
    %1074 = vmatpush1.msra.mxu0 0.0
    %1075 = vmatprep.subr.mxu0 0.0
    %1076 = vmatpush1.msra.mxu0 0.0
    %1077 = vmatprep.subr.mxu0 0.0
    %1078 = vmatpush1.msra.mxu0 0.0
    %1079 = vmatprep.mubr.f32.mxu0 %v516
    %1080 = vmatmul.mubr.f32.gmra.mrb[0].mxu0 %v509
    %v1081 = vpop.f32.mrb[0].mxu0
    %v1082 = vadd.f32 %v1011, %v1081
    %v1083 = vpop.f32.mrb[0].mxu0
    %v1084 = vadd.f32 %v1013, %v1083
    %1085 = vdwg.mxu0
    %v1086 = vmax.f32 %v656, 0.0
    %v1087 = vmax.f32 %v658, 0.0
    %v1088 = vmax.f32 %v798, 0.0
    %v1089 = vmax.f32 %v800, 0.0
    %v1090 = vmax.f32 %v940, 0.0
    %v1091 = vmax.f32 %v942, 0.0
    %v1092 = vmax.f32 %v1082, 0.0
    %v1093 = vmax.f32 %v1084, 0.0
    %v1094 = vpack.c.bf16 %v1086, %v1086
    %v1095 = vpack.c.bf16 %v1087, %v1087
    %v1096 = vpack.c.bf16 %v1088, %v1088
    %v1097 = vpack.c.bf16 %v1089, %v1089
    %v1098 = vpack.c.bf16 %v1090, %v1090
    %v1099 = vpack.c.bf16 %v1091, %v1091
    %v1100 = vpack.c.bf16 %v1092, %v1092
    %v1101 = vpack.c.bf16 %v1093, %v1093
    %v1110 = vcombine.low %v1094, %v1095
    %v1111 = vcombine.low %v1096, %v1097
    %v1112 = vcombine.low %v1098, %v1099
    %v1113 = vcombine.low %v1100, %v1101
    %v1115 = vunpack.c.l.s4 1966171168
    %v1116 = vunpack.c.0.s8 %v1115
    %v1117 = vlaneseq
    %v1118 = vshrl.u32 %v1117, 7
    %v1119 = vsub.s32 %v1116, %v1118
    %v1120 = vrot.slane %v1110, %v1119
    %v1122 = vunpack.c.l.s4 1966171168
    %v1123 = vunpack.c.0.s8 %v1122
    %v1124 = vlaneseq
    %v1125 = vshrl.u32 %v1124, 7
    %v1126 = vsub.s32 %v1123, %v1125
    %v1127 = vrot.slane %v1111, %v1126
    %v1129 = vunpack.c.l.s4 1966171168
    %v1130 = vunpack.c.0.s8 %v1129
    %v1131 = vlaneseq
    %v1132 = vshrl.u32 %v1131, 7
    %v1133 = vsub.s32 %v1130, %v1132
    %v1134 = vrot.slane %v1112, %v1133
    %v1136 = vunpack.c.l.s4 1966171168
    %v1137 = vunpack.c.0.s8 %v1136
    %v1138 = vlaneseq
    %v1139 = vshrl.u32 %v1138, 7
    %v1140 = vsub.s32 %v1137, %v1139
    %v1141 = vrot.slane %v1113, %v1140
    %v1142 = vcombine.low %v1120, %v1127
    %v1143 = vcombine.low %v1134, %v1141
    %v1145 = vunpack.c.l.s4 1966171168
    %v1146 = vunpack.c.0.s8 %v1145
    %v1147 = vlaneseq
    %v1148 = vshrl.u32 %v1147, 7
    %v1149 = vsub.s32 %v1146, %v1148
    %v1150 = vrot.slane %v1142, %v1149
    %v1152 = vunpack.c.l.s4 1966171168
    %v1153 = vunpack.c.0.s8 %v1152
    %v1154 = vlaneseq
    %v1155 = vshrl.u32 %v1154, 7
    %v1156 = vsub.s32 %v1153, %v1155
    %v1157 = vrot.slane %v1143, %v1156
    %v1158 = vcombine.low %v1150, %v1157
    %vm1160 = vcmask 1040384
    %vm1161 = vcmask 1041409
    %vm1162 = vmor %vm1161, %vm1160
    %vm1163 = vcmask 1042434
    %vm1164 = vmor %vm1163, %vm1162
    %vm1165 = vcmask 1043459
    %vm1166 = vmor %vm1165, %vm1164
    %vm1167 = vcmask 1044484
    %vm1168 = vmor %vm1167, %vm1166
    %vm1169 = vcmask 1045509
    %vm1170 = vmor %vm1169, %vm1168
    %vm1171 = vcmask 1046534
    %vm1172 = vmor %vm1171, %vm1170
    %vm1173 = vcmask 850951
    %vm1174 = vmor %vm1173, %vm1172
    %1175 = vst.msk [vmem:[%s3] sm:$0xff] %vm1174, %v1158
    // Predicated region
    $region26: #{_lambda_.2} parent=1 // pred_check
      _
    $region27: #{_lambda_.2} parent=1 // pred_check_branch
      %1177 = sbr.rel (0) target = $region29
    $region28: #{_lambda_.2} parent=1 // pred_region
      _
    $region29: #{_lambda_.2} parent=1 // pred_fallthru
      _
    // Predicated region
    $region30: #{_lambda_.2} parent=1 // pred_check
      _
    $region31: #{_lambda_.2} parent=1 // pred_check_branch
      %1179 = sbr.rel (0) target = $region33
    $region32: #{_lambda_.2} parent=1 // pred_region
      _
    $region33: #{_lambda_.2} parent=1 // pred_fallthru
      _
    %1180 = vsyncpa [#allocation3], 1
    %1181 = vsyncpa [#allocation5], 1

// kernel: _lambda_.3
$region0: #{_lambda_.3}
  #allocation0 [shape = 'u32[]', space=smem, size = 0x4, offset = 0x4, fixed_abs, tag = 'smem constant byte address 0x4 - core index']
  #allocation1 [shape = 'u32[144,128]{1,0:T(1,128)}', space=vmem, size = 0x12000, scoped, tag = 'internal scratch']
  %s0 = inlined_call_operand.vmem [shape: bf16[2,1000], index: 0, kind: input, shape index: {}]
  %s1 = inlined_call_operand.hbm [shape: bf16[1000,230400], index: 1, kind: input, shape index: {}]
  %s2 = inlined_call_operand.vmem [shape: f32[1,230400], index: 2, kind: input, shape index: {}]
  %s3 = inlined_call_operand.vmem [shape: f32[2,230400], index: 3, kind: output, shape index: {}]
  %s4 = sld [smem:[#allocation0]]
  $region49: #{_lambda_.3} parent=0
    _
  %s6 = ssub.s32 1, %s4
  %s7 = scalar_select 0, %s6, %s4
  $region1: #{_lambda_.3} parent=0
    #allocation2 [shape = 'u8[9216000]{0}', space=vmem, size = 0x8ca000, scoped, tag = 'input window, operand 1']
    #allocation3 [shape = 's32[2]{0}', space=sflag, size = 0x8, scoped, tag = 'scoped memory for _lambda_.3']
    %8 = vsyncpa [#allocation3], 0
    %s9 = scalar_lea.sflag [#allocation3], 1
    %10 = vsyncpa %s9, 0
    loop: start=0, step=1, limit=102
    $region2: #{_lambda_.3} parent=1 // loop_pre_header
      _
    $region3: #{_lambda_.3} parent=1 // loop_header
      %s12 = sphi 0, %s16
      %p13 = scmp.ge.s32.totalorder %s12, 102
      %s20 = sphi 0, %s20
      %s22 = sphi 0, %s20
      %s23 = sphi 0, %s22
      %s37 = sphi 0, %s23
      %s43 = sphi 0, %s45
      %s46 = sphi 0, %s43
      %s47 = sphi 0, %s46
      %s63 = sphi 0, %s47
      %s69 = sphi 0, %s71
      %s72 = sphi 0, %s69
      %s73 = sphi 0, %s72
      %s89 = sphi 0, %s73
      %s95 = sphi 0, %s97
      %s98 = sphi 0, %s95
      %s99 = sphi 0, %s98
      %s115 = sphi 0, %s99
    $region4: #{_lambda_.3} parent=1 // loop_header_branch
      %15 = sbr.rel (%p13) target = $region8
    $region5: #{_lambda_.3} parent=1 // loop_body
      %s17 = ssub.s32 %s12, 1
      %s18 = ssub.s32 %s12, 2
      %s19 = sadd.s32 %s12, 1
      %s21 = sadd.s32 %s20, 1
      %p24 = scmp.eq.s32.totalorder %s12, 99
      %p25 = scmp.ne.s32.totalorder %s20, %s22
      %p26 = scmp.eq.s32.totalorder %s12, 0
      %p27 = por %p25, %p26
      %p28 = scmp.ne.s32.totalorder %s20, %s22
      %p29 = scmp.eq.s32.totalorder %s17, 99
      %p30 = por %p28, %p29
      %p31 = scmp.ne.s32.totalorder %s22, %s23
      %p32 = scmp.eq.s32.totalorder %s17, 0
      %p33 = por %p31, %p32
      %p34 = scmp.ne.s32.totalorder %s22, %s23
      %p35 = scmp.eq.s32.totalorder %s18, 99
      %p36 = por %p34, %p35
      %p38 = scmp.ne.s32.totalorder %s23, %s37
      %p39 = scmp.eq.s32.totalorder %s18, 0
      %p40 = por %p38, %p39
      %s41 = ssub.s32 %s12, %s19
      %p42 = scmp.eq.s32.totalorder %s41, 0
      %s44 = sadd.s32 %s43, 1
      %s45 = scalar_select %p42, %s43, %s44
      %p48 = pneg %p42
      %p49 = scmp.eq.s32.totalorder %s12, 99
      %p50 = por %p48, %p49
      %p51 = scmp.ne.s32.totalorder %s43, %s46
      %p52 = scmp.eq.s32.totalorder %s12, 0
      %p53 = por %p51, %p52
      %p54 = scmp.ne.s32.totalorder %s43, %s46
      %p55 = scmp.eq.s32.totalorder %s17, 99
      %p56 = por %p54, %p55
      %p57 = scmp.ne.s32.totalorder %s46, %s47
      %p58 = scmp.eq.s32.totalorder %s17, 0
      %p59 = por %p57, %p58
      %p60 = scmp.ne.s32.totalorder %s46, %s47
      %p61 = scmp.eq.s32.totalorder %s18, 99
      %p62 = por %p60, %p61
      %p64 = scmp.ne.s32.totalorder %s47, %s63
      %p65 = scmp.eq.s32.totalorder %s18, 0
      %p66 = por %p64, %p65
      %s67 = ssub.s32 %s12, %s19
      %p68 = scmp.eq.s32.totalorder %s67, 0
      %s70 = sadd.s32 %s69, 1
      %s71 = scalar_select %p68, %s69, %s70
      %p74 = pneg %p68
      %p75 = scmp.eq.s32.totalorder %s12, 99
      %p76 = por %p74, %p75
      %p77 = scmp.ne.s32.totalorder %s69, %s72
      %p78 = scmp.eq.s32.totalorder %s12, 0
      %p79 = por %p77, %p78
      %p80 = scmp.ne.s32.totalorder %s69, %s72
      %p81 = scmp.eq.s32.totalorder %s17, 99
      %p82 = por %p80, %p81
      %p83 = scmp.ne.s32.totalorder %s72, %s73
      %p84 = scmp.eq.s32.totalorder %s17, 0
      %p85 = por %p83, %p84
      %p86 = scmp.ne.s32.totalorder %s72, %s73
      %p87 = scmp.eq.s32.totalorder %s18, 99
      %p88 = por %p86, %p87
      %p90 = scmp.ne.s32.totalorder %s73, %s89
      %p91 = scmp.eq.s32.totalorder %s18, 0
      %p92 = por %p90, %p91
      %s93 = ssub.s32 %s12, %s19
      %p94 = scmp.eq.s32.totalorder %s93, 0
      %s96 = sadd.s32 %s95, 1
      %s97 = scalar_select %p94, %s95, %s96
      %p100 = pneg %p94
      %p101 = scmp.eq.s32.totalorder %s12, 99
      %p102 = por %p100, %p101
      %p103 = scmp.ne.s32.totalorder %s95, %s98
      %p104 = scmp.eq.s32.totalorder %s12, 0
      %p105 = por %p103, %p104
      %p106 = scmp.ne.s32.totalorder %s95, %s98
      %p107 = scmp.eq.s32.totalorder %s17, 99
      %p108 = por %p106, %p107
      %p109 = scmp.ne.s32.totalorder %s98, %s99
      %p110 = scmp.eq.s32.totalorder %s17, 0
      %p111 = por %p109, %p110
      %p112 = scmp.ne.s32.totalorder %s98, %s99
      %p113 = scmp.eq.s32.totalorder %s18, 99
      %p114 = por %p112, %p113
      %p116 = scmp.ne.s32.totalorder %s99, %s115
      %p117 = scmp.eq.s32.totalorder %s18, 0
      %p118 = por %p116, %p117
      %p119 = scmp.le.s32.totalorder 1, %s12
      %p120 = scmp.lt.s32.totalorder %s12, 101
      %p121 = pnand %p119, %p120
      %p122 = pneg %p121
      // Predicated region
      $region9: #{_lambda_.3} parent=5 // pred_check
        _
      $region10: #{_lambda_.3} parent=5 // pred_check_branch
        %124 = sbr.rel (%p121) target = $region12
      $region11: #{_lambda_.3} parent=5 // pred_region
        %s125 = ssub.s32 %s12, 1
        // Predicated region
        $region13: #{_lambda_.3} parent=11 // pred_check
          %p126 = pneg %p33
        $region14: #{_lambda_.3} parent=11 // pred_check_branch
          %128 = sbr.rel (%p126) target = $region16
        $region15: #{_lambda_.3} parent=11 // pred_region
          _
        $region16: #{_lambda_.3} parent=11 // pred_fallthru
          _
      $region12: #{_lambda_.3} parent=5 // pred_fallthru
        _
      %p129 = scmp.lt.s32.totalorder %s12, 100
      // Predicated region
      $region17: #{_lambda_.3} parent=5 // pred_check
        %p130 = pneg %p129
      $region18: #{_lambda_.3} parent=5 // pred_check_branch
        %132 = sbr.rel (%p130) target = $region20
      $region19: #{_lambda_.3} parent=5 // pred_region
        // Predicated region
        $region21: #{_lambda_.3} parent=19 // pred_check
          %p133 = pneg %p53
        $region22: #{_lambda_.3} parent=19 // pred_check_branch
          %135 = sbr.rel (%p133) target = $region24
        $region23: #{_lambda_.3} parent=19 // pred_region
          %s136 = sand.u32 %s43, 1
          %s137 = scalar_lea.sflag [#allocation3], %s136
          %s138 = sand.u32 %s43, 1
          %s139 = smul.addr %s138, 9000
          %s140 = scalar_lea.vmem [#allocation2], %s139
          %s141 = smul.u32 18, %s12
          %s143 = ssub.s32 144000, 144000
          %144 = vsyncadd %s137, %s143
          %s145 = smul.addr %s141, 64
          %s146 = scalar_lea.hbm %s1, %s145
          %s147 = sshll.u32 %s140, 4
          %s148 = int_to_ptr.vmem [resolvable:$true] %s147
          %153 = dma.hbm_to_vmem [thread:$0]  %s146, 144000, %s148, %s137, 115200, 1152, 72
        $region24: #{_lambda_.3} parent=19 // pred_fallthru
          _
        // Predicated region
        $region25: #{_lambda_.3} parent=19 // pred_check
          %p154 = pneg %p79
        $region26: #{_lambda_.3} parent=19 // pred_check_branch
          %156 = sbr.rel (%p154) target = $region28
        $region27: #{_lambda_.3} parent=19 // pred_region
          %s157 = smul.u32 18, %s12
          %p158 = scmp.lt.s32.totalorder %s157, 1799
          %s159 = scalar_select %p158, %s157, 1799
          %s160 = scalar_lea.vmem %s2, %s159
          %s161 = smul.u32 18, %s12
        $region28: #{_lambda_.3} parent=19 // pred_fallthru
          _
      $region20: #{_lambda_.3} parent=5 // pred_fallthru
        _
      %p162 = scmp.le.s32.totalorder 1, %s12
      %p163 = scmp.lt.s32.totalorder %s12, 101
      %p164 = pnand %p162, %p163
      %p165 = pneg %p164
      // Predicated region
      $region29: #{_lambda_.3} parent=5 // pred_check
        _
      $region30: #{_lambda_.3} parent=5 // pred_check_branch
        %167 = sbr.rel (%p164) target = $region32
      $region31: #{_lambda_.3} parent=5 // pred_region
        %s168 = ssub.s32 %s12, 1
        %s169 = sand.u32 %s46, 1
        %s170 = scalar_lea.sflag [#allocation3], %s169
        %s171 = sand.u32 %s46, 1
        %s172 = smul.addr %s171, 9000
        %s173 = scalar_lea.vmem [#allocation2], %s172
        // Predicated region
        $region33: #{_lambda_.3} parent=31 // pred_check
          %p174 = pneg %p59
        $region34: #{_lambda_.3} parent=31 // pred_check_branch
          %176 = sbr.rel (%p174) target = $region36
        $region35: #{_lambda_.3} parent=31 // pred_region
          %177 = dma.done %s170, 144000
        $region36: #{_lambda_.3} parent=31 // pred_fallthru
          _
        %p178 = pneg %p33
        %p179 = pneg %p30
        %s180 = sand.u32 %s46, 1
        %s181 = scalar_lea.sflag [#allocation3], %s180
        %s182 = sand.u32 %s46, 1
        %s183 = smul.addr %s182, 9000
        %s184 = scalar_lea.vmem [#allocation2], %s183
        %p185 = pneg %p59
        %p186 = pneg %p56
        %s187 = smul.u32 18, %s17
        %p188 = scmp.lt.s32.totalorder %s187, 1799
        %s189 = scalar_select %p188, %s187, 1799
        %s190 = scalar_lea.vmem %s2, %s189
        %p191 = pneg %p85
        %p192 = pneg %p82
        %p193 = pneg %p111
        %p194 = pneg %p108
        %s195 = smul.u32 18, %s17
        %p196 = scmp.lt.s32.totalorder %s195, 1799
        %s197 = scalar_select %p196, %s195, 1799
        %s198 = smul.addr %s197, 2
        %s199 = scalar_lea.vmem %s3, %s198
        %s200 = smul.u32 18, %s17
        %s201 = smul.u32 18, %s17
        %p202 = scmp.lt.s32.totalorder %s201, 1799
        %s203 = scalar_select %p202, %s201, 1799
        %s204 = scalar_lea.vmem %s2, %s203
        %s205 = smul.u32 18, %s17
        %s206 = smul.u32 18, %s17
        %p207 = scmp.lt.s32.totalorder %s206, 1799
        %s208 = scalar_select %p207, %s206, 1799
        %s209 = smul.addr %s208, 2
        %s210 = scalar_lea.vmem %s3, %s209
        %s211 = smul.u32 18, %s17
        %v213 = vld [vmem:[%s0] sm:$0xff]
        %v214 = vld [vmem:[%s173] sm:$0xff]
        %v215 = vld [vmem:[%s173 + $0x8] sm:$0xff]
        %v216 = vld [vmem:[%s173 + $0x10] sm:$0xff]
        %v217 = vld [vmem:[%s173 + $0x18] sm:$0xff]
        %v218 = vld [vmem:[%s173 + $0x20] sm:$0xff]
        %v219 = vld [vmem:[%s173 + $0x28] sm:$0xff]
        %v220 = vld [vmem:[%s173 + $0x30] sm:$0xff]
        %v221 = vld [vmem:[%s173 + $0x38] sm:$0xff]
        %v222 = vld [vmem:[%s173 + $0x40] sm:$0xff]
        %v223 = vld [vmem:[%s173 + $0x48] sm:$0xff]
        %v224 = vld [vmem:[%s173 + $0x50] sm:$0xff]
        %v225 = vld [vmem:[%s173 + $0x58] sm:$0xff]
        %v226 = vld [vmem:[%s173 + $0x60] sm:$0xff]
        %v227 = vld [vmem:[%s173 + $0x68] sm:$0xff]
        %v228 = vld [vmem:[%s173 + $0x70] sm:$0xff]
        %v229 = vld [vmem:[%s173 + $0x78] sm:$0xff]
        %v230 = vld [vmem:[%s173 + $0x80] sm:$0xff]
        %v231 = vld [vmem:[%s173 + $0x88] sm:$0xff]
        %v232 = vld [vmem:[%s173 + $0x90] sm:$0xff]
        %v233 = vld [vmem:[%s173 + $0x98] sm:$0xff]
        %v234 = vld [vmem:[%s173 + $0xa0] sm:$0xff]
        %v235 = vld [vmem:[%s173 + $0xa8] sm:$0xff]
        %v236 = vld [vmem:[%s173 + $0xb0] sm:$0xff]
        %v237 = vld [vmem:[%s173 + $0xb8] sm:$0xff]
        %v238 = vld [vmem:[%s173 + $0xc0] sm:$0xff]
        %v239 = vld [vmem:[%s173 + $0xc8] sm:$0xff]
        %v240 = vld [vmem:[%s173 + $0xd0] sm:$0xff]
        %v241 = vld [vmem:[%s173 + $0xd8] sm:$0xff]
        %v242 = vld [vmem:[%s173 + $0xe0] sm:$0xff]
        %v243 = vld [vmem:[%s173 + $0xe8] sm:$0xff]
        %v244 = vld [vmem:[%s173 + $0xf0] sm:$0xff]
        %v245 = vld [vmem:[%s173 + $0xf8] sm:$0xff]
        %v246 = vld [vmem:[%s173 + $0x100] sm:$0xff]
        %v247 = vld [vmem:[%s173 + $0x108] sm:$0xff]
        %v248 = vld [vmem:[%s173 + $0x110] sm:$0xff]
        %v249 = vld [vmem:[%s173 + $0x118] sm:$0xff]
        %v250 = vld [vmem:[%s173 + $0x120] sm:$0xff]
        %v251 = vld [vmem:[%s173 + $0x128] sm:$0xff]
        %v252 = vld [vmem:[%s173 + $0x130] sm:$0xff]
        %v253 = vld [vmem:[%s173 + $0x138] sm:$0xff]
        %v254 = vld [vmem:[%s173 + $0x140] sm:$0xff]
        %v255 = vld [vmem:[%s173 + $0x148] sm:$0xff]
        %v256 = vld [vmem:[%s173 + $0x150] sm:$0xff]
        %v257 = vld [vmem:[%s173 + $0x158] sm:$0xff]
        %v258 = vld [vmem:[%s173 + $0x160] sm:$0xff]
        %v259 = vld [vmem:[%s173 + $0x168] sm:$0xff]
        %v260 = vld [vmem:[%s173 + $0x170] sm:$0xff]
        %v261 = vld [vmem:[%s173 + $0x178] sm:$0xff]
        %v262 = vld [vmem:[%s173 + $0x180] sm:$0xff]
        %v263 = vld [vmem:[%s173 + $0x188] sm:$0xff]
        %v264 = vld [vmem:[%s173 + $0x190] sm:$0xff]
        %v265 = vld [vmem:[%s173 + $0x198] sm:$0xff]
        %v266 = vld [vmem:[%s173 + $0x1a0] sm:$0xff]
        %v267 = vld [vmem:[%s173 + $0x1a8] sm:$0xff]
        %v268 = vld [vmem:[%s173 + $0x1b0] sm:$0xff]
        %v269 = vld [vmem:[%s173 + $0x1b8] sm:$0xff]
        %v270 = vld [vmem:[%s173 + $0x1c0] sm:$0xff]
        %v271 = vld [vmem:[%s173 + $0x1c8] sm:$0xff]
        %v272 = vld [vmem:[%s173 + $0x1d0] sm:$0xff]
        %v273 = vld [vmem:[%s173 + $0x1d8] sm:$0xff]
        %v274 = vld [vmem:[%s173 + $0x1e0] sm:$0xff]
        %v275 = vld [vmem:[%s173 + $0x1e8] sm:$0xff]
        %v276 = vld [vmem:[%s173 + $0x1f0] sm:$0xff]
        %v277 = vld [vmem:[%s173 + $0x1f8] sm:$0xff]
        %v278 = vld [vmem:[%s173 + $0x200] sm:$0xff]
        %v279 = vld [vmem:[%s173 + $0x208] sm:$0xff]
        %v280 = vld [vmem:[%s173 + $0x210] sm:$0xff]
        %v281 = vld [vmem:[%s173 + $0x218] sm:$0xff]
        %v282 = vld [vmem:[%s173 + $0x220] sm:$0xff]
        %v283 = vld [vmem:[%s173 + $0x228] sm:$0xff]
        %v284 = vld [vmem:[%s173 + $0x230] sm:$0xff]
        %v285 = vld [vmem:[%s173 + $0x238] sm:$0xff]
        %v286 = vld [vmem:[%s173 + $0x240] sm:$0xff]
        %v287 = vld [vmem:[%s173 + $0x248] sm:$0xff]
        %v288 = vld [vmem:[%s173 + $0x250] sm:$0xff]
        %v289 = vld [vmem:[%s173 + $0x258] sm:$0xff]
        %v290 = vld [vmem:[%s173 + $0x260] sm:$0xff]
        %v291 = vld [vmem:[%s173 + $0x268] sm:$0xff]
        %v292 = vld [vmem:[%s173 + $0x270] sm:$0xff]
        %v293 = vld [vmem:[%s173 + $0x278] sm:$0xff]
        %v294 = vld [vmem:[%s173 + $0x280] sm:$0xff]
        %v295 = vld [vmem:[%s173 + $0x288] sm:$0xff]
        %v296 = vld [vmem:[%s173 + $0x290] sm:$0xff]
        %v297 = vld [vmem:[%s173 + $0x298] sm:$0xff]
        %v298 = vld [vmem:[%s173 + $0x2a0] sm:$0xff]
        %v299 = vld [vmem:[%s173 + $0x2a8] sm:$0xff]
        %v300 = vld [vmem:[%s173 + $0x2b0] sm:$0xff]
        %v301 = vld [vmem:[%s173 + $0x2b8] sm:$0xff]
        %v302 = vld [vmem:[%s173 + $0x2c0] sm:$0xff]
        %v303 = vld [vmem:[%s173 + $0x2c8] sm:$0xff]
        %v304 = vld [vmem:[%s173 + $0x2d0] sm:$0xff]
        %v305 = vld [vmem:[%s173 + $0x2d8] sm:$0xff]
        %v306 = vld [vmem:[%s173 + $0x2e0] sm:$0xff]
        %v307 = vld [vmem:[%s173 + $0x2e8] sm:$0xff]
        %v308 = vld [vmem:[%s173 + $0x2f0] sm:$0xff]
        %v309 = vld [vmem:[%s173 + $0x2f8] sm:$0xff]
        %v310 = vld [vmem:[%s173 + $0x300] sm:$0xff]
        %v311 = vld [vmem:[%s173 + $0x308] sm:$0xff]
        %v312 = vld [vmem:[%s173 + $0x310] sm:$0xff]
        %v313 = vld [vmem:[%s173 + $0x318] sm:$0xff]
        %v314 = vld [vmem:[%s173 + $0x320] sm:$0xff]
        %v315 = vld [vmem:[%s173 + $0x328] sm:$0xff]
        %v316 = vld [vmem:[%s173 + $0x330] sm:$0xff]
        %v317 = vld [vmem:[%s173 + $0x338] sm:$0xff]
        %v318 = vld [vmem:[%s173 + $0x340] sm:$0xff]
        %v319 = vld [vmem:[%s173 + $0x348] sm:$0xff]
        %v320 = vld [vmem:[%s173 + $0x350] sm:$0xff]
        %v321 = vld [vmem:[%s173 + $0x358] sm:$0xff]
        %v322 = vld [vmem:[%s173 + $0x360] sm:$0xff]
        %v323 = vld [vmem:[%s173 + $0x368] sm:$0xff]
        %v324 = vld [vmem:[%s173 + $0x370] sm:$0xff]
        %v325 = vld [vmem:[%s173 + $0x378] sm:$0xff]
        %v326 = vld [vmem:[%s173 + $0x380] sm:$0xff]
        %v327 = vld [vmem:[%s173 + $0x388] sm:$0xff]
        %v328 = vld [vmem:[%s173 + $0x390] sm:$0xff]
        %v329 = vld [vmem:[%s173 + $0x398] sm:$0xff]
        %v330 = vld [vmem:[%s173 + $0x3a0] sm:$0xff]
        %v331 = vld [vmem:[%s173 + $0x3a8] sm:$0xff]
        %v332 = vld [vmem:[%s173 + $0x3b0] sm:$0xff]
        %v333 = vld [vmem:[%s173 + $0x3b8] sm:$0xff]
        %v334 = vld [vmem:[%s173 + $0x3c0] sm:$0xff]
        %v335 = vld [vmem:[%s173 + $0x3c8] sm:$0xff]
        %v336 = vld [vmem:[%s173 + $0x3d0] sm:$0xff]
        %v337 = vld [vmem:[%s173 + $0x3d8] sm:$0xff]
        %v338 = vld [vmem:[%s173 + $0x3e0] sm:$0xff]
        %v339 = vld [vmem:[%s173 + $0x3e8] sm:$0xff]
        %v340 = vld [vmem:[%s173 + $0x3f0] sm:$0xff]
        %v341 = vld [vmem:[%s173 + $0x3f8] sm:$0xff]
        %v342 = vld [vmem:[%s173 + $0x400] sm:$0xff]
        %v343 = vld [vmem:[%s173 + $0x408] sm:$0xff]
        %v344 = vld [vmem:[%s173 + $0x410] sm:$0xff]
        %v345 = vld [vmem:[%s173 + $0x418] sm:$0xff]
        %v346 = vld [vmem:[%s173 + $0x420] sm:$0xff]
        %v347 = vld [vmem:[%s173 + $0x428] sm:$0xff]
        %v348 = vld [vmem:[%s173 + $0x430] sm:$0xff]
        %v349 = vld [vmem:[%s173 + $0x438] sm:$0xff]
        %v350 = vld [vmem:[%s173 + $0x440] sm:$0xff]
        %v351 = vld [vmem:[%s173 + $0x448] sm:$0xff]
        %v352 = vld [vmem:[%s173 + $0x450] sm:$0xff]
        %v353 = vld [vmem:[%s173 + $0x458] sm:$0xff]
        %v354 = vld [vmem:[%s173 + $0x460] sm:$0xff]
        %v355 = vld [vmem:[%s173 + $0x468] sm:$0xff]
        %v356 = vld [vmem:[%s173 + $0x470] sm:$0xff]
        %v357 = vld [vmem:[%s173 + $0x478] sm:$0xff]
        %v358 = vld [vmem:[%s173 + $0x480] sm:$0xff]
        %v359 = vld [vmem:[%s173 + $0x488] sm:$0xff]
        %v360 = vld [vmem:[%s173 + $0x490] sm:$0xff]
        %v361 = vld [vmem:[%s173 + $0x498] sm:$0xff]
        %v362 = vld [vmem:[%s173 + $0x4a0] sm:$0xff]
        %v363 = vld [vmem:[%s173 + $0x4a8] sm:$0xff]
        %v364 = vld [vmem:[%s173 + $0x4b0] sm:$0xff]
        %v365 = vld [vmem:[%s173 + $0x4b8] sm:$0xff]
        %v366 = vld [vmem:[%s173 + $0x4c0] sm:$0xff]
        %v367 = vld [vmem:[%s173 + $0x4c8] sm:$0xff]
        %v368 = vld [vmem:[%s173 + $0x4d0] sm:$0xff]
        %v369 = vld [vmem:[%s173 + $0x4d8] sm:$0xff]
        %v370 = vld [vmem:[%s173 + $0x4e0] sm:$0xff]
        %v371 = vld [vmem:[%s173 + $0x4e8] sm:$0xff]
        %v372 = vld [vmem:[%s173 + $0x4f0] sm:$0xff]
        %v373 = vld [vmem:[%s173 + $0x4f8] sm:$0xff]
        %v374 = vld [vmem:[%s173 + $0x500] sm:$0xff]
        %v375 = vld [vmem:[%s173 + $0x508] sm:$0xff]
        %v376 = vld [vmem:[%s173 + $0x510] sm:$0xff]
        %v377 = vld [vmem:[%s173 + $0x518] sm:$0xff]
        %v378 = vld [vmem:[%s173 + $0x520] sm:$0xff]
        %v379 = vld [vmem:[%s173 + $0x528] sm:$0xff]
        %v380 = vld [vmem:[%s173 + $0x530] sm:$0xff]
        %v381 = vld [vmem:[%s173 + $0x538] sm:$0xff]
        %v382 = vld [vmem:[%s173 + $0x540] sm:$0xff]
        %v383 = vld [vmem:[%s173 + $0x548] sm:$0xff]
        %v384 = vld [vmem:[%s173 + $0x550] sm:$0xff]
        %v385 = vld [vmem:[%s173 + $0x558] sm:$0xff]
        %v386 = vld [vmem:[%s173 + $0x560] sm:$0xff]
        %v387 = vld [vmem:[%s173 + $0x568] sm:$0xff]
        %v388 = vld [vmem:[%s173 + $0x570] sm:$0xff]
        %v389 = vld [vmem:[%s173 + $0x578] sm:$0xff]
        %v390 = vld [vmem:[%s173 + $0x580] sm:$0xff]
        %v391 = vld [vmem:[%s173 + $0x588] sm:$0xff]
        %v392 = vld [vmem:[%s173 + $0x590] sm:$0xff]
        %v393 = vld [vmem:[%s173 + $0x598] sm:$0xff]
        %v394 = vld [vmem:[%s173 + $0x5a0] sm:$0xff]
        %v395 = vld [vmem:[%s173 + $0x5a8] sm:$0xff]
        %v396 = vld [vmem:[%s173 + $0x5b0] sm:$0xff]
        %v397 = vld [vmem:[%s173 + $0x5b8] sm:$0xff]
        %v398 = vld [vmem:[%s173 + $0x5c0] sm:$0xff]
        %v399 = vld [vmem:[%s173 + $0x5c8] sm:$0xff]
        %v400 = vld [vmem:[%s173 + $0x5d0] sm:$0xff]
        %v401 = vld [vmem:[%s173 + $0x5d8] sm:$0xff]
        %v402 = vld [vmem:[%s173 + $0x5e0] sm:$0xff]
        %v403 = vld [vmem:[%s173 + $0x5e8] sm:$0xff]
        %v404 = vld [vmem:[%s173 + $0x5f0] sm:$0xff]
        %v405 = vld [vmem:[%s173 + $0x5f8] sm:$0xff]
        %v406 = vld [vmem:[%s173 + $0x600] sm:$0xff]
        %v407 = vld [vmem:[%s173 + $0x608] sm:$0xff]
        %v408 = vld [vmem:[%s173 + $0x610] sm:$0xff]
        %v409 = vld [vmem:[%s173 + $0x618] sm:$0xff]
        %v410 = vld [vmem:[%s173 + $0x620] sm:$0xff]
        %v411 = vld [vmem:[%s173 + $0x628] sm:$0xff]
        %v412 = vld [vmem:[%s173 + $0x630] sm:$0xff]
        %v413 = vld [vmem:[%s173 + $0x638] sm:$0xff]
        %v414 = vld [vmem:[%s173 + $0x640] sm:$0xff]
        %v415 = vld [vmem:[%s173 + $0x648] sm:$0xff]
        %v416 = vld [vmem:[%s173 + $0x650] sm:$0xff]
        %v417 = vld [vmem:[%s173 + $0x658] sm:$0xff]
        %v418 = vld [vmem:[%s173 + $0x660] sm:$0xff]
        %v419 = vld [vmem:[%s173 + $0x668] sm:$0xff]
        %v420 = vld [vmem:[%s173 + $0x670] sm:$0xff]
        %v421 = vld [vmem:[%s173 + $0x678] sm:$0xff]
        %v422 = vld [vmem:[%s173 + $0x680] sm:$0xff]
        %v423 = vld [vmem:[%s173 + $0x688] sm:$0xff]
        %v424 = vld [vmem:[%s173 + $0x690] sm:$0xff]
        %v425 = vld [vmem:[%s173 + $0x698] sm:$0xff]
        %v426 = vld [vmem:[%s173 + $0x6a0] sm:$0xff]
        %v427 = vld [vmem:[%s173 + $0x6a8] sm:$0xff]
        %v428 = vld [vmem:[%s173 + $0x6b0] sm:$0xff]
        %v429 = vld [vmem:[%s173 + $0x6b8] sm:$0xff]
        %v430 = vld [vmem:[%s173 + $0x6c0] sm:$0xff]
        %v431 = vld [vmem:[%s173 + $0x6c8] sm:$0xff]
        %v432 = vld [vmem:[%s173 + $0x6d0] sm:$0xff]
        %v433 = vld [vmem:[%s173 + $0x6d8] sm:$0xff]
        %v434 = vld [vmem:[%s173 + $0x6e0] sm:$0xff]
        %v435 = vld [vmem:[%s173 + $0x6e8] sm:$0xff]
        %v436 = vld [vmem:[%s173 + $0x6f0] sm:$0xff]
        %v437 = vld [vmem:[%s173 + $0x6f8] sm:$0xff]
        %v438 = vld [vmem:[%s173 + $0x700] sm:$0xff]
        %v439 = vld [vmem:[%s173 + $0x708] sm:$0xff]
        %v440 = vld [vmem:[%s173 + $0x710] sm:$0xff]
        %v441 = vld [vmem:[%s173 + $0x718] sm:$0xff]
        %v442 = vld [vmem:[%s173 + $0x720] sm:$0xff]
        %v443 = vld [vmem:[%s173 + $0x728] sm:$0xff]
        %v444 = vld [vmem:[%s173 + $0x730] sm:$0xff]
        %v445 = vld [vmem:[%s173 + $0x738] sm:$0xff]
        %v446 = vld [vmem:[%s173 + $0x740] sm:$0xff]
        %v447 = vld [vmem:[%s173 + $0x748] sm:$0xff]
        %v448 = vld [vmem:[%s173 + $0x750] sm:$0xff]
        %v449 = vld [vmem:[%s173 + $0x758] sm:$0xff]
        %v450 = vld [vmem:[%s173 + $0x760] sm:$0xff]
        %v451 = vld [vmem:[%s173 + $0x768] sm:$0xff]
        %v452 = vld [vmem:[%s173 + $0x770] sm:$0xff]
        %v453 = vld [vmem:[%s173 + $0x778] sm:$0xff]
        %v454 = vld [vmem:[%s173 + $0x780] sm:$0xff]
        %v455 = vld [vmem:[%s173 + $0x788] sm:$0xff]
        %v456 = vld [vmem:[%s173 + $0x790] sm:$0xff]
        %v457 = vld [vmem:[%s173 + $0x798] sm:$0xff]
        %v458 = vld [vmem:[%s173 + $0x7a0] sm:$0xff]
        %v459 = vld [vmem:[%s173 + $0x7a8] sm:$0xff]
        %v460 = vld [vmem:[%s173 + $0x7b0] sm:$0xff]
        %v461 = vld [vmem:[%s173 + $0x7b8] sm:$0xff]
        %v462 = vld [vmem:[%s173 + $0x7c0] sm:$0xff]
        %v463 = vld [vmem:[%s173 + $0x7c8] sm:$0xff]
        %v464 = vld [vmem:[%s173 + $0x7d0] sm:$0xff]
        %v465 = vld [vmem:[%s173 + $0x7d8] sm:$0xff]
        %v466 = vld [vmem:[%s173 + $0x7e0] sm:$0xff]
        %v467 = vld [vmem:[%s173 + $0x7e8] sm:$0xff]
        %v468 = vld [vmem:[%s173 + $0x7f0] sm:$0xff]
        %v469 = vld [vmem:[%s173 + $0x7f8] sm:$0xff]
        %v470 = vld [vmem:[%s173 + $0x800] sm:$0xff]
        %v471 = vld [vmem:[%s173 + $0x808] sm:$0xff]
        %v472 = vld [vmem:[%s173 + $0x810] sm:$0xff]
        %v473 = vld [vmem:[%s173 + $0x818] sm:$0xff]
        %v474 = vld [vmem:[%s173 + $0x820] sm:$0xff]
        %v475 = vld [vmem:[%s173 + $0x828] sm:$0xff]
        %v476 = vld [vmem:[%s173 + $0x830] sm:$0xff]
        %v477 = vld [vmem:[%s173 + $0x838] sm:$0xff]
        %v478 = vld [vmem:[%s173 + $0x840] sm:$0xff]
        %v479 = vld [vmem:[%s173 + $0x848] sm:$0xff]
        %v480 = vld [vmem:[%s173 + $0x850] sm:$0xff]
        %v481 = vld [vmem:[%s173 + $0x858] sm:$0xff]
        %v482 = vld [vmem:[%s173 + $0x860] sm:$0xff]
        %v483 = vld [vmem:[%s173 + $0x868] sm:$0xff]
        %v484 = vld [vmem:[%s173 + $0x870] sm:$0xff]
        %v485 = vld [vmem:[%s173 + $0x878] sm:$0xff]
        %v486 = vld [vmem:[%s173 + $0x880] sm:$0xff]
        %v487 = vld [vmem:[%s173 + $0x888] sm:$0xff]
        %v488 = vld [vmem:[%s173 + $0x890] sm:$0xff]
        %v489 = vld [vmem:[%s173 + $0x898] sm:$0xff]
        %v490 = vld [vmem:[%s173 + $0x8a0] sm:$0xff]
        %v491 = vld [vmem:[%s173 + $0x8a8] sm:$0xff]
        %v492 = vld [vmem:[%s173 + $0x8b0] sm:$0xff]
        %v493 = vld [vmem:[%s173 + $0x8b8] sm:$0xff]
        %v494 = vld [vmem:[%s173 + $0x8c0] sm:$0xff]
        %v495 = vld [vmem:[%s173 + $0x8c8] sm:$0xff]
        %v496 = vld [vmem:[%s173 + $0x8d0] sm:$0xff]
        %v497 = vld [vmem:[%s173 + $0x8d8] sm:$0xff]
        %v498 = vld [vmem:[%s173 + $0x8e0] sm:$0xff]
        %v499 = vld [vmem:[%s173 + $0x8e8] sm:$0xff]
        %v500 = vld [vmem:[%s173 + $0x8f0] sm:$0xff]
        %v501 = vld [vmem:[%s173 + $0x8f8] sm:$0xff]
        %v502 = vld [vmem:[%s173 + $0x900] sm:$0xff]
        %v503 = vld [vmem:[%s173 + $0x908] sm:$0xff]
        %v504 = vld [vmem:[%s173 + $0x910] sm:$0xff]
        %v505 = vld [vmem:[%s173 + $0x918] sm:$0xff]
        %v506 = vld [vmem:[%s173 + $0x920] sm:$0xff]
        %v507 = vld [vmem:[%s173 + $0x928] sm:$0xff]
        %v508 = vld [vmem:[%s173 + $0x930] sm:$0xff]
        %v509 = vld [vmem:[%s173 + $0x938] sm:$0xff]
        %v510 = vld [vmem:[%s173 + $0x940] sm:$0xff]
        %v511 = vld [vmem:[%s173 + $0x948] sm:$0xff]
        %v512 = vld [vmem:[%s173 + $0x950] sm:$0xff]
        %v513 = vld [vmem:[%s173 + $0x958] sm:$0xff]
        %v514 = vld [vmem:[%s173 + $0x960] sm:$0xff]
        %v515 = vld [vmem:[%s173 + $0x968] sm:$0xff]
        %v516 = vld [vmem:[%s173 + $0x970] sm:$0xff]
        %v517 = vld [vmem:[%s173 + $0x978] sm:$0xff]
        %v518 = vld [vmem:[%s173 + $0x980] sm:$0xff]
        %v519 = vld [vmem:[%s173 + $0x988] sm:$0xff]
        %v520 = vld [vmem:[%s173 + $0x990] sm:$0xff]
        %v521 = vld [vmem:[%s173 + $0x998] sm:$0xff]
        %v522 = vld [vmem:[%s173 + $0x9a0] sm:$0xff]
        %v523 = vld [vmem:[%s173 + $0x9a8] sm:$0xff]
        %v524 = vld [vmem:[%s173 + $0x9b0] sm:$0xff]
        %v525 = vld [vmem:[%s173 + $0x9b8] sm:$0xff]
        %v526 = vld [vmem:[%s173 + $0x9c0] sm:$0xff]
        %v527 = vld [vmem:[%s173 + $0x9c8] sm:$0xff]
        %v528 = vld [vmem:[%s173 + $0x9d0] sm:$0xff]
        %v529 = vld [vmem:[%s173 + $0x9d8] sm:$0xff]
        %v530 = vld [vmem:[%s173 + $0x9e0] sm:$0xff]
        %v531 = vld [vmem:[%s173 + $0x9e8] sm:$0xff]
        %v532 = vld [vmem:[%s173 + $0x9f0] sm:$0xff]
        %v533 = vld [vmem:[%s173 + $0x9f8] sm:$0xff]
        %v534 = vld [vmem:[%s173 + $0xa00] sm:$0xff]
        %v535 = vld [vmem:[%s173 + $0xa08] sm:$0xff]
        %v536 = vld [vmem:[%s173 + $0xa10] sm:$0xff]
        %v537 = vld [vmem:[%s173 + $0xa18] sm:$0xff]
        %v538 = vld [vmem:[%s173 + $0xa20] sm:$0xff]
        %v539 = vld [vmem:[%s173 + $0xa28] sm:$0xff]
        %v540 = vld [vmem:[%s173 + $0xa30] sm:$0xff]
        %v541 = vld [vmem:[%s173 + $0xa38] sm:$0xff]
        %v542 = vld [vmem:[%s173 + $0xa40] sm:$0xff]
        %v543 = vld [vmem:[%s173 + $0xa48] sm:$0xff]
        %v544 = vld [vmem:[%s173 + $0xa50] sm:$0xff]
        %v545 = vld [vmem:[%s173 + $0xa58] sm:$0xff]
        %v546 = vld [vmem:[%s173 + $0xa60] sm:$0xff]
        %v547 = vld [vmem:[%s173 + $0xa68] sm:$0xff]
        %v548 = vld [vmem:[%s173 + $0xa70] sm:$0xff]
        %v549 = vld [vmem:[%s173 + $0xa78] sm:$0xff]
        %v550 = vld [vmem:[%s173 + $0xa80] sm:$0xff]
        %v551 = vld [vmem:[%s173 + $0xa88] sm:$0xff]
        %v552 = vld [vmem:[%s173 + $0xa90] sm:$0xff]
        %v553 = vld [vmem:[%s173 + $0xa98] sm:$0xff]
        %v554 = vld [vmem:[%s173 + $0xaa0] sm:$0xff]
        %v555 = vld [vmem:[%s173 + $0xaa8] sm:$0xff]
        %v556 = vld [vmem:[%s173 + $0xab0] sm:$0xff]
        %v557 = vld [vmem:[%s173 + $0xab8] sm:$0xff]
        %v558 = vld [vmem:[%s173 + $0xac0] sm:$0xff]
        %v559 = vld [vmem:[%s173 + $0xac8] sm:$0xff]
        %v560 = vld [vmem:[%s173 + $0xad0] sm:$0xff]
        %v561 = vld [vmem:[%s173 + $0xad8] sm:$0xff]
        %v562 = vld [vmem:[%s173 + $0xae0] sm:$0xff]
        %v563 = vld [vmem:[%s173 + $0xae8] sm:$0xff]
        %v564 = vld [vmem:[%s173 + $0xaf0] sm:$0xff]
        %v565 = vld [vmem:[%s173 + $0xaf8] sm:$0xff]
        %v566 = vld [vmem:[%s173 + $0xb00] sm:$0xff]
        %v567 = vld [vmem:[%s173 + $0xb08] sm:$0xff]
        %v568 = vld [vmem:[%s173 + $0xb10] sm:$0xff]
        %v569 = vld [vmem:[%s173 + $0xb18] sm:$0xff]
        %v570 = vld [vmem:[%s173 + $0xb20] sm:$0xff]
        %v571 = vld [vmem:[%s173 + $0xb28] sm:$0xff]
        %v572 = vld [vmem:[%s173 + $0xb30] sm:$0xff]
        %v573 = vld [vmem:[%s173 + $0xb38] sm:$0xff]
        %v574 = vld [vmem:[%s173 + $0xb40] sm:$0xff]
        %v575 = vld [vmem:[%s173 + $0xb48] sm:$0xff]
        %v576 = vld [vmem:[%s173 + $0xb50] sm:$0xff]
        %v577 = vld [vmem:[%s173 + $0xb58] sm:$0xff]
        %v578 = vld [vmem:[%s173 + $0xb60] sm:$0xff]
        %v579 = vld [vmem:[%s173 + $0xb68] sm:$0xff]
        %v580 = vld [vmem:[%s173 + $0xb70] sm:$0xff]
        %v581 = vld [vmem:[%s173 + $0xb78] sm:$0xff]
        %v582 = vld [vmem:[%s173 + $0xb80] sm:$0xff]
        %v583 = vld [vmem:[%s173 + $0xb88] sm:$0xff]
        %v584 = vld [vmem:[%s173 + $0xb90] sm:$0xff]
        %v585 = vld [vmem:[%s173 + $0xb98] sm:$0xff]
        %v586 = vld [vmem:[%s173 + $0xba0] sm:$0xff]
        %v587 = vld [vmem:[%s173 + $0xba8] sm:$0xff]
        %v588 = vld [vmem:[%s173 + $0xbb0] sm:$0xff]
        %v589 = vld [vmem:[%s173 + $0xbb8] sm:$0xff]
        %v590 = vld [vmem:[%s173 + $0xbc0] sm:$0xff]
        %v591 = vld [vmem:[%s173 + $0xbc8] sm:$0xff]
        %v592 = vld [vmem:[%s173 + $0xbd0] sm:$0xff]
        %v593 = vld [vmem:[%s173 + $0xbd8] sm:$0xff]
        %v594 = vld [vmem:[%s173 + $0xbe0] sm:$0xff]
        %v595 = vld [vmem:[%s173 + $0xbe8] sm:$0xff]
        %v596 = vld [vmem:[%s173 + $0xbf0] sm:$0xff]
        %v597 = vld [vmem:[%s173 + $0xbf8] sm:$0xff]
        %v598 = vld [vmem:[%s173 + $0xc00] sm:$0xff]
        %v599 = vld [vmem:[%s173 + $0xc08] sm:$0xff]
        %v600 = vld [vmem:[%s173 + $0xc10] sm:$0xff]
        %v601 = vld [vmem:[%s173 + $0xc18] sm:$0xff]
        %v602 = vld [vmem:[%s173 + $0xc20] sm:$0xff]
        %v603 = vld [vmem:[%s173 + $0xc28] sm:$0xff]
        %v604 = vld [vmem:[%s173 + $0xc30] sm:$0xff]
        %v605 = vld [vmem:[%s173 + $0xc38] sm:$0xff]
        %v606 = vld [vmem:[%s173 + $0xc40] sm:$0xff]
        %v607 = vld [vmem:[%s173 + $0xc48] sm:$0xff]
        %v608 = vld [vmem:[%s173 + $0xc50] sm:$0xff]
        %v609 = vld [vmem:[%s173 + $0xc58] sm:$0xff]
        %v610 = vld [vmem:[%s173 + $0xc60] sm:$0xff]
        %v611 = vld [vmem:[%s173 + $0xc68] sm:$0xff]
        %v612 = vld [vmem:[%s173 + $0xc70] sm:$0xff]
        %v613 = vld [vmem:[%s173 + $0xc78] sm:$0xff]
        %v614 = vld [vmem:[%s173 + $0xc80] sm:$0xff]
        %v615 = vld [vmem:[%s173 + $0xc88] sm:$0xff]
        %v616 = vld [vmem:[%s173 + $0xc90] sm:$0xff]
        %v617 = vld [vmem:[%s173 + $0xc98] sm:$0xff]
        %v618 = vld [vmem:[%s173 + $0xca0] sm:$0xff]
        %v619 = vld [vmem:[%s173 + $0xca8] sm:$0xff]
        %v620 = vld [vmem:[%s173 + $0xcb0] sm:$0xff]
        %v621 = vld [vmem:[%s173 + $0xcb8] sm:$0xff]
        %v622 = vld [vmem:[%s173 + $0xcc0] sm:$0xff]
        %v623 = vld [vmem:[%s173 + $0xcc8] sm:$0xff]
        %v624 = vld [vmem:[%s173 + $0xcd0] sm:$0xff]
        %v625 = vld [vmem:[%s173 + $0xcd8] sm:$0xff]
        %v626 = vld [vmem:[%s173 + $0xce0] sm:$0xff]
        %v627 = vld [vmem:[%s173 + $0xce8] sm:$0xff]
        %v628 = vld [vmem:[%s173 + $0xcf0] sm:$0xff]
        %v629 = vld [vmem:[%s173 + $0xcf8] sm:$0xff]
        %v630 = vld [vmem:[%s173 + $0xd00] sm:$0xff]
        %v631 = vld [vmem:[%s173 + $0xd08] sm:$0xff]
        %v632 = vld [vmem:[%s173 + $0xd10] sm:$0xff]
        %v633 = vld [vmem:[%s173 + $0xd18] sm:$0xff]
        %v634 = vld [vmem:[%s173 + $0xd20] sm:$0xff]
        %v635 = vld [vmem:[%s173 + $0xd28] sm:$0xff]
        %v636 = vld [vmem:[%s173 + $0xd30] sm:$0xff]
        %v637 = vld [vmem:[%s173 + $0xd38] sm:$0xff]
        %v638 = vld [vmem:[%s173 + $0xd40] sm:$0xff]
        %v639 = vld [vmem:[%s173 + $0xd48] sm:$0xff]
        %v640 = vld [vmem:[%s173 + $0xd50] sm:$0xff]
        %v641 = vld [vmem:[%s173 + $0xd58] sm:$0xff]
        %v642 = vld [vmem:[%s173 + $0xd60] sm:$0xff]
        %v643 = vld [vmem:[%s173 + $0xd68] sm:$0xff]
        %v644 = vld [vmem:[%s173 + $0xd70] sm:$0xff]
        %v645 = vld [vmem:[%s173 + $0xd78] sm:$0xff]
        %v646 = vld [vmem:[%s173 + $0xd80] sm:$0xff]
        %v647 = vld [vmem:[%s173 + $0xd88] sm:$0xff]
        %v648 = vld [vmem:[%s173 + $0xd90] sm:$0xff]
        %v649 = vld [vmem:[%s173 + $0xd98] sm:$0xff]
        %v650 = vld [vmem:[%s173 + $0xda0] sm:$0xff]
        %v651 = vld [vmem:[%s173 + $0xda8] sm:$0xff]
        %v652 = vld [vmem:[%s173 + $0xdb0] sm:$0xff]
        %v653 = vld [vmem:[%s173 + $0xdb8] sm:$0xff]
        %v654 = vld [vmem:[%s173 + $0xdc0] sm:$0xff]
        %v655 = vld [vmem:[%s173 + $0xdc8] sm:$0xff]
        %v656 = vld [vmem:[%s173 + $0xdd0] sm:$0xff]
        %v657 = vld [vmem:[%s173 + $0xdd8] sm:$0xff]
        %v658 = vld [vmem:[%s173 + $0xde0] sm:$0xff]
        %v659 = vld [vmem:[%s173 + $0xde8] sm:$0xff]
        %v660 = vld [vmem:[%s173 + $0xdf0] sm:$0xff]
        %v661 = vld [vmem:[%s173 + $0xdf8] sm:$0xff]
        %v662 = vld [vmem:[%s173 + $0xe00] sm:$0xff]
        %v663 = vld [vmem:[%s173 + $0xe08] sm:$0xff]
        %v664 = vld [vmem:[%s173 + $0xe10] sm:$0xff]
        %v665 = vld [vmem:[%s173 + $0xe18] sm:$0xff]
        %v666 = vld [vmem:[%s173 + $0xe20] sm:$0xff]
        %v667 = vld [vmem:[%s173 + $0xe28] sm:$0xff]
        %v668 = vld [vmem:[%s173 + $0xe30] sm:$0xff]
        %v669 = vld [vmem:[%s173 + $0xe38] sm:$0xff]
        %v670 = vld [vmem:[%s173 + $0xe40] sm:$0xff]
        %v671 = vld [vmem:[%s173 + $0xe48] sm:$0xff]
        %v672 = vld [vmem:[%s173 + $0xe50] sm:$0xff]
        %v673 = vld [vmem:[%s173 + $0xe58] sm:$0xff]
        %v674 = vld [vmem:[%s173 + $0xe60] sm:$0xff]
        %v675 = vld [vmem:[%s173 + $0xe68] sm:$0xff]
        %v676 = vld [vmem:[%s173 + $0xe70] sm:$0xff]
        %v677 = vld [vmem:[%s173 + $0xe78] sm:$0xff]
        %v678 = vld [vmem:[%s173 + $0xe80] sm:$0xff]
        %v679 = vld [vmem:[%s173 + $0xe88] sm:$0xff]
        %v680 = vld [vmem:[%s173 + $0xe90] sm:$0xff]
        %v681 = vld [vmem:[%s173 + $0xe98] sm:$0xff]
        %v682 = vld [vmem:[%s173 + $0xea0] sm:$0xff]
        %v683 = vld [vmem:[%s173 + $0xea8] sm:$0xff]
        %v684 = vld [vmem:[%s173 + $0xeb0] sm:$0xff]
        %v685 = vld [vmem:[%s173 + $0xeb8] sm:$0xff]
        %v686 = vld [vmem:[%s173 + $0xec0] sm:$0xff]
        %v687 = vld [vmem:[%s173 + $0xec8] sm:$0xff]
        %v688 = vld [vmem:[%s173 + $0xed0] sm:$0xff]
        %v689 = vld [vmem:[%s173 + $0xed8] sm:$0xff]
        %v690 = vld [vmem:[%s173 + $0xee0] sm:$0xff]
        %v691 = vld [vmem:[%s173 + $0xee8] sm:$0xff]
        %v692 = vld [vmem:[%s173 + $0xef0] sm:$0xff]
        %v693 = vld [vmem:[%s173 + $0xef8] sm:$0xff]
        %v694 = vld [vmem:[%s173 + $0xf00] sm:$0xff]
        %v695 = vld [vmem:[%s173 + $0xf08] sm:$0xff]
        %v696 = vld [vmem:[%s173 + $0xf10] sm:$0xff]
        %v697 = vld [vmem:[%s173 + $0xf18] sm:$0xff]
        %v698 = vld [vmem:[%s173 + $0xf20] sm:$0xff]
        %v699 = vld [vmem:[%s173 + $0xf28] sm:$0xff]
        %v700 = vld [vmem:[%s173 + $0xf30] sm:$0xff]
        %v701 = vld [vmem:[%s173 + $0xf38] sm:$0xff]
        %v702 = vld [vmem:[%s173 + $0xf40] sm:$0xff]
        %v703 = vld [vmem:[%s173 + $0xf48] sm:$0xff]
        %v704 = vld [vmem:[%s173 + $0xf50] sm:$0xff]
        %v705 = vld [vmem:[%s173 + $0xf58] sm:$0xff]
        %v706 = vld [vmem:[%s173 + $0xf60] sm:$0xff]
        %v707 = vld [vmem:[%s173 + $0xf68] sm:$0xff]
        %v708 = vld [vmem:[%s173 + $0xf70] sm:$0xff]
        %v709 = vld [vmem:[%s173 + $0xf78] sm:$0xff]
        %v710 = vld [vmem:[%s173 + $0xf80] sm:$0xff]
        %v711 = vld [vmem:[%s173 + $0xf88] sm:$0xff]
        %v712 = vld [vmem:[%s173 + $0xf90] sm:$0xff]
        %v713 = vld [vmem:[%s173 + $0xf98] sm:$0xff]
        %v714 = vld [vmem:[%s173 + $0xfa0] sm:$0xff]
        %v715 = vld [vmem:[%s173 + $0xfa8] sm:$0xff]
        %v716 = vld [vmem:[%s173 + $0xfb0] sm:$0xff]
        %v717 = vld [vmem:[%s173 + $0xfb8] sm:$0xff]
        %v718 = vld [vmem:[%s173 + $0xfc0] sm:$0xff]
        %v719 = vld [vmem:[%s173 + $0xfc8] sm:$0xff]
        %v720 = vld [vmem:[%s173 + $0xfd0] sm:$0xff]
        %v721 = vld [vmem:[%s173 + $0xfd8] sm:$0xff]
        %v722 = vld [vmem:[%s173 + $0xfe0] sm:$0xff]
        %v723 = vld [vmem:[%s173 + $0xfe8] sm:$0xff]
        %v724 = vld [vmem:[%s173 + $0xff0] sm:$0xff]
        %v725 = vld [vmem:[%s173 + $0xff8] sm:$0xff]
        %v726 = vld [vmem:[%s173 + $0x1000] sm:$0xff]
        %v727 = vld [vmem:[%s173 + $0x1008] sm:$0xff]
        %v728 = vld [vmem:[%s173 + $0x1010] sm:$0xff]
        %v729 = vld [vmem:[%s173 + $0x1018] sm:$0xff]
        %v730 = vld [vmem:[%s173 + $0x1020] sm:$0xff]
        %v731 = vld [vmem:[%s173 + $0x1028] sm:$0xff]
        %v732 = vld [vmem:[%s173 + $0x1030] sm:$0xff]
        %v733 = vld [vmem:[%s173 + $0x1038] sm:$0xff]
        %v734 = vld [vmem:[%s173 + $0x1040] sm:$0xff]
        %v735 = vld [vmem:[%s173 + $0x1048] sm:$0xff]
        %v736 = vld [vmem:[%s173 + $0x1050] sm:$0xff]
        %v737 = vld [vmem:[%s173 + $0x1058] sm:$0xff]
        %v738 = vld [vmem:[%s173 + $0x1060] sm:$0xff]
        %v739 = vld [vmem:[%s173 + $0x1068] sm:$0xff]
        %v740 = vld [vmem:[%s173 + $0x1070] sm:$0xff]
        %v741 = vld [vmem:[%s173 + $0x1078] sm:$0xff]
        %v742 = vld [vmem:[%s173 + $0x1080] sm:$0xff]
        %v743 = vld [vmem:[%s173 + $0x1088] sm:$0xff]
        %v744 = vld [vmem:[%s173 + $0x1090] sm:$0xff]
        %v745 = vld [vmem:[%s173 + $0x1098] sm:$0xff]
        %v746 = vld [vmem:[%s173 + $0x10a0] sm:$0xff]
        %v747 = vld [vmem:[%s173 + $0x10a8] sm:$0xff]
        %v748 = vld [vmem:[%s173 + $0x10b0] sm:$0xff]
        %v749 = vld [vmem:[%s173 + $0x10b8] sm:$0xff]
        %v750 = vld [vmem:[%s173 + $0x10c0] sm:$0xff]
        %v751 = vld [vmem:[%s173 + $0x10c8] sm:$0xff]
        %v752 = vld [vmem:[%s173 + $0x10d0] sm:$0xff]
        %v753 = vld [vmem:[%s173 + $0x10d8] sm:$0xff]
        %v754 = vld [vmem:[%s173 + $0x10e0] sm:$0xff]
        %v755 = vld [vmem:[%s173 + $0x10e8] sm:$0xff]
        %v756 = vld [vmem:[%s173 + $0x10f0] sm:$0xff]
        %v757 = vld [vmem:[%s173 + $0x10f8] sm:$0xff]
        %v758 = vld [vmem:[%s173 + $0x1100] sm:$0xff]
        %v759 = vld [vmem:[%s173 + $0x1108] sm:$0xff]
        %v760 = vld [vmem:[%s173 + $0x1110] sm:$0xff]
        %v761 = vld [vmem:[%s173 + $0x1118] sm:$0xff]
        %v762 = vld [vmem:[%s173 + $0x1120] sm:$0xff]
        %v763 = vld [vmem:[%s173 + $0x1128] sm:$0xff]
        %v764 = vld [vmem:[%s173 + $0x1130] sm:$0xff]
        %v765 = vld [vmem:[%s173 + $0x1138] sm:$0xff]
        %v766 = vld [vmem:[%s173 + $0x1140] sm:$0xff]
        %v767 = vld [vmem:[%s173 + $0x1148] sm:$0xff]
        %v768 = vld [vmem:[%s173 + $0x1150] sm:$0xff]
        %v769 = vld [vmem:[%s173 + $0x1158] sm:$0xff]
        %v770 = vld [vmem:[%s173 + $0x1160] sm:$0xff]
        %v771 = vld [vmem:[%s173 + $0x1168] sm:$0xff]
        %v772 = vld [vmem:[%s173 + $0x1170] sm:$0xff]
        %v773 = vld [vmem:[%s173 + $0x1178] sm:$0xff]
        %v774 = vld [vmem:[%s173 + $0x1180] sm:$0xff]
        %v775 = vld [vmem:[%s173 + $0x1188] sm:$0xff]
        %v776 = vld [vmem:[%s173 + $0x1190] sm:$0xff]
        %v777 = vld [vmem:[%s173 + $0x1198] sm:$0xff]
        %v778 = vld [vmem:[%s173 + $0x11a0] sm:$0xff]
        %v779 = vld [vmem:[%s173 + $0x11a8] sm:$0xff]
        %v780 = vld [vmem:[%s173 + $0x11b0] sm:$0xff]
        %v781 = vld [vmem:[%s173 + $0x11b8] sm:$0xff]
        %v782 = vld [vmem:[%s173 + $0x11c0] sm:$0xff]
        %v783 = vld [vmem:[%s173 + $0x11c8] sm:$0xff]
        %v784 = vld [vmem:[%s173 + $0x11d0] sm:$0xff]
        %v785 = vld [vmem:[%s173 + $0x11d8] sm:$0xff]
        %v786 = vld [vmem:[%s173 + $0x11e0] sm:$0xff]
        %v787 = vld [vmem:[%s173 + $0x11e8] sm:$0xff]
        %v788 = vld [vmem:[%s173 + $0x11f0] sm:$0xff]
        %v789 = vld [vmem:[%s173 + $0x11f8] sm:$0xff]
        %v790 = vld [vmem:[%s173 + $0x1200] sm:$0xff]
        %v791 = vld [vmem:[%s173 + $0x1208] sm:$0xff]
        %v792 = vld [vmem:[%s173 + $0x1210] sm:$0xff]
        %v793 = vld [vmem:[%s173 + $0x1218] sm:$0xff]
        %v794 = vld [vmem:[%s173 + $0x1220] sm:$0xff]
        %v795 = vld [vmem:[%s173 + $0x1228] sm:$0xff]
        %v796 = vld [vmem:[%s173 + $0x1230] sm:$0xff]
        %v797 = vld [vmem:[%s173 + $0x1238] sm:$0xff]
        %v798 = vld [vmem:[%s173 + $0x1240] sm:$0xff]
        %v799 = vld [vmem:[%s173 + $0x1248] sm:$0xff]
        %v800 = vld [vmem:[%s173 + $0x1250] sm:$0xff]
        %v801 = vld [vmem:[%s173 + $0x1258] sm:$0xff]
        %v802 = vld [vmem:[%s173 + $0x1260] sm:$0xff]
        %v803 = vld [vmem:[%s173 + $0x1268] sm:$0xff]
        %v804 = vld [vmem:[%s173 + $0x1270] sm:$0xff]
        %v805 = vld [vmem:[%s173 + $0x1278] sm:$0xff]
        %v806 = vld [vmem:[%s173 + $0x1280] sm:$0xff]
        %v807 = vld [vmem:[%s173 + $0x1288] sm:$0xff]
        %v808 = vld [vmem:[%s173 + $0x1290] sm:$0xff]
        %v809 = vld [vmem:[%s173 + $0x1298] sm:$0xff]
        %v810 = vld [vmem:[%s173 + $0x12a0] sm:$0xff]
        %v811 = vld [vmem:[%s173 + $0x12a8] sm:$0xff]
        %v812 = vld [vmem:[%s173 + $0x12b0] sm:$0xff]
        %v813 = vld [vmem:[%s173 + $0x12b8] sm:$0xff]
        %v814 = vld [vmem:[%s173 + $0x12c0] sm:$0xff]
        %v815 = vld [vmem:[%s173 + $0x12c8] sm:$0xff]
        %v816 = vld [vmem:[%s173 + $0x12d0] sm:$0xff]
        %v817 = vld [vmem:[%s173 + $0x12d8] sm:$0xff]
        %v818 = vld [vmem:[%s173 + $0x12e0] sm:$0xff]
        %v819 = vld [vmem:[%s173 + $0x12e8] sm:$0xff]
        %v820 = vld [vmem:[%s173 + $0x12f0] sm:$0xff]
        %v821 = vld [vmem:[%s173 + $0x12f8] sm:$0xff]
        %v822 = vld [vmem:[%s173 + $0x1300] sm:$0xff]
        %v823 = vld [vmem:[%s173 + $0x1308] sm:$0xff]
        %v824 = vld [vmem:[%s173 + $0x1310] sm:$0xff]
        %v825 = vld [vmem:[%s173 + $0x1318] sm:$0xff]
        %v826 = vld [vmem:[%s173 + $0x1320] sm:$0xff]
        %v827 = vld [vmem:[%s173 + $0x1328] sm:$0xff]
        %v828 = vld [vmem:[%s173 + $0x1330] sm:$0xff]
        %v829 = vld [vmem:[%s173 + $0x1338] sm:$0xff]
        %v830 = vld [vmem:[%s173 + $0x1340] sm:$0xff]
        %v831 = vld [vmem:[%s173 + $0x1348] sm:$0xff]
        %v832 = vld [vmem:[%s173 + $0x1350] sm:$0xff]
        %v833 = vld [vmem:[%s173 + $0x1358] sm:$0xff]
        %v834 = vld [vmem:[%s173 + $0x1360] sm:$0xff]
        %v835 = vld [vmem:[%s173 + $0x1368] sm:$0xff]
        %v836 = vld [vmem:[%s173 + $0x1370] sm:$0xff]
        %v837 = vld [vmem:[%s173 + $0x1378] sm:$0xff]
        %v838 = vld [vmem:[%s173 + $0x1380] sm:$0xff]
        %v839 = vld [vmem:[%s173 + $0x1388] sm:$0xff]
        %v840 = vld [vmem:[%s173 + $0x1390] sm:$0xff]
        %v841 = vld [vmem:[%s173 + $0x1398] sm:$0xff]
        %v842 = vld [vmem:[%s173 + $0x13a0] sm:$0xff]
        %v843 = vld [vmem:[%s173 + $0x13a8] sm:$0xff]
        %v844 = vld [vmem:[%s173 + $0x13b0] sm:$0xff]
        %v845 = vld [vmem:[%s173 + $0x13b8] sm:$0xff]
        %v846 = vld [vmem:[%s173 + $0x13c0] sm:$0xff]
        %v847 = vld [vmem:[%s173 + $0x13c8] sm:$0xff]
        %v848 = vld [vmem:[%s173 + $0x13d0] sm:$0xff]
        %v849 = vld [vmem:[%s173 + $0x13d8] sm:$0xff]
        %v850 = vld [vmem:[%s173 + $0x13e0] sm:$0xff]
        %v851 = vld [vmem:[%s173 + $0x13e8] sm:$0xff]
        %v852 = vld [vmem:[%s173 + $0x13f0] sm:$0xff]
        %v853 = vld [vmem:[%s173 + $0x13f8] sm:$0xff]
        %v854 = vld [vmem:[%s173 + $0x1400] sm:$0xff]
        %v855 = vld [vmem:[%s173 + $0x1408] sm:$0xff]
        %v856 = vld [vmem:[%s173 + $0x1410] sm:$0xff]
        %v857 = vld [vmem:[%s173 + $0x1418] sm:$0xff]
        %v858 = vld [vmem:[%s173 + $0x1420] sm:$0xff]
        %v859 = vld [vmem:[%s173 + $0x1428] sm:$0xff]
        %v860 = vld [vmem:[%s173 + $0x1430] sm:$0xff]
        %v861 = vld [vmem:[%s173 + $0x1438] sm:$0xff]
        %v862 = vld [vmem:[%s173 + $0x1440] sm:$0xff]
        %v863 = vld [vmem:[%s173 + $0x1448] sm:$0xff]
        %v864 = vld [vmem:[%s173 + $0x1450] sm:$0xff]
        %v865 = vld [vmem:[%s173 + $0x1458] sm:$0xff]
        %v866 = vld [vmem:[%s173 + $0x1460] sm:$0xff]
        %v867 = vld [vmem:[%s173 + $0x1468] sm:$0xff]
        %v868 = vld [vmem:[%s173 + $0x1470] sm:$0xff]
        %v869 = vld [vmem:[%s173 + $0x1478] sm:$0xff]
        %v870 = vld [vmem:[%s173 + $0x1480] sm:$0xff]
        %v871 = vld [vmem:[%s173 + $0x1488] sm:$0xff]
        %v872 = vld [vmem:[%s173 + $0x1490] sm:$0xff]
        %v873 = vld [vmem:[%s173 + $0x1498] sm:$0xff]
        %v874 = vld [vmem:[%s173 + $0x14a0] sm:$0xff]
        %v875 = vld [vmem:[%s173 + $0x14a8] sm:$0xff]
        %v876 = vld [vmem:[%s173 + $0x14b0] sm:$0xff]
        %v877 = vld [vmem:[%s173 + $0x14b8] sm:$0xff]
        %v878 = vld [vmem:[%s173 + $0x14c0] sm:$0xff]
        %v879 = vld [vmem:[%s173 + $0x14c8] sm:$0xff]
        %v880 = vld [vmem:[%s173 + $0x14d0] sm:$0xff]
        %v881 = vld [vmem:[%s173 + $0x14d8] sm:$0xff]
        %v882 = vld [vmem:[%s173 + $0x14e0] sm:$0xff]
        %v883 = vld [vmem:[%s173 + $0x14e8] sm:$0xff]
        %v884 = vld [vmem:[%s173 + $0x14f0] sm:$0xff]
        %v885 = vld [vmem:[%s173 + $0x14f8] sm:$0xff]
        %v886 = vld [vmem:[%s173 + $0x1500] sm:$0xff]
        %v887 = vld [vmem:[%s173 + $0x1508] sm:$0xff]
        %v888 = vld [vmem:[%s173 + $0x1510] sm:$0xff]
        %v889 = vld [vmem:[%s173 + $0x1518] sm:$0xff]
        %v890 = vld [vmem:[%s173 + $0x1520] sm:$0xff]
        %v891 = vld [vmem:[%s173 + $0x1528] sm:$0xff]
        %v892 = vld [vmem:[%s173 + $0x1530] sm:$0xff]
        %v893 = vld [vmem:[%s173 + $0x1538] sm:$0xff]
        %v894 = vld [vmem:[%s173 + $0x1540] sm:$0xff]
        %v895 = vld [vmem:[%s173 + $0x1548] sm:$0xff]
        %v896 = vld [vmem:[%s173 + $0x1550] sm:$0xff]
        %v897 = vld [vmem:[%s173 + $0x1558] sm:$0xff]
        %v898 = vld [vmem:[%s173 + $0x1560] sm:$0xff]
        %v899 = vld [vmem:[%s173 + $0x1568] sm:$0xff]
        %v900 = vld [vmem:[%s173 + $0x1570] sm:$0xff]
        %v901 = vld [vmem:[%s173 + $0x1578] sm:$0xff]
        %v902 = vld [vmem:[%s173 + $0x1580] sm:$0xff]
        %v903 = vld [vmem:[%s173 + $0x1588] sm:$0xff]
        %v904 = vld [vmem:[%s173 + $0x1590] sm:$0xff]
        %v905 = vld [vmem:[%s173 + $0x1598] sm:$0xff]
        %v906 = vld [vmem:[%s173 + $0x15a0] sm:$0xff]
        %v907 = vld [vmem:[%s173 + $0x15a8] sm:$0xff]
        %v908 = vld [vmem:[%s173 + $0x15b0] sm:$0xff]
        %v909 = vld [vmem:[%s173 + $0x15b8] sm:$0xff]
        %v910 = vld [vmem:[%s173 + $0x15c0] sm:$0xff]
        %v911 = vld [vmem:[%s173 + $0x15c8] sm:$0xff]
        %v912 = vld [vmem:[%s173 + $0x15d0] sm:$0xff]
        %v913 = vld [vmem:[%s173 + $0x15d8] sm:$0xff]
        %v914 = vld [vmem:[%s173 + $0x15e0] sm:$0xff]
        %v915 = vld [vmem:[%s173 + $0x15e8] sm:$0xff]
        %v916 = vld [vmem:[%s173 + $0x15f0] sm:$0xff]
        %v917 = vld [vmem:[%s173 + $0x15f8] sm:$0xff]
        %v918 = vld [vmem:[%s173 + $0x1600] sm:$0xff]
        %v919 = vld [vmem:[%s173 + $0x1608] sm:$0xff]
        %v920 = vld [vmem:[%s173 + $0x1610] sm:$0xff]
        %v921 = vld [vmem:[%s173 + $0x1618] sm:$0xff]
        %v922 = vld [vmem:[%s173 + $0x1620] sm:$0xff]
        %v923 = vld [vmem:[%s173 + $0x1628] sm:$0xff]
        %v924 = vld [vmem:[%s173 + $0x1630] sm:$0xff]
        %v925 = vld [vmem:[%s173 + $0x1638] sm:$0xff]
        %v926 = vld [vmem:[%s173 + $0x1640] sm:$0xff]
        %v927 = vld [vmem:[%s173 + $0x1648] sm:$0xff]
        %v928 = vld [vmem:[%s173 + $0x1650] sm:$0xff]
        %v929 = vld [vmem:[%s173 + $0x1658] sm:$0xff]
        %v930 = vld [vmem:[%s173 + $0x1660] sm:$0xff]
        %v931 = vld [vmem:[%s173 + $0x1668] sm:$0xff]
        %v932 = vld [vmem:[%s173 + $0x1670] sm:$0xff]
        %v933 = vld [vmem:[%s173 + $0x1678] sm:$0xff]
        %v934 = vld [vmem:[%s173 + $0x1680] sm:$0xff]
        %v935 = vld [vmem:[%s173 + $0x1688] sm:$0xff]
        %v936 = vld [vmem:[%s173 + $0x1690] sm:$0xff]
        %v937 = vld [vmem:[%s173 + $0x1698] sm:$0xff]
        %v938 = vld [vmem:[%s173 + $0x16a0] sm:$0xff]
        %v939 = vld [vmem:[%s173 + $0x16a8] sm:$0xff]
        %v940 = vld [vmem:[%s173 + $0x16b0] sm:$0xff]
        %v941 = vld [vmem:[%s173 + $0x16b8] sm:$0xff]
        %v942 = vld [vmem:[%s173 + $0x16c0] sm:$0xff]
        %v943 = vld [vmem:[%s173 + $0x16c8] sm:$0xff]
        %v944 = vld [vmem:[%s173 + $0x16d0] sm:$0xff]
        %v945 = vld [vmem:[%s173 + $0x16d8] sm:$0xff]
        %v946 = vld [vmem:[%s173 + $0x16e0] sm:$0xff]
        %v947 = vld [vmem:[%s173 + $0x16e8] sm:$0xff]
        %v948 = vld [vmem:[%s173 + $0x16f0] sm:$0xff]
        %v949 = vld [vmem:[%s173 + $0x16f8] sm:$0xff]
        %v950 = vld [vmem:[%s173 + $0x1700] sm:$0xff]
        %v951 = vld [vmem:[%s173 + $0x1708] sm:$0xff]
        %v952 = vld [vmem:[%s173 + $0x1710] sm:$0xff]
        %v953 = vld [vmem:[%s173 + $0x1718] sm:$0xff]
        %v954 = vld [vmem:[%s173 + $0x1720] sm:$0xff]
        %v955 = vld [vmem:[%s173 + $0x1728] sm:$0xff]
        %v956 = vld [vmem:[%s173 + $0x1730] sm:$0xff]
        %v957 = vld [vmem:[%s173 + $0x1738] sm:$0xff]
        %v958 = vld [vmem:[%s173 + $0x1740] sm:$0xff]
        %v959 = vld [vmem:[%s173 + $0x1748] sm:$0xff]
        %v960 = vld [vmem:[%s173 + $0x1750] sm:$0xff]
        %v961 = vld [vmem:[%s173 + $0x1758] sm:$0xff]
        %v962 = vld [vmem:[%s173 + $0x1760] sm:$0xff]
        %v963 = vld [vmem:[%s173 + $0x1768] sm:$0xff]
        %v964 = vld [vmem:[%s173 + $0x1770] sm:$0xff]
        %v965 = vld [vmem:[%s173 + $0x1778] sm:$0xff]
        %v966 = vld [vmem:[%s173 + $0x1780] sm:$0xff]
        %v967 = vld [vmem:[%s173 + $0x1788] sm:$0xff]
        %v968 = vld [vmem:[%s173 + $0x1790] sm:$0xff]
        %v969 = vld [vmem:[%s173 + $0x1798] sm:$0xff]
        %v970 = vld [vmem:[%s173 + $0x17a0] sm:$0xff]
        %v971 = vld [vmem:[%s173 + $0x17a8] sm:$0xff]
        %v972 = vld [vmem:[%s173 + $0x17b0] sm:$0xff]
        %v973 = vld [vmem:[%s173 + $0x17b8] sm:$0xff]
        %v974 = vld [vmem:[%s173 + $0x17c0] sm:$0xff]
        %v975 = vld [vmem:[%s173 + $0x17c8] sm:$0xff]
        %v976 = vld [vmem:[%s173 + $0x17d0] sm:$0xff]
        %v977 = vld [vmem:[%s173 + $0x17d8] sm:$0xff]
        %v978 = vld [vmem:[%s173 + $0x17e0] sm:$0xff]
        %v979 = vld [vmem:[%s173 + $0x17e8] sm:$0xff]
        %v980 = vld [vmem:[%s173 + $0x17f0] sm:$0xff]
        %v981 = vld [vmem:[%s173 + $0x17f8] sm:$0xff]
        %v982 = vld [vmem:[%s173 + $0x1800] sm:$0xff]
        %v983 = vld [vmem:[%s173 + $0x1808] sm:$0xff]
        %v984 = vld [vmem:[%s173 + $0x1810] sm:$0xff]
        %v985 = vld [vmem:[%s173 + $0x1818] sm:$0xff]
        %v986 = vld [vmem:[%s173 + $0x1820] sm:$0xff]
        %v987 = vld [vmem:[%s173 + $0x1828] sm:$0xff]
        %v988 = vld [vmem:[%s173 + $0x1830] sm:$0xff]
        %v989 = vld [vmem:[%s173 + $0x1838] sm:$0xff]
        %v990 = vld [vmem:[%s173 + $0x1840] sm:$0xff]
        %v991 = vld [vmem:[%s173 + $0x1848] sm:$0xff]
        %v992 = vld [vmem:[%s173 + $0x1850] sm:$0xff]
        %v993 = vld [vmem:[%s173 + $0x1858] sm:$0xff]
        %v994 = vld [vmem:[%s173 + $0x1860] sm:$0xff]
        %v995 = vld [vmem:[%s173 + $0x1868] sm:$0xff]
        %v996 = vld [vmem:[%s173 + $0x1870] sm:$0xff]
        %v997 = vld [vmem:[%s173 + $0x1878] sm:$0xff]
        %v998 = vld [vmem:[%s173 + $0x1880] sm:$0xff]
        %v999 = vld [vmem:[%s173 + $0x1888] sm:$0xff]
        %v1000 = vld [vmem:[%s173 + $0x1890] sm:$0xff]
        %v1001 = vld [vmem:[%s173 + $0x1898] sm:$0xff]
        %v1002 = vld [vmem:[%s173 + $0x18a0] sm:$0xff]
        %v1003 = vld [vmem:[%s173 + $0x18a8] sm:$0xff]
        %v1004 = vld [vmem:[%s173 + $0x18b0] sm:$0xff]
        %v1005 = vld [vmem:[%s173 + $0x18b8] sm:$0xff]
        %v1006 = vld [vmem:[%s173 + $0x18c0] sm:$0xff]
        %v1007 = vld [vmem:[%s173 + $0x18c8] sm:$0xff]
        %v1008 = vld [vmem:[%s173 + $0x18d0] sm:$0xff]
        %v1009 = vld [vmem:[%s173 + $0x18d8] sm:$0xff]
        %v1010 = vld [vmem:[%s173 + $0x18e0] sm:$0xff]
        %v1011 = vld [vmem:[%s173 + $0x18e8] sm:$0xff]
        %v1012 = vld [vmem:[%s173 + $0x18f0] sm:$0xff]
        %v1013 = vld [vmem:[%s173 + $0x18f8] sm:$0xff]
        %v1014 = vld [vmem:[%s173 + $0x1900] sm:$0xff]
        %v1015 = vld [vmem:[%s173 + $0x1908] sm:$0xff]
        %v1016 = vld [vmem:[%s173 + $0x1910] sm:$0xff]
        %v1017 = vld [vmem:[%s173 + $0x1918] sm:$0xff]
        %v1018 = vld [vmem:[%s173 + $0x1920] sm:$0xff]
        %v1019 = vld [vmem:[%s173 + $0x1928] sm:$0xff]
        %v1020 = vld [vmem:[%s173 + $0x1930] sm:$0xff]
        %v1021 = vld [vmem:[%s173 + $0x1938] sm:$0xff]
        %v1022 = vld [vmem:[%s173 + $0x1940] sm:$0xff]
        %v1023 = vld [vmem:[%s173 + $0x1948] sm:$0xff]
        %v1024 = vld [vmem:[%s173 + $0x1950] sm:$0xff]
        %v1025 = vld [vmem:[%s173 + $0x1958] sm:$0xff]
        %v1026 = vld [vmem:[%s173 + $0x1960] sm:$0xff]
        %v1027 = vld [vmem:[%s173 + $0x1968] sm:$0xff]
        %v1028 = vld [vmem:[%s173 + $0x1970] sm:$0xff]
        %v1029 = vld [vmem:[%s173 + $0x1978] sm:$0xff]
        %v1030 = vld [vmem:[%s173 + $0x1980] sm:$0xff]
        %v1031 = vld [vmem:[%s173 + $0x1988] sm:$0xff]
        %v1032 = vld [vmem:[%s173 + $0x1990] sm:$0xff]
        %v1033 = vld [vmem:[%s173 + $0x1998] sm:$0xff]
        %v1034 = vld [vmem:[%s173 + $0x19a0] sm:$0xff]
        %v1035 = vld [vmem:[%s173 + $0x19a8] sm:$0xff]
        %v1036 = vld [vmem:[%s173 + $0x19b0] sm:$0xff]
        %v1037 = vld [vmem:[%s173 + $0x19b8] sm:$0xff]
        %v1038 = vld [vmem:[%s173 + $0x19c0] sm:$0xff]
        %v1039 = vld [vmem:[%s173 + $0x19c8] sm:$0xff]
        %v1040 = vld [vmem:[%s173 + $0x19d0] sm:$0xff]
        %v1041 = vld [vmem:[%s173 + $0x19d8] sm:$0xff]
        %v1042 = vld [vmem:[%s173 + $0x19e0] sm:$0xff]
        %v1043 = vld [vmem:[%s173 + $0x19e8] sm:$0xff]
        %v1044 = vld [vmem:[%s173 + $0x19f0] sm:$0xff]
        %v1045 = vld [vmem:[%s173 + $0x19f8] sm:$0xff]
        %v1046 = vld [vmem:[%s173 + $0x1a00] sm:$0xff]
        %v1047 = vld [vmem:[%s173 + $0x1a08] sm:$0xff]
        %v1048 = vld [vmem:[%s173 + $0x1a10] sm:$0xff]
        %v1049 = vld [vmem:[%s173 + $0x1a18] sm:$0xff]
        %v1050 = vld [vmem:[%s173 + $0x1a20] sm:$0xff]
        %v1051 = vld [vmem:[%s173 + $0x1a28] sm:$0xff]
        %v1052 = vld [vmem:[%s173 + $0x1a30] sm:$0xff]
        %v1053 = vld [vmem:[%s173 + $0x1a38] sm:$0xff]
        %v1054 = vld [vmem:[%s173 + $0x1a40] sm:$0xff]
        %v1055 = vld [vmem:[%s173 + $0x1a48] sm:$0xff]
        %v1056 = vld [vmem:[%s173 + $0x1a50] sm:$0xff]
        %v1057 = vld [vmem:[%s173 + $0x1a58] sm:$0xff]
        %v1058 = vld [vmem:[%s173 + $0x1a60] sm:$0xff]
        %v1059 = vld [vmem:[%s173 + $0x1a68] sm:$0xff]
        %v1060 = vld [vmem:[%s173 + $0x1a70] sm:$0xff]
        %v1061 = vld [vmem:[%s173 + $0x1a78] sm:$0xff]
        %v1062 = vld [vmem:[%s173 + $0x1a80] sm:$0xff]
        %v1063 = vld [vmem:[%s173 + $0x1a88] sm:$0xff]
        %v1064 = vld [vmem:[%s173 + $0x1a90] sm:$0xff]
        %v1065 = vld [vmem:[%s173 + $0x1a98] sm:$0xff]
        %v1066 = vld [vmem:[%s173 + $0x1aa0] sm:$0xff]
        %v1067 = vld [vmem:[%s173 + $0x1aa8] sm:$0xff]
        %v1068 = vld [vmem:[%s173 + $0x1ab0] sm:$0xff]
        %v1069 = vld [vmem:[%s173 + $0x1ab8] sm:$0xff]
        %v1070 = vld [vmem:[%s173 + $0x1ac0] sm:$0xff]
        %v1071 = vld [vmem:[%s173 + $0x1ac8] sm:$0xff]
        %v1072 = vld [vmem:[%s173 + $0x1ad0] sm:$0xff]
        %v1073 = vld [vmem:[%s173 + $0x1ad8] sm:$0xff]
        %v1074 = vld [vmem:[%s173 + $0x1ae0] sm:$0xff]
        %v1075 = vld [vmem:[%s173 + $0x1ae8] sm:$0xff]
        %v1076 = vld [vmem:[%s173 + $0x1af0] sm:$0xff]
        %v1077 = vld [vmem:[%s173 + $0x1af8] sm:$0xff]
        %v1078 = vld [vmem:[%s173 + $0x1b00] sm:$0xff]
        %v1079 = vld [vmem:[%s173 + $0x1b08] sm:$0xff]
        %v1080 = vld [vmem:[%s173 + $0x1b10] sm:$0xff]
        %v1081 = vld [vmem:[%s173 + $0x1b18] sm:$0xff]
        %v1082 = vld [vmem:[%s173 + $0x1b20] sm:$0xff]
        %v1083 = vld [vmem:[%s173 + $0x1b28] sm:$0xff]
        %v1084 = vld [vmem:[%s173 + $0x1b30] sm:$0xff]
        %v1085 = vld [vmem:[%s173 + $0x1b38] sm:$0xff]
        %v1086 = vld [vmem:[%s173 + $0x1b40] sm:$0xff]
        %v1087 = vld [vmem:[%s173 + $0x1b48] sm:$0xff]
        %v1088 = vld [vmem:[%s173 + $0x1b50] sm:$0xff]
        %v1089 = vld [vmem:[%s173 + $0x1b58] sm:$0xff]
        %v1090 = vld [vmem:[%s173 + $0x1b60] sm:$0xff]
        %v1091 = vld [vmem:[%s173 + $0x1b68] sm:$0xff]
        %v1092 = vld [vmem:[%s173 + $0x1b70] sm:$0xff]
        %v1093 = vld [vmem:[%s173 + $0x1b78] sm:$0xff]
        %v1094 = vld [vmem:[%s173 + $0x1b80] sm:$0xff]
        %v1095 = vld [vmem:[%s173 + $0x1b88] sm:$0xff]
        %v1096 = vld [vmem:[%s173 + $0x1b90] sm:$0xff]
        %v1097 = vld [vmem:[%s173 + $0x1b98] sm:$0xff]
        %v1098 = vld [vmem:[%s173 + $0x1ba0] sm:$0xff]
        %v1099 = vld [vmem:[%s173 + $0x1ba8] sm:$0xff]
        %v1100 = vld [vmem:[%s173 + $0x1bb0] sm:$0xff]
        %v1101 = vld [vmem:[%s173 + $0x1bb8] sm:$0xff]
        %v1102 = vld [vmem:[%s173 + $0x1bc0] sm:$0xff]
        %v1103 = vld [vmem:[%s173 + $0x1bc8] sm:$0xff]
        %v1104 = vld [vmem:[%s173 + $0x1bd0] sm:$0xff]
        %v1105 = vld [vmem:[%s173 + $0x1bd8] sm:$0xff]
        %v1106 = vld [vmem:[%s173 + $0x1be0] sm:$0xff]
        %v1107 = vld [vmem:[%s173 + $0x1be8] sm:$0xff]
        %v1108 = vld [vmem:[%s173 + $0x1bf0] sm:$0xff]
        %v1109 = vld [vmem:[%s173 + $0x1bf8] sm:$0xff]
        %v1110 = vld [vmem:[%s173 + $0x1c00] sm:$0xff]
        %v1111 = vld [vmem:[%s173 + $0x1c08] sm:$0xff]
        %v1112 = vld [vmem:[%s173 + $0x1c10] sm:$0xff]
        %v1113 = vld [vmem:[%s173 + $0x1c18] sm:$0xff]
        %v1114 = vld [vmem:[%s173 + $0x1c20] sm:$0xff]
        %v1115 = vld [vmem:[%s173 + $0x1c28] sm:$0xff]
        %v1116 = vld [vmem:[%s173 + $0x1c30] sm:$0xff]
        %v1117 = vld [vmem:[%s173 + $0x1c38] sm:$0xff]
        %v1118 = vld [vmem:[%s173 + $0x1c40] sm:$0xff]
        %v1119 = vld [vmem:[%s173 + $0x1c48] sm:$0xff]
        %v1120 = vld [vmem:[%s173 + $0x1c50] sm:$0xff]
        %v1121 = vld [vmem:[%s173 + $0x1c58] sm:$0xff]
        %v1122 = vld [vmem:[%s173 + $0x1c60] sm:$0xff]
        %v1123 = vld [vmem:[%s173 + $0x1c68] sm:$0xff]
        %v1124 = vld [vmem:[%s173 + $0x1c70] sm:$0xff]
        %v1125 = vld [vmem:[%s173 + $0x1c78] sm:$0xff]
        %v1126 = vld [vmem:[%s173 + $0x1c80] sm:$0xff]
        %v1127 = vld [vmem:[%s173 + $0x1c88] sm:$0xff]
        %v1128 = vld [vmem:[%s173 + $0x1c90] sm:$0xff]
        %v1129 = vld [vmem:[%s173 + $0x1c98] sm:$0xff]
        %v1130 = vld [vmem:[%s173 + $0x1ca0] sm:$0xff]
        %v1131 = vld [vmem:[%s173 + $0x1ca8] sm:$0xff]
        %v1132 = vld [vmem:[%s173 + $0x1cb0] sm:$0xff]
        %v1133 = vld [vmem:[%s173 + $0x1cb8] sm:$0xff]
        %v1134 = vld [vmem:[%s173 + $0x1cc0] sm:$0xff]
        %v1135 = vld [vmem:[%s173 + $0x1cc8] sm:$0xff]
        %v1136 = vld [vmem:[%s173 + $0x1cd0] sm:$0xff]
        %v1137 = vld [vmem:[%s173 + $0x1cd8] sm:$0xff]
        %v1138 = vld [vmem:[%s173 + $0x1ce0] sm:$0xff]
        %v1139 = vld [vmem:[%s173 + $0x1ce8] sm:$0xff]
        %v1140 = vld [vmem:[%s173 + $0x1cf0] sm:$0xff]
        %v1141 = vld [vmem:[%s173 + $0x1cf8] sm:$0xff]
        %v1142 = vld [vmem:[%s173 + $0x1d00] sm:$0xff]
        %v1143 = vld [vmem:[%s173 + $0x1d08] sm:$0xff]
        %v1144 = vld [vmem:[%s173 + $0x1d10] sm:$0xff]
        %v1145 = vld [vmem:[%s173 + $0x1d18] sm:$0xff]
        %v1146 = vld [vmem:[%s173 + $0x1d20] sm:$0xff]
        %v1147 = vld [vmem:[%s173 + $0x1d28] sm:$0xff]
        %v1148 = vld [vmem:[%s173 + $0x1d30] sm:$0xff]
        %v1149 = vld [vmem:[%s173 + $0x1d38] sm:$0xff]
        %v1150 = vld [vmem:[%s173 + $0x1d40] sm:$0xff]
        %v1151 = vld [vmem:[%s173 + $0x1d48] sm:$0xff]
        %v1152 = vld [vmem:[%s173 + $0x1d50] sm:$0xff]
        %v1153 = vld [vmem:[%s173 + $0x1d58] sm:$0xff]
        %v1154 = vld [vmem:[%s173 + $0x1d60] sm:$0xff]
        %v1155 = vld [vmem:[%s173 + $0x1d68] sm:$0xff]
        %v1156 = vld [vmem:[%s173 + $0x1d70] sm:$0xff]
        %v1157 = vld [vmem:[%s173 + $0x1d78] sm:$0xff]
        %v1158 = vld [vmem:[%s173 + $0x1d80] sm:$0xff]
        %v1159 = vld [vmem:[%s173 + $0x1d88] sm:$0xff]
        %v1160 = vld [vmem:[%s173 + $0x1d90] sm:$0xff]
        %v1161 = vld [vmem:[%s173 + $0x1d98] sm:$0xff]
        %v1162 = vld [vmem:[%s173 + $0x1da0] sm:$0xff]
        %v1163 = vld [vmem:[%s173 + $0x1da8] sm:$0xff]
        %v1164 = vld [vmem:[%s173 + $0x1db0] sm:$0xff]
        %v1165 = vld [vmem:[%s173 + $0x1db8] sm:$0xff]
        %v1166 = vld [vmem:[%s173 + $0x1dc0] sm:$0xff]
        %v1167 = vld [vmem:[%s173 + $0x1dc8] sm:$0xff]
        %v1168 = vld [vmem:[%s173 + $0x1dd0] sm:$0xff]
        %v1169 = vld [vmem:[%s173 + $0x1dd8] sm:$0xff]
        %v1170 = vld [vmem:[%s173 + $0x1de0] sm:$0xff]
        %v1171 = vld [vmem:[%s173 + $0x1de8] sm:$0xff]
        %v1172 = vld [vmem:[%s173 + $0x1df0] sm:$0xff]
        %v1173 = vld [vmem:[%s173 + $0x1df8] sm:$0xff]
        %v1174 = vld [vmem:[%s173 + $0x1e00] sm:$0xff]
        %v1175 = vld [vmem:[%s173 + $0x1e08] sm:$0xff]
        %v1176 = vld [vmem:[%s173 + $0x1e10] sm:$0xff]
        %v1177 = vld [vmem:[%s173 + $0x1e18] sm:$0xff]
        %v1178 = vld [vmem:[%s173 + $0x1e20] sm:$0xff]
        %v1179 = vld [vmem:[%s173 + $0x1e28] sm:$0xff]
        %v1180 = vld [vmem:[%s173 + $0x1e30] sm:$0xff]
        %v1181 = vld [vmem:[%s173 + $0x1e38] sm:$0xff]
        %v1182 = vld [vmem:[%s173 + $0x1e40] sm:$0xff]
        %v1183 = vld [vmem:[%s173 + $0x1e48] sm:$0xff]
        %v1184 = vld [vmem:[%s173 + $0x1e50] sm:$0xff]
        %v1185 = vld [vmem:[%s173 + $0x1e58] sm:$0xff]
        %v1186 = vld [vmem:[%s173 + $0x1e60] sm:$0xff]
        %v1187 = vld [vmem:[%s173 + $0x1e68] sm:$0xff]
        %v1188 = vld [vmem:[%s173 + $0x1e70] sm:$0xff]
        %v1189 = vld [vmem:[%s173 + $0x1e78] sm:$0xff]
        %v1190 = vld [vmem:[%s173 + $0x1e80] sm:$0xff]
        %v1191 = vld [vmem:[%s173 + $0x1e88] sm:$0xff]
        %v1192 = vld [vmem:[%s173 + $0x1e90] sm:$0xff]
        %v1193 = vld [vmem:[%s173 + $0x1e98] sm:$0xff]
        %v1194 = vld [vmem:[%s173 + $0x1ea0] sm:$0xff]
        %v1195 = vld [vmem:[%s173 + $0x1ea8] sm:$0xff]
        %v1196 = vld [vmem:[%s173 + $0x1eb0] sm:$0xff]
        %v1197 = vld [vmem:[%s173 + $0x1eb8] sm:$0xff]
        %v1198 = vld [vmem:[%s173 + $0x1ec0] sm:$0xff]
        %v1199 = vld [vmem:[%s173 + $0x1ec8] sm:$0xff]
        %v1200 = vld [vmem:[%s173 + $0x1ed0] sm:$0xff]
        %v1201 = vld [vmem:[%s173 + $0x1ed8] sm:$0xff]
        %v1202 = vld [vmem:[%s173 + $0x1ee0] sm:$0xff]
        %v1203 = vld [vmem:[%s173 + $0x1ee8] sm:$0xff]
        %v1204 = vld [vmem:[%s173 + $0x1ef0] sm:$0xff]
        %v1205 = vld [vmem:[%s173 + $0x1ef8] sm:$0xff]
        %v1206 = vld [vmem:[%s173 + $0x1f00] sm:$0xff]
        %v1207 = vld [vmem:[%s173 + $0x1f08] sm:$0xff]
        %v1208 = vld [vmem:[%s173 + $0x1f10] sm:$0xff]
        %v1209 = vld [vmem:[%s173 + $0x1f18] sm:$0xff]
        %v1210 = vld [vmem:[%s173 + $0x1f20] sm:$0xff]
        %v1211 = vld [vmem:[%s173 + $0x1f28] sm:$0xff]
        %v1212 = vld [vmem:[%s173 + $0x1f30] sm:$0xff]
        %v1213 = vld [vmem:[%s173 + $0x1f38] sm:$0xff]
        %v1214 = vld [vmem:[%s173 + $0x1f40] sm:$0xff]
        %v1215 = vld [vmem:[%s173 + $0x1f48] sm:$0xff]
        %v1216 = vld [vmem:[%s173 + $0x1f50] sm:$0xff]
        %v1217 = vld [vmem:[%s173 + $0x1f58] sm:$0xff]
        %v1218 = vld [vmem:[%s173 + $0x1f60] sm:$0xff]
        %v1219 = vld [vmem:[%s173 + $0x1f68] sm:$0xff]
        %v1220 = vld [vmem:[%s173 + $0x1f70] sm:$0xff]
        %v1221 = vld [vmem:[%s173 + $0x1f78] sm:$0xff]
        %v1222 = vld [vmem:[%s173 + $0x1f80] sm:$0xff]
        %v1223 = vld [vmem:[%s173 + $0x1f88] sm:$0xff]
        %v1224 = vld [vmem:[%s173 + $0x1f90] sm:$0xff]
        %v1225 = vld [vmem:[%s173 + $0x1f98] sm:$0xff]
        %v1226 = vld [vmem:[%s173 + $0x1fa0] sm:$0xff]
        %v1227 = vld [vmem:[%s173 + $0x1fa8] sm:$0xff]
        %v1228 = vld [vmem:[%s173 + $0x1fb0] sm:$0xff]
        %v1229 = vld [vmem:[%s173 + $0x1fb8] sm:$0xff]
        %v1230 = vld [vmem:[%s173 + $0x1fc0] sm:$0xff]
        %v1231 = vld [vmem:[%s173 + $0x1fc8] sm:$0xff]
        %v1232 = vld [vmem:[%s173 + $0x1fd0] sm:$0xff]
        %v1233 = vld [vmem:[%s173 + $0x1fd8] sm:$0xff]
        %v1234 = vld [vmem:[%s173 + $0x1fe0] sm:$0xff]
        %v1235 = vld [vmem:[%s173 + $0x1fe8] sm:$0xff]
        %v1236 = vld [vmem:[%s173 + $0x1ff0] sm:$0xff]
        %v1237 = vld [vmem:[%s173 + $0x1ff8] sm:$0xff]
        %v1238 = vld [vmem:[%s173 + $0x2000] sm:$0xff]
        %v1239 = vld [vmem:[%s173 + $0x2008] sm:$0xff]
        %v1240 = vld [vmem:[%s173 + $0x2010] sm:$0xff]
        %v1241 = vld [vmem:[%s173 + $0x2018] sm:$0xff]
        %v1242 = vld [vmem:[%s173 + $0x2020] sm:$0xff]
        %v1243 = vld [vmem:[%s173 + $0x2028] sm:$0xff]
        %v1244 = vld [vmem:[%s173 + $0x2030] sm:$0xff]
        %v1245 = vld [vmem:[%s173 + $0x2038] sm:$0xff]
        %v1246 = vld [vmem:[%s173 + $0x2040] sm:$0xff]
        %v1247 = vld [vmem:[%s173 + $0x2048] sm:$0xff]
        %v1248 = vld [vmem:[%s173 + $0x2050] sm:$0xff]
        %v1249 = vld [vmem:[%s173 + $0x2058] sm:$0xff]
        %v1250 = vld [vmem:[%s173 + $0x2060] sm:$0xff]
        %v1251 = vld [vmem:[%s173 + $0x2068] sm:$0xff]
        %v1252 = vld [vmem:[%s173 + $0x2070] sm:$0xff]
        %v1253 = vld [vmem:[%s173 + $0x2078] sm:$0xff]
        %v1254 = vld [vmem:[%s173 + $0x2080] sm:$0xff]
        %v1255 = vld [vmem:[%s173 + $0x2088] sm:$0xff]
        %v1256 = vld [vmem:[%s173 + $0x2090] sm:$0xff]
        %v1257 = vld [vmem:[%s173 + $0x2098] sm:$0xff]
        %v1258 = vld [vmem:[%s173 + $0x20a0] sm:$0xff]
        %v1259 = vld [vmem:[%s173 + $0x20a8] sm:$0xff]
        %v1260 = vld [vmem:[%s173 + $0x20b0] sm:$0xff]
        %v1261 = vld [vmem:[%s173 + $0x20b8] sm:$0xff]
        %v1262 = vld [vmem:[%s173 + $0x20c0] sm:$0xff]
        %v1263 = vld [vmem:[%s173 + $0x20c8] sm:$0xff]
        %v1264 = vld [vmem:[%s173 + $0x20d0] sm:$0xff]
        %v1265 = vld [vmem:[%s173 + $0x20d8] sm:$0xff]
        %v1266 = vld [vmem:[%s173 + $0x20e0] sm:$0xff]
        %v1267 = vld [vmem:[%s173 + $0x20e8] sm:$0xff]
        %v1268 = vld [vmem:[%s173 + $0x20f0] sm:$0xff]
        %v1269 = vld [vmem:[%s173 + $0x20f8] sm:$0xff]
        %v1270 = vld [vmem:[%s173 + $0x2100] sm:$0xff]
        %v1271 = vld [vmem:[%s173 + $0x2108] sm:$0xff]
        %v1272 = vld [vmem:[%s173 + $0x2110] sm:$0xff]
        %v1273 = vld [vmem:[%s173 + $0x2118] sm:$0xff]
        %v1274 = vld [vmem:[%s173 + $0x2120] sm:$0xff]
        %v1275 = vld [vmem:[%s173 + $0x2128] sm:$0xff]
        %v1276 = vld [vmem:[%s173 + $0x2130] sm:$0xff]
        %v1277 = vld [vmem:[%s173 + $0x2138] sm:$0xff]
        %v1278 = vld [vmem:[%s173 + $0x2140] sm:$0xff]
        %v1279 = vld [vmem:[%s173 + $0x2148] sm:$0xff]
        %v1280 = vld [vmem:[%s173 + $0x2150] sm:$0xff]
        %v1281 = vld [vmem:[%s173 + $0x2158] sm:$0xff]
        %v1282 = vld [vmem:[%s173 + $0x2160] sm:$0xff]
        %v1283 = vld [vmem:[%s173 + $0x2168] sm:$0xff]
        %v1284 = vld [vmem:[%s173 + $0x2170] sm:$0xff]
        %v1285 = vld [vmem:[%s173 + $0x2178] sm:$0xff]
        %v1286 = vld [vmem:[%s173 + $0x2180] sm:$0xff]
        %v1287 = vld [vmem:[%s173 + $0x2188] sm:$0xff]
        %v1288 = vld [vmem:[%s173 + $0x2190] sm:$0xff]
        %v1289 = vld [vmem:[%s173 + $0x2198] sm:$0xff]
        %v1290 = vld [vmem:[%s173 + $0x21a0] sm:$0xff]
        %v1291 = vld [vmem:[%s173 + $0x21a8] sm:$0xff]
        %v1292 = vld [vmem:[%s173 + $0x21b0] sm:$0xff]
        %v1293 = vld [vmem:[%s173 + $0x21b8] sm:$0xff]
        %v1294 = vld [vmem:[%s173 + $0x21c0] sm:$0xff]
        %v1295 = vld [vmem:[%s173 + $0x21c8] sm:$0xff]
        %v1296 = vld [vmem:[%s173 + $0x21d0] sm:$0xff]
        %v1297 = vld [vmem:[%s173 + $0x21d8] sm:$0xff]
        %v1298 = vld [vmem:[%s173 + $0x21e0] sm:$0xff]
        %v1299 = vld [vmem:[%s173 + $0x21e8] sm:$0xff]
        %v1300 = vld [vmem:[%s173 + $0x21f0] sm:$0xff]
        %v1301 = vld [vmem:[%s173 + $0x21f8] sm:$0xff]
        %v1302 = vld [vmem:[%s173 + $0x2200] sm:$0xff]
        %v1303 = vld [vmem:[%s173 + $0x2208] sm:$0xff]
        %v1304 = vld [vmem:[%s173 + $0x2210] sm:$0xff]
        %v1305 = vld [vmem:[%s173 + $0x2218] sm:$0xff]
        %v1306 = vld [vmem:[%s173 + $0x2220] sm:$0xff]
        %v1307 = vld [vmem:[%s173 + $0x2228] sm:$0xff]
        %v1308 = vld [vmem:[%s173 + $0x2230] sm:$0xff]
        %v1309 = vld [vmem:[%s173 + $0x2238] sm:$0xff]
        %v1310 = vld [vmem:[%s173 + $0x2240] sm:$0xff]
        %v1311 = vld [vmem:[%s173 + $0x2248] sm:$0xff]
        %v1312 = vld [vmem:[%s173 + $0x2250] sm:$0xff]
        %v1313 = vld [vmem:[%s173 + $0x2258] sm:$0xff]
        %v1314 = vld [vmem:[%s173 + $0x2260] sm:$0xff]
        %v1315 = vld [vmem:[%s173 + $0x2268] sm:$0xff]
        %v1316 = vld [vmem:[%s173 + $0x2270] sm:$0xff]
        %v1317 = vld [vmem:[%s173 + $0x2278] sm:$0xff]
        %v1318 = vld [vmem:[%s173 + $0x2280] sm:$0xff]
        %v1319 = vld [vmem:[%s173 + $0x2288] sm:$0xff]
        %v1320 = vld [vmem:[%s173 + $0x2290] sm:$0xff]
        %v1321 = vld [vmem:[%s173 + $0x2298] sm:$0xff]
        %v1322 = vld [vmem:[%s173 + $0x22a0] sm:$0xff]
        %v1323 = vld [vmem:[%s173 + $0x22a8] sm:$0xff]
        %v1324 = vld [vmem:[%s173 + $0x22b0] sm:$0xff]
        %v1325 = vld [vmem:[%s173 + $0x22b8] sm:$0xff]
        %v1326 = vld [vmem:[%s173 + $0x22c0] sm:$0xff]
        %v1327 = vld [vmem:[%s173 + $0x22c8] sm:$0xff]
        %v1328 = vld [vmem:[%s173 + $0x22d0] sm:$0xff]
        %v1329 = vld [vmem:[%s173 + $0x22d8] sm:$0xff]
        %v1330 = vld [vmem:[%s173 + $0x22e0] sm:$0xff]
        %v1331 = vld [vmem:[%s173 + $0x22e8] sm:$0xff]
        %v1332 = vld [vmem:[%s173 + $0x22f0] sm:$0xff]
        %v1333 = vld [vmem:[%s173 + $0x22f8] sm:$0xff]
        %v1334 = vld [vmem:[%s173 + $0x2300] sm:$0xff]
        %v1335 = vld [vmem:[%s173 + $0x2308] sm:$0xff]
        %v1336 = vld [vmem:[%s173 + $0x2310] sm:$0xff]
        %v1337 = vld [vmem:[%s173 + $0x2318] sm:$0xff]
        %v1338 = vld [vmem:[%s173 + $0x2320] sm:$0xff]
        %v1339 = vld [vmem:[%s204] sm:$0xff]
        %v1340 = vld [vmem:[%s204 + $0x8] sm:$0xff]
        %v1341 = vld [vmem:[%s204 + $0x10] sm:$0x3]
        %v1345 = vlaneseq
        %v1346 = vshrl.u32 %v1345, 7
        %v1347 = vsub.s32 0, %v1346
        %v1348 = vrot.slane %v1339, %v1347
        %v1349 = vlaneseq
        %v1350 = vshrl.u32 %v1349, 7
        %v1351 = vsub.s32 1, %v1350
        %v1352 = vrot.slane %v1339, %v1351
        %v1353 = vlaneseq
        %v1354 = vshrl.u32 %v1353, 7
        %v1355 = vsub.s32 2, %v1354
        %v1356 = vrot.slane %v1339, %v1355
        %v1357 = vlaneseq
        %v1358 = vshrl.u32 %v1357, 7
        %v1359 = vsub.s32 3, %v1358
        %v1360 = vrot.slane %v1339, %v1359
        %v1361 = vlaneseq
        %v1362 = vshrl.u32 %v1361, 7
        %v1363 = vsub.s32 4, %v1362
        %v1364 = vrot.slane %v1339, %v1363
        %v1365 = vlaneseq
        %v1366 = vshrl.u32 %v1365, 7
        %v1367 = vsub.s32 5, %v1366
        %v1368 = vrot.slane %v1339, %v1367
        %v1369 = vlaneseq
        %v1370 = vshrl.u32 %v1369, 7
        %v1371 = vsub.s32 6, %v1370
        %v1372 = vrot.slane %v1339, %v1371
        %v1373 = vlaneseq
        %v1374 = vshrl.u32 %v1373, 7
        %v1375 = vsub.s32 7, %v1374
        %v1376 = vrot.slane %v1339, %v1375
        %v1377 = vlaneseq
        %v1378 = vshrl.u32 %v1377, 7
        %v1379 = vsub.s32 0, %v1378
        %v1380 = vrot.slane %v1340, %v1379
        %v1381 = vlaneseq
        %v1382 = vshrl.u32 %v1381, 7
        %v1383 = vsub.s32 1, %v1382
        %v1384 = vrot.slane %v1340, %v1383
        %v1385 = vlaneseq
        %v1386 = vshrl.u32 %v1385, 7
        %v1387 = vsub.s32 2, %v1386
        %v1388 = vrot.slane %v1340, %v1387
        %v1389 = vlaneseq
        %v1390 = vshrl.u32 %v1389, 7
        %v1391 = vsub.s32 3, %v1390
        %v1392 = vrot.slane %v1340, %v1391
        %v1393 = vlaneseq
        %v1394 = vshrl.u32 %v1393, 7
        %v1395 = vsub.s32 4, %v1394
        %v1396 = vrot.slane %v1340, %v1395
        %v1397 = vlaneseq
        %v1398 = vshrl.u32 %v1397, 7
        %v1399 = vsub.s32 5, %v1398
        %v1400 = vrot.slane %v1340, %v1399
        %v1401 = vlaneseq
        %v1402 = vshrl.u32 %v1401, 7
        %v1403 = vsub.s32 6, %v1402
        %v1404 = vrot.slane %v1340, %v1403
        %v1405 = vlaneseq
        %v1406 = vshrl.u32 %v1405, 7
        %v1407 = vsub.s32 7, %v1406
        %v1408 = vrot.slane %v1340, %v1407
        %v1409 = vlaneseq
        %v1410 = vshrl.u32 %v1409, 7
        %v1411 = vsub.s32 0, %v1410
        %v1412 = vrot.slane %v1341, %v1411
        %v1413 = vlaneseq
        %v1414 = vshrl.u32 %v1413, 7
        %v1415 = vsub.s32 1, %v1414
        %v1416 = vrot.slane %v1341, %v1415
        %v1436 = vcombine.high %v213, %v213
        %v1438 = vunpack.c.l.s4 1966171168
        %v1439 = vunpack.c.0.s8 %v1438
        %v1440 = vlaneseq
        %v1441 = vshrl.u32 %v1440, 7
        %v1442 = vsub.s32 %v1439, %v1441
        %v1443 = vrot.slane %v213, %v1442
        %v1445 = vunpack.c.l.s4 1966171168
        %v1446 = vunpack.c.0.s8 %v1445
        %v1447 = vlaneseq
        %v1448 = vshrl.u32 %v1447, 7
        %v1449 = vsub.s32 %v1446, %v1448
        %v1450 = vrot.slane %v1436, %v1449
        %v1451 = vcombine.high %v1443, %v1443
        %v1452 = vcombine.high %v1450, %v1450
        %v1454 = vunpack.c.l.s4 1966171168
        %v1455 = vunpack.c.0.s8 %v1454
        %v1456 = vlaneseq
        %v1457 = vshrl.u32 %v1456, 7
        %v1458 = vsub.s32 %v1455, %v1457
        %v1459 = vrot.slane %v1443, %v1458
        %v1461 = vunpack.c.l.s4 1966171168
        %v1462 = vunpack.c.0.s8 %v1461
        %v1463 = vlaneseq
        %v1464 = vshrl.u32 %v1463, 7
        %v1465 = vsub.s32 %v1462, %v1464
        %v1466 = vrot.slane %v1450, %v1465
        %v1468 = vunpack.c.l.s4 1966171168
        %v1469 = vunpack.c.0.s8 %v1468
        %v1470 = vlaneseq
        %v1471 = vshrl.u32 %v1470, 7
        %v1472 = vsub.s32 %v1469, %v1471
        %v1473 = vrot.slane %v1451, %v1472
        %v1475 = vunpack.c.l.s4 1966171168
        %v1476 = vunpack.c.0.s8 %v1475
        %v1477 = vlaneseq
        %v1478 = vshrl.u32 %v1477, 7
        %v1479 = vsub.s32 %v1476, %v1478
        %v1480 = vrot.slane %v1452, %v1479
        %v1481 = vcombine.high %v1459, %v1459
        %v1482 = vcombine.high %v1466, %v1466
        %v1483 = vcombine.high %v1473, %v1473
        %v1484 = vcombine.high %v1480, %v1480
        %v2617 = vunpack.c.l.b16 %v214
        %v2618 = vunpack.c.h.b16 %v214
        %v2619 = vunpack.c.l.b16 %v215
        %v2620 = vunpack.c.h.b16 %v215
        %v2621 = vunpack.c.l.b16 %v216
        %v2622 = vunpack.c.h.b16 %v216
        %v2623 = vunpack.c.l.b16 %v217
        %v2624 = vunpack.c.h.b16 %v217
        %v2625 = vunpack.c.l.b16 %v218
        %v2626 = vunpack.c.h.b16 %v218
        %v2627 = vunpack.c.l.b16 %v219
        %v2628 = vunpack.c.h.b16 %v219
        %v2629 = vunpack.c.l.b16 %v220
        %v2630 = vunpack.c.h.b16 %v220
        %v2631 = vunpack.c.l.b16 %v221
        %v2632 = vunpack.c.h.b16 %v221
        %v2633 = vunpack.c.l.b16 %v222
        %v2634 = vunpack.c.h.b16 %v222
        %v2635 = vunpack.c.l.b16 %v223
        %v2636 = vunpack.c.h.b16 %v223
        %v2637 = vunpack.c.l.b16 %v224
        %v2638 = vunpack.c.h.b16 %v224
        %v2639 = vunpack.c.l.b16 %v225
        %v2640 = vunpack.c.h.b16 %v225
        %v2641 = vunpack.c.l.b16 %v226
        %v2642 = vunpack.c.h.b16 %v226
        %v2643 = vunpack.c.l.b16 %v227
        %v2644 = vunpack.c.h.b16 %v227
        %v2645 = vunpack.c.l.b16 %v228
        %v2646 = vunpack.c.h.b16 %v228
        %v2647 = vunpack.c.l.b16 %v229
        %v2648 = vunpack.c.h.b16 %v229
        %v2649 = vunpack.c.l.b16 %v230
        %v2650 = vunpack.c.h.b16 %v230
        %v2651 = vunpack.c.l.b16 %v231
        %v2652 = vunpack.c.h.b16 %v231
        %v2653 = vunpack.c.l.b16 %v232
        %v2654 = vunpack.c.h.b16 %v232
        %v2655 = vunpack.c.l.b16 %v233
        %v2656 = vunpack.c.h.b16 %v233
        %v2657 = vunpack.c.l.b16 %v234
        %v2658 = vunpack.c.h.b16 %v234
        %v2659 = vunpack.c.l.b16 %v235
        %v2660 = vunpack.c.h.b16 %v235
        %v2661 = vunpack.c.l.b16 %v236
        %v2662 = vunpack.c.h.b16 %v236
        %v2663 = vunpack.c.l.b16 %v237
        %v2664 = vunpack.c.h.b16 %v237
        %v2665 = vunpack.c.l.b16 %v238
        %v2666 = vunpack.c.h.b16 %v238
        %v2667 = vunpack.c.l.b16 %v239
        %v2668 = vunpack.c.h.b16 %v239
        %v2669 = vunpack.c.l.b16 %v240
        %v2670 = vunpack.c.h.b16 %v240
        %v2671 = vunpack.c.l.b16 %v241
        %v2672 = vunpack.c.h.b16 %v241
        %v2673 = vunpack.c.l.b16 %v242
        %v2674 = vunpack.c.h.b16 %v242
        %v2675 = vunpack.c.l.b16 %v243
        %v2676 = vunpack.c.h.b16 %v243
        %v2677 = vunpack.c.l.b16 %v244
        %v2678 = vunpack.c.h.b16 %v244
        %v2679 = vunpack.c.l.b16 %v245
        %v2680 = vunpack.c.h.b16 %v245
        %v2681 = vunpack.c.l.b16 %v246
        %v2682 = vunpack.c.h.b16 %v246
        %v2683 = vunpack.c.l.b16 %v247
        %v2684 = vunpack.c.h.b16 %v247
        %v2685 = vunpack.c.l.b16 %v248
        %v2686 = vunpack.c.h.b16 %v248
        %v2687 = vunpack.c.l.b16 %v249
        %v2688 = vunpack.c.h.b16 %v249
        %v2689 = vunpack.c.l.b16 %v250
        %v2690 = vunpack.c.h.b16 %v250
        %v2691 = vunpack.c.l.b16 %v251
        %v2692 = vunpack.c.h.b16 %v251
        %v2693 = vunpack.c.l.b16 %v252
        %v2694 = vunpack.c.h.b16 %v252
        %v2695 = vunpack.c.l.b16 %v253
        %v2696 = vunpack.c.h.b16 %v253
        %v2697 = vunpack.c.l.b16 %v254
        %v2698 = vunpack.c.h.b16 %v254
        %v2699 = vunpack.c.l.b16 %v255
        %v2700 = vunpack.c.h.b16 %v255
        %v2701 = vunpack.c.l.b16 %v256
        %v2702 = vunpack.c.h.b16 %v256
        %v2703 = vunpack.c.l.b16 %v257
        %v2704 = vunpack.c.h.b16 %v257
        %v2705 = vunpack.c.l.b16 %v258
        %v2706 = vunpack.c.h.b16 %v258
        %v2707 = vunpack.c.l.b16 %v259
        %v2708 = vunpack.c.h.b16 %v259
        %v2709 = vunpack.c.l.b16 %v260
        %v2710 = vunpack.c.h.b16 %v260
        %v2711 = vunpack.c.l.b16 %v261
        %v2712 = vunpack.c.h.b16 %v261
        %v2713 = vunpack.c.l.b16 %v262
        %v2714 = vunpack.c.h.b16 %v262
        %v2715 = vunpack.c.l.b16 %v263
        %v2716 = vunpack.c.h.b16 %v263
        %v2717 = vunpack.c.l.b16 %v264
        %v2718 = vunpack.c.h.b16 %v264
        %v2719 = vunpack.c.l.b16 %v265
        %v2720 = vunpack.c.h.b16 %v265
        %v2721 = vunpack.c.l.b16 %v266
        %v2722 = vunpack.c.h.b16 %v266
        %v2723 = vunpack.c.l.b16 %v267
        %v2724 = vunpack.c.h.b16 %v267
        %v2725 = vunpack.c.l.b16 %v268
        %v2726 = vunpack.c.h.b16 %v268
        %v2727 = vunpack.c.l.b16 %v269
        %v2728 = vunpack.c.h.b16 %v269
        %v2729 = vunpack.c.l.b16 %v270
        %v2730 = vunpack.c.h.b16 %v270
        %v2731 = vunpack.c.l.b16 %v271
        %v2732 = vunpack.c.h.b16 %v271
        %v2733 = vunpack.c.l.b16 %v272
        %v2734 = vunpack.c.h.b16 %v272
        %v2735 = vunpack.c.l.b16 %v273
        %v2736 = vunpack.c.h.b16 %v273
        %v2737 = vunpack.c.l.b16 %v274
        %v2738 = vunpack.c.h.b16 %v274
        %v2739 = vunpack.c.l.b16 %v275
        %v2740 = vunpack.c.h.b16 %v275
        %v2741 = vunpack.c.l.b16 %v276
        %v2742 = vunpack.c.h.b16 %v276
        %v2743 = vunpack.c.l.b16 %v277
        %v2744 = vunpack.c.h.b16 %v277
        %v2745 = vunpack.c.l.b16 %v278
        %v2746 = vunpack.c.h.b16 %v278
        %v2747 = vunpack.c.l.b16 %v279
        %v2748 = vunpack.c.h.b16 %v279
        %v2749 = vunpack.c.l.b16 %v280
        %v2750 = vunpack.c.h.b16 %v280
        %v2751 = vunpack.c.l.b16 %v281
        %v2752 = vunpack.c.h.b16 %v281
        %v2753 = vunpack.c.l.b16 %v282
        %v2754 = vunpack.c.h.b16 %v282
        %v2755 = vunpack.c.l.b16 %v283
        %v2756 = vunpack.c.h.b16 %v283
        %v2757 = vunpack.c.l.b16 %v284
        %v2758 = vunpack.c.h.b16 %v284
        %v2759 = vunpack.c.l.b16 %v285
        %v2760 = vunpack.c.h.b16 %v285
        %v2761 = vunpack.c.l.b16 %v286
        %v2762 = vunpack.c.h.b16 %v286
        %v2763 = vunpack.c.l.b16 %v287
        %v2764 = vunpack.c.h.b16 %v287
        %v2765 = vunpack.c.l.b16 %v288
        %v2766 = vunpack.c.h.b16 %v288
        %v2767 = vunpack.c.l.b16 %v289
        %v2768 = vunpack.c.h.b16 %v289
        %v2769 = vunpack.c.l.b16 %v290
        %v2770 = vunpack.c.h.b16 %v290
        %v2771 = vunpack.c.l.b16 %v291
        %v2772 = vunpack.c.h.b16 %v291
        %v2773 = vunpack.c.l.b16 %v292
        %v2774 = vunpack.c.h.b16 %v292
        %v2775 = vunpack.c.l.b16 %v293
        %v2776 = vunpack.c.h.b16 %v293
        %v2777 = vunpack.c.l.b16 %v294
        %v2778 = vunpack.c.h.b16 %v294
        %v2779 = vunpack.c.l.b16 %v295
        %v2780 = vunpack.c.h.b16 %v295
        %v2781 = vunpack.c.l.b16 %v296
        %v2782 = vunpack.c.h.b16 %v296
        %v2783 = vunpack.c.l.b16 %v297
        %v2784 = vunpack.c.h.b16 %v297
        %v2785 = vunpack.c.l.b16 %v298
        %v2786 = vunpack.c.h.b16 %v298
        %v2787 = vunpack.c.l.b16 %v299
        %v2788 = vunpack.c.h.b16 %v299
        %v2789 = vunpack.c.l.b16 %v300
        %v2790 = vunpack.c.h.b16 %v300
        %v2791 = vunpack.c.l.b16 %v301
        %v2792 = vunpack.c.h.b16 %v301
        %v2793 = vunpack.c.l.b16 %v302
        %v2794 = vunpack.c.h.b16 %v302
        %v2795 = vunpack.c.l.b16 %v303
        %v2796 = vunpack.c.h.b16 %v303
        %v2797 = vunpack.c.l.b16 %v304
        %v2798 = vunpack.c.h.b16 %v304
        %v2799 = vunpack.c.l.b16 %v305
        %v2800 = vunpack.c.h.b16 %v305
        %v2801 = vunpack.c.l.b16 %v306
        %v2802 = vunpack.c.h.b16 %v306
        %v2803 = vunpack.c.l.b16 %v307
        %v2804 = vunpack.c.h.b16 %v307
        %v2805 = vunpack.c.l.b16 %v308
        %v2806 = vunpack.c.h.b16 %v308
        %v2807 = vunpack.c.l.b16 %v309
        %v2808 = vunpack.c.h.b16 %v309
        %v2809 = vunpack.c.l.b16 %v310
        %v2810 = vunpack.c.h.b16 %v310
        %v2811 = vunpack.c.l.b16 %v311
        %v2812 = vunpack.c.h.b16 %v311
        %v2813 = vunpack.c.l.b16 %v312
        %v2814 = vunpack.c.h.b16 %v312
        %v2815 = vunpack.c.l.b16 %v313
        %v2816 = vunpack.c.h.b16 %v313
        %v2817 = vunpack.c.l.b16 %v314
        %v2818 = vunpack.c.h.b16 %v314
        %v2819 = vunpack.c.l.b16 %v315
        %v2820 = vunpack.c.h.b16 %v315
        %v2821 = vunpack.c.l.b16 %v316
        %v2822 = vunpack.c.h.b16 %v316
        %v2823 = vunpack.c.l.b16 %v317
        %v2824 = vunpack.c.h.b16 %v317
        %v2825 = vunpack.c.l.b16 %v318
        %v2826 = vunpack.c.h.b16 %v318
        %v2827 = vunpack.c.l.b16 %v319
        %v2828 = vunpack.c.h.b16 %v319
        %v2829 = vunpack.c.l.b16 %v320
        %v2830 = vunpack.c.h.b16 %v320
        %v2831 = vunpack.c.l.b16 %v321
        %v2832 = vunpack.c.h.b16 %v321
        %v2833 = vunpack.c.l.b16 %v322
        %v2834 = vunpack.c.h.b16 %v322
        %v2835 = vunpack.c.l.b16 %v323
        %v2836 = vunpack.c.h.b16 %v323
        %v2837 = vunpack.c.l.b16 %v324
        %v2838 = vunpack.c.h.b16 %v324
        %v2839 = vunpack.c.l.b16 %v325
        %v2840 = vunpack.c.h.b16 %v325
        %v2841 = vunpack.c.l.b16 %v326
        %v2842 = vunpack.c.h.b16 %v326
        %v2843 = vunpack.c.l.b16 %v327
        %v2844 = vunpack.c.h.b16 %v327
        %v2845 = vunpack.c.l.b16 %v328
        %v2846 = vunpack.c.h.b16 %v328
        %v2847 = vunpack.c.l.b16 %v329
        %v2848 = vunpack.c.h.b16 %v329
        %v2849 = vunpack.c.l.b16 %v330
        %v2850 = vunpack.c.h.b16 %v330
        %v2851 = vunpack.c.l.b16 %v331
        %v2852 = vunpack.c.h.b16 %v331
        %v2853 = vunpack.c.l.b16 %v332
        %v2854 = vunpack.c.h.b16 %v332
        %v2855 = vunpack.c.l.b16 %v333
        %v2856 = vunpack.c.h.b16 %v333
        %v2857 = vunpack.c.l.b16 %v334
        %v2858 = vunpack.c.h.b16 %v334
        %v2859 = vunpack.c.l.b16 %v335
        %v2860 = vunpack.c.h.b16 %v335
        %v2861 = vunpack.c.l.b16 %v336
        %v2862 = vunpack.c.h.b16 %v336
        %v2863 = vunpack.c.l.b16 %v337
        %v2864 = vunpack.c.h.b16 %v337
        %v2865 = vunpack.c.l.b16 %v338
        %v2866 = vunpack.c.h.b16 %v338
        %v2867 = vunpack.c.l.b16 %v339
        %v2868 = vunpack.c.h.b16 %v339
        %v2869 = vunpack.c.l.b16 %v340
        %v2870 = vunpack.c.h.b16 %v340
        %v2871 = vunpack.c.l.b16 %v341
        %v2872 = vunpack.c.h.b16 %v341
        %v2873 = vunpack.c.l.b16 %v342
        %v2874 = vunpack.c.h.b16 %v342
        %v2875 = vunpack.c.l.b16 %v343
        %v2876 = vunpack.c.h.b16 %v343
        %v2877 = vunpack.c.l.b16 %v344
        %v2878 = vunpack.c.h.b16 %v344
        %v2879 = vunpack.c.l.b16 %v345
        %v2880 = vunpack.c.h.b16 %v345
        %v2881 = vunpack.c.l.b16 %v346
        %v2882 = vunpack.c.h.b16 %v346
        %v2883 = vunpack.c.l.b16 %v347
        %v2884 = vunpack.c.h.b16 %v347
        %v2885 = vunpack.c.l.b16 %v348
        %v2886 = vunpack.c.h.b16 %v348
        %v2887 = vunpack.c.l.b16 %v349
        %v2888 = vunpack.c.h.b16 %v349
        %v2889 = vunpack.c.l.b16 %v350
        %v2890 = vunpack.c.h.b16 %v350
        %v2891 = vunpack.c.l.b16 %v351
        %v2892 = vunpack.c.h.b16 %v351
        %v2893 = vunpack.c.l.b16 %v352
        %v2894 = vunpack.c.h.b16 %v352
        %v2895 = vunpack.c.l.b16 %v353
        %v2896 = vunpack.c.h.b16 %v353
        %v2897 = vunpack.c.l.b16 %v354
        %v2898 = vunpack.c.h.b16 %v354
        %v2899 = vunpack.c.l.b16 %v355
        %v2900 = vunpack.c.h.b16 %v355
        %v2901 = vunpack.c.l.b16 %v356
        %v2902 = vunpack.c.h.b16 %v356
        %v2903 = vunpack.c.l.b16 %v357
        %v2904 = vunpack.c.h.b16 %v357
        %v2905 = vunpack.c.l.b16 %v358
        %v2906 = vunpack.c.h.b16 %v358
        %v2907 = vunpack.c.l.b16 %v359
        %v2908 = vunpack.c.h.b16 %v359
        %v2909 = vunpack.c.l.b16 %v360
        %v2910 = vunpack.c.h.b16 %v360
        %v2911 = vunpack.c.l.b16 %v361
        %v2912 = vunpack.c.h.b16 %v361
        %v2913 = vunpack.c.l.b16 %v362
        %v2914 = vunpack.c.h.b16 %v362
        %v2915 = vunpack.c.l.b16 %v363
        %v2916 = vunpack.c.h.b16 %v363
        %v2917 = vunpack.c.l.b16 %v364
        %v2918 = vunpack.c.h.b16 %v364
        %v2919 = vunpack.c.l.b16 %v365
        %v2920 = vunpack.c.h.b16 %v365
        %v2921 = vunpack.c.l.b16 %v366
        %v2922 = vunpack.c.h.b16 %v366
        %v2923 = vunpack.c.l.b16 %v367
        %v2924 = vunpack.c.h.b16 %v367
        %v2925 = vunpack.c.l.b16 %v368
        %v2926 = vunpack.c.h.b16 %v368
        %v2927 = vunpack.c.l.b16 %v369
        %v2928 = vunpack.c.h.b16 %v369
        %v2929 = vunpack.c.l.b16 %v370
        %v2930 = vunpack.c.h.b16 %v370
        %v2931 = vunpack.c.l.b16 %v371
        %v2932 = vunpack.c.h.b16 %v371
        %v2933 = vunpack.c.l.b16 %v372
        %v2934 = vunpack.c.h.b16 %v372
        %v2935 = vunpack.c.l.b16 %v373
        %v2936 = vunpack.c.h.b16 %v373
        %v2937 = vunpack.c.l.b16 %v374
        %v2938 = vunpack.c.h.b16 %v374
        %v2939 = vunpack.c.l.b16 %v375
        %v2940 = vunpack.c.h.b16 %v375
        %v2941 = vunpack.c.l.b16 %v376
        %v2942 = vunpack.c.h.b16 %v376
        %v2943 = vunpack.c.l.b16 %v377
        %v2944 = vunpack.c.h.b16 %v377
        %v2945 = vunpack.c.l.b16 %v378
        %v2946 = vunpack.c.h.b16 %v378
        %v2947 = vunpack.c.l.b16 %v379
        %v2948 = vunpack.c.h.b16 %v379
        %v2949 = vunpack.c.l.b16 %v380
        %v2950 = vunpack.c.h.b16 %v380
        %v2951 = vunpack.c.l.b16 %v381
        %v2952 = vunpack.c.h.b16 %v381
        %v2953 = vunpack.c.l.b16 %v382
        %v2954 = vunpack.c.h.b16 %v382
        %v2955 = vunpack.c.l.b16 %v383
        %v2956 = vunpack.c.h.b16 %v383
        %v2957 = vunpack.c.l.b16 %v384
        %v2958 = vunpack.c.h.b16 %v384
        %v2959 = vunpack.c.l.b16 %v385
        %v2960 = vunpack.c.h.b16 %v385
        %v2961 = vunpack.c.l.b16 %v386
        %v2962 = vunpack.c.h.b16 %v386
        %v2963 = vunpack.c.l.b16 %v387
        %v2964 = vunpack.c.h.b16 %v387
        %v2965 = vunpack.c.l.b16 %v388
        %v2966 = vunpack.c.h.b16 %v388
        %v2967 = vunpack.c.l.b16 %v389
        %v2968 = vunpack.c.h.b16 %v389
        %v2969 = vunpack.c.l.b16 %v390
        %v2970 = vunpack.c.h.b16 %v390
        %v2971 = vunpack.c.l.b16 %v391
        %v2972 = vunpack.c.h.b16 %v391
        %v2973 = vunpack.c.l.b16 %v392
        %v2974 = vunpack.c.h.b16 %v392
        %v2975 = vunpack.c.l.b16 %v393
        %v2976 = vunpack.c.h.b16 %v393
        %v2977 = vunpack.c.l.b16 %v394
        %v2978 = vunpack.c.h.b16 %v394
        %v2979 = vunpack.c.l.b16 %v395
        %v2980 = vunpack.c.h.b16 %v395
        %v2981 = vunpack.c.l.b16 %v396
        %v2982 = vunpack.c.h.b16 %v396
        %v2983 = vunpack.c.l.b16 %v397
        %v2984 = vunpack.c.h.b16 %v397
        %v2985 = vunpack.c.l.b16 %v398
        %v2986 = vunpack.c.h.b16 %v398
        %v2987 = vunpack.c.l.b16 %v399
        %v2988 = vunpack.c.h.b16 %v399
        %v2989 = vunpack.c.l.b16 %v400
        %v2990 = vunpack.c.h.b16 %v400
        %v2991 = vunpack.c.l.b16 %v401
        %v2992 = vunpack.c.h.b16 %v401
        %v2993 = vunpack.c.l.b16 %v402
        %v2994 = vunpack.c.h.b16 %v402
        %v2995 = vunpack.c.l.b16 %v403
        %v2996 = vunpack.c.h.b16 %v403
        %v2997 = vunpack.c.l.b16 %v404
        %v2998 = vunpack.c.h.b16 %v404
        %v2999 = vunpack.c.l.b16 %v405
        %v3000 = vunpack.c.h.b16 %v405
        %v3001 = vunpack.c.l.b16 %v406
        %v3002 = vunpack.c.h.b16 %v406
        %v3003 = vunpack.c.l.b16 %v407
        %v3004 = vunpack.c.h.b16 %v407
        %v3005 = vunpack.c.l.b16 %v408
        %v3006 = vunpack.c.h.b16 %v408
        %v3007 = vunpack.c.l.b16 %v409
        %v3008 = vunpack.c.h.b16 %v409
        %v3009 = vunpack.c.l.b16 %v410
        %v3010 = vunpack.c.h.b16 %v410
        %v3011 = vunpack.c.l.b16 %v411
        %v3012 = vunpack.c.h.b16 %v411
        %v3013 = vunpack.c.l.b16 %v412
        %v3014 = vunpack.c.h.b16 %v412
        %v3015 = vunpack.c.l.b16 %v413
        %v3016 = vunpack.c.h.b16 %v413
        %v3017 = vunpack.c.l.b16 %v414
        %v3018 = vunpack.c.h.b16 %v414
        %v3019 = vunpack.c.l.b16 %v415
        %v3020 = vunpack.c.h.b16 %v415
        %v3021 = vunpack.c.l.b16 %v416
        %v3022 = vunpack.c.h.b16 %v416
        %v3023 = vunpack.c.l.b16 %v417
        %v3024 = vunpack.c.h.b16 %v417
        %v3025 = vunpack.c.l.b16 %v418
        %v3026 = vunpack.c.h.b16 %v418
        %v3027 = vunpack.c.l.b16 %v419
        %v3028 = vunpack.c.h.b16 %v419
        %v3029 = vunpack.c.l.b16 %v420
        %v3030 = vunpack.c.h.b16 %v420
        %v3031 = vunpack.c.l.b16 %v421
        %v3032 = vunpack.c.h.b16 %v421
        %v3033 = vunpack.c.l.b16 %v422
        %v3034 = vunpack.c.h.b16 %v422
        %v3035 = vunpack.c.l.b16 %v423
        %v3036 = vunpack.c.h.b16 %v423
        %v3037 = vunpack.c.l.b16 %v424
        %v3038 = vunpack.c.h.b16 %v424
        %v3039 = vunpack.c.l.b16 %v425
        %v3040 = vunpack.c.h.b16 %v425
        %v3041 = vunpack.c.l.b16 %v426
        %v3042 = vunpack.c.h.b16 %v426
        %v3043 = vunpack.c.l.b16 %v427
        %v3044 = vunpack.c.h.b16 %v427
        %v3045 = vunpack.c.l.b16 %v428
        %v3046 = vunpack.c.h.b16 %v428
        %v3047 = vunpack.c.l.b16 %v429
        %v3048 = vunpack.c.h.b16 %v429
        %v3049 = vunpack.c.l.b16 %v430
        %v3050 = vunpack.c.h.b16 %v430
        %v3051 = vunpack.c.l.b16 %v431
        %v3052 = vunpack.c.h.b16 %v431
        %v3053 = vunpack.c.l.b16 %v432
        %v3054 = vunpack.c.h.b16 %v432
        %v3055 = vunpack.c.l.b16 %v433
        %v3056 = vunpack.c.h.b16 %v433
        %v3057 = vunpack.c.l.b16 %v434
        %v3058 = vunpack.c.h.b16 %v434
        %v3059 = vunpack.c.l.b16 %v435
        %v3060 = vunpack.c.h.b16 %v435
        %v3061 = vunpack.c.l.b16 %v436
        %v3062 = vunpack.c.h.b16 %v436
        %v3063 = vunpack.c.l.b16 %v437
        %v3064 = vunpack.c.h.b16 %v437
        %v3065 = vunpack.c.l.b16 %v438
        %v3066 = vunpack.c.h.b16 %v438
        %v3067 = vunpack.c.l.b16 %v439
        %v3068 = vunpack.c.h.b16 %v439
        %v3069 = vunpack.c.l.b16 %v440
        %v3070 = vunpack.c.h.b16 %v440
        %v3071 = vunpack.c.l.b16 %v441
        %v3072 = vunpack.c.h.b16 %v441
        %v3073 = vunpack.c.l.b16 %v442
        %v3074 = vunpack.c.h.b16 %v442
        %v3075 = vunpack.c.l.b16 %v443
        %v3076 = vunpack.c.h.b16 %v443
        %v3077 = vunpack.c.l.b16 %v444
        %v3078 = vunpack.c.h.b16 %v444
        %v3079 = vunpack.c.l.b16 %v445
        %v3080 = vunpack.c.h.b16 %v445
        %v3081 = vunpack.c.l.b16 %v446
        %v3082 = vunpack.c.h.b16 %v446
        %v3083 = vunpack.c.l.b16 %v447
        %v3084 = vunpack.c.h.b16 %v447
        %v3085 = vunpack.c.l.b16 %v448
        %v3086 = vunpack.c.h.b16 %v448
        %v3087 = vunpack.c.l.b16 %v449
        %v3088 = vunpack.c.h.b16 %v449
        %v3089 = vunpack.c.l.b16 %v450
        %v3090 = vunpack.c.h.b16 %v450
        %v3091 = vunpack.c.l.b16 %v451
        %v3092 = vunpack.c.h.b16 %v451
        %v3093 = vunpack.c.l.b16 %v452
        %v3094 = vunpack.c.h.b16 %v452
        %v3095 = vunpack.c.l.b16 %v453
        %v3096 = vunpack.c.h.b16 %v453
        %v3097 = vunpack.c.l.b16 %v454
        %v3098 = vunpack.c.h.b16 %v454
        %v3099 = vunpack.c.l.b16 %v455
        %v3100 = vunpack.c.h.b16 %v455
        %v3101 = vunpack.c.l.b16 %v456
        %v3102 = vunpack.c.h.b16 %v456
        %v3103 = vunpack.c.l.b16 %v457
        %v3104 = vunpack.c.h.b16 %v457
        %v3105 = vunpack.c.l.b16 %v458
        %v3106 = vunpack.c.h.b16 %v458
        %v3107 = vunpack.c.l.b16 %v459
        %v3108 = vunpack.c.h.b16 %v459
        %v3109 = vunpack.c.l.b16 %v460
        %v3110 = vunpack.c.h.b16 %v460
        %v3111 = vunpack.c.l.b16 %v461
        %v3112 = vunpack.c.h.b16 %v461
        %v3113 = vunpack.c.l.b16 %v462
        %v3114 = vunpack.c.h.b16 %v462
        %v3115 = vunpack.c.l.b16 %v463
        %v3116 = vunpack.c.h.b16 %v463
        %v3117 = vunpack.c.l.b16 %v464
        %v3118 = vunpack.c.h.b16 %v464
        %v3119 = vunpack.c.l.b16 %v465
        %v3120 = vunpack.c.h.b16 %v465
        %v3121 = vunpack.c.l.b16 %v466
        %v3122 = vunpack.c.h.b16 %v466
        %v3123 = vunpack.c.l.b16 %v467
        %v3124 = vunpack.c.h.b16 %v467
        %v3125 = vunpack.c.l.b16 %v468
        %v3126 = vunpack.c.h.b16 %v468
        %v3127 = vunpack.c.l.b16 %v469
        %v3128 = vunpack.c.h.b16 %v469
        %v3129 = vunpack.c.l.b16 %v470
        %v3130 = vunpack.c.h.b16 %v470
        %v3131 = vunpack.c.l.b16 %v471
        %v3132 = vunpack.c.h.b16 %v471
        %v3133 = vunpack.c.l.b16 %v472
        %v3134 = vunpack.c.h.b16 %v472
        %v3135 = vunpack.c.l.b16 %v473
        %v3136 = vunpack.c.h.b16 %v473
        %v3137 = vunpack.c.l.b16 %v474
        %v3138 = vunpack.c.h.b16 %v474
        %v3139 = vunpack.c.l.b16 %v475
        %v3140 = vunpack.c.h.b16 %v475
        %v3141 = vunpack.c.l.b16 %v476
        %v3142 = vunpack.c.h.b16 %v476
        %v3143 = vunpack.c.l.b16 %v477
        %v3144 = vunpack.c.h.b16 %v477
        %v3145 = vunpack.c.l.b16 %v478
        %v3146 = vunpack.c.h.b16 %v478
        %v3147 = vunpack.c.l.b16 %v479
        %v3148 = vunpack.c.h.b16 %v479
        %v3149 = vunpack.c.l.b16 %v480
        %v3150 = vunpack.c.h.b16 %v480
        %v3151 = vunpack.c.l.b16 %v481
        %v3152 = vunpack.c.h.b16 %v481
        %v3153 = vunpack.c.l.b16 %v482
        %v3154 = vunpack.c.h.b16 %v482
        %v3155 = vunpack.c.l.b16 %v483
        %v3156 = vunpack.c.h.b16 %v483
        %v3157 = vunpack.c.l.b16 %v484
        %v3158 = vunpack.c.h.b16 %v484
        %v3159 = vunpack.c.l.b16 %v485
        %v3160 = vunpack.c.h.b16 %v485
        %v3161 = vunpack.c.l.b16 %v486
        %v3162 = vunpack.c.h.b16 %v486
        %v3163 = vunpack.c.l.b16 %v487
        %v3164 = vunpack.c.h.b16 %v487
        %v3165 = vunpack.c.l.b16 %v488
        %v3166 = vunpack.c.h.b16 %v488
        %v3167 = vunpack.c.l.b16 %v489
        %v3168 = vunpack.c.h.b16 %v489
        %v3169 = vunpack.c.l.b16 %v490
        %v3170 = vunpack.c.h.b16 %v490
        %v3171 = vunpack.c.l.b16 %v491
        %v3172 = vunpack.c.h.b16 %v491
        %v3173 = vunpack.c.l.b16 %v492
        %v3174 = vunpack.c.h.b16 %v492
        %v3175 = vunpack.c.l.b16 %v493
        %v3176 = vunpack.c.h.b16 %v493
        %v3177 = vunpack.c.l.b16 %v494
        %v3178 = vunpack.c.h.b16 %v494
        %v3179 = vunpack.c.l.b16 %v495
        %v3180 = vunpack.c.h.b16 %v495
        %v3181 = vunpack.c.l.b16 %v496
        %v3182 = vunpack.c.h.b16 %v496
        %v3183 = vunpack.c.l.b16 %v497
        %v3184 = vunpack.c.h.b16 %v497
        %v3185 = vunpack.c.l.b16 %v498
        %v3186 = vunpack.c.h.b16 %v498
        %v3187 = vunpack.c.l.b16 %v499
        %v3188 = vunpack.c.h.b16 %v499
        %v3189 = vunpack.c.l.b16 %v500
        %v3190 = vunpack.c.h.b16 %v500
        %v3191 = vunpack.c.l.b16 %v501
        %v3192 = vunpack.c.h.b16 %v501
        %v3193 = vunpack.c.l.b16 %v502
        %v3194 = vunpack.c.h.b16 %v502
        %v3195 = vunpack.c.l.b16 %v503
        %v3196 = vunpack.c.h.b16 %v503
        %v3197 = vunpack.c.l.b16 %v504
        %v3198 = vunpack.c.h.b16 %v504
        %v3199 = vunpack.c.l.b16 %v505
        %v3200 = vunpack.c.h.b16 %v505
        %v3201 = vunpack.c.l.b16 %v506
        %v3202 = vunpack.c.h.b16 %v506
        %v3203 = vunpack.c.l.b16 %v507
        %v3204 = vunpack.c.h.b16 %v507
        %v3205 = vunpack.c.l.b16 %v508
        %v3206 = vunpack.c.h.b16 %v508
        %v3207 = vunpack.c.l.b16 %v509
        %v3208 = vunpack.c.h.b16 %v509
        %v3209 = vunpack.c.l.b16 %v510
        %v3210 = vunpack.c.h.b16 %v510
        %v3211 = vunpack.c.l.b16 %v511
        %v3212 = vunpack.c.h.b16 %v511
        %v3213 = vunpack.c.l.b16 %v512
        %v3214 = vunpack.c.h.b16 %v512
        %v3215 = vunpack.c.l.b16 %v513
        %v3216 = vunpack.c.h.b16 %v513
        %v3217 = vunpack.c.l.b16 %v514
        %v3218 = vunpack.c.h.b16 %v514
        %v3219 = vunpack.c.l.b16 %v515
        %v3220 = vunpack.c.h.b16 %v515
        %v3221 = vunpack.c.l.b16 %v516
        %v3222 = vunpack.c.h.b16 %v516
        %v3223 = vunpack.c.l.b16 %v517
        %v3224 = vunpack.c.h.b16 %v517
        %v3225 = vunpack.c.l.b16 %v518
        %v3226 = vunpack.c.h.b16 %v518
        %v3227 = vunpack.c.l.b16 %v519
        %v3228 = vunpack.c.h.b16 %v519
        %v3229 = vunpack.c.l.b16 %v520
        %v3230 = vunpack.c.h.b16 %v520
        %v3231 = vunpack.c.l.b16 %v521
        %v3232 = vunpack.c.h.b16 %v521
        %v3233 = vunpack.c.l.b16 %v522
        %v3234 = vunpack.c.h.b16 %v522
        %v3235 = vunpack.c.l.b16 %v523
        %v3236 = vunpack.c.h.b16 %v523
        %v3237 = vunpack.c.l.b16 %v524
        %v3238 = vunpack.c.h.b16 %v524
        %v3239 = vunpack.c.l.b16 %v525
        %v3240 = vunpack.c.h.b16 %v525
        %v3241 = vunpack.c.l.b16 %v526
        %v3242 = vunpack.c.h.b16 %v526
        %v3243 = vunpack.c.l.b16 %v527
        %v3244 = vunpack.c.h.b16 %v527
        %v3245 = vunpack.c.l.b16 %v528
        %v3246 = vunpack.c.h.b16 %v528
        %v3247 = vunpack.c.l.b16 %v529
        %v3248 = vunpack.c.h.b16 %v529
        %v3249 = vunpack.c.l.b16 %v530
        %v3250 = vunpack.c.h.b16 %v530
        %v3251 = vunpack.c.l.b16 %v531
        %v3252 = vunpack.c.h.b16 %v531
        %v3253 = vunpack.c.l.b16 %v532
        %v3254 = vunpack.c.h.b16 %v532
        %v3255 = vunpack.c.l.b16 %v533
        %v3256 = vunpack.c.h.b16 %v533
        %v3257 = vunpack.c.l.b16 %v534
        %v3258 = vunpack.c.h.b16 %v534
        %v3259 = vunpack.c.l.b16 %v535
        %v3260 = vunpack.c.h.b16 %v535
        %v3261 = vunpack.c.l.b16 %v536
        %v3262 = vunpack.c.h.b16 %v536
        %v3263 = vunpack.c.l.b16 %v537
        %v3264 = vunpack.c.h.b16 %v537
        %v3265 = vunpack.c.l.b16 %v538
        %v3266 = vunpack.c.h.b16 %v538
        %v3267 = vunpack.c.l.b16 %v539
        %v3268 = vunpack.c.h.b16 %v539
        %v3269 = vunpack.c.l.b16 %v540
        %v3270 = vunpack.c.h.b16 %v540
        %v3271 = vunpack.c.l.b16 %v541
        %v3272 = vunpack.c.h.b16 %v541
        %v3273 = vunpack.c.l.b16 %v542
        %v3274 = vunpack.c.h.b16 %v542
        %v3275 = vunpack.c.l.b16 %v543
        %v3276 = vunpack.c.h.b16 %v543
        %v3277 = vunpack.c.l.b16 %v544
        %v3278 = vunpack.c.h.b16 %v544
        %v3279 = vunpack.c.l.b16 %v545
        %v3280 = vunpack.c.h.b16 %v545
        %v3281 = vunpack.c.l.b16 %v546
        %v3282 = vunpack.c.h.b16 %v546
        %v3283 = vunpack.c.l.b16 %v547
        %v3284 = vunpack.c.h.b16 %v547
        %v3285 = vunpack.c.l.b16 %v548
        %v3286 = vunpack.c.h.b16 %v548
        %v3287 = vunpack.c.l.b16 %v549
        %v3288 = vunpack.c.h.b16 %v549
        %v3289 = vunpack.c.l.b16 %v550
        %v3290 = vunpack.c.h.b16 %v550
        %v3291 = vunpack.c.l.b16 %v551
        %v3292 = vunpack.c.h.b16 %v551
        %v3293 = vunpack.c.l.b16 %v552
        %v3294 = vunpack.c.h.b16 %v552
        %v3295 = vunpack.c.l.b16 %v553
        %v3296 = vunpack.c.h.b16 %v553
        %v3297 = vunpack.c.l.b16 %v554
        %v3298 = vunpack.c.h.b16 %v554
        %v3299 = vunpack.c.l.b16 %v555
        %v3300 = vunpack.c.h.b16 %v555
        %v3301 = vunpack.c.l.b16 %v556
        %v3302 = vunpack.c.h.b16 %v556
        %v3303 = vunpack.c.l.b16 %v557
        %v3304 = vunpack.c.h.b16 %v557
        %v3305 = vunpack.c.l.b16 %v558
        %v3306 = vunpack.c.h.b16 %v558
        %v3307 = vunpack.c.l.b16 %v559
        %v3308 = vunpack.c.h.b16 %v559
        %v3309 = vunpack.c.l.b16 %v560
        %v3310 = vunpack.c.h.b16 %v560
        %v3311 = vunpack.c.l.b16 %v561
        %v3312 = vunpack.c.h.b16 %v561
        %v3313 = vunpack.c.l.b16 %v562
        %v3314 = vunpack.c.h.b16 %v562
        %v3315 = vunpack.c.l.b16 %v563
        %v3316 = vunpack.c.h.b16 %v563
        %v3317 = vunpack.c.l.b16 %v564
        %v3318 = vunpack.c.h.b16 %v564
        %v3319 = vunpack.c.l.b16 %v565
        %v3320 = vunpack.c.h.b16 %v565
        %v3321 = vunpack.c.l.b16 %v566
        %v3322 = vunpack.c.h.b16 %v566
        %v3323 = vunpack.c.l.b16 %v567
        %v3324 = vunpack.c.h.b16 %v567
        %v3325 = vunpack.c.l.b16 %v568
        %v3326 = vunpack.c.h.b16 %v568
        %v3327 = vunpack.c.l.b16 %v569
        %v3328 = vunpack.c.h.b16 %v569
        %v3329 = vunpack.c.l.b16 %v570
        %v3330 = vunpack.c.h.b16 %v570
        %v3331 = vunpack.c.l.b16 %v571
        %v3332 = vunpack.c.h.b16 %v571
        %v3333 = vunpack.c.l.b16 %v572
        %v3334 = vunpack.c.h.b16 %v572
        %v3335 = vunpack.c.l.b16 %v573
        %v3336 = vunpack.c.h.b16 %v573
        %v3337 = vunpack.c.l.b16 %v574
        %v3338 = vunpack.c.h.b16 %v574
        %v3339 = vunpack.c.l.b16 %v575
        %v3340 = vunpack.c.h.b16 %v575
        %v3341 = vunpack.c.l.b16 %v576
        %v3342 = vunpack.c.h.b16 %v576
        %v3343 = vunpack.c.l.b16 %v577
        %v3344 = vunpack.c.h.b16 %v577
        %v3345 = vunpack.c.l.b16 %v578
        %v3346 = vunpack.c.h.b16 %v578
        %v3347 = vunpack.c.l.b16 %v579
        %v3348 = vunpack.c.h.b16 %v579
        %v3349 = vunpack.c.l.b16 %v580
        %v3350 = vunpack.c.h.b16 %v580
        %v3351 = vunpack.c.l.b16 %v581
        %v3352 = vunpack.c.h.b16 %v581
        %v3353 = vunpack.c.l.b16 %v582
        %v3354 = vunpack.c.h.b16 %v582
        %v3355 = vunpack.c.l.b16 %v583
        %v3356 = vunpack.c.h.b16 %v583
        %v3357 = vunpack.c.l.b16 %v584
        %v3358 = vunpack.c.h.b16 %v584
        %v3359 = vunpack.c.l.b16 %v585
        %v3360 = vunpack.c.h.b16 %v585
        %v3361 = vunpack.c.l.b16 %v586
        %v3362 = vunpack.c.h.b16 %v586
        %v3363 = vunpack.c.l.b16 %v587
        %v3364 = vunpack.c.h.b16 %v587
        %v3365 = vunpack.c.l.b16 %v588
        %v3366 = vunpack.c.h.b16 %v588
        %v3367 = vunpack.c.l.b16 %v589
        %v3368 = vunpack.c.h.b16 %v589
        %v3369 = vunpack.c.l.b16 %v590
        %v3370 = vunpack.c.h.b16 %v590
        %v3371 = vunpack.c.l.b16 %v591
        %v3372 = vunpack.c.h.b16 %v591
        %v3373 = vunpack.c.l.b16 %v592
        %v3374 = vunpack.c.h.b16 %v592
        %v3375 = vunpack.c.l.b16 %v593
        %v3376 = vunpack.c.h.b16 %v593
        %v3377 = vunpack.c.l.b16 %v594
        %v3378 = vunpack.c.h.b16 %v594
        %v3379 = vunpack.c.l.b16 %v595
        %v3380 = vunpack.c.h.b16 %v595
        %v3381 = vunpack.c.l.b16 %v596
        %v3382 = vunpack.c.h.b16 %v596
        %v3383 = vunpack.c.l.b16 %v597
        %v3384 = vunpack.c.h.b16 %v597
        %v3385 = vunpack.c.l.b16 %v598
        %v3386 = vunpack.c.h.b16 %v598
        %v3387 = vunpack.c.l.b16 %v599
        %v3388 = vunpack.c.h.b16 %v599
        %v3389 = vunpack.c.l.b16 %v600
        %v3390 = vunpack.c.h.b16 %v600
        %v3391 = vunpack.c.l.b16 %v601
        %v3392 = vunpack.c.h.b16 %v601
        %v3393 = vunpack.c.l.b16 %v602
        %v3394 = vunpack.c.h.b16 %v602
        %v3395 = vunpack.c.l.b16 %v603
        %v3396 = vunpack.c.h.b16 %v603
        %v3397 = vunpack.c.l.b16 %v604
        %v3398 = vunpack.c.h.b16 %v604
        %v3399 = vunpack.c.l.b16 %v605
        %v3400 = vunpack.c.h.b16 %v605
        %v3401 = vunpack.c.l.b16 %v606
        %v3402 = vunpack.c.h.b16 %v606
        %v3403 = vunpack.c.l.b16 %v607
        %v3404 = vunpack.c.h.b16 %v607
        %v3405 = vunpack.c.l.b16 %v608
        %v3406 = vunpack.c.h.b16 %v608
        %v3407 = vunpack.c.l.b16 %v609
        %v3408 = vunpack.c.h.b16 %v609
        %v3409 = vunpack.c.l.b16 %v610
        %v3410 = vunpack.c.h.b16 %v610
        %v3411 = vunpack.c.l.b16 %v611
        %v3412 = vunpack.c.h.b16 %v611
        %v3413 = vunpack.c.l.b16 %v612
        %v3414 = vunpack.c.h.b16 %v612
        %v3415 = vunpack.c.l.b16 %v613
        %v3416 = vunpack.c.h.b16 %v613
        %v3417 = vunpack.c.l.b16 %v614
        %v3418 = vunpack.c.h.b16 %v614
        %v3419 = vunpack.c.l.b16 %v615
        %v3420 = vunpack.c.h.b16 %v615
        %v3421 = vunpack.c.l.b16 %v616
        %v3422 = vunpack.c.h.b16 %v616
        %v3423 = vunpack.c.l.b16 %v617
        %v3424 = vunpack.c.h.b16 %v617
        %v3425 = vunpack.c.l.b16 %v618
        %v3426 = vunpack.c.h.b16 %v618
        %v3427 = vunpack.c.l.b16 %v619
        %v3428 = vunpack.c.h.b16 %v619
        %v3429 = vunpack.c.l.b16 %v620
        %v3430 = vunpack.c.h.b16 %v620
        %v3431 = vunpack.c.l.b16 %v621
        %v3432 = vunpack.c.h.b16 %v621
        %v3433 = vunpack.c.l.b16 %v622
        %v3434 = vunpack.c.h.b16 %v622
        %v3435 = vunpack.c.l.b16 %v623
        %v3436 = vunpack.c.h.b16 %v623
        %v3437 = vunpack.c.l.b16 %v624
        %v3438 = vunpack.c.h.b16 %v624
        %v3439 = vunpack.c.l.b16 %v625
        %v3440 = vunpack.c.h.b16 %v625
        %v3441 = vunpack.c.l.b16 %v626
        %v3442 = vunpack.c.h.b16 %v626
        %v3443 = vunpack.c.l.b16 %v627
        %v3444 = vunpack.c.h.b16 %v627
        %v3445 = vunpack.c.l.b16 %v628
        %v3446 = vunpack.c.h.b16 %v628
        %v3447 = vunpack.c.l.b16 %v629
        %v3448 = vunpack.c.h.b16 %v629
        %v3449 = vunpack.c.l.b16 %v630
        %v3450 = vunpack.c.h.b16 %v630
        %v3451 = vunpack.c.l.b16 %v631
        %v3452 = vunpack.c.h.b16 %v631
        %v3453 = vunpack.c.l.b16 %v632
        %v3454 = vunpack.c.h.b16 %v632
        %v3455 = vunpack.c.l.b16 %v633
        %v3456 = vunpack.c.h.b16 %v633
        %v3457 = vunpack.c.l.b16 %v634
        %v3458 = vunpack.c.h.b16 %v634
        %v3459 = vunpack.c.l.b16 %v635
        %v3460 = vunpack.c.h.b16 %v635
        %v3461 = vunpack.c.l.b16 %v636
        %v3462 = vunpack.c.h.b16 %v636
        %v3463 = vunpack.c.l.b16 %v637
        %v3464 = vunpack.c.h.b16 %v637
        %v3465 = vunpack.c.l.b16 %v638
        %v3466 = vunpack.c.h.b16 %v638
        %v3467 = vunpack.c.l.b16 %v639
        %v3468 = vunpack.c.h.b16 %v639
        %v3469 = vunpack.c.l.b16 %v640
        %v3470 = vunpack.c.h.b16 %v640
        %v3471 = vunpack.c.l.b16 %v641
        %v3472 = vunpack.c.h.b16 %v641
        %v3473 = vunpack.c.l.b16 %v642
        %v3474 = vunpack.c.h.b16 %v642
        %v3475 = vunpack.c.l.b16 %v643
        %v3476 = vunpack.c.h.b16 %v643
        %v3477 = vunpack.c.l.b16 %v644
        %v3478 = vunpack.c.h.b16 %v644
        %v3479 = vunpack.c.l.b16 %v645
        %v3480 = vunpack.c.h.b16 %v645
        %v3481 = vunpack.c.l.b16 %v646
        %v3482 = vunpack.c.h.b16 %v646
        %v3483 = vunpack.c.l.b16 %v647
        %v3484 = vunpack.c.h.b16 %v647
        %v3485 = vunpack.c.l.b16 %v648
        %v3486 = vunpack.c.h.b16 %v648
        %v3487 = vunpack.c.l.b16 %v649
        %v3488 = vunpack.c.h.b16 %v649
        %v3489 = vunpack.c.l.b16 %v650
        %v3490 = vunpack.c.h.b16 %v650
        %v3491 = vunpack.c.l.b16 %v651
        %v3492 = vunpack.c.h.b16 %v651
        %v3493 = vunpack.c.l.b16 %v652
        %v3494 = vunpack.c.h.b16 %v652
        %v3495 = vunpack.c.l.b16 %v653
        %v3496 = vunpack.c.h.b16 %v653
        %v3497 = vunpack.c.l.b16 %v654
        %v3498 = vunpack.c.h.b16 %v654
        %v3499 = vunpack.c.l.b16 %v655
        %v3500 = vunpack.c.h.b16 %v655
        %v3501 = vunpack.c.l.b16 %v656
        %v3502 = vunpack.c.h.b16 %v656
        %v3503 = vunpack.c.l.b16 %v657
        %v3504 = vunpack.c.h.b16 %v657
        %v3505 = vunpack.c.l.b16 %v658
        %v3506 = vunpack.c.h.b16 %v658
        %v3507 = vunpack.c.l.b16 %v659
        %v3508 = vunpack.c.h.b16 %v659
        %v3509 = vunpack.c.l.b16 %v660
        %v3510 = vunpack.c.h.b16 %v660
        %v3511 = vunpack.c.l.b16 %v661
        %v3512 = vunpack.c.h.b16 %v661
        %v3513 = vunpack.c.l.b16 %v662
        %v3514 = vunpack.c.h.b16 %v662
        %v3515 = vunpack.c.l.b16 %v663
        %v3516 = vunpack.c.h.b16 %v663
        %v3517 = vunpack.c.l.b16 %v664
        %v3518 = vunpack.c.h.b16 %v664
        %v3519 = vunpack.c.l.b16 %v665
        %v3520 = vunpack.c.h.b16 %v665
        %v3521 = vunpack.c.l.b16 %v666
        %v3522 = vunpack.c.h.b16 %v666
        %v3523 = vunpack.c.l.b16 %v667
        %v3524 = vunpack.c.h.b16 %v667
        %v3525 = vunpack.c.l.b16 %v668
        %v3526 = vunpack.c.h.b16 %v668
        %v3527 = vunpack.c.l.b16 %v669
        %v3528 = vunpack.c.h.b16 %v669
        %v3529 = vunpack.c.l.b16 %v670
        %v3530 = vunpack.c.h.b16 %v670
        %v3531 = vunpack.c.l.b16 %v671
        %v3532 = vunpack.c.h.b16 %v671
        %v3533 = vunpack.c.l.b16 %v672
        %v3534 = vunpack.c.h.b16 %v672
        %v3535 = vunpack.c.l.b16 %v673
        %v3536 = vunpack.c.h.b16 %v673
        %v3537 = vunpack.c.l.b16 %v674
        %v3538 = vunpack.c.h.b16 %v674
        %v3539 = vunpack.c.l.b16 %v675
        %v3540 = vunpack.c.h.b16 %v675
        %v3541 = vunpack.c.l.b16 %v676
        %v3542 = vunpack.c.h.b16 %v676
        %v3543 = vunpack.c.l.b16 %v677
        %v3544 = vunpack.c.h.b16 %v677
        %v3545 = vunpack.c.l.b16 %v678
        %v3546 = vunpack.c.h.b16 %v678
        %v3547 = vunpack.c.l.b16 %v679
        %v3548 = vunpack.c.h.b16 %v679
        %v3549 = vunpack.c.l.b16 %v680
        %v3550 = vunpack.c.h.b16 %v680
        %v3551 = vunpack.c.l.b16 %v681
        %v3552 = vunpack.c.h.b16 %v681
        %v3553 = vunpack.c.l.b16 %v682
        %v3554 = vunpack.c.h.b16 %v682
        %v3555 = vunpack.c.l.b16 %v683
        %v3556 = vunpack.c.h.b16 %v683
        %v3557 = vunpack.c.l.b16 %v684
        %v3558 = vunpack.c.h.b16 %v684
        %v3559 = vunpack.c.l.b16 %v685
        %v3560 = vunpack.c.h.b16 %v685
        %v3561 = vunpack.c.l.b16 %v686
        %v3562 = vunpack.c.h.b16 %v686
        %v3563 = vunpack.c.l.b16 %v687
        %v3564 = vunpack.c.h.b16 %v687
        %v3565 = vunpack.c.l.b16 %v688
        %v3566 = vunpack.c.h.b16 %v688
        %v3567 = vunpack.c.l.b16 %v689
        %v3568 = vunpack.c.h.b16 %v689
        %v3569 = vunpack.c.l.b16 %v690
        %v3570 = vunpack.c.h.b16 %v690
        %v3571 = vunpack.c.l.b16 %v691
        %v3572 = vunpack.c.h.b16 %v691
        %v3573 = vunpack.c.l.b16 %v692
        %v3574 = vunpack.c.h.b16 %v692
        %v3575 = vunpack.c.l.b16 %v693
        %v3576 = vunpack.c.h.b16 %v693
        %v3577 = vunpack.c.l.b16 %v694
        %v3578 = vunpack.c.h.b16 %v694
        %v3579 = vunpack.c.l.b16 %v695
        %v3580 = vunpack.c.h.b16 %v695
        %v3581 = vunpack.c.l.b16 %v696
        %v3582 = vunpack.c.h.b16 %v696
        %v3583 = vunpack.c.l.b16 %v697
        %v3584 = vunpack.c.h.b16 %v697
        %v3585 = vunpack.c.l.b16 %v698
        %v3586 = vunpack.c.h.b16 %v698
        %v3587 = vunpack.c.l.b16 %v699
        %v3588 = vunpack.c.h.b16 %v699
        %v3589 = vunpack.c.l.b16 %v700
        %v3590 = vunpack.c.h.b16 %v700
        %v3591 = vunpack.c.l.b16 %v701
        %v3592 = vunpack.c.h.b16 %v701
        %v3593 = vunpack.c.l.b16 %v702
        %v3594 = vunpack.c.h.b16 %v702
        %v3595 = vunpack.c.l.b16 %v703
        %v3596 = vunpack.c.h.b16 %v703
        %v3597 = vunpack.c.l.b16 %v704
        %v3598 = vunpack.c.h.b16 %v704
        %v3599 = vunpack.c.l.b16 %v705
        %v3600 = vunpack.c.h.b16 %v705
        %v3601 = vunpack.c.l.b16 %v706
        %v3602 = vunpack.c.h.b16 %v706
        %v3603 = vunpack.c.l.b16 %v707
        %v3604 = vunpack.c.h.b16 %v707
        %v3605 = vunpack.c.l.b16 %v708
        %v3606 = vunpack.c.h.b16 %v708
        %v3607 = vunpack.c.l.b16 %v709
        %v3608 = vunpack.c.h.b16 %v709
        %v3609 = vunpack.c.l.b16 %v710
        %v3610 = vunpack.c.h.b16 %v710
        %v3611 = vunpack.c.l.b16 %v711
        %v3612 = vunpack.c.h.b16 %v711
        %v3613 = vunpack.c.l.b16 %v712
        %v3614 = vunpack.c.h.b16 %v712
        %v3615 = vunpack.c.l.b16 %v713
        %v3616 = vunpack.c.h.b16 %v713
        %v3617 = vunpack.c.l.b16 %v714
        %v3618 = vunpack.c.h.b16 %v714
        %v3619 = vunpack.c.l.b16 %v715
        %v3620 = vunpack.c.h.b16 %v715
        %v3621 = vunpack.c.l.b16 %v716
        %v3622 = vunpack.c.h.b16 %v716
        %v3623 = vunpack.c.l.b16 %v717
        %v3624 = vunpack.c.h.b16 %v717
        %v3625 = vunpack.c.l.b16 %v718
        %v3626 = vunpack.c.h.b16 %v718
        %v3627 = vunpack.c.l.b16 %v719
        %v3628 = vunpack.c.h.b16 %v719
        %v3629 = vunpack.c.l.b16 %v720
        %v3630 = vunpack.c.h.b16 %v720
        %v3631 = vunpack.c.l.b16 %v721
        %v3632 = vunpack.c.h.b16 %v721
        %v3633 = vunpack.c.l.b16 %v722
        %v3634 = vunpack.c.h.b16 %v722
        %v3635 = vunpack.c.l.b16 %v723
        %v3636 = vunpack.c.h.b16 %v723
        %v3637 = vunpack.c.l.b16 %v724
        %v3638 = vunpack.c.h.b16 %v724
        %v3639 = vunpack.c.l.b16 %v725
        %v3640 = vunpack.c.h.b16 %v725
        %v3641 = vunpack.c.l.b16 %v726
        %v3642 = vunpack.c.h.b16 %v726
        %v3643 = vunpack.c.l.b16 %v727
        %v3644 = vunpack.c.h.b16 %v727
        %v3645 = vunpack.c.l.b16 %v728
        %v3646 = vunpack.c.h.b16 %v728
        %v3647 = vunpack.c.l.b16 %v729
        %v3648 = vunpack.c.h.b16 %v729
        %v3649 = vunpack.c.l.b16 %v730
        %v3650 = vunpack.c.h.b16 %v730
        %v3651 = vunpack.c.l.b16 %v731
        %v3652 = vunpack.c.h.b16 %v731
        %v3653 = vunpack.c.l.b16 %v732
        %v3654 = vunpack.c.h.b16 %v732
        %v3655 = vunpack.c.l.b16 %v733
        %v3656 = vunpack.c.h.b16 %v733
        %v3657 = vunpack.c.l.b16 %v734
        %v3658 = vunpack.c.h.b16 %v734
        %v3659 = vunpack.c.l.b16 %v735
        %v3660 = vunpack.c.h.b16 %v735
        %v3661 = vunpack.c.l.b16 %v736
        %v3662 = vunpack.c.h.b16 %v736
        %v3663 = vunpack.c.l.b16 %v737
        %v3664 = vunpack.c.h.b16 %v737
        %v3665 = vunpack.c.l.b16 %v738
        %v3666 = vunpack.c.h.b16 %v738
        %v3667 = vunpack.c.l.b16 %v739
        %v3668 = vunpack.c.h.b16 %v739
        %v3669 = vunpack.c.l.b16 %v740
        %v3670 = vunpack.c.h.b16 %v740
        %v3671 = vunpack.c.l.b16 %v741
        %v3672 = vunpack.c.h.b16 %v741
        %v3673 = vunpack.c.l.b16 %v742
        %v3674 = vunpack.c.h.b16 %v742
        %v3675 = vunpack.c.l.b16 %v743
        %v3676 = vunpack.c.h.b16 %v743
        %v3677 = vunpack.c.l.b16 %v744
        %v3678 = vunpack.c.h.b16 %v744
        %v3679 = vunpack.c.l.b16 %v745
        %v3680 = vunpack.c.h.b16 %v745
        %v3681 = vunpack.c.l.b16 %v746
        %v3682 = vunpack.c.h.b16 %v746
        %v3683 = vunpack.c.l.b16 %v747
        %v3684 = vunpack.c.h.b16 %v747
        %v3685 = vunpack.c.l.b16 %v748
        %v3686 = vunpack.c.h.b16 %v748
        %v3687 = vunpack.c.l.b16 %v749
        %v3688 = vunpack.c.h.b16 %v749
        %v3689 = vunpack.c.l.b16 %v750
        %v3690 = vunpack.c.h.b16 %v750
        %v3691 = vunpack.c.l.b16 %v751
        %v3692 = vunpack.c.h.b16 %v751
        %v3693 = vunpack.c.l.b16 %v752
        %v3694 = vunpack.c.h.b16 %v752
        %v3695 = vunpack.c.l.b16 %v753
        %v3696 = vunpack.c.h.b16 %v753
        %v3697 = vunpack.c.l.b16 %v754
        %v3698 = vunpack.c.h.b16 %v754
        %v3699 = vunpack.c.l.b16 %v755
        %v3700 = vunpack.c.h.b16 %v755
        %v3701 = vunpack.c.l.b16 %v756
        %v3702 = vunpack.c.h.b16 %v756
        %v3703 = vunpack.c.l.b16 %v757
        %v3704 = vunpack.c.h.b16 %v757
        %v3705 = vunpack.c.l.b16 %v758
        %v3706 = vunpack.c.h.b16 %v758
        %v3707 = vunpack.c.l.b16 %v759
        %v3708 = vunpack.c.h.b16 %v759
        %v3709 = vunpack.c.l.b16 %v760
        %v3710 = vunpack.c.h.b16 %v760
        %v3711 = vunpack.c.l.b16 %v761
        %v3712 = vunpack.c.h.b16 %v761
        %v3713 = vunpack.c.l.b16 %v762
        %v3714 = vunpack.c.h.b16 %v762
        %v3715 = vunpack.c.l.b16 %v763
        %v3716 = vunpack.c.h.b16 %v763
        %v3717 = vunpack.c.l.b16 %v764
        %v3718 = vunpack.c.h.b16 %v764
        %v3719 = vunpack.c.l.b16 %v765
        %v3720 = vunpack.c.h.b16 %v765
        %v3721 = vunpack.c.l.b16 %v766
        %v3722 = vunpack.c.h.b16 %v766
        %v3723 = vunpack.c.l.b16 %v767
        %v3724 = vunpack.c.h.b16 %v767
        %v3725 = vunpack.c.l.b16 %v768
        %v3726 = vunpack.c.h.b16 %v768
        %v3727 = vunpack.c.l.b16 %v769
        %v3728 = vunpack.c.h.b16 %v769
        %v3729 = vunpack.c.l.b16 %v770
        %v3730 = vunpack.c.h.b16 %v770
        %v3731 = vunpack.c.l.b16 %v771
        %v3732 = vunpack.c.h.b16 %v771
        %v3733 = vunpack.c.l.b16 %v772
        %v3734 = vunpack.c.h.b16 %v772
        %v3735 = vunpack.c.l.b16 %v773
        %v3736 = vunpack.c.h.b16 %v773
        %v3737 = vunpack.c.l.b16 %v774
        %v3738 = vunpack.c.h.b16 %v774
        %v3739 = vunpack.c.l.b16 %v775
        %v3740 = vunpack.c.h.b16 %v775
        %v3741 = vunpack.c.l.b16 %v776
        %v3742 = vunpack.c.h.b16 %v776
        %v3743 = vunpack.c.l.b16 %v777
        %v3744 = vunpack.c.h.b16 %v777
        %v3745 = vunpack.c.l.b16 %v778
        %v3746 = vunpack.c.h.b16 %v778
        %v3747 = vunpack.c.l.b16 %v779
        %v3748 = vunpack.c.h.b16 %v779
        %v3749 = vunpack.c.l.b16 %v780
        %v3750 = vunpack.c.h.b16 %v780
        %v3751 = vunpack.c.l.b16 %v781
        %v3752 = vunpack.c.h.b16 %v781
        %v3753 = vunpack.c.l.b16 %v782
        %v3754 = vunpack.c.h.b16 %v782
        %v3755 = vunpack.c.l.b16 %v783
        %v3756 = vunpack.c.h.b16 %v783
        %v3757 = vunpack.c.l.b16 %v784
        %v3758 = vunpack.c.h.b16 %v784
        %v3759 = vunpack.c.l.b16 %v785
        %v3760 = vunpack.c.h.b16 %v785
        %v3761 = vunpack.c.l.b16 %v786
        %v3762 = vunpack.c.h.b16 %v786
        %v3763 = vunpack.c.l.b16 %v787
        %v3764 = vunpack.c.h.b16 %v787
        %v3765 = vunpack.c.l.b16 %v788
        %v3766 = vunpack.c.h.b16 %v788
        %v3767 = vunpack.c.l.b16 %v789
        %v3768 = vunpack.c.h.b16 %v789
        %v3769 = vunpack.c.l.b16 %v790
        %v3770 = vunpack.c.h.b16 %v790
        %v3771 = vunpack.c.l.b16 %v791
        %v3772 = vunpack.c.h.b16 %v791
        %v3773 = vunpack.c.l.b16 %v792
        %v3774 = vunpack.c.h.b16 %v792
        %v3775 = vunpack.c.l.b16 %v793
        %v3776 = vunpack.c.h.b16 %v793
        %v3777 = vunpack.c.l.b16 %v794
        %v3778 = vunpack.c.h.b16 %v794
        %v3779 = vunpack.c.l.b16 %v795
        %v3780 = vunpack.c.h.b16 %v795
        %v3781 = vunpack.c.l.b16 %v796
        %v3782 = vunpack.c.h.b16 %v796
        %v3783 = vunpack.c.l.b16 %v797
        %v3784 = vunpack.c.h.b16 %v797
        %v3785 = vunpack.c.l.b16 %v798
        %v3786 = vunpack.c.h.b16 %v798
        %v3787 = vunpack.c.l.b16 %v799
        %v3788 = vunpack.c.h.b16 %v799
        %v3789 = vunpack.c.l.b16 %v800
        %v3790 = vunpack.c.h.b16 %v800
        %v3791 = vunpack.c.l.b16 %v801
        %v3792 = vunpack.c.h.b16 %v801
        %v3793 = vunpack.c.l.b16 %v802
        %v3794 = vunpack.c.h.b16 %v802
        %v3795 = vunpack.c.l.b16 %v803
        %v3796 = vunpack.c.h.b16 %v803
        %v3797 = vunpack.c.l.b16 %v804
        %v3798 = vunpack.c.h.b16 %v804
        %v3799 = vunpack.c.l.b16 %v805
        %v3800 = vunpack.c.h.b16 %v805
        %v3801 = vunpack.c.l.b16 %v806
        %v3802 = vunpack.c.h.b16 %v806
        %v3803 = vunpack.c.l.b16 %v807
        %v3804 = vunpack.c.h.b16 %v807
        %v3805 = vunpack.c.l.b16 %v808
        %v3806 = vunpack.c.h.b16 %v808
        %v3807 = vunpack.c.l.b16 %v809
        %v3808 = vunpack.c.h.b16 %v809
        %v3809 = vunpack.c.l.b16 %v810
        %v3810 = vunpack.c.h.b16 %v810
        %v3811 = vunpack.c.l.b16 %v811
        %v3812 = vunpack.c.h.b16 %v811
        %v3813 = vunpack.c.l.b16 %v812
        %v3814 = vunpack.c.h.b16 %v812
        %v3815 = vunpack.c.l.b16 %v813
        %v3816 = vunpack.c.h.b16 %v813
        %v3817 = vunpack.c.l.b16 %v814
        %v3818 = vunpack.c.h.b16 %v814
        %v3819 = vunpack.c.l.b16 %v815
        %v3820 = vunpack.c.h.b16 %v815
        %v3821 = vunpack.c.l.b16 %v816
        %v3822 = vunpack.c.h.b16 %v816
        %v3823 = vunpack.c.l.b16 %v817
        %v3824 = vunpack.c.h.b16 %v817
        %v3825 = vunpack.c.l.b16 %v818
        %v3826 = vunpack.c.h.b16 %v818
        %v3827 = vunpack.c.l.b16 %v819
        %v3828 = vunpack.c.h.b16 %v819
        %v3829 = vunpack.c.l.b16 %v820
        %v3830 = vunpack.c.h.b16 %v820
        %v3831 = vunpack.c.l.b16 %v821
        %v3832 = vunpack.c.h.b16 %v821
        %v3833 = vunpack.c.l.b16 %v822
        %v3834 = vunpack.c.h.b16 %v822
        %v3835 = vunpack.c.l.b16 %v823
        %v3836 = vunpack.c.h.b16 %v823
        %v3837 = vunpack.c.l.b16 %v824
        %v3838 = vunpack.c.h.b16 %v824
        %v3839 = vunpack.c.l.b16 %v825
        %v3840 = vunpack.c.h.b16 %v825
        %v3841 = vunpack.c.l.b16 %v826
        %v3842 = vunpack.c.h.b16 %v826
        %v3843 = vunpack.c.l.b16 %v827
        %v3844 = vunpack.c.h.b16 %v827
        %v3845 = vunpack.c.l.b16 %v828
        %v3846 = vunpack.c.h.b16 %v828
        %v3847 = vunpack.c.l.b16 %v829
        %v3848 = vunpack.c.h.b16 %v829
        %v3849 = vunpack.c.l.b16 %v830
        %v3850 = vunpack.c.h.b16 %v830
        %v3851 = vunpack.c.l.b16 %v831
        %v3852 = vunpack.c.h.b16 %v831
        %v3853 = vunpack.c.l.b16 %v832
        %v3854 = vunpack.c.h.b16 %v832
        %v3855 = vunpack.c.l.b16 %v833
        %v3856 = vunpack.c.h.b16 %v833
        %v3857 = vunpack.c.l.b16 %v834
        %v3858 = vunpack.c.h.b16 %v834
        %v3859 = vunpack.c.l.b16 %v835
        %v3860 = vunpack.c.h.b16 %v835
        %v3861 = vunpack.c.l.b16 %v836
        %v3862 = vunpack.c.h.b16 %v836
        %v3863 = vunpack.c.l.b16 %v837
        %v3864 = vunpack.c.h.b16 %v837
        %v3865 = vunpack.c.l.b16 %v838
        %v3866 = vunpack.c.h.b16 %v838
        %v3867 = vunpack.c.l.b16 %v839
        %v3868 = vunpack.c.h.b16 %v839
        %v3869 = vunpack.c.l.b16 %v840
        %v3870 = vunpack.c.h.b16 %v840
        %v3871 = vunpack.c.l.b16 %v841
        %v3872 = vunpack.c.h.b16 %v841
        %v3873 = vunpack.c.l.b16 %v842
        %v3874 = vunpack.c.h.b16 %v842
        %v3875 = vunpack.c.l.b16 %v843
        %v3876 = vunpack.c.h.b16 %v843
        %v3877 = vunpack.c.l.b16 %v844
        %v3878 = vunpack.c.h.b16 %v844
        %v3879 = vunpack.c.l.b16 %v845
        %v3880 = vunpack.c.h.b16 %v845
        %v3881 = vunpack.c.l.b16 %v846
        %v3882 = vunpack.c.h.b16 %v846
        %v3883 = vunpack.c.l.b16 %v847
        %v3884 = vunpack.c.h.b16 %v847
        %v3885 = vunpack.c.l.b16 %v848
        %v3886 = vunpack.c.h.b16 %v848
        %v3887 = vunpack.c.l.b16 %v849
        %v3888 = vunpack.c.h.b16 %v849
        %v3889 = vunpack.c.l.b16 %v850
        %v3890 = vunpack.c.h.b16 %v850
        %v3891 = vunpack.c.l.b16 %v851
        %v3892 = vunpack.c.h.b16 %v851
        %v3893 = vunpack.c.l.b16 %v852
        %v3894 = vunpack.c.h.b16 %v852
        %v3895 = vunpack.c.l.b16 %v853
        %v3896 = vunpack.c.h.b16 %v853
        %v3897 = vunpack.c.l.b16 %v854
        %v3898 = vunpack.c.h.b16 %v854
        %v3899 = vunpack.c.l.b16 %v855
        %v3900 = vunpack.c.h.b16 %v855
        %v3901 = vunpack.c.l.b16 %v856
        %v3902 = vunpack.c.h.b16 %v856
        %v3903 = vunpack.c.l.b16 %v857
        %v3904 = vunpack.c.h.b16 %v857
        %v3905 = vunpack.c.l.b16 %v858
        %v3906 = vunpack.c.h.b16 %v858
        %v3907 = vunpack.c.l.b16 %v859
        %v3908 = vunpack.c.h.b16 %v859
        %v3909 = vunpack.c.l.b16 %v860
        %v3910 = vunpack.c.h.b16 %v860
        %v3911 = vunpack.c.l.b16 %v861
        %v3912 = vunpack.c.h.b16 %v861
        %v3913 = vunpack.c.l.b16 %v862
        %v3914 = vunpack.c.h.b16 %v862
        %v3915 = vunpack.c.l.b16 %v863
        %v3916 = vunpack.c.h.b16 %v863
        %v3917 = vunpack.c.l.b16 %v864
        %v3918 = vunpack.c.h.b16 %v864
        %v3919 = vunpack.c.l.b16 %v865
        %v3920 = vunpack.c.h.b16 %v865
        %v3921 = vunpack.c.l.b16 %v866
        %v3922 = vunpack.c.h.b16 %v866
        %v3923 = vunpack.c.l.b16 %v867
        %v3924 = vunpack.c.h.b16 %v867
        %v3925 = vunpack.c.l.b16 %v868
        %v3926 = vunpack.c.h.b16 %v868
        %v3927 = vunpack.c.l.b16 %v869
        %v3928 = vunpack.c.h.b16 %v869
        %v3929 = vunpack.c.l.b16 %v870
        %v3930 = vunpack.c.h.b16 %v870
        %v3931 = vunpack.c.l.b16 %v871
        %v3932 = vunpack.c.h.b16 %v871
        %v3933 = vunpack.c.l.b16 %v872
        %v3934 = vunpack.c.h.b16 %v872
        %v3935 = vunpack.c.l.b16 %v873
        %v3936 = vunpack.c.h.b16 %v873
        %v3937 = vunpack.c.l.b16 %v874
        %v3938 = vunpack.c.h.b16 %v874
        %v3939 = vunpack.c.l.b16 %v875
        %v3940 = vunpack.c.h.b16 %v875
        %v3941 = vunpack.c.l.b16 %v876
        %v3942 = vunpack.c.h.b16 %v876
        %v3943 = vunpack.c.l.b16 %v877
        %v3944 = vunpack.c.h.b16 %v877
        %v3945 = vunpack.c.l.b16 %v878
        %v3946 = vunpack.c.h.b16 %v878
        %v3947 = vunpack.c.l.b16 %v879
        %v3948 = vunpack.c.h.b16 %v879
        %v3949 = vunpack.c.l.b16 %v880
        %v3950 = vunpack.c.h.b16 %v880
        %v3951 = vunpack.c.l.b16 %v881
        %v3952 = vunpack.c.h.b16 %v881
        %v3953 = vunpack.c.l.b16 %v882
        %v3954 = vunpack.c.h.b16 %v882
        %v3955 = vunpack.c.l.b16 %v883
        %v3956 = vunpack.c.h.b16 %v883
        %v3957 = vunpack.c.l.b16 %v884
        %v3958 = vunpack.c.h.b16 %v884
        %v3959 = vunpack.c.l.b16 %v885
        %v3960 = vunpack.c.h.b16 %v885
        %v3961 = vunpack.c.l.b16 %v886
        %v3962 = vunpack.c.h.b16 %v886
        %v3963 = vunpack.c.l.b16 %v887
        %v3964 = vunpack.c.h.b16 %v887
        %v3965 = vunpack.c.l.b16 %v888
        %v3966 = vunpack.c.h.b16 %v888
        %v3967 = vunpack.c.l.b16 %v889
        %v3968 = vunpack.c.h.b16 %v889
        %v3969 = vunpack.c.l.b16 %v890
        %v3970 = vunpack.c.h.b16 %v890
        %v3971 = vunpack.c.l.b16 %v891
        %v3972 = vunpack.c.h.b16 %v891
        %v3973 = vunpack.c.l.b16 %v892
        %v3974 = vunpack.c.h.b16 %v892
        %v3975 = vunpack.c.l.b16 %v893
        %v3976 = vunpack.c.h.b16 %v893
        %v3977 = vunpack.c.l.b16 %v894
        %v3978 = vunpack.c.h.b16 %v894
        %v3979 = vunpack.c.l.b16 %v895
        %v3980 = vunpack.c.h.b16 %v895
        %v3981 = vunpack.c.l.b16 %v896
        %v3982 = vunpack.c.h.b16 %v896
        %v3983 = vunpack.c.l.b16 %v897
        %v3984 = vunpack.c.h.b16 %v897
        %v3985 = vunpack.c.l.b16 %v898
        %v3986 = vunpack.c.h.b16 %v898
        %v3987 = vunpack.c.l.b16 %v899
        %v3988 = vunpack.c.h.b16 %v899
        %v3989 = vunpack.c.l.b16 %v900
        %v3990 = vunpack.c.h.b16 %v900
        %v3991 = vunpack.c.l.b16 %v901
        %v3992 = vunpack.c.h.b16 %v901
        %v3993 = vunpack.c.l.b16 %v902
        %v3994 = vunpack.c.h.b16 %v902
        %v3995 = vunpack.c.l.b16 %v903
        %v3996 = vunpack.c.h.b16 %v903
        %v3997 = vunpack.c.l.b16 %v904
        %v3998 = vunpack.c.h.b16 %v904
        %v3999 = vunpack.c.l.b16 %v905
        %v4000 = vunpack.c.h.b16 %v905
        %v4001 = vunpack.c.l.b16 %v906
        %v4002 = vunpack.c.h.b16 %v906
        %v4003 = vunpack.c.l.b16 %v907
        %v4004 = vunpack.c.h.b16 %v907
        %v4005 = vunpack.c.l.b16 %v908
        %v4006 = vunpack.c.h.b16 %v908
        %v4007 = vunpack.c.l.b16 %v909
        %v4008 = vunpack.c.h.b16 %v909
        %v4009 = vunpack.c.l.b16 %v910
        %v4010 = vunpack.c.h.b16 %v910
        %v4011 = vunpack.c.l.b16 %v911
        %v4012 = vunpack.c.h.b16 %v911
        %v4013 = vunpack.c.l.b16 %v912
        %v4014 = vunpack.c.h.b16 %v912
        %v4015 = vunpack.c.l.b16 %v913
        %v4016 = vunpack.c.h.b16 %v913
        %v4017 = vunpack.c.l.b16 %v914
        %v4018 = vunpack.c.h.b16 %v914
        %v4019 = vunpack.c.l.b16 %v915
        %v4020 = vunpack.c.h.b16 %v915
        %v4021 = vunpack.c.l.b16 %v916
        %v4022 = vunpack.c.h.b16 %v916
        %v4023 = vunpack.c.l.b16 %v917
        %v4024 = vunpack.c.h.b16 %v917
        %v4025 = vunpack.c.l.b16 %v918
        %v4026 = vunpack.c.h.b16 %v918
        %v4027 = vunpack.c.l.b16 %v919
        %v4028 = vunpack.c.h.b16 %v919
        %v4029 = vunpack.c.l.b16 %v920
        %v4030 = vunpack.c.h.b16 %v920
        %v4031 = vunpack.c.l.b16 %v921
        %v4032 = vunpack.c.h.b16 %v921
        %v4033 = vunpack.c.l.b16 %v922
        %v4034 = vunpack.c.h.b16 %v922
        %v4035 = vunpack.c.l.b16 %v923
        %v4036 = vunpack.c.h.b16 %v923
        %v4037 = vunpack.c.l.b16 %v924
        %v4038 = vunpack.c.h.b16 %v924
        %v4039 = vunpack.c.l.b16 %v925
        %v4040 = vunpack.c.h.b16 %v925
        %v4041 = vunpack.c.l.b16 %v926
        %v4042 = vunpack.c.h.b16 %v926
        %v4043 = vunpack.c.l.b16 %v927
        %v4044 = vunpack.c.h.b16 %v927
        %v4045 = vunpack.c.l.b16 %v928
        %v4046 = vunpack.c.h.b16 %v928
        %v4047 = vunpack.c.l.b16 %v929
        %v4048 = vunpack.c.h.b16 %v929
        %v4049 = vunpack.c.l.b16 %v930
        %v4050 = vunpack.c.h.b16 %v930
        %v4051 = vunpack.c.l.b16 %v931
        %v4052 = vunpack.c.h.b16 %v931
        %v4053 = vunpack.c.l.b16 %v932
        %v4054 = vunpack.c.h.b16 %v932
        %v4055 = vunpack.c.l.b16 %v933
        %v4056 = vunpack.c.h.b16 %v933
        %v4057 = vunpack.c.l.b16 %v934
        %v4058 = vunpack.c.h.b16 %v934
        %v4059 = vunpack.c.l.b16 %v935
        %v4060 = vunpack.c.h.b16 %v935
        %v4061 = vunpack.c.l.b16 %v936
        %v4062 = vunpack.c.h.b16 %v936
        %v4063 = vunpack.c.l.b16 %v937
        %v4064 = vunpack.c.h.b16 %v937
        %v4065 = vunpack.c.l.b16 %v938
        %v4066 = vunpack.c.h.b16 %v938
        %v4067 = vunpack.c.l.b16 %v939
        %v4068 = vunpack.c.h.b16 %v939
        %v4069 = vunpack.c.l.b16 %v940
        %v4070 = vunpack.c.h.b16 %v940
        %v4071 = vunpack.c.l.b16 %v941
        %v4072 = vunpack.c.h.b16 %v941
        %v4073 = vunpack.c.l.b16 %v942
        %v4074 = vunpack.c.h.b16 %v942
        %v4075 = vunpack.c.l.b16 %v943
        %v4076 = vunpack.c.h.b16 %v943
        %v4077 = vunpack.c.l.b16 %v944
        %v4078 = vunpack.c.h.b16 %v944
        %v4079 = vunpack.c.l.b16 %v945
        %v4080 = vunpack.c.h.b16 %v945
        %v4081 = vunpack.c.l.b16 %v946
        %v4082 = vunpack.c.h.b16 %v946
        %v4083 = vunpack.c.l.b16 %v947
        %v4084 = vunpack.c.h.b16 %v947
        %v4085 = vunpack.c.l.b16 %v948
        %v4086 = vunpack.c.h.b16 %v948
        %v4087 = vunpack.c.l.b16 %v949
        %v4088 = vunpack.c.h.b16 %v949
        %v4089 = vunpack.c.l.b16 %v950
        %v4090 = vunpack.c.h.b16 %v950
        %v4091 = vunpack.c.l.b16 %v951
        %v4092 = vunpack.c.h.b16 %v951
        %v4093 = vunpack.c.l.b16 %v952
        %v4094 = vunpack.c.h.b16 %v952
        %v4095 = vunpack.c.l.b16 %v953
        %v4096 = vunpack.c.h.b16 %v953
        %v4097 = vunpack.c.l.b16 %v954
        %v4098 = vunpack.c.h.b16 %v954
        %v4099 = vunpack.c.l.b16 %v955
        %v4100 = vunpack.c.h.b16 %v955
        %v4101 = vunpack.c.l.b16 %v956
        %v4102 = vunpack.c.h.b16 %v956
        %v4103 = vunpack.c.l.b16 %v957
        %v4104 = vunpack.c.h.b16 %v957
        %v4105 = vunpack.c.l.b16 %v958
        %v4106 = vunpack.c.h.b16 %v958
        %v4107 = vunpack.c.l.b16 %v959
        %v4108 = vunpack.c.h.b16 %v959
        %v4109 = vunpack.c.l.b16 %v960
        %v4110 = vunpack.c.h.b16 %v960
        %v4111 = vunpack.c.l.b16 %v961
        %v4112 = vunpack.c.h.b16 %v961
        %v4113 = vunpack.c.l.b16 %v962
        %v4114 = vunpack.c.h.b16 %v962
        %v4115 = vunpack.c.l.b16 %v963
        %v4116 = vunpack.c.h.b16 %v963
        %v4117 = vunpack.c.l.b16 %v964
        %v4118 = vunpack.c.h.b16 %v964
        %v4119 = vunpack.c.l.b16 %v965
        %v4120 = vunpack.c.h.b16 %v965
        %v4121 = vunpack.c.l.b16 %v966
        %v4122 = vunpack.c.h.b16 %v966
        %v4123 = vunpack.c.l.b16 %v967
        %v4124 = vunpack.c.h.b16 %v967
        %v4125 = vunpack.c.l.b16 %v968
        %v4126 = vunpack.c.h.b16 %v968
        %v4127 = vunpack.c.l.b16 %v969
        %v4128 = vunpack.c.h.b16 %v969
        %v4129 = vunpack.c.l.b16 %v970
        %v4130 = vunpack.c.h.b16 %v970
        %v4131 = vunpack.c.l.b16 %v971
        %v4132 = vunpack.c.h.b16 %v971
        %v4133 = vunpack.c.l.b16 %v972
        %v4134 = vunpack.c.h.b16 %v972
        %v4135 = vunpack.c.l.b16 %v973
        %v4136 = vunpack.c.h.b16 %v973
        %v4137 = vunpack.c.l.b16 %v974
        %v4138 = vunpack.c.h.b16 %v974
        %v4139 = vunpack.c.l.b16 %v975
        %v4140 = vunpack.c.h.b16 %v975
        %v4141 = vunpack.c.l.b16 %v976
        %v4142 = vunpack.c.h.b16 %v976
        %v4143 = vunpack.c.l.b16 %v977
        %v4144 = vunpack.c.h.b16 %v977
        %v4145 = vunpack.c.l.b16 %v978
        %v4146 = vunpack.c.h.b16 %v978
        %v4147 = vunpack.c.l.b16 %v979
        %v4148 = vunpack.c.h.b16 %v979
        %v4149 = vunpack.c.l.b16 %v980
        %v4150 = vunpack.c.h.b16 %v980
        %v4151 = vunpack.c.l.b16 %v981
        %v4152 = vunpack.c.h.b16 %v981
        %v4153 = vunpack.c.l.b16 %v982
        %v4154 = vunpack.c.h.b16 %v982
        %v4155 = vunpack.c.l.b16 %v983
        %v4156 = vunpack.c.h.b16 %v983
        %v4157 = vunpack.c.l.b16 %v984
        %v4158 = vunpack.c.h.b16 %v984
        %v4159 = vunpack.c.l.b16 %v985
        %v4160 = vunpack.c.h.b16 %v985
        %v4161 = vunpack.c.l.b16 %v986
        %v4162 = vunpack.c.h.b16 %v986
        %v4163 = vunpack.c.l.b16 %v987
        %v4164 = vunpack.c.h.b16 %v987
        %v4165 = vunpack.c.l.b16 %v988
        %v4166 = vunpack.c.h.b16 %v988
        %v4167 = vunpack.c.l.b16 %v989
        %v4168 = vunpack.c.h.b16 %v989
        %v4169 = vunpack.c.l.b16 %v990
        %v4170 = vunpack.c.h.b16 %v990
        %v4171 = vunpack.c.l.b16 %v991
        %v4172 = vunpack.c.h.b16 %v991
        %v4173 = vunpack.c.l.b16 %v992
        %v4174 = vunpack.c.h.b16 %v992
        %v4175 = vunpack.c.l.b16 %v993
        %v4176 = vunpack.c.h.b16 %v993
        %v4177 = vunpack.c.l.b16 %v994
        %v4178 = vunpack.c.h.b16 %v994
        %v4179 = vunpack.c.l.b16 %v995
        %v4180 = vunpack.c.h.b16 %v995
        %v4181 = vunpack.c.l.b16 %v996
        %v4182 = vunpack.c.h.b16 %v996
        %v4183 = vunpack.c.l.b16 %v997
        %v4184 = vunpack.c.h.b16 %v997
        %v4185 = vunpack.c.l.b16 %v998
        %v4186 = vunpack.c.h.b16 %v998
        %v4187 = vunpack.c.l.b16 %v999
        %v4188 = vunpack.c.h.b16 %v999
        %v4189 = vunpack.c.l.b16 %v1000
        %v4190 = vunpack.c.h.b16 %v1000
        %v4191 = vunpack.c.l.b16 %v1001
        %v4192 = vunpack.c.h.b16 %v1001
        %v4193 = vunpack.c.l.b16 %v1002
        %v4194 = vunpack.c.h.b16 %v1002
        %v4195 = vunpack.c.l.b16 %v1003
        %v4196 = vunpack.c.h.b16 %v1003
        %v4197 = vunpack.c.l.b16 %v1004
        %v4198 = vunpack.c.h.b16 %v1004
        %v4199 = vunpack.c.l.b16 %v1005
        %v4200 = vunpack.c.h.b16 %v1005
        %v4201 = vunpack.c.l.b16 %v1006
        %v4202 = vunpack.c.h.b16 %v1006
        %v4203 = vunpack.c.l.b16 %v1007
        %v4204 = vunpack.c.h.b16 %v1007
        %v4205 = vunpack.c.l.b16 %v1008
        %v4206 = vunpack.c.h.b16 %v1008
        %v4207 = vunpack.c.l.b16 %v1009
        %v4208 = vunpack.c.h.b16 %v1009
        %v4209 = vunpack.c.l.b16 %v1010
        %v4210 = vunpack.c.h.b16 %v1010
        %v4211 = vunpack.c.l.b16 %v1011
        %v4212 = vunpack.c.h.b16 %v1011
        %v4213 = vunpack.c.l.b16 %v1012
        %v4214 = vunpack.c.h.b16 %v1012
        %v4215 = vunpack.c.l.b16 %v1013
        %v4216 = vunpack.c.h.b16 %v1013
        %v4217 = vunpack.c.l.b16 %v1014
        %v4218 = vunpack.c.h.b16 %v1014
        %v4219 = vunpack.c.l.b16 %v1015
        %v4220 = vunpack.c.h.b16 %v1015
        %v4221 = vunpack.c.l.b16 %v1016
        %v4222 = vunpack.c.h.b16 %v1016
        %v4223 = vunpack.c.l.b16 %v1017
        %v4224 = vunpack.c.h.b16 %v1017
        %v4225 = vunpack.c.l.b16 %v1018
        %v4226 = vunpack.c.h.b16 %v1018
        %v4227 = vunpack.c.l.b16 %v1019
        %v4228 = vunpack.c.h.b16 %v1019
        %v4229 = vunpack.c.l.b16 %v1020
        %v4230 = vunpack.c.h.b16 %v1020
        %v4231 = vunpack.c.l.b16 %v1021
        %v4232 = vunpack.c.h.b16 %v1021
        %v4233 = vunpack.c.l.b16 %v1022
        %v4234 = vunpack.c.h.b16 %v1022
        %v4235 = vunpack.c.l.b16 %v1023
        %v4236 = vunpack.c.h.b16 %v1023
        %v4237 = vunpack.c.l.b16 %v1024
        %v4238 = vunpack.c.h.b16 %v1024
        %v4239 = vunpack.c.l.b16 %v1025
        %v4240 = vunpack.c.h.b16 %v1025
        %v4241 = vunpack.c.l.b16 %v1026
        %v4242 = vunpack.c.h.b16 %v1026
        %v4243 = vunpack.c.l.b16 %v1027
        %v4244 = vunpack.c.h.b16 %v1027
        %v4245 = vunpack.c.l.b16 %v1028
        %v4246 = vunpack.c.h.b16 %v1028
        %v4247 = vunpack.c.l.b16 %v1029
        %v4248 = vunpack.c.h.b16 %v1029
        %v4249 = vunpack.c.l.b16 %v1030
        %v4250 = vunpack.c.h.b16 %v1030
        %v4251 = vunpack.c.l.b16 %v1031
        %v4252 = vunpack.c.h.b16 %v1031
        %v4253 = vunpack.c.l.b16 %v1032
        %v4254 = vunpack.c.h.b16 %v1032
        %v4255 = vunpack.c.l.b16 %v1033
        %v4256 = vunpack.c.h.b16 %v1033
        %v4257 = vunpack.c.l.b16 %v1034
        %v4258 = vunpack.c.h.b16 %v1034
        %v4259 = vunpack.c.l.b16 %v1035
        %v4260 = vunpack.c.h.b16 %v1035
        %v4261 = vunpack.c.l.b16 %v1036
        %v4262 = vunpack.c.h.b16 %v1036
        %v4263 = vunpack.c.l.b16 %v1037
        %v4264 = vunpack.c.h.b16 %v1037
        %v4265 = vunpack.c.l.b16 %v1038
        %v4266 = vunpack.c.h.b16 %v1038
        %v4267 = vunpack.c.l.b16 %v1039
        %v4268 = vunpack.c.h.b16 %v1039
        %v4269 = vunpack.c.l.b16 %v1040
        %v4270 = vunpack.c.h.b16 %v1040
        %v4271 = vunpack.c.l.b16 %v1041
        %v4272 = vunpack.c.h.b16 %v1041
        %v4273 = vunpack.c.l.b16 %v1042
        %v4274 = vunpack.c.h.b16 %v1042
        %v4275 = vunpack.c.l.b16 %v1043
        %v4276 = vunpack.c.h.b16 %v1043
        %v4277 = vunpack.c.l.b16 %v1044
        %v4278 = vunpack.c.h.b16 %v1044
        %v4279 = vunpack.c.l.b16 %v1045
        %v4280 = vunpack.c.h.b16 %v1045
        %v4281 = vunpack.c.l.b16 %v1046
        %v4282 = vunpack.c.h.b16 %v1046
        %v4283 = vunpack.c.l.b16 %v1047
        %v4284 = vunpack.c.h.b16 %v1047
        %v4285 = vunpack.c.l.b16 %v1048
        %v4286 = vunpack.c.h.b16 %v1048
        %v4287 = vunpack.c.l.b16 %v1049
        %v4288 = vunpack.c.h.b16 %v1049
        %v4289 = vunpack.c.l.b16 %v1050
        %v4290 = vunpack.c.h.b16 %v1050
        %v4291 = vunpack.c.l.b16 %v1051
        %v4292 = vunpack.c.h.b16 %v1051
        %v4293 = vunpack.c.l.b16 %v1052
        %v4294 = vunpack.c.h.b16 %v1052
        %v4295 = vunpack.c.l.b16 %v1053
        %v4296 = vunpack.c.h.b16 %v1053
        %v4297 = vunpack.c.l.b16 %v1054
        %v4298 = vunpack.c.h.b16 %v1054
        %v4299 = vunpack.c.l.b16 %v1055
        %v4300 = vunpack.c.h.b16 %v1055
        %v4301 = vunpack.c.l.b16 %v1056
        %v4302 = vunpack.c.h.b16 %v1056
        %v4303 = vunpack.c.l.b16 %v1057
        %v4304 = vunpack.c.h.b16 %v1057
        %v4305 = vunpack.c.l.b16 %v1058
        %v4306 = vunpack.c.h.b16 %v1058
        %v4307 = vunpack.c.l.b16 %v1059
        %v4308 = vunpack.c.h.b16 %v1059
        %v4309 = vunpack.c.l.b16 %v1060
        %v4310 = vunpack.c.h.b16 %v1060
        %v4311 = vunpack.c.l.b16 %v1061
        %v4312 = vunpack.c.h.b16 %v1061
        %v4313 = vunpack.c.l.b16 %v1062
        %v4314 = vunpack.c.h.b16 %v1062
        %v4315 = vunpack.c.l.b16 %v1063
        %v4316 = vunpack.c.h.b16 %v1063
        %v4317 = vunpack.c.l.b16 %v1064
        %v4318 = vunpack.c.h.b16 %v1064
        %v4319 = vunpack.c.l.b16 %v1065
        %v4320 = vunpack.c.h.b16 %v1065
        %v4321 = vunpack.c.l.b16 %v1066
        %v4322 = vunpack.c.h.b16 %v1066
        %v4323 = vunpack.c.l.b16 %v1067
        %v4324 = vunpack.c.h.b16 %v1067
        %v4325 = vunpack.c.l.b16 %v1068
        %v4326 = vunpack.c.h.b16 %v1068
        %v4327 = vunpack.c.l.b16 %v1069
        %v4328 = vunpack.c.h.b16 %v1069
        %v4329 = vunpack.c.l.b16 %v1070
        %v4330 = vunpack.c.h.b16 %v1070
        %v4331 = vunpack.c.l.b16 %v1071
        %v4332 = vunpack.c.h.b16 %v1071
        %v4333 = vunpack.c.l.b16 %v1072
        %v4334 = vunpack.c.h.b16 %v1072
        %v4335 = vunpack.c.l.b16 %v1073
        %v4336 = vunpack.c.h.b16 %v1073
        %v4337 = vunpack.c.l.b16 %v1074
        %v4338 = vunpack.c.h.b16 %v1074
        %v4339 = vunpack.c.l.b16 %v1075
        %v4340 = vunpack.c.h.b16 %v1075
        %v4341 = vunpack.c.l.b16 %v1076
        %v4342 = vunpack.c.h.b16 %v1076
        %v4343 = vunpack.c.l.b16 %v1077
        %v4344 = vunpack.c.h.b16 %v1077
        %v4345 = vunpack.c.l.b16 %v1078
        %v4346 = vunpack.c.h.b16 %v1078
        %v4347 = vunpack.c.l.b16 %v1079
        %v4348 = vunpack.c.h.b16 %v1079
        %v4349 = vunpack.c.l.b16 %v1080
        %v4350 = vunpack.c.h.b16 %v1080
        %v4351 = vunpack.c.l.b16 %v1081
        %v4352 = vunpack.c.h.b16 %v1081
        %v4353 = vunpack.c.l.b16 %v1082
        %v4354 = vunpack.c.h.b16 %v1082
        %v4355 = vunpack.c.l.b16 %v1083
        %v4356 = vunpack.c.h.b16 %v1083
        %v4357 = vunpack.c.l.b16 %v1084
        %v4358 = vunpack.c.h.b16 %v1084
        %v4359 = vunpack.c.l.b16 %v1085
        %v4360 = vunpack.c.h.b16 %v1085
        %v4361 = vunpack.c.l.b16 %v1086
        %v4362 = vunpack.c.h.b16 %v1086
        %v4363 = vunpack.c.l.b16 %v1087
        %v4364 = vunpack.c.h.b16 %v1087
        %v4365 = vunpack.c.l.b16 %v1088
        %v4366 = vunpack.c.h.b16 %v1088
        %v4367 = vunpack.c.l.b16 %v1089
        %v4368 = vunpack.c.h.b16 %v1089
        %v4369 = vunpack.c.l.b16 %v1090
        %v4370 = vunpack.c.h.b16 %v1090
        %v4371 = vunpack.c.l.b16 %v1091
        %v4372 = vunpack.c.h.b16 %v1091
        %v4373 = vunpack.c.l.b16 %v1092
        %v4374 = vunpack.c.h.b16 %v1092
        %v4375 = vunpack.c.l.b16 %v1093
        %v4376 = vunpack.c.h.b16 %v1093
        %v4377 = vunpack.c.l.b16 %v1094
        %v4378 = vunpack.c.h.b16 %v1094
        %v4379 = vunpack.c.l.b16 %v1095
        %v4380 = vunpack.c.h.b16 %v1095
        %v4381 = vunpack.c.l.b16 %v1096
        %v4382 = vunpack.c.h.b16 %v1096
        %v4383 = vunpack.c.l.b16 %v1097
        %v4384 = vunpack.c.h.b16 %v1097
        %v4385 = vunpack.c.l.b16 %v1098
        %v4386 = vunpack.c.h.b16 %v1098
        %v4387 = vunpack.c.l.b16 %v1099
        %v4388 = vunpack.c.h.b16 %v1099
        %v4389 = vunpack.c.l.b16 %v1100
        %v4390 = vunpack.c.h.b16 %v1100
        %v4391 = vunpack.c.l.b16 %v1101
        %v4392 = vunpack.c.h.b16 %v1101
        %v4393 = vunpack.c.l.b16 %v1102
        %v4394 = vunpack.c.h.b16 %v1102
        %v4395 = vunpack.c.l.b16 %v1103
        %v4396 = vunpack.c.h.b16 %v1103
        %v4397 = vunpack.c.l.b16 %v1104
        %v4398 = vunpack.c.h.b16 %v1104
        %v4399 = vunpack.c.l.b16 %v1105
        %v4400 = vunpack.c.h.b16 %v1105
        %v4401 = vunpack.c.l.b16 %v1106
        %v4402 = vunpack.c.h.b16 %v1106
        %v4403 = vunpack.c.l.b16 %v1107
        %v4404 = vunpack.c.h.b16 %v1107
        %v4405 = vunpack.c.l.b16 %v1108
        %v4406 = vunpack.c.h.b16 %v1108
        %v4407 = vunpack.c.l.b16 %v1109
        %v4408 = vunpack.c.h.b16 %v1109
        %v4409 = vunpack.c.l.b16 %v1110
        %v4410 = vunpack.c.h.b16 %v1110
        %v4411 = vunpack.c.l.b16 %v1111
        %v4412 = vunpack.c.h.b16 %v1111
        %v4413 = vunpack.c.l.b16 %v1112
        %v4414 = vunpack.c.h.b16 %v1112
        %v4415 = vunpack.c.l.b16 %v1113
        %v4416 = vunpack.c.h.b16 %v1113
        %v4417 = vunpack.c.l.b16 %v1114
        %v4418 = vunpack.c.h.b16 %v1114
        %v4419 = vunpack.c.l.b16 %v1115
        %v4420 = vunpack.c.h.b16 %v1115
        %v4421 = vunpack.c.l.b16 %v1116
        %v4422 = vunpack.c.h.b16 %v1116
        %v4423 = vunpack.c.l.b16 %v1117
        %v4424 = vunpack.c.h.b16 %v1117
        %v4425 = vunpack.c.l.b16 %v1118
        %v4426 = vunpack.c.h.b16 %v1118
        %v4427 = vunpack.c.l.b16 %v1119
        %v4428 = vunpack.c.h.b16 %v1119
        %v4429 = vunpack.c.l.b16 %v1120
        %v4430 = vunpack.c.h.b16 %v1120
        %v4431 = vunpack.c.l.b16 %v1121
        %v4432 = vunpack.c.h.b16 %v1121
        %v4433 = vunpack.c.l.b16 %v1122
        %v4434 = vunpack.c.h.b16 %v1122
        %v4435 = vunpack.c.l.b16 %v1123
        %v4436 = vunpack.c.h.b16 %v1123
        %v4437 = vunpack.c.l.b16 %v1124
        %v4438 = vunpack.c.h.b16 %v1124
        %v4439 = vunpack.c.l.b16 %v1125
        %v4440 = vunpack.c.h.b16 %v1125
        %v4441 = vunpack.c.l.b16 %v1126
        %v4442 = vunpack.c.h.b16 %v1126
        %v4443 = vunpack.c.l.b16 %v1127
        %v4444 = vunpack.c.h.b16 %v1127
        %v4445 = vunpack.c.l.b16 %v1128
        %v4446 = vunpack.c.h.b16 %v1128
        %v4447 = vunpack.c.l.b16 %v1129
        %v4448 = vunpack.c.h.b16 %v1129
        %v4449 = vunpack.c.l.b16 %v1130
        %v4450 = vunpack.c.h.b16 %v1130
        %v4451 = vunpack.c.l.b16 %v1131
        %v4452 = vunpack.c.h.b16 %v1131
        %v4453 = vunpack.c.l.b16 %v1132
        %v4454 = vunpack.c.h.b16 %v1132
        %v4455 = vunpack.c.l.b16 %v1133
        %v4456 = vunpack.c.h.b16 %v1133
        %v4457 = vunpack.c.l.b16 %v1134
        %v4458 = vunpack.c.h.b16 %v1134
        %v4459 = vunpack.c.l.b16 %v1135
        %v4460 = vunpack.c.h.b16 %v1135
        %v4461 = vunpack.c.l.b16 %v1136
        %v4462 = vunpack.c.h.b16 %v1136
        %v4463 = vunpack.c.l.b16 %v1137
        %v4464 = vunpack.c.h.b16 %v1137
        %v4465 = vunpack.c.l.b16 %v1138
        %v4466 = vunpack.c.h.b16 %v1138
        %v4467 = vunpack.c.l.b16 %v1139
        %v4468 = vunpack.c.h.b16 %v1139
        %v4469 = vunpack.c.l.b16 %v1140
        %v4470 = vunpack.c.h.b16 %v1140
        %v4471 = vunpack.c.l.b16 %v1141
        %v4472 = vunpack.c.h.b16 %v1141
        %v4473 = vunpack.c.l.b16 %v1142
        %v4474 = vunpack.c.h.b16 %v1142
        %v4475 = vunpack.c.l.b16 %v1143
        %v4476 = vunpack.c.h.b16 %v1143
        %v4477 = vunpack.c.l.b16 %v1144
        %v4478 = vunpack.c.h.b16 %v1144
        %v4479 = vunpack.c.l.b16 %v1145
        %v4480 = vunpack.c.h.b16 %v1145
        %v4481 = vunpack.c.l.b16 %v1146
        %v4482 = vunpack.c.h.b16 %v1146
        %v4483 = vunpack.c.l.b16 %v1147
        %v4484 = vunpack.c.h.b16 %v1147
        %v4485 = vunpack.c.l.b16 %v1148
        %v4486 = vunpack.c.h.b16 %v1148
        %v4487 = vunpack.c.l.b16 %v1149
        %v4488 = vunpack.c.h.b16 %v1149
        %v4489 = vunpack.c.l.b16 %v1150
        %v4490 = vunpack.c.h.b16 %v1150
        %v4491 = vunpack.c.l.b16 %v1151
        %v4492 = vunpack.c.h.b16 %v1151
        %v4493 = vunpack.c.l.b16 %v1152
        %v4494 = vunpack.c.h.b16 %v1152
        %v4495 = vunpack.c.l.b16 %v1153
        %v4496 = vunpack.c.h.b16 %v1153
        %v4497 = vunpack.c.l.b16 %v1154
        %v4498 = vunpack.c.h.b16 %v1154
        %v4499 = vunpack.c.l.b16 %v1155
        %v4500 = vunpack.c.h.b16 %v1155
        %v4501 = vunpack.c.l.b16 %v1156
        %v4502 = vunpack.c.h.b16 %v1156
        %v4503 = vunpack.c.l.b16 %v1157
        %v4504 = vunpack.c.h.b16 %v1157
        %v4505 = vunpack.c.l.b16 %v1158
        %v4506 = vunpack.c.h.b16 %v1158
        %v4507 = vunpack.c.l.b16 %v1159
        %v4508 = vunpack.c.h.b16 %v1159
        %v4509 = vunpack.c.l.b16 %v1160
        %v4510 = vunpack.c.h.b16 %v1160
        %v4511 = vunpack.c.l.b16 %v1161
        %v4512 = vunpack.c.h.b16 %v1161
        %v4513 = vunpack.c.l.b16 %v1162
        %v4514 = vunpack.c.h.b16 %v1162
        %v4515 = vunpack.c.l.b16 %v1163
        %v4516 = vunpack.c.h.b16 %v1163
        %v4517 = vunpack.c.l.b16 %v1164
        %v4518 = vunpack.c.h.b16 %v1164
        %v4519 = vunpack.c.l.b16 %v1165
        %v4520 = vunpack.c.h.b16 %v1165
        %v4521 = vunpack.c.l.b16 %v1166
        %v4522 = vunpack.c.h.b16 %v1166
        %v4523 = vunpack.c.l.b16 %v1167
        %v4524 = vunpack.c.h.b16 %v1167
        %v4525 = vunpack.c.l.b16 %v1168
        %v4526 = vunpack.c.h.b16 %v1168
        %v4527 = vunpack.c.l.b16 %v1169
        %v4528 = vunpack.c.h.b16 %v1169
        %v4529 = vunpack.c.l.b16 %v1170
        %v4530 = vunpack.c.h.b16 %v1170
        %v4531 = vunpack.c.l.b16 %v1171
        %v4532 = vunpack.c.h.b16 %v1171
        %v4533 = vunpack.c.l.b16 %v1172
        %v4534 = vunpack.c.h.b16 %v1172
        %v4535 = vunpack.c.l.b16 %v1173
        %v4536 = vunpack.c.h.b16 %v1173
        %v4537 = vunpack.c.l.b16 %v1174
        %v4538 = vunpack.c.h.b16 %v1174
        %v4539 = vunpack.c.l.b16 %v1175
        %v4540 = vunpack.c.h.b16 %v1175
        %v4541 = vunpack.c.l.b16 %v1176
        %v4542 = vunpack.c.h.b16 %v1176
        %v4543 = vunpack.c.l.b16 %v1177
        %v4544 = vunpack.c.h.b16 %v1177
        %v4545 = vunpack.c.l.b16 %v1178
        %v4546 = vunpack.c.h.b16 %v1178
        %v4547 = vunpack.c.l.b16 %v1179
        %v4548 = vunpack.c.h.b16 %v1179
        %v4549 = vunpack.c.l.b16 %v1180
        %v4550 = vunpack.c.h.b16 %v1180
        %v4551 = vunpack.c.l.b16 %v1181
        %v4552 = vunpack.c.h.b16 %v1181
        %v4553 = vunpack.c.l.b16 %v1182
        %v4554 = vunpack.c.h.b16 %v1182
        %v4555 = vunpack.c.l.b16 %v1183
        %v4556 = vunpack.c.h.b16 %v1183
        %v4557 = vunpack.c.l.b16 %v1184
        %v4558 = vunpack.c.h.b16 %v1184
        %v4559 = vunpack.c.l.b16 %v1185
        %v4560 = vunpack.c.h.b16 %v1185
        %v4561 = vunpack.c.l.b16 %v1186
        %v4562 = vunpack.c.h.b16 %v1186
        %v4563 = vunpack.c.l.b16 %v1187
        %v4564 = vunpack.c.h.b16 %v1187
        %v4565 = vunpack.c.l.b16 %v1188
        %v4566 = vunpack.c.h.b16 %v1188
        %v4567 = vunpack.c.l.b16 %v1189
        %v4568 = vunpack.c.h.b16 %v1189
        %v4569 = vunpack.c.l.b16 %v1190
        %v4570 = vunpack.c.h.b16 %v1190
        %v4571 = vunpack.c.l.b16 %v1191
        %v4572 = vunpack.c.h.b16 %v1191
        %v4573 = vunpack.c.l.b16 %v1192
        %v4574 = vunpack.c.h.b16 %v1192
        %v4575 = vunpack.c.l.b16 %v1193
        %v4576 = vunpack.c.h.b16 %v1193
        %v4577 = vunpack.c.l.b16 %v1194
        %v4578 = vunpack.c.h.b16 %v1194
        %v4579 = vunpack.c.l.b16 %v1195
        %v4580 = vunpack.c.h.b16 %v1195
        %v4581 = vunpack.c.l.b16 %v1196
        %v4582 = vunpack.c.h.b16 %v1196
        %v4583 = vunpack.c.l.b16 %v1197
        %v4584 = vunpack.c.h.b16 %v1197
        %v4585 = vunpack.c.l.b16 %v1198
        %v4586 = vunpack.c.h.b16 %v1198
        %v4587 = vunpack.c.l.b16 %v1199
        %v4588 = vunpack.c.h.b16 %v1199
        %v4589 = vunpack.c.l.b16 %v1200
        %v4590 = vunpack.c.h.b16 %v1200
        %v4591 = vunpack.c.l.b16 %v1201
        %v4592 = vunpack.c.h.b16 %v1201
        %v4593 = vunpack.c.l.b16 %v1202
        %v4594 = vunpack.c.h.b16 %v1202
        %v4595 = vunpack.c.l.b16 %v1203
        %v4596 = vunpack.c.h.b16 %v1203
        %v4597 = vunpack.c.l.b16 %v1204
        %v4598 = vunpack.c.h.b16 %v1204
        %v4599 = vunpack.c.l.b16 %v1205
        %v4600 = vunpack.c.h.b16 %v1205
        %v4601 = vunpack.c.l.b16 %v1206
        %v4602 = vunpack.c.h.b16 %v1206
        %v4603 = vunpack.c.l.b16 %v1207
        %v4604 = vunpack.c.h.b16 %v1207
        %v4605 = vunpack.c.l.b16 %v1208
        %v4606 = vunpack.c.h.b16 %v1208
        %v4607 = vunpack.c.l.b16 %v1209
        %v4608 = vunpack.c.h.b16 %v1209
        %v4609 = vunpack.c.l.b16 %v1210
        %v4610 = vunpack.c.h.b16 %v1210
        %v4611 = vunpack.c.l.b16 %v1211
        %v4612 = vunpack.c.h.b16 %v1211
        %v4613 = vunpack.c.l.b16 %v1212
        %v4614 = vunpack.c.h.b16 %v1212
        %v4615 = vunpack.c.l.b16 %v1213
        %v4616 = vunpack.c.h.b16 %v1213
        %v4617 = vunpack.c.l.b16 %v1214
        %v4618 = vunpack.c.h.b16 %v1214
        %v4619 = vunpack.c.l.b16 %v1215
        %v4620 = vunpack.c.h.b16 %v1215
        %v4621 = vunpack.c.l.b16 %v1216
        %v4622 = vunpack.c.h.b16 %v1216
        %v4623 = vunpack.c.l.b16 %v1217
        %v4624 = vunpack.c.h.b16 %v1217
        %v4625 = vunpack.c.l.b16 %v1218
        %v4626 = vunpack.c.h.b16 %v1218
        %v4627 = vunpack.c.l.b16 %v1219
        %v4628 = vunpack.c.h.b16 %v1219
        %v4629 = vunpack.c.l.b16 %v1220
        %v4630 = vunpack.c.h.b16 %v1220
        %v4631 = vunpack.c.l.b16 %v1221
        %v4632 = vunpack.c.h.b16 %v1221
        %v4633 = vunpack.c.l.b16 %v1222
        %v4634 = vunpack.c.h.b16 %v1222
        %v4635 = vunpack.c.l.b16 %v1223
        %v4636 = vunpack.c.h.b16 %v1223
        %v4637 = vunpack.c.l.b16 %v1224
        %v4638 = vunpack.c.h.b16 %v1224
        %v4639 = vunpack.c.l.b16 %v1225
        %v4640 = vunpack.c.h.b16 %v1225
        %v4641 = vunpack.c.l.b16 %v1226
        %v4642 = vunpack.c.h.b16 %v1226
        %v4643 = vunpack.c.l.b16 %v1227
        %v4644 = vunpack.c.h.b16 %v1227
        %v4645 = vunpack.c.l.b16 %v1228
        %v4646 = vunpack.c.h.b16 %v1228
        %v4647 = vunpack.c.l.b16 %v1229
        %v4648 = vunpack.c.h.b16 %v1229
        %v4649 = vunpack.c.l.b16 %v1230
        %v4650 = vunpack.c.h.b16 %v1230
        %v4651 = vunpack.c.l.b16 %v1231
        %v4652 = vunpack.c.h.b16 %v1231
        %v4653 = vunpack.c.l.b16 %v1232
        %v4654 = vunpack.c.h.b16 %v1232
        %v4655 = vunpack.c.l.b16 %v1233
        %v4656 = vunpack.c.h.b16 %v1233
        %v4657 = vunpack.c.l.b16 %v1234
        %v4658 = vunpack.c.h.b16 %v1234
        %v4659 = vunpack.c.l.b16 %v1235
        %v4660 = vunpack.c.h.b16 %v1235
        %v4661 = vunpack.c.l.b16 %v1236
        %v4662 = vunpack.c.h.b16 %v1236
        %v4663 = vunpack.c.l.b16 %v1237
        %v4664 = vunpack.c.h.b16 %v1237
        %v4665 = vunpack.c.l.b16 %v1238
        %v4666 = vunpack.c.h.b16 %v1238
        %v4667 = vunpack.c.l.b16 %v1239
        %v4668 = vunpack.c.h.b16 %v1239
        %v4669 = vunpack.c.l.b16 %v1240
        %v4670 = vunpack.c.h.b16 %v1240
        %v4671 = vunpack.c.l.b16 %v1241
        %v4672 = vunpack.c.h.b16 %v1241
        %v4673 = vunpack.c.l.b16 %v1242
        %v4674 = vunpack.c.h.b16 %v1242
        %v4675 = vunpack.c.l.b16 %v1243
        %v4676 = vunpack.c.h.b16 %v1243
        %v4677 = vunpack.c.l.b16 %v1244
        %v4678 = vunpack.c.h.b16 %v1244
        %v4679 = vunpack.c.l.b16 %v1245
        %v4680 = vunpack.c.h.b16 %v1245
        %v4681 = vunpack.c.l.b16 %v1246
        %v4682 = vunpack.c.h.b16 %v1246
        %v4683 = vunpack.c.l.b16 %v1247
        %v4684 = vunpack.c.h.b16 %v1247
        %v4685 = vunpack.c.l.b16 %v1248
        %v4686 = vunpack.c.h.b16 %v1248
        %v4687 = vunpack.c.l.b16 %v1249
        %v4688 = vunpack.c.h.b16 %v1249
        %v4689 = vunpack.c.l.b16 %v1250
        %v4690 = vunpack.c.h.b16 %v1250
        %v4691 = vunpack.c.l.b16 %v1251
        %v4692 = vunpack.c.h.b16 %v1251
        %v4693 = vunpack.c.l.b16 %v1252
        %v4694 = vunpack.c.h.b16 %v1252
        %v4695 = vunpack.c.l.b16 %v1253
        %v4696 = vunpack.c.h.b16 %v1253
        %v4697 = vunpack.c.l.b16 %v1254
        %v4698 = vunpack.c.h.b16 %v1254
        %v4699 = vunpack.c.l.b16 %v1255
        %v4700 = vunpack.c.h.b16 %v1255
        %v4701 = vunpack.c.l.b16 %v1256
        %v4702 = vunpack.c.h.b16 %v1256
        %v4703 = vunpack.c.l.b16 %v1257
        %v4704 = vunpack.c.h.b16 %v1257
        %v4705 = vunpack.c.l.b16 %v1258
        %v4706 = vunpack.c.h.b16 %v1258
        %v4707 = vunpack.c.l.b16 %v1259
        %v4708 = vunpack.c.h.b16 %v1259
        %v4709 = vunpack.c.l.b16 %v1260
        %v4710 = vunpack.c.h.b16 %v1260
        %v4711 = vunpack.c.l.b16 %v1261
        %v4712 = vunpack.c.h.b16 %v1261
        %v4713 = vunpack.c.l.b16 %v1262
        %v4714 = vunpack.c.h.b16 %v1262
        %v4715 = vunpack.c.l.b16 %v1263
        %v4716 = vunpack.c.h.b16 %v1263
        %v4717 = vunpack.c.l.b16 %v1264
        %v4718 = vunpack.c.h.b16 %v1264
        %v4719 = vunpack.c.l.b16 %v1265
        %v4720 = vunpack.c.h.b16 %v1265
        %v4721 = vunpack.c.l.b16 %v1266
        %v4722 = vunpack.c.h.b16 %v1266
        %v4723 = vunpack.c.l.b16 %v1267
        %v4724 = vunpack.c.h.b16 %v1267
        %v4725 = vunpack.c.l.b16 %v1268
        %v4726 = vunpack.c.h.b16 %v1268
        %v4727 = vunpack.c.l.b16 %v1269
        %v4728 = vunpack.c.h.b16 %v1269
        %v4729 = vunpack.c.l.b16 %v1270
        %v4730 = vunpack.c.h.b16 %v1270
        %v4731 = vunpack.c.l.b16 %v1271
        %v4732 = vunpack.c.h.b16 %v1271
        %v4733 = vunpack.c.l.b16 %v1272
        %v4734 = vunpack.c.h.b16 %v1272
        %v4735 = vunpack.c.l.b16 %v1273
        %v4736 = vunpack.c.h.b16 %v1273
        %v4737 = vunpack.c.l.b16 %v1274
        %v4738 = vunpack.c.h.b16 %v1274
        %v4739 = vunpack.c.l.b16 %v1275
        %v4740 = vunpack.c.h.b16 %v1275
        %v4741 = vunpack.c.l.b16 %v1276
        %v4742 = vunpack.c.h.b16 %v1276
        %v4743 = vunpack.c.l.b16 %v1277
        %v4744 = vunpack.c.h.b16 %v1277
        %v4745 = vunpack.c.l.b16 %v1278
        %v4746 = vunpack.c.h.b16 %v1278
        %v4747 = vunpack.c.l.b16 %v1279
        %v4748 = vunpack.c.h.b16 %v1279
        %v4749 = vunpack.c.l.b16 %v1280
        %v4750 = vunpack.c.h.b16 %v1280
        %v4751 = vunpack.c.l.b16 %v1281
        %v4752 = vunpack.c.h.b16 %v1281
        %v4753 = vunpack.c.l.b16 %v1282
        %v4754 = vunpack.c.h.b16 %v1282
        %v4755 = vunpack.c.l.b16 %v1283
        %v4756 = vunpack.c.h.b16 %v1283
        %v4757 = vunpack.c.l.b16 %v1284
        %v4758 = vunpack.c.h.b16 %v1284
        %v4759 = vunpack.c.l.b16 %v1285
        %v4760 = vunpack.c.h.b16 %v1285
        %v4761 = vunpack.c.l.b16 %v1286
        %v4762 = vunpack.c.h.b16 %v1286
        %v4763 = vunpack.c.l.b16 %v1287
        %v4764 = vunpack.c.h.b16 %v1287
        %v4765 = vunpack.c.l.b16 %v1288
        %v4766 = vunpack.c.h.b16 %v1288
        %v4767 = vunpack.c.l.b16 %v1289
        %v4768 = vunpack.c.h.b16 %v1289
        %v4769 = vunpack.c.l.b16 %v1290
        %v4770 = vunpack.c.h.b16 %v1290
        %v4771 = vunpack.c.l.b16 %v1291
        %v4772 = vunpack.c.h.b16 %v1291
        %v4773 = vunpack.c.l.b16 %v1292
        %v4774 = vunpack.c.h.b16 %v1292
        %v4775 = vunpack.c.l.b16 %v1293
        %v4776 = vunpack.c.h.b16 %v1293
        %v4777 = vunpack.c.l.b16 %v1294
        %v4778 = vunpack.c.h.b16 %v1294
        %v4779 = vunpack.c.l.b16 %v1295
        %v4780 = vunpack.c.h.b16 %v1295
        %v4781 = vunpack.c.l.b16 %v1296
        %v4782 = vunpack.c.h.b16 %v1296
        %v4783 = vunpack.c.l.b16 %v1297
        %v4784 = vunpack.c.h.b16 %v1297
        %v4785 = vunpack.c.l.b16 %v1298
        %v4786 = vunpack.c.h.b16 %v1298
        %v4787 = vunpack.c.l.b16 %v1299
        %v4788 = vunpack.c.h.b16 %v1299
        %v4789 = vunpack.c.l.b16 %v1300
        %v4790 = vunpack.c.h.b16 %v1300
        %v4791 = vunpack.c.l.b16 %v1301
        %v4792 = vunpack.c.h.b16 %v1301
        %v4793 = vunpack.c.l.b16 %v1302
        %v4794 = vunpack.c.h.b16 %v1302
        %v4795 = vunpack.c.l.b16 %v1303
        %v4796 = vunpack.c.h.b16 %v1303
        %v4797 = vunpack.c.l.b16 %v1304
        %v4798 = vunpack.c.h.b16 %v1304
        %v4799 = vunpack.c.l.b16 %v1305
        %v4800 = vunpack.c.h.b16 %v1305
        %v4801 = vunpack.c.l.b16 %v1306
        %v4802 = vunpack.c.h.b16 %v1306
        %v4803 = vunpack.c.l.b16 %v1307
        %v4804 = vunpack.c.h.b16 %v1307
        %v4805 = vunpack.c.l.b16 %v1308
        %v4806 = vunpack.c.h.b16 %v1308
        %v4807 = vunpack.c.l.b16 %v1309
        %v4808 = vunpack.c.h.b16 %v1309
        %v4809 = vunpack.c.l.b16 %v1310
        %v4810 = vunpack.c.h.b16 %v1310
        %v4811 = vunpack.c.l.b16 %v1311
        %v4812 = vunpack.c.h.b16 %v1311
        %v4813 = vunpack.c.l.b16 %v1312
        %v4814 = vunpack.c.h.b16 %v1312
        %v4815 = vunpack.c.l.b16 %v1313
        %v4816 = vunpack.c.h.b16 %v1313
        %v4817 = vunpack.c.l.b16 %v1314
        %v4818 = vunpack.c.h.b16 %v1314
        %v4819 = vunpack.c.l.b16 %v1315
        %v4820 = vunpack.c.h.b16 %v1315
        %v4821 = vunpack.c.l.b16 %v1316
        %v4822 = vunpack.c.h.b16 %v1316
        %v4823 = vunpack.c.l.b16 %v1317
        %v4824 = vunpack.c.h.b16 %v1317
        %v4825 = vunpack.c.l.b16 %v1318
        %v4826 = vunpack.c.h.b16 %v1318
        %v4827 = vunpack.c.l.b16 %v1319
        %v4828 = vunpack.c.h.b16 %v1319
        %v4829 = vunpack.c.l.b16 %v1320
        %v4830 = vunpack.c.h.b16 %v1320
        %v4831 = vunpack.c.l.b16 %v1321
        %v4832 = vunpack.c.h.b16 %v1321
        %v4833 = vunpack.c.l.b16 %v1322
        %v4834 = vunpack.c.h.b16 %v1322
        %v4835 = vunpack.c.l.b16 %v1323
        %v4836 = vunpack.c.h.b16 %v1323
        %v4837 = vunpack.c.l.b16 %v1324
        %v4838 = vunpack.c.h.b16 %v1324
        %v4839 = vunpack.c.l.b16 %v1325
        %v4840 = vunpack.c.h.b16 %v1325
        %v4841 = vunpack.c.l.b16 %v1326
        %v4842 = vunpack.c.h.b16 %v1326
        %v4843 = vunpack.c.l.b16 %v1327
        %v4844 = vunpack.c.h.b16 %v1327
        %v4845 = vunpack.c.l.b16 %v1328
        %v4846 = vunpack.c.h.b16 %v1328
        %v4847 = vunpack.c.l.b16 %v1329
        %v4848 = vunpack.c.h.b16 %v1329
        %v4849 = vunpack.c.l.b16 %v1330
        %v4850 = vunpack.c.h.b16 %v1330
        %v4851 = vunpack.c.l.b16 %v1331
        %v4852 = vunpack.c.h.b16 %v1331
        %v4853 = vunpack.c.l.b16 %v1332
        %v4854 = vunpack.c.h.b16 %v1332
        %v4855 = vunpack.c.l.b16 %v1333
        %v4856 = vunpack.c.h.b16 %v1333
        %v4857 = vunpack.c.l.b16 %v1334
        %v4858 = vunpack.c.h.b16 %v1334
        %v4859 = vunpack.c.l.b16 %v1335
        %v4860 = vunpack.c.h.b16 %v1335
        %v4861 = vunpack.c.l.b16 %v1336
        %v4862 = vunpack.c.h.b16 %v1336
        %v4863 = vunpack.c.l.b16 %v1337
        %v4864 = vunpack.c.h.b16 %v1337
        %v4865 = vunpack.c.l.b16 %v1338
        %v4866 = vunpack.c.h.b16 %v1338
        %v4867 = vpack.c.b16 %v2635, %v2617
        %v4868 = vpack.c.b16 %v2636, %v2618
        %v4869 = vpack.c.b16 %v2637, %v2619
        %v4870 = vpack.c.b16 %v2638, %v2620
        %v4871 = vpack.c.b16 %v2639, %v2621
        %v4872 = vpack.c.b16 %v2640, %v2622
        %v4873 = vpack.c.b16 %v2641, %v2623
        %v4874 = vpack.c.b16 %v2642, %v2624
        %v4875 = vpack.c.b16 %v2643, %v2625
        %v4876 = vpack.c.b16 %v2644, %v2626
        %v4877 = vpack.c.b16 %v2645, %v2627
        %v4878 = vpack.c.b16 %v2646, %v2628
        %v4879 = vpack.c.b16 %v2647, %v2629
        %v4880 = vpack.c.b16 %v2648, %v2630
        %v4881 = vpack.c.b16 %v2649, %v2631
        %v4882 = vpack.c.b16 %v2650, %v2632
        %v4883 = vpack.c.b16 %v2651, %v2633
        %v4884 = vpack.c.b16 %v2652, %v2634
        %v4885 = vpack.c.b16 %v2671, %v2653
        %v4886 = vpack.c.b16 %v2672, %v2654
        %v4887 = vpack.c.b16 %v2673, %v2655
        %v4888 = vpack.c.b16 %v2674, %v2656
        %v4889 = vpack.c.b16 %v2675, %v2657
        %v4890 = vpack.c.b16 %v2676, %v2658
        %v4891 = vpack.c.b16 %v2677, %v2659
        %v4892 = vpack.c.b16 %v2678, %v2660
        %v4893 = vpack.c.b16 %v2679, %v2661
        %v4894 = vpack.c.b16 %v2680, %v2662
        %v4895 = vpack.c.b16 %v2681, %v2663
        %v4896 = vpack.c.b16 %v2682, %v2664
        %v4897 = vpack.c.b16 %v2683, %v2665
        %v4898 = vpack.c.b16 %v2684, %v2666
        %v4899 = vpack.c.b16 %v2685, %v2667
        %v4900 = vpack.c.b16 %v2686, %v2668
        %v4901 = vpack.c.b16 %v2687, %v2669
        %v4902 = vpack.c.b16 %v2688, %v2670
        %v4903 = vpack.c.b16 %v2707, %v2689
        %v4904 = vpack.c.b16 %v2708, %v2690
        %v4905 = vpack.c.b16 %v2709, %v2691
        %v4906 = vpack.c.b16 %v2710, %v2692
        %v4907 = vpack.c.b16 %v2711, %v2693
        %v4908 = vpack.c.b16 %v2712, %v2694
        %v4909 = vpack.c.b16 %v2713, %v2695
        %v4910 = vpack.c.b16 %v2714, %v2696
        %v4911 = vpack.c.b16 %v2715, %v2697
        %v4912 = vpack.c.b16 %v2716, %v2698
        %v4913 = vpack.c.b16 %v2717, %v2699
        %v4914 = vpack.c.b16 %v2718, %v2700
        %v4915 = vpack.c.b16 %v2719, %v2701
        %v4916 = vpack.c.b16 %v2720, %v2702
        %v4917 = vpack.c.b16 %v2721, %v2703
        %v4918 = vpack.c.b16 %v2722, %v2704
        %v4919 = vpack.c.b16 %v2723, %v2705
        %v4920 = vpack.c.b16 %v2724, %v2706
        %v4921 = vpack.c.b16 %v2743, %v2725
        %v4922 = vpack.c.b16 %v2744, %v2726
        %v4923 = vpack.c.b16 %v2745, %v2727
        %v4924 = vpack.c.b16 %v2746, %v2728
        %v4925 = vpack.c.b16 %v2747, %v2729
        %v4926 = vpack.c.b16 %v2748, %v2730
        %v4927 = vpack.c.b16 %v2749, %v2731
        %v4928 = vpack.c.b16 %v2750, %v2732
        %v4929 = vpack.c.b16 %v2751, %v2733
        %v4930 = vpack.c.b16 %v2752, %v2734
        %v4931 = vpack.c.b16 %v2753, %v2735
        %v4932 = vpack.c.b16 %v2754, %v2736
        %v4933 = vpack.c.b16 %v2755, %v2737
        %v4934 = vpack.c.b16 %v2756, %v2738
        %v4935 = vpack.c.b16 %v2757, %v2739
        %v4936 = vpack.c.b16 %v2758, %v2740
        %v4937 = vpack.c.b16 %v2759, %v2741
        %v4938 = vpack.c.b16 %v2760, %v2742
        %v4939 = vpack.c.b16 %v2779, %v2761
        %v4940 = vpack.c.b16 %v2780, %v2762
        %v4941 = vpack.c.b16 %v2781, %v2763
        %v4942 = vpack.c.b16 %v2782, %v2764
        %v4943 = vpack.c.b16 %v2783, %v2765
        %v4944 = vpack.c.b16 %v2784, %v2766
        %v4945 = vpack.c.b16 %v2785, %v2767
        %v4946 = vpack.c.b16 %v2786, %v2768
        %v4947 = vpack.c.b16 %v2787, %v2769
        %v4948 = vpack.c.b16 %v2788, %v2770
        %v4949 = vpack.c.b16 %v2789, %v2771
        %v4950 = vpack.c.b16 %v2790, %v2772
        %v4951 = vpack.c.b16 %v2791, %v2773
        %v4952 = vpack.c.b16 %v2792, %v2774
        %v4953 = vpack.c.b16 %v2793, %v2775
        %v4954 = vpack.c.b16 %v2794, %v2776
        %v4955 = vpack.c.b16 %v2795, %v2777
        %v4956 = vpack.c.b16 %v2796, %v2778
        %v4957 = vpack.c.b16 %v2815, %v2797
        %v4958 = vpack.c.b16 %v2816, %v2798
        %v4959 = vpack.c.b16 %v2817, %v2799
        %v4960 = vpack.c.b16 %v2818, %v2800
        %v4961 = vpack.c.b16 %v2819, %v2801
        %v4962 = vpack.c.b16 %v2820, %v2802
        %v4963 = vpack.c.b16 %v2821, %v2803
        %v4964 = vpack.c.b16 %v2822, %v2804
        %v4965 = vpack.c.b16 %v2823, %v2805
        %v4966 = vpack.c.b16 %v2824, %v2806
        %v4967 = vpack.c.b16 %v2825, %v2807
        %v4968 = vpack.c.b16 %v2826, %v2808
        %v4969 = vpack.c.b16 %v2827, %v2809
        %v4970 = vpack.c.b16 %v2828, %v2810
        %v4971 = vpack.c.b16 %v2829, %v2811
        %v4972 = vpack.c.b16 %v2830, %v2812
        %v4973 = vpack.c.b16 %v2831, %v2813
        %v4974 = vpack.c.b16 %v2832, %v2814
        %v4975 = vpack.c.b16 %v2851, %v2833
        %v4976 = vpack.c.b16 %v2852, %v2834
        %v4977 = vpack.c.b16 %v2853, %v2835
        %v4978 = vpack.c.b16 %v2854, %v2836
        %v4979 = vpack.c.b16 %v2855, %v2837
        %v4980 = vpack.c.b16 %v2856, %v2838
        %v4981 = vpack.c.b16 %v2857, %v2839
        %v4982 = vpack.c.b16 %v2858, %v2840
        %v4983 = vpack.c.b16 %v2859, %v2841
        %v4984 = vpack.c.b16 %v2860, %v2842
        %v4985 = vpack.c.b16 %v2861, %v2843
        %v4986 = vpack.c.b16 %v2862, %v2844
        %v4987 = vpack.c.b16 %v2863, %v2845
        %v4988 = vpack.c.b16 %v2864, %v2846
        %v4989 = vpack.c.b16 %v2865, %v2847
        %v4990 = vpack.c.b16 %v2866, %v2848
        %v4991 = vpack.c.b16 %v2867, %v2849
        %v4992 = vpack.c.b16 %v2868, %v2850
        %v4993 = vpack.c.b16 %v2887, %v2869
        %v4994 = vpack.c.b16 %v2888, %v2870
        %v4995 = vpack.c.b16 %v2889, %v2871
        %v4996 = vpack.c.b16 %v2890, %v2872
        %v4997 = vpack.c.b16 %v2891, %v2873
        %v4998 = vpack.c.b16 %v2892, %v2874
        %v4999 = vpack.c.b16 %v2893, %v2875
        %v5000 = vpack.c.b16 %v2894, %v2876
        %v5001 = vpack.c.b16 %v2895, %v2877
        %v5002 = vpack.c.b16 %v2896, %v2878
        %v5003 = vpack.c.b16 %v2897, %v2879
        %v5004 = vpack.c.b16 %v2898, %v2880
        %v5005 = vpack.c.b16 %v2899, %v2881
        %v5006 = vpack.c.b16 %v2900, %v2882
        %v5007 = vpack.c.b16 %v2901, %v2883
        %v5008 = vpack.c.b16 %v2902, %v2884
        %v5009 = vpack.c.b16 %v2903, %v2885
        %v5010 = vpack.c.b16 %v2904, %v2886
        %v5011 = vpack.c.b16 %v2923, %v2905
        %v5012 = vpack.c.b16 %v2924, %v2906
        %v5013 = vpack.c.b16 %v2925, %v2907
        %v5014 = vpack.c.b16 %v2926, %v2908
        %v5015 = vpack.c.b16 %v2927, %v2909
        %v5016 = vpack.c.b16 %v2928, %v2910
        %v5017 = vpack.c.b16 %v2929, %v2911
        %v5018 = vpack.c.b16 %v2930, %v2912
        %v5019 = vpack.c.b16 %v2931, %v2913
        %v5020 = vpack.c.b16 %v2932, %v2914
        %v5021 = vpack.c.b16 %v2933, %v2915
        %v5022 = vpack.c.b16 %v2934, %v2916
        %v5023 = vpack.c.b16 %v2935, %v2917
        %v5024 = vpack.c.b16 %v2936, %v2918
        %v5025 = vpack.c.b16 %v2937, %v2919
        %v5026 = vpack.c.b16 %v2938, %v2920
        %v5027 = vpack.c.b16 %v2939, %v2921
        %v5028 = vpack.c.b16 %v2940, %v2922
        %v5029 = vpack.c.b16 %v2959, %v2941
        %v5030 = vpack.c.b16 %v2960, %v2942
        %v5031 = vpack.c.b16 %v2961, %v2943
        %v5032 = vpack.c.b16 %v2962, %v2944
        %v5033 = vpack.c.b16 %v2963, %v2945
        %v5034 = vpack.c.b16 %v2964, %v2946
        %v5035 = vpack.c.b16 %v2965, %v2947
        %v5036 = vpack.c.b16 %v2966, %v2948
        %v5037 = vpack.c.b16 %v2967, %v2949
        %v5038 = vpack.c.b16 %v2968, %v2950
        %v5039 = vpack.c.b16 %v2969, %v2951
        %v5040 = vpack.c.b16 %v2970, %v2952
        %v5041 = vpack.c.b16 %v2971, %v2953
        %v5042 = vpack.c.b16 %v2972, %v2954
        %v5043 = vpack.c.b16 %v2973, %v2955
        %v5044 = vpack.c.b16 %v2974, %v2956
        %v5045 = vpack.c.b16 %v2975, %v2957
        %v5046 = vpack.c.b16 %v2976, %v2958
        %v5047 = vpack.c.b16 %v2995, %v2977
        %v5048 = vpack.c.b16 %v2996, %v2978
        %v5049 = vpack.c.b16 %v2997, %v2979
        %v5050 = vpack.c.b16 %v2998, %v2980
        %v5051 = vpack.c.b16 %v2999, %v2981
        %v5052 = vpack.c.b16 %v3000, %v2982
        %v5053 = vpack.c.b16 %v3001, %v2983
        %v5054 = vpack.c.b16 %v3002, %v2984
        %v5055 = vpack.c.b16 %v3003, %v2985
        %v5056 = vpack.c.b16 %v3004, %v2986
        %v5057 = vpack.c.b16 %v3005, %v2987
        %v5058 = vpack.c.b16 %v3006, %v2988
        %v5059 = vpack.c.b16 %v3007, %v2989
        %v5060 = vpack.c.b16 %v3008, %v2990
        %v5061 = vpack.c.b16 %v3009, %v2991
        %v5062 = vpack.c.b16 %v3010, %v2992
        %v5063 = vpack.c.b16 %v3011, %v2993
        %v5064 = vpack.c.b16 %v3012, %v2994
        %v5065 = vpack.c.b16 %v3031, %v3013
        %v5066 = vpack.c.b16 %v3032, %v3014
        %v5067 = vpack.c.b16 %v3033, %v3015
        %v5068 = vpack.c.b16 %v3034, %v3016
        %v5069 = vpack.c.b16 %v3035, %v3017
        %v5070 = vpack.c.b16 %v3036, %v3018
        %v5071 = vpack.c.b16 %v3037, %v3019
        %v5072 = vpack.c.b16 %v3038, %v3020
        %v5073 = vpack.c.b16 %v3039, %v3021
        %v5074 = vpack.c.b16 %v3040, %v3022
        %v5075 = vpack.c.b16 %v3041, %v3023
        %v5076 = vpack.c.b16 %v3042, %v3024
        %v5077 = vpack.c.b16 %v3043, %v3025
        %v5078 = vpack.c.b16 %v3044, %v3026
        %v5079 = vpack.c.b16 %v3045, %v3027
        %v5080 = vpack.c.b16 %v3046, %v3028
        %v5081 = vpack.c.b16 %v3047, %v3029
        %v5082 = vpack.c.b16 %v3048, %v3030
        %v5083 = vpack.c.b16 %v3067, %v3049
        %v5084 = vpack.c.b16 %v3068, %v3050
        %v5085 = vpack.c.b16 %v3069, %v3051
        %v5086 = vpack.c.b16 %v3070, %v3052
        %v5087 = vpack.c.b16 %v3071, %v3053
        %v5088 = vpack.c.b16 %v3072, %v3054
        %v5089 = vpack.c.b16 %v3073, %v3055
        %v5090 = vpack.c.b16 %v3074, %v3056
        %v5091 = vpack.c.b16 %v3075, %v3057
        %v5092 = vpack.c.b16 %v3076, %v3058
        %v5093 = vpack.c.b16 %v3077, %v3059
        %v5094 = vpack.c.b16 %v3078, %v3060
        %v5095 = vpack.c.b16 %v3079, %v3061
        %v5096 = vpack.c.b16 %v3080, %v3062
        %v5097 = vpack.c.b16 %v3081, %v3063
        %v5098 = vpack.c.b16 %v3082, %v3064
        %v5099 = vpack.c.b16 %v3083, %v3065
        %v5100 = vpack.c.b16 %v3084, %v3066
        %v5101 = vpack.c.b16 %v3103, %v3085
        %v5102 = vpack.c.b16 %v3104, %v3086
        %v5103 = vpack.c.b16 %v3105, %v3087
        %v5104 = vpack.c.b16 %v3106, %v3088
        %v5105 = vpack.c.b16 %v3107, %v3089
        %v5106 = vpack.c.b16 %v3108, %v3090
        %v5107 = vpack.c.b16 %v3109, %v3091
        %v5108 = vpack.c.b16 %v3110, %v3092
        %v5109 = vpack.c.b16 %v3111, %v3093
        %v5110 = vpack.c.b16 %v3112, %v3094
        %v5111 = vpack.c.b16 %v3113, %v3095
        %v5112 = vpack.c.b16 %v3114, %v3096
        %v5113 = vpack.c.b16 %v3115, %v3097
        %v5114 = vpack.c.b16 %v3116, %v3098
        %v5115 = vpack.c.b16 %v3117, %v3099
        %v5116 = vpack.c.b16 %v3118, %v3100
        %v5117 = vpack.c.b16 %v3119, %v3101
        %v5118 = vpack.c.b16 %v3120, %v3102
        %v5119 = vpack.c.b16 %v3139, %v3121
        %v5120 = vpack.c.b16 %v3140, %v3122
        %v5121 = vpack.c.b16 %v3141, %v3123
        %v5122 = vpack.c.b16 %v3142, %v3124
        %v5123 = vpack.c.b16 %v3143, %v3125
        %v5124 = vpack.c.b16 %v3144, %v3126
        %v5125 = vpack.c.b16 %v3145, %v3127
        %v5126 = vpack.c.b16 %v3146, %v3128
        %v5127 = vpack.c.b16 %v3147, %v3129
        %v5128 = vpack.c.b16 %v3148, %v3130
        %v5129 = vpack.c.b16 %v3149, %v3131
        %v5130 = vpack.c.b16 %v3150, %v3132
        %v5131 = vpack.c.b16 %v3151, %v3133
        %v5132 = vpack.c.b16 %v3152, %v3134
        %v5133 = vpack.c.b16 %v3153, %v3135
        %v5134 = vpack.c.b16 %v3154, %v3136
        %v5135 = vpack.c.b16 %v3155, %v3137
        %v5136 = vpack.c.b16 %v3156, %v3138
        %v5137 = vpack.c.b16 %v3175, %v3157
        %v5138 = vpack.c.b16 %v3176, %v3158
        %v5139 = vpack.c.b16 %v3177, %v3159
        %v5140 = vpack.c.b16 %v3178, %v3160
        %v5141 = vpack.c.b16 %v3179, %v3161
        %v5142 = vpack.c.b16 %v3180, %v3162
        %v5143 = vpack.c.b16 %v3181, %v3163
        %v5144 = vpack.c.b16 %v3182, %v3164
        %v5145 = vpack.c.b16 %v3183, %v3165
        %v5146 = vpack.c.b16 %v3184, %v3166
        %v5147 = vpack.c.b16 %v3185, %v3167
        %v5148 = vpack.c.b16 %v3186, %v3168
        %v5149 = vpack.c.b16 %v3187, %v3169
        %v5150 = vpack.c.b16 %v3188, %v3170
        %v5151 = vpack.c.b16 %v3189, %v3171
        %v5152 = vpack.c.b16 %v3190, %v3172
        %v5153 = vpack.c.b16 %v3191, %v3173
        %v5154 = vpack.c.b16 %v3192, %v3174
        %v5155 = vpack.c.b16 %v3211, %v3193
        %v5156 = vpack.c.b16 %v3212, %v3194
        %v5157 = vpack.c.b16 %v3213, %v3195
        %v5158 = vpack.c.b16 %v3214, %v3196
        %v5159 = vpack.c.b16 %v3215, %v3197
        %v5160 = vpack.c.b16 %v3216, %v3198
        %v5161 = vpack.c.b16 %v3217, %v3199
        %v5162 = vpack.c.b16 %v3218, %v3200
        %v5163 = vpack.c.b16 %v3219, %v3201
        %v5164 = vpack.c.b16 %v3220, %v3202
        %v5165 = vpack.c.b16 %v3221, %v3203
        %v5166 = vpack.c.b16 %v3222, %v3204
        %v5167 = vpack.c.b16 %v3223, %v3205
        %v5168 = vpack.c.b16 %v3224, %v3206
        %v5169 = vpack.c.b16 %v3225, %v3207
        %v5170 = vpack.c.b16 %v3226, %v3208
        %v5171 = vpack.c.b16 %v3227, %v3209
        %v5172 = vpack.c.b16 %v3228, %v3210
        %v5173 = vpack.c.b16 %v3247, %v3229
        %v5174 = vpack.c.b16 %v3248, %v3230
        %v5175 = vpack.c.b16 %v3249, %v3231
        %v5176 = vpack.c.b16 %v3250, %v3232
        %v5177 = vpack.c.b16 %v3251, %v3233
        %v5178 = vpack.c.b16 %v3252, %v3234
        %v5179 = vpack.c.b16 %v3253, %v3235
        %v5180 = vpack.c.b16 %v3254, %v3236
        %v5181 = vpack.c.b16 %v3255, %v3237
        %v5182 = vpack.c.b16 %v3256, %v3238
        %v5183 = vpack.c.b16 %v3257, %v3239
        %v5184 = vpack.c.b16 %v3258, %v3240
        %v5185 = vpack.c.b16 %v3259, %v3241
        %v5186 = vpack.c.b16 %v3260, %v3242
        %v5187 = vpack.c.b16 %v3261, %v3243
        %v5188 = vpack.c.b16 %v3262, %v3244
        %v5189 = vpack.c.b16 %v3263, %v3245
        %v5190 = vpack.c.b16 %v3264, %v3246
        %v5191 = vpack.c.b16 %v3283, %v3265
        %v5192 = vpack.c.b16 %v3284, %v3266
        %v5193 = vpack.c.b16 %v3285, %v3267
        %v5194 = vpack.c.b16 %v3286, %v3268
        %v5195 = vpack.c.b16 %v3287, %v3269
        %v5196 = vpack.c.b16 %v3288, %v3270
        %v5197 = vpack.c.b16 %v3289, %v3271
        %v5198 = vpack.c.b16 %v3290, %v3272
        %v5199 = vpack.c.b16 %v3291, %v3273
        %v5200 = vpack.c.b16 %v3292, %v3274
        %v5201 = vpack.c.b16 %v3293, %v3275
        %v5202 = vpack.c.b16 %v3294, %v3276
        %v5203 = vpack.c.b16 %v3295, %v3277
        %v5204 = vpack.c.b16 %v3296, %v3278
        %v5205 = vpack.c.b16 %v3297, %v3279
        %v5206 = vpack.c.b16 %v3298, %v3280
        %v5207 = vpack.c.b16 %v3299, %v3281
        %v5208 = vpack.c.b16 %v3300, %v3282
        %v5209 = vpack.c.b16 %v3319, %v3301
        %v5210 = vpack.c.b16 %v3320, %v3302
        %v5211 = vpack.c.b16 %v3321, %v3303
        %v5212 = vpack.c.b16 %v3322, %v3304
        %v5213 = vpack.c.b16 %v3323, %v3305
        %v5214 = vpack.c.b16 %v3324, %v3306
        %v5215 = vpack.c.b16 %v3325, %v3307
        %v5216 = vpack.c.b16 %v3326, %v3308
        %v5217 = vpack.c.b16 %v3327, %v3309
        %v5218 = vpack.c.b16 %v3328, %v3310
        %v5219 = vpack.c.b16 %v3329, %v3311
        %v5220 = vpack.c.b16 %v3330, %v3312
        %v5221 = vpack.c.b16 %v3331, %v3313
        %v5222 = vpack.c.b16 %v3332, %v3314
        %v5223 = vpack.c.b16 %v3333, %v3315
        %v5224 = vpack.c.b16 %v3334, %v3316
        %v5225 = vpack.c.b16 %v3335, %v3317
        %v5226 = vpack.c.b16 %v3336, %v3318
        %v5227 = vpack.c.b16 %v3355, %v3337
        %v5228 = vpack.c.b16 %v3356, %v3338
        %v5229 = vpack.c.b16 %v3357, %v3339
        %v5230 = vpack.c.b16 %v3358, %v3340
        %v5231 = vpack.c.b16 %v3359, %v3341
        %v5232 = vpack.c.b16 %v3360, %v3342
        %v5233 = vpack.c.b16 %v3361, %v3343
        %v5234 = vpack.c.b16 %v3362, %v3344
        %v5235 = vpack.c.b16 %v3363, %v3345
        %v5236 = vpack.c.b16 %v3364, %v3346
        %v5237 = vpack.c.b16 %v3365, %v3347
        %v5238 = vpack.c.b16 %v3366, %v3348
        %v5239 = vpack.c.b16 %v3367, %v3349
        %v5240 = vpack.c.b16 %v3368, %v3350
        %v5241 = vpack.c.b16 %v3369, %v3351
        %v5242 = vpack.c.b16 %v3370, %v3352
        %v5243 = vpack.c.b16 %v3371, %v3353
        %v5244 = vpack.c.b16 %v3372, %v3354
        %v5245 = vpack.c.b16 %v3391, %v3373
        %v5246 = vpack.c.b16 %v3392, %v3374
        %v5247 = vpack.c.b16 %v3393, %v3375
        %v5248 = vpack.c.b16 %v3394, %v3376
        %v5249 = vpack.c.b16 %v3395, %v3377
        %v5250 = vpack.c.b16 %v3396, %v3378
        %v5251 = vpack.c.b16 %v3397, %v3379
        %v5252 = vpack.c.b16 %v3398, %v3380
        %v5253 = vpack.c.b16 %v3399, %v3381
        %v5254 = vpack.c.b16 %v3400, %v3382
        %v5255 = vpack.c.b16 %v3401, %v3383
        %v5256 = vpack.c.b16 %v3402, %v3384
        %v5257 = vpack.c.b16 %v3403, %v3385
        %v5258 = vpack.c.b16 %v3404, %v3386
        %v5259 = vpack.c.b16 %v3405, %v3387
        %v5260 = vpack.c.b16 %v3406, %v3388
        %v5261 = vpack.c.b16 %v3407, %v3389
        %v5262 = vpack.c.b16 %v3408, %v3390
        %v5263 = vpack.c.b16 %v3427, %v3409
        %v5264 = vpack.c.b16 %v3428, %v3410
        %v5265 = vpack.c.b16 %v3429, %v3411
        %v5266 = vpack.c.b16 %v3430, %v3412
        %v5267 = vpack.c.b16 %v3431, %v3413
        %v5268 = vpack.c.b16 %v3432, %v3414
        %v5269 = vpack.c.b16 %v3433, %v3415
        %v5270 = vpack.c.b16 %v3434, %v3416
        %v5271 = vpack.c.b16 %v3435, %v3417
        %v5272 = vpack.c.b16 %v3436, %v3418
        %v5273 = vpack.c.b16 %v3437, %v3419
        %v5274 = vpack.c.b16 %v3438, %v3420
        %v5275 = vpack.c.b16 %v3439, %v3421
        %v5276 = vpack.c.b16 %v3440, %v3422
        %v5277 = vpack.c.b16 %v3441, %v3423
        %v5278 = vpack.c.b16 %v3442, %v3424
        %v5279 = vpack.c.b16 %v3443, %v3425
        %v5280 = vpack.c.b16 %v3444, %v3426
        %v5281 = vpack.c.b16 %v3463, %v3445
        %v5282 = vpack.c.b16 %v3464, %v3446
        %v5283 = vpack.c.b16 %v3465, %v3447
        %v5284 = vpack.c.b16 %v3466, %v3448
        %v5285 = vpack.c.b16 %v3467, %v3449
        %v5286 = vpack.c.b16 %v3468, %v3450
        %v5287 = vpack.c.b16 %v3469, %v3451
        %v5288 = vpack.c.b16 %v3470, %v3452
        %v5289 = vpack.c.b16 %v3471, %v3453
        %v5290 = vpack.c.b16 %v3472, %v3454
        %v5291 = vpack.c.b16 %v3473, %v3455
        %v5292 = vpack.c.b16 %v3474, %v3456
        %v5293 = vpack.c.b16 %v3475, %v3457
        %v5294 = vpack.c.b16 %v3476, %v3458
        %v5295 = vpack.c.b16 %v3477, %v3459
        %v5296 = vpack.c.b16 %v3478, %v3460
        %v5297 = vpack.c.b16 %v3479, %v3461
        %v5298 = vpack.c.b16 %v3480, %v3462
        %v5299 = vpack.c.b16 %v3499, %v3481
        %v5300 = vpack.c.b16 %v3500, %v3482
        %v5301 = vpack.c.b16 %v3501, %v3483
        %v5302 = vpack.c.b16 %v3502, %v3484
        %v5303 = vpack.c.b16 %v3503, %v3485
        %v5304 = vpack.c.b16 %v3504, %v3486
        %v5305 = vpack.c.b16 %v3505, %v3487
        %v5306 = vpack.c.b16 %v3506, %v3488
        %v5307 = vpack.c.b16 %v3507, %v3489
        %v5308 = vpack.c.b16 %v3508, %v3490
        %v5309 = vpack.c.b16 %v3509, %v3491
        %v5310 = vpack.c.b16 %v3510, %v3492
        %v5311 = vpack.c.b16 %v3511, %v3493
        %v5312 = vpack.c.b16 %v3512, %v3494
        %v5313 = vpack.c.b16 %v3513, %v3495
        %v5314 = vpack.c.b16 %v3514, %v3496
        %v5315 = vpack.c.b16 %v3515, %v3497
        %v5316 = vpack.c.b16 %v3516, %v3498
        %v5317 = vpack.c.b16 %v3535, %v3517
        %v5318 = vpack.c.b16 %v3536, %v3518
        %v5319 = vpack.c.b16 %v3537, %v3519
        %v5320 = vpack.c.b16 %v3538, %v3520
        %v5321 = vpack.c.b16 %v3539, %v3521
        %v5322 = vpack.c.b16 %v3540, %v3522
        %v5323 = vpack.c.b16 %v3541, %v3523
        %v5324 = vpack.c.b16 %v3542, %v3524
        %v5325 = vpack.c.b16 %v3543, %v3525
        %v5326 = vpack.c.b16 %v3544, %v3526
        %v5327 = vpack.c.b16 %v3545, %v3527
        %v5328 = vpack.c.b16 %v3546, %v3528
        %v5329 = vpack.c.b16 %v3547, %v3529
        %v5330 = vpack.c.b16 %v3548, %v3530
        %v5331 = vpack.c.b16 %v3549, %v3531
        %v5332 = vpack.c.b16 %v3550, %v3532
        %v5333 = vpack.c.b16 %v3551, %v3533
        %v5334 = vpack.c.b16 %v3552, %v3534
        %v5335 = vpack.c.b16 %v3571, %v3553
        %v5336 = vpack.c.b16 %v3572, %v3554
        %v5337 = vpack.c.b16 %v3573, %v3555
        %v5338 = vpack.c.b16 %v3574, %v3556
        %v5339 = vpack.c.b16 %v3575, %v3557
        %v5340 = vpack.c.b16 %v3576, %v3558
        %v5341 = vpack.c.b16 %v3577, %v3559
        %v5342 = vpack.c.b16 %v3578, %v3560
        %v5343 = vpack.c.b16 %v3579, %v3561
        %v5344 = vpack.c.b16 %v3580, %v3562
        %v5345 = vpack.c.b16 %v3581, %v3563
        %v5346 = vpack.c.b16 %v3582, %v3564
        %v5347 = vpack.c.b16 %v3583, %v3565
        %v5348 = vpack.c.b16 %v3584, %v3566
        %v5349 = vpack.c.b16 %v3585, %v3567
        %v5350 = vpack.c.b16 %v3586, %v3568
        %v5351 = vpack.c.b16 %v3587, %v3569
        %v5352 = vpack.c.b16 %v3588, %v3570
        %v5353 = vpack.c.b16 %v3607, %v3589
        %v5354 = vpack.c.b16 %v3608, %v3590
        %v5355 = vpack.c.b16 %v3609, %v3591
        %v5356 = vpack.c.b16 %v3610, %v3592
        %v5357 = vpack.c.b16 %v3611, %v3593
        %v5358 = vpack.c.b16 %v3612, %v3594
        %v5359 = vpack.c.b16 %v3613, %v3595
        %v5360 = vpack.c.b16 %v3614, %v3596
        %v5361 = vpack.c.b16 %v3615, %v3597
        %v5362 = vpack.c.b16 %v3616, %v3598
        %v5363 = vpack.c.b16 %v3617, %v3599
        %v5364 = vpack.c.b16 %v3618, %v3600
        %v5365 = vpack.c.b16 %v3619, %v3601
        %v5366 = vpack.c.b16 %v3620, %v3602
        %v5367 = vpack.c.b16 %v3621, %v3603
        %v5368 = vpack.c.b16 %v3622, %v3604
        %v5369 = vpack.c.b16 %v3623, %v3605
        %v5370 = vpack.c.b16 %v3624, %v3606
        %v5371 = vpack.c.b16 %v3643, %v3625
        %v5372 = vpack.c.b16 %v3644, %v3626
        %v5373 = vpack.c.b16 %v3645, %v3627
        %v5374 = vpack.c.b16 %v3646, %v3628
        %v5375 = vpack.c.b16 %v3647, %v3629
        %v5376 = vpack.c.b16 %v3648, %v3630
        %v5377 = vpack.c.b16 %v3649, %v3631
        %v5378 = vpack.c.b16 %v3650, %v3632
        %v5379 = vpack.c.b16 %v3651, %v3633
        %v5380 = vpack.c.b16 %v3652, %v3634
        %v5381 = vpack.c.b16 %v3653, %v3635
        %v5382 = vpack.c.b16 %v3654, %v3636
        %v5383 = vpack.c.b16 %v3655, %v3637
        %v5384 = vpack.c.b16 %v3656, %v3638
        %v5385 = vpack.c.b16 %v3657, %v3639
        %v5386 = vpack.c.b16 %v3658, %v3640
        %v5387 = vpack.c.b16 %v3659, %v3641
        %v5388 = vpack.c.b16 %v3660, %v3642
        %v5389 = vpack.c.b16 %v3679, %v3661
        %v5390 = vpack.c.b16 %v3680, %v3662
        %v5391 = vpack.c.b16 %v3681, %v3663
        %v5392 = vpack.c.b16 %v3682, %v3664
        %v5393 = vpack.c.b16 %v3683, %v3665
        %v5394 = vpack.c.b16 %v3684, %v3666
        %v5395 = vpack.c.b16 %v3685, %v3667
        %v5396 = vpack.c.b16 %v3686, %v3668
        %v5397 = vpack.c.b16 %v3687, %v3669
        %v5398 = vpack.c.b16 %v3688, %v3670
        %v5399 = vpack.c.b16 %v3689, %v3671
        %v5400 = vpack.c.b16 %v3690, %v3672
        %v5401 = vpack.c.b16 %v3691, %v3673
        %v5402 = vpack.c.b16 %v3692, %v3674
        %v5403 = vpack.c.b16 %v3693, %v3675
        %v5404 = vpack.c.b16 %v3694, %v3676
        %v5405 = vpack.c.b16 %v3695, %v3677
        %v5406 = vpack.c.b16 %v3696, %v3678
        %v5407 = vpack.c.b16 %v3715, %v3697
        %v5408 = vpack.c.b16 %v3716, %v3698
        %v5409 = vpack.c.b16 %v3717, %v3699
        %v5410 = vpack.c.b16 %v3718, %v3700
        %v5411 = vpack.c.b16 %v3719, %v3701
        %v5412 = vpack.c.b16 %v3720, %v3702
        %v5413 = vpack.c.b16 %v3721, %v3703
        %v5414 = vpack.c.b16 %v3722, %v3704
        %v5415 = vpack.c.b16 %v3723, %v3705
        %v5416 = vpack.c.b16 %v3724, %v3706
        %v5417 = vpack.c.b16 %v3725, %v3707
        %v5418 = vpack.c.b16 %v3726, %v3708
        %v5419 = vpack.c.b16 %v3727, %v3709
        %v5420 = vpack.c.b16 %v3728, %v3710
        %v5421 = vpack.c.b16 %v3729, %v3711
        %v5422 = vpack.c.b16 %v3730, %v3712
        %v5423 = vpack.c.b16 %v3731, %v3713
        %v5424 = vpack.c.b16 %v3732, %v3714
        %v5425 = vpack.c.b16 %v3751, %v3733
        %v5426 = vpack.c.b16 %v3752, %v3734
        %v5427 = vpack.c.b16 %v3753, %v3735
        %v5428 = vpack.c.b16 %v3754, %v3736
        %v5429 = vpack.c.b16 %v3755, %v3737
        %v5430 = vpack.c.b16 %v3756, %v3738
        %v5431 = vpack.c.b16 %v3757, %v3739
        %v5432 = vpack.c.b16 %v3758, %v3740
        %v5433 = vpack.c.b16 %v3759, %v3741
        %v5434 = vpack.c.b16 %v3760, %v3742
        %v5435 = vpack.c.b16 %v3761, %v3743
        %v5436 = vpack.c.b16 %v3762, %v3744
        %v5437 = vpack.c.b16 %v3763, %v3745
        %v5438 = vpack.c.b16 %v3764, %v3746
        %v5439 = vpack.c.b16 %v3765, %v3747
        %v5440 = vpack.c.b16 %v3766, %v3748
        %v5441 = vpack.c.b16 %v3767, %v3749
        %v5442 = vpack.c.b16 %v3768, %v3750
        %v5443 = vpack.c.b16 %v3787, %v3769
        %v5444 = vpack.c.b16 %v3788, %v3770
        %v5445 = vpack.c.b16 %v3789, %v3771
        %v5446 = vpack.c.b16 %v3790, %v3772
        %v5447 = vpack.c.b16 %v3791, %v3773
        %v5448 = vpack.c.b16 %v3792, %v3774
        %v5449 = vpack.c.b16 %v3793, %v3775
        %v5450 = vpack.c.b16 %v3794, %v3776
        %v5451 = vpack.c.b16 %v3795, %v3777
        %v5452 = vpack.c.b16 %v3796, %v3778
        %v5453 = vpack.c.b16 %v3797, %v3779
        %v5454 = vpack.c.b16 %v3798, %v3780
        %v5455 = vpack.c.b16 %v3799, %v3781
        %v5456 = vpack.c.b16 %v3800, %v3782
        %v5457 = vpack.c.b16 %v3801, %v3783
        %v5458 = vpack.c.b16 %v3802, %v3784
        %v5459 = vpack.c.b16 %v3803, %v3785
        %v5460 = vpack.c.b16 %v3804, %v3786
        %v5461 = vpack.c.b16 %v3823, %v3805
        %v5462 = vpack.c.b16 %v3824, %v3806
        %v5463 = vpack.c.b16 %v3825, %v3807
        %v5464 = vpack.c.b16 %v3826, %v3808
        %v5465 = vpack.c.b16 %v3827, %v3809
        %v5466 = vpack.c.b16 %v3828, %v3810
        %v5467 = vpack.c.b16 %v3829, %v3811
        %v5468 = vpack.c.b16 %v3830, %v3812
        %v5469 = vpack.c.b16 %v3831, %v3813
        %v5470 = vpack.c.b16 %v3832, %v3814
        %v5471 = vpack.c.b16 %v3833, %v3815
        %v5472 = vpack.c.b16 %v3834, %v3816
        %v5473 = vpack.c.b16 %v3835, %v3817
        %v5474 = vpack.c.b16 %v3836, %v3818
        %v5475 = vpack.c.b16 %v3837, %v3819
        %v5476 = vpack.c.b16 %v3838, %v3820
        %v5477 = vpack.c.b16 %v3839, %v3821
        %v5478 = vpack.c.b16 %v3840, %v3822
        %v5479 = vpack.c.b16 %v3859, %v3841
        %v5480 = vpack.c.b16 %v3860, %v3842
        %v5481 = vpack.c.b16 %v3861, %v3843
        %v5482 = vpack.c.b16 %v3862, %v3844
        %v5483 = vpack.c.b16 %v3863, %v3845
        %v5484 = vpack.c.b16 %v3864, %v3846
        %v5485 = vpack.c.b16 %v3865, %v3847
        %v5486 = vpack.c.b16 %v3866, %v3848
        %v5487 = vpack.c.b16 %v3867, %v3849
        %v5488 = vpack.c.b16 %v3868, %v3850
        %v5489 = vpack.c.b16 %v3869, %v3851
        %v5490 = vpack.c.b16 %v3870, %v3852
        %v5491 = vpack.c.b16 %v3871, %v3853
        %v5492 = vpack.c.b16 %v3872, %v3854
        %v5493 = vpack.c.b16 %v3873, %v3855
        %v5494 = vpack.c.b16 %v3874, %v3856
        %v5495 = vpack.c.b16 %v3875, %v3857
        %v5496 = vpack.c.b16 %v3876, %v3858
        %v5497 = vpack.c.b16 %v3895, %v3877
        %v5498 = vpack.c.b16 %v3896, %v3878
        %v5499 = vpack.c.b16 %v3897, %v3879
        %v5500 = vpack.c.b16 %v3898, %v3880
        %v5501 = vpack.c.b16 %v3899, %v3881
        %v5502 = vpack.c.b16 %v3900, %v3882
        %v5503 = vpack.c.b16 %v3901, %v3883
        %v5504 = vpack.c.b16 %v3902, %v3884
        %v5505 = vpack.c.b16 %v3903, %v3885
        %v5506 = vpack.c.b16 %v3904, %v3886
        %v5507 = vpack.c.b16 %v3905, %v3887
        %v5508 = vpack.c.b16 %v3906, %v3888
        %v5509 = vpack.c.b16 %v3907, %v3889
        %v5510 = vpack.c.b16 %v3908, %v3890
        %v5511 = vpack.c.b16 %v3909, %v3891
        %v5512 = vpack.c.b16 %v3910, %v3892
        %v5513 = vpack.c.b16 %v3911, %v3893
        %v5514 = vpack.c.b16 %v3912, %v3894
        %v5515 = vpack.c.b16 %v3931, %v3913
        %v5516 = vpack.c.b16 %v3932, %v3914
        %v5517 = vpack.c.b16 %v3933, %v3915
        %v5518 = vpack.c.b16 %v3934, %v3916
        %v5519 = vpack.c.b16 %v3935, %v3917
        %v5520 = vpack.c.b16 %v3936, %v3918
        %v5521 = vpack.c.b16 %v3937, %v3919
        %v5522 = vpack.c.b16 %v3938, %v3920
        %v5523 = vpack.c.b16 %v3939, %v3921
        %v5524 = vpack.c.b16 %v3940, %v3922
        %v5525 = vpack.c.b16 %v3941, %v3923
        %v5526 = vpack.c.b16 %v3942, %v3924
        %v5527 = vpack.c.b16 %v3943, %v3925
        %v5528 = vpack.c.b16 %v3944, %v3926
        %v5529 = vpack.c.b16 %v3945, %v3927
        %v5530 = vpack.c.b16 %v3946, %v3928
        %v5531 = vpack.c.b16 %v3947, %v3929
        %v5532 = vpack.c.b16 %v3948, %v3930
        %v5533 = vpack.c.b16 %v3967, %v3949
        %v5534 = vpack.c.b16 %v3968, %v3950
        %v5535 = vpack.c.b16 %v3969, %v3951
        %v5536 = vpack.c.b16 %v3970, %v3952
        %v5537 = vpack.c.b16 %v3971, %v3953
        %v5538 = vpack.c.b16 %v3972, %v3954
        %v5539 = vpack.c.b16 %v3973, %v3955
        %v5540 = vpack.c.b16 %v3974, %v3956
        %v5541 = vpack.c.b16 %v3975, %v3957
        %v5542 = vpack.c.b16 %v3976, %v3958
        %v5543 = vpack.c.b16 %v3977, %v3959
        %v5544 = vpack.c.b16 %v3978, %v3960
        %v5545 = vpack.c.b16 %v3979, %v3961
        %v5546 = vpack.c.b16 %v3980, %v3962
        %v5547 = vpack.c.b16 %v3981, %v3963
        %v5548 = vpack.c.b16 %v3982, %v3964
        %v5549 = vpack.c.b16 %v3983, %v3965
        %v5550 = vpack.c.b16 %v3984, %v3966
        %v5551 = vpack.c.b16 %v4003, %v3985
        %v5552 = vpack.c.b16 %v4004, %v3986
        %v5553 = vpack.c.b16 %v4005, %v3987
        %v5554 = vpack.c.b16 %v4006, %v3988
        %v5555 = vpack.c.b16 %v4007, %v3989
        %v5556 = vpack.c.b16 %v4008, %v3990
        %v5557 = vpack.c.b16 %v4009, %v3991
        %v5558 = vpack.c.b16 %v4010, %v3992
        %v5559 = vpack.c.b16 %v4011, %v3993
        %v5560 = vpack.c.b16 %v4012, %v3994
        %v5561 = vpack.c.b16 %v4013, %v3995
        %v5562 = vpack.c.b16 %v4014, %v3996
        %v5563 = vpack.c.b16 %v4015, %v3997
        %v5564 = vpack.c.b16 %v4016, %v3998
        %v5565 = vpack.c.b16 %v4017, %v3999
        %v5566 = vpack.c.b16 %v4018, %v4000
        %v5567 = vpack.c.b16 %v4019, %v4001
        %v5568 = vpack.c.b16 %v4020, %v4002
        %v5569 = vpack.c.b16 %v4039, %v4021
        %v5570 = vpack.c.b16 %v4040, %v4022
        %v5571 = vpack.c.b16 %v4041, %v4023
        %v5572 = vpack.c.b16 %v4042, %v4024
        %v5573 = vpack.c.b16 %v4043, %v4025
        %v5574 = vpack.c.b16 %v4044, %v4026
        %v5575 = vpack.c.b16 %v4045, %v4027
        %v5576 = vpack.c.b16 %v4046, %v4028
        %v5577 = vpack.c.b16 %v4047, %v4029
        %v5578 = vpack.c.b16 %v4048, %v4030
        %v5579 = vpack.c.b16 %v4049, %v4031
        %v5580 = vpack.c.b16 %v4050, %v4032
        %v5581 = vpack.c.b16 %v4051, %v4033
        %v5582 = vpack.c.b16 %v4052, %v4034
        %v5583 = vpack.c.b16 %v4053, %v4035
        %v5584 = vpack.c.b16 %v4054, %v4036
        %v5585 = vpack.c.b16 %v4055, %v4037
        %v5586 = vpack.c.b16 %v4056, %v4038
        %v5587 = vpack.c.b16 %v4075, %v4057
        %v5588 = vpack.c.b16 %v4076, %v4058
        %v5589 = vpack.c.b16 %v4077, %v4059
        %v5590 = vpack.c.b16 %v4078, %v4060
        %v5591 = vpack.c.b16 %v4079, %v4061
        %v5592 = vpack.c.b16 %v4080, %v4062
        %v5593 = vpack.c.b16 %v4081, %v4063
        %v5594 = vpack.c.b16 %v4082, %v4064
        %v5595 = vpack.c.b16 %v4083, %v4065
        %v5596 = vpack.c.b16 %v4084, %v4066
        %v5597 = vpack.c.b16 %v4085, %v4067
        %v5598 = vpack.c.b16 %v4086, %v4068
        %v5599 = vpack.c.b16 %v4087, %v4069
        %v5600 = vpack.c.b16 %v4088, %v4070
        %v5601 = vpack.c.b16 %v4089, %v4071
        %v5602 = vpack.c.b16 %v4090, %v4072
        %v5603 = vpack.c.b16 %v4091, %v4073
        %v5604 = vpack.c.b16 %v4092, %v4074
        %v5605 = vpack.c.b16 %v4111, %v4093
        %v5606 = vpack.c.b16 %v4112, %v4094
        %v5607 = vpack.c.b16 %v4113, %v4095
        %v5608 = vpack.c.b16 %v4114, %v4096
        %v5609 = vpack.c.b16 %v4115, %v4097
        %v5610 = vpack.c.b16 %v4116, %v4098
        %v5611 = vpack.c.b16 %v4117, %v4099
        %v5612 = vpack.c.b16 %v4118, %v4100
        %v5613 = vpack.c.b16 %v4119, %v4101
        %v5614 = vpack.c.b16 %v4120, %v4102
        %v5615 = vpack.c.b16 %v4121, %v4103
        %v5616 = vpack.c.b16 %v4122, %v4104
        %v5617 = vpack.c.b16 %v4123, %v4105
        %v5618 = vpack.c.b16 %v4124, %v4106
        %v5619 = vpack.c.b16 %v4125, %v4107
        %v5620 = vpack.c.b16 %v4126, %v4108
        %v5621 = vpack.c.b16 %v4127, %v4109
        %v5622 = vpack.c.b16 %v4128, %v4110
        %v5623 = vpack.c.b16 %v4147, %v4129
        %v5624 = vpack.c.b16 %v4148, %v4130
        %v5625 = vpack.c.b16 %v4149, %v4131
        %v5626 = vpack.c.b16 %v4150, %v4132
        %v5627 = vpack.c.b16 %v4151, %v4133
        %v5628 = vpack.c.b16 %v4152, %v4134
        %v5629 = vpack.c.b16 %v4153, %v4135
        %v5630 = vpack.c.b16 %v4154, %v4136
        %v5631 = vpack.c.b16 %v4155, %v4137
        %v5632 = vpack.c.b16 %v4156, %v4138
        %v5633 = vpack.c.b16 %v4157, %v4139
        %v5634 = vpack.c.b16 %v4158, %v4140
        %v5635 = vpack.c.b16 %v4159, %v4141
        %v5636 = vpack.c.b16 %v4160, %v4142
        %v5637 = vpack.c.b16 %v4161, %v4143
        %v5638 = vpack.c.b16 %v4162, %v4144
        %v5639 = vpack.c.b16 %v4163, %v4145
        %v5640 = vpack.c.b16 %v4164, %v4146
        %v5641 = vpack.c.b16 %v4183, %v4165
        %v5642 = vpack.c.b16 %v4184, %v4166
        %v5643 = vpack.c.b16 %v4185, %v4167
        %v5644 = vpack.c.b16 %v4186, %v4168
        %v5645 = vpack.c.b16 %v4187, %v4169
        %v5646 = vpack.c.b16 %v4188, %v4170
        %v5647 = vpack.c.b16 %v4189, %v4171
        %v5648 = vpack.c.b16 %v4190, %v4172
        %v5649 = vpack.c.b16 %v4191, %v4173
        %v5650 = vpack.c.b16 %v4192, %v4174
        %v5651 = vpack.c.b16 %v4193, %v4175
        %v5652 = vpack.c.b16 %v4194, %v4176
        %v5653 = vpack.c.b16 %v4195, %v4177
        %v5654 = vpack.c.b16 %v4196, %v4178
        %v5655 = vpack.c.b16 %v4197, %v4179
        %v5656 = vpack.c.b16 %v4198, %v4180
        %v5657 = vpack.c.b16 %v4199, %v4181
        %v5658 = vpack.c.b16 %v4200, %v4182
        %v5659 = vpack.c.b16 %v4219, %v4201
        %v5660 = vpack.c.b16 %v4220, %v4202
        %v5661 = vpack.c.b16 %v4221, %v4203
        %v5662 = vpack.c.b16 %v4222, %v4204
        %v5663 = vpack.c.b16 %v4223, %v4205
        %v5664 = vpack.c.b16 %v4224, %v4206
        %v5665 = vpack.c.b16 %v4225, %v4207
        %v5666 = vpack.c.b16 %v4226, %v4208
        %v5667 = vpack.c.b16 %v4227, %v4209
        %v5668 = vpack.c.b16 %v4228, %v4210
        %v5669 = vpack.c.b16 %v4229, %v4211
        %v5670 = vpack.c.b16 %v4230, %v4212
        %v5671 = vpack.c.b16 %v4231, %v4213
        %v5672 = vpack.c.b16 %v4232, %v4214
        %v5673 = vpack.c.b16 %v4233, %v4215
        %v5674 = vpack.c.b16 %v4234, %v4216
        %v5675 = vpack.c.b16 %v4235, %v4217
        %v5676 = vpack.c.b16 %v4236, %v4218
        %v5677 = vpack.c.b16 %v4255, %v4237
        %v5678 = vpack.c.b16 %v4256, %v4238
        %v5679 = vpack.c.b16 %v4257, %v4239
        %v5680 = vpack.c.b16 %v4258, %v4240
        %v5681 = vpack.c.b16 %v4259, %v4241
        %v5682 = vpack.c.b16 %v4260, %v4242
        %v5683 = vpack.c.b16 %v4261, %v4243
        %v5684 = vpack.c.b16 %v4262, %v4244
        %v5685 = vpack.c.b16 %v4263, %v4245
        %v5686 = vpack.c.b16 %v4264, %v4246
        %v5687 = vpack.c.b16 %v4265, %v4247
        %v5688 = vpack.c.b16 %v4266, %v4248
        %v5689 = vpack.c.b16 %v4267, %v4249
        %v5690 = vpack.c.b16 %v4268, %v4250
        %v5691 = vpack.c.b16 %v4269, %v4251
        %v5692 = vpack.c.b16 %v4270, %v4252
        %v5693 = vpack.c.b16 %v4271, %v4253
        %v5694 = vpack.c.b16 %v4272, %v4254
        %v5695 = vpack.c.b16 %v4291, %v4273
        %v5696 = vpack.c.b16 %v4292, %v4274
        %v5697 = vpack.c.b16 %v4293, %v4275
        %v5698 = vpack.c.b16 %v4294, %v4276
        %v5699 = vpack.c.b16 %v4295, %v4277
        %v5700 = vpack.c.b16 %v4296, %v4278
        %v5701 = vpack.c.b16 %v4297, %v4279
        %v5702 = vpack.c.b16 %v4298, %v4280
        %v5703 = vpack.c.b16 %v4299, %v4281
        %v5704 = vpack.c.b16 %v4300, %v4282
        %v5705 = vpack.c.b16 %v4301, %v4283
        %v5706 = vpack.c.b16 %v4302, %v4284
        %v5707 = vpack.c.b16 %v4303, %v4285
        %v5708 = vpack.c.b16 %v4304, %v4286
        %v5709 = vpack.c.b16 %v4305, %v4287
        %v5710 = vpack.c.b16 %v4306, %v4288
        %v5711 = vpack.c.b16 %v4307, %v4289
        %v5712 = vpack.c.b16 %v4308, %v4290
        %v5713 = vpack.c.b16 %v4327, %v4309
        %v5714 = vpack.c.b16 %v4328, %v4310
        %v5715 = vpack.c.b16 %v4329, %v4311
        %v5716 = vpack.c.b16 %v4330, %v4312
        %v5717 = vpack.c.b16 %v4331, %v4313
        %v5718 = vpack.c.b16 %v4332, %v4314
        %v5719 = vpack.c.b16 %v4333, %v4315
        %v5720 = vpack.c.b16 %v4334, %v4316
        %v5721 = vpack.c.b16 %v4335, %v4317
        %v5722 = vpack.c.b16 %v4336, %v4318
        %v5723 = vpack.c.b16 %v4337, %v4319
        %v5724 = vpack.c.b16 %v4338, %v4320
        %v5725 = vpack.c.b16 %v4339, %v4321
        %v5726 = vpack.c.b16 %v4340, %v4322
        %v5727 = vpack.c.b16 %v4341, %v4323
        %v5728 = vpack.c.b16 %v4342, %v4324
        %v5729 = vpack.c.b16 %v4343, %v4325
        %v5730 = vpack.c.b16 %v4344, %v4326
        %v5731 = vpack.c.b16 %v4363, %v4345
        %v5732 = vpack.c.b16 %v4364, %v4346
        %v5733 = vpack.c.b16 %v4365, %v4347
        %v5734 = vpack.c.b16 %v4366, %v4348
        %v5735 = vpack.c.b16 %v4367, %v4349
        %v5736 = vpack.c.b16 %v4368, %v4350
        %v5737 = vpack.c.b16 %v4369, %v4351
        %v5738 = vpack.c.b16 %v4370, %v4352
        %v5739 = vpack.c.b16 %v4371, %v4353
        %v5740 = vpack.c.b16 %v4372, %v4354
        %v5741 = vpack.c.b16 %v4373, %v4355
        %v5742 = vpack.c.b16 %v4374, %v4356
        %v5743 = vpack.c.b16 %v4375, %v4357
        %v5744 = vpack.c.b16 %v4376, %v4358
        %v5745 = vpack.c.b16 %v4377, %v4359
        %v5746 = vpack.c.b16 %v4378, %v4360
        %v5747 = vpack.c.b16 %v4379, %v4361
        %v5748 = vpack.c.b16 %v4380, %v4362
        %v5749 = vpack.c.b16 %v4399, %v4381
        %v5750 = vpack.c.b16 %v4400, %v4382
        %v5751 = vpack.c.b16 %v4401, %v4383
        %v5752 = vpack.c.b16 %v4402, %v4384
        %v5753 = vpack.c.b16 %v4403, %v4385
        %v5754 = vpack.c.b16 %v4404, %v4386
        %v5755 = vpack.c.b16 %v4405, %v4387
        %v5756 = vpack.c.b16 %v4406, %v4388
        %v5757 = vpack.c.b16 %v4407, %v4389
        %v5758 = vpack.c.b16 %v4408, %v4390
        %v5759 = vpack.c.b16 %v4409, %v4391
        %v5760 = vpack.c.b16 %v4410, %v4392
        %v5761 = vpack.c.b16 %v4411, %v4393
        %v5762 = vpack.c.b16 %v4412, %v4394
        %v5763 = vpack.c.b16 %v4413, %v4395
        %v5764 = vpack.c.b16 %v4414, %v4396
        %v5765 = vpack.c.b16 %v4415, %v4397
        %v5766 = vpack.c.b16 %v4416, %v4398
        %v5767 = vpack.c.b16 %v4435, %v4417
        %v5768 = vpack.c.b16 %v4436, %v4418
        %v5769 = vpack.c.b16 %v4437, %v4419
        %v5770 = vpack.c.b16 %v4438, %v4420
        %v5771 = vpack.c.b16 %v4439, %v4421
        %v5772 = vpack.c.b16 %v4440, %v4422
        %v5773 = vpack.c.b16 %v4441, %v4423
        %v5774 = vpack.c.b16 %v4442, %v4424
        %v5775 = vpack.c.b16 %v4443, %v4425
        %v5776 = vpack.c.b16 %v4444, %v4426
        %v5777 = vpack.c.b16 %v4445, %v4427
        %v5778 = vpack.c.b16 %v4446, %v4428
        %v5779 = vpack.c.b16 %v4447, %v4429
        %v5780 = vpack.c.b16 %v4448, %v4430
        %v5781 = vpack.c.b16 %v4449, %v4431
        %v5782 = vpack.c.b16 %v4450, %v4432
        %v5783 = vpack.c.b16 %v4451, %v4433
        %v5784 = vpack.c.b16 %v4452, %v4434
        %v5785 = vpack.c.b16 %v4471, %v4453
        %v5786 = vpack.c.b16 %v4472, %v4454
        %v5787 = vpack.c.b16 %v4473, %v4455
        %v5788 = vpack.c.b16 %v4474, %v4456
        %v5789 = vpack.c.b16 %v4475, %v4457
        %v5790 = vpack.c.b16 %v4476, %v4458
        %v5791 = vpack.c.b16 %v4477, %v4459
        %v5792 = vpack.c.b16 %v4478, %v4460
        %v5793 = vpack.c.b16 %v4479, %v4461
        %v5794 = vpack.c.b16 %v4480, %v4462
        %v5795 = vpack.c.b16 %v4481, %v4463
        %v5796 = vpack.c.b16 %v4482, %v4464
        %v5797 = vpack.c.b16 %v4483, %v4465
        %v5798 = vpack.c.b16 %v4484, %v4466
        %v5799 = vpack.c.b16 %v4485, %v4467
        %v5800 = vpack.c.b16 %v4486, %v4468
        %v5801 = vpack.c.b16 %v4487, %v4469
        %v5802 = vpack.c.b16 %v4488, %v4470
        %v5803 = vpack.c.b16 %v4507, %v4489
        %v5804 = vpack.c.b16 %v4508, %v4490
        %v5805 = vpack.c.b16 %v4509, %v4491
        %v5806 = vpack.c.b16 %v4510, %v4492
        %v5807 = vpack.c.b16 %v4511, %v4493
        %v5808 = vpack.c.b16 %v4512, %v4494
        %v5809 = vpack.c.b16 %v4513, %v4495
        %v5810 = vpack.c.b16 %v4514, %v4496
        %v5811 = vpack.c.b16 %v4515, %v4497
        %v5812 = vpack.c.b16 %v4516, %v4498
        %v5813 = vpack.c.b16 %v4517, %v4499
        %v5814 = vpack.c.b16 %v4518, %v4500
        %v5815 = vpack.c.b16 %v4519, %v4501
        %v5816 = vpack.c.b16 %v4520, %v4502
        %v5817 = vpack.c.b16 %v4521, %v4503
        %v5818 = vpack.c.b16 %v4522, %v4504
        %v5819 = vpack.c.b16 %v4523, %v4505
        %v5820 = vpack.c.b16 %v4524, %v4506
        %v5821 = vpack.c.b16 %v4543, %v4525
        %v5822 = vpack.c.b16 %v4544, %v4526
        %v5823 = vpack.c.b16 %v4545, %v4527
        %v5824 = vpack.c.b16 %v4546, %v4528
        %v5825 = vpack.c.b16 %v4547, %v4529
        %v5826 = vpack.c.b16 %v4548, %v4530
        %v5827 = vpack.c.b16 %v4549, %v4531
        %v5828 = vpack.c.b16 %v4550, %v4532
        %v5829 = vpack.c.b16 %v4551, %v4533
        %v5830 = vpack.c.b16 %v4552, %v4534
        %v5831 = vpack.c.b16 %v4553, %v4535
        %v5832 = vpack.c.b16 %v4554, %v4536
        %v5833 = vpack.c.b16 %v4555, %v4537
        %v5834 = vpack.c.b16 %v4556, %v4538
        %v5835 = vpack.c.b16 %v4557, %v4539
        %v5836 = vpack.c.b16 %v4558, %v4540
        %v5837 = vpack.c.b16 %v4559, %v4541
        %v5838 = vpack.c.b16 %v4560, %v4542
        %v5839 = vpack.c.b16 %v4579, %v4561
        %v5840 = vpack.c.b16 %v4580, %v4562
        %v5841 = vpack.c.b16 %v4581, %v4563
        %v5842 = vpack.c.b16 %v4582, %v4564
        %v5843 = vpack.c.b16 %v4583, %v4565
        %v5844 = vpack.c.b16 %v4584, %v4566
        %v5845 = vpack.c.b16 %v4585, %v4567
        %v5846 = vpack.c.b16 %v4586, %v4568
        %v5847 = vpack.c.b16 %v4587, %v4569
        %v5848 = vpack.c.b16 %v4588, %v4570
        %v5849 = vpack.c.b16 %v4589, %v4571
        %v5850 = vpack.c.b16 %v4590, %v4572
        %v5851 = vpack.c.b16 %v4591, %v4573
        %v5852 = vpack.c.b16 %v4592, %v4574
        %v5853 = vpack.c.b16 %v4593, %v4575
        %v5854 = vpack.c.b16 %v4594, %v4576
        %v5855 = vpack.c.b16 %v4595, %v4577
        %v5856 = vpack.c.b16 %v4596, %v4578
        %v5857 = vpack.c.b16 %v4615, %v4597
        %v5858 = vpack.c.b16 %v4616, %v4598
        %v5859 = vpack.c.b16 %v4617, %v4599
        %v5860 = vpack.c.b16 %v4618, %v4600
        %v5861 = vpack.c.b16 %v4619, %v4601
        %v5862 = vpack.c.b16 %v4620, %v4602
        %v5863 = vpack.c.b16 %v4621, %v4603
        %v5864 = vpack.c.b16 %v4622, %v4604
        %v5865 = vpack.c.b16 %v4623, %v4605
        %v5866 = vpack.c.b16 %v4624, %v4606
        %v5867 = vpack.c.b16 %v4625, %v4607
        %v5868 = vpack.c.b16 %v4626, %v4608
        %v5869 = vpack.c.b16 %v4627, %v4609
        %v5870 = vpack.c.b16 %v4628, %v4610
        %v5871 = vpack.c.b16 %v4629, %v4611
        %v5872 = vpack.c.b16 %v4630, %v4612
        %v5873 = vpack.c.b16 %v4631, %v4613
        %v5874 = vpack.c.b16 %v4632, %v4614
        %v5875 = vpack.c.b16 %v4651, %v4633
        %v5876 = vpack.c.b16 %v4652, %v4634
        %v5877 = vpack.c.b16 %v4653, %v4635
        %v5878 = vpack.c.b16 %v4654, %v4636
        %v5879 = vpack.c.b16 %v4655, %v4637
        %v5880 = vpack.c.b16 %v4656, %v4638
        %v5881 = vpack.c.b16 %v4657, %v4639
        %v5882 = vpack.c.b16 %v4658, %v4640
        %v5883 = vpack.c.b16 %v4659, %v4641
        %v5884 = vpack.c.b16 %v4660, %v4642
        %v5885 = vpack.c.b16 %v4661, %v4643
        %v5886 = vpack.c.b16 %v4662, %v4644
        %v5887 = vpack.c.b16 %v4663, %v4645
        %v5888 = vpack.c.b16 %v4664, %v4646
        %v5889 = vpack.c.b16 %v4665, %v4647
        %v5890 = vpack.c.b16 %v4666, %v4648
        %v5891 = vpack.c.b16 %v4667, %v4649
        %v5892 = vpack.c.b16 %v4668, %v4650
        %v5893 = vpack.c.b16 %v4687, %v4669
        %v5894 = vpack.c.b16 %v4688, %v4670
        %v5895 = vpack.c.b16 %v4689, %v4671
        %v5896 = vpack.c.b16 %v4690, %v4672
        %v5897 = vpack.c.b16 %v4691, %v4673
        %v5898 = vpack.c.b16 %v4692, %v4674
        %v5899 = vpack.c.b16 %v4693, %v4675
        %v5900 = vpack.c.b16 %v4694, %v4676
        %v5901 = vpack.c.b16 %v4695, %v4677
        %v5902 = vpack.c.b16 %v4696, %v4678
        %v5903 = vpack.c.b16 %v4697, %v4679
        %v5904 = vpack.c.b16 %v4698, %v4680
        %v5905 = vpack.c.b16 %v4699, %v4681
        %v5906 = vpack.c.b16 %v4700, %v4682
        %v5907 = vpack.c.b16 %v4701, %v4683
        %v5908 = vpack.c.b16 %v4702, %v4684
        %v5909 = vpack.c.b16 %v4703, %v4685
        %v5910 = vpack.c.b16 %v4704, %v4686
        %v5911 = vpack.c.b16 %v4723, %v4705
        %v5912 = vpack.c.b16 %v4724, %v4706
        %v5913 = vpack.c.b16 %v4725, %v4707
        %v5914 = vpack.c.b16 %v4726, %v4708
        %v5915 = vpack.c.b16 %v4727, %v4709
        %v5916 = vpack.c.b16 %v4728, %v4710
        %v5917 = vpack.c.b16 %v4729, %v4711
        %v5918 = vpack.c.b16 %v4730, %v4712
        %v5919 = vpack.c.b16 %v4731, %v4713
        %v5920 = vpack.c.b16 %v4732, %v4714
        %v5921 = vpack.c.b16 %v4733, %v4715
        %v5922 = vpack.c.b16 %v4734, %v4716
        %v5923 = vpack.c.b16 %v4735, %v4717
        %v5924 = vpack.c.b16 %v4736, %v4718
        %v5925 = vpack.c.b16 %v4737, %v4719
        %v5926 = vpack.c.b16 %v4738, %v4720
        %v5927 = vpack.c.b16 %v4739, %v4721
        %v5928 = vpack.c.b16 %v4740, %v4722
        %v5929 = vpack.c.b16 %v4759, %v4741
        %v5930 = vpack.c.b16 %v4760, %v4742
        %v5931 = vpack.c.b16 %v4761, %v4743
        %v5932 = vpack.c.b16 %v4762, %v4744
        %v5933 = vpack.c.b16 %v4763, %v4745
        %v5934 = vpack.c.b16 %v4764, %v4746
        %v5935 = vpack.c.b16 %v4765, %v4747
        %v5936 = vpack.c.b16 %v4766, %v4748
        %v5937 = vpack.c.b16 %v4767, %v4749
        %v5938 = vpack.c.b16 %v4768, %v4750
        %v5939 = vpack.c.b16 %v4769, %v4751
        %v5940 = vpack.c.b16 %v4770, %v4752
        %v5941 = vpack.c.b16 %v4771, %v4753
        %v5942 = vpack.c.b16 %v4772, %v4754
        %v5943 = vpack.c.b16 %v4773, %v4755
        %v5944 = vpack.c.b16 %v4774, %v4756
        %v5945 = vpack.c.b16 %v4775, %v4757
        %v5946 = vpack.c.b16 %v4776, %v4758
        %v5947 = vpack.c.b16 %v4795, %v4777
        %v5948 = vpack.c.b16 %v4796, %v4778
        %v5949 = vpack.c.b16 %v4797, %v4779
        %v5950 = vpack.c.b16 %v4798, %v4780
        %v5951 = vpack.c.b16 %v4799, %v4781
        %v5952 = vpack.c.b16 %v4800, %v4782
        %v5953 = vpack.c.b16 %v4801, %v4783
        %v5954 = vpack.c.b16 %v4802, %v4784
        %v5955 = vpack.c.b16 %v4803, %v4785
        %v5956 = vpack.c.b16 %v4804, %v4786
        %v5957 = vpack.c.b16 %v4805, %v4787
        %v5958 = vpack.c.b16 %v4806, %v4788
        %v5959 = vpack.c.b16 %v4807, %v4789
        %v5960 = vpack.c.b16 %v4808, %v4790
        %v5961 = vpack.c.b16 %v4809, %v4791
        %v5962 = vpack.c.b16 %v4810, %v4792
        %v5963 = vpack.c.b16 %v4811, %v4793
        %v5964 = vpack.c.b16 %v4812, %v4794
        %v5965 = vpack.c.b16 %v4831, %v4813
        %v5966 = vpack.c.b16 %v4832, %v4814
        %v5967 = vpack.c.b16 %v4833, %v4815
        %v5968 = vpack.c.b16 %v4834, %v4816
        %v5969 = vpack.c.b16 %v4835, %v4817
        %v5970 = vpack.c.b16 %v4836, %v4818
        %v5971 = vpack.c.b16 %v4837, %v4819
        %v5972 = vpack.c.b16 %v4838, %v4820
        %v5973 = vpack.c.b16 %v4839, %v4821
        %v5974 = vpack.c.b16 %v4840, %v4822
        %v5975 = vpack.c.b16 %v4841, %v4823
        %v5976 = vpack.c.b16 %v4842, %v4824
        %v5977 = vpack.c.b16 %v4843, %v4825
        %v5978 = vpack.c.b16 %v4844, %v4826
        %v5979 = vpack.c.b16 %v4845, %v4827
        %v5980 = vpack.c.b16 %v4846, %v4828
        %v5981 = vpack.c.b16 %v4847, %v4829
        %v5982 = vpack.c.b16 %v4848, %v4830
        %v5983 = vpack.c.b16 %v4849, %v4849
        %v5984 = vpack.c.b16 %v4850, %v4850
        %v5985 = vpack.c.b16 %v4851, %v4851
        %v5986 = vpack.c.b16 %v4852, %v4852
        %v5987 = vpack.c.b16 %v4853, %v4853
        %v5988 = vpack.c.b16 %v4854, %v4854
        %v5989 = vpack.c.b16 %v4855, %v4855
        %v5990 = vpack.c.b16 %v4856, %v4856
        %v5991 = vpack.c.b16 %v4857, %v4857
        %v5992 = vpack.c.b16 %v4858, %v4858
        %v5993 = vpack.c.b16 %v4859, %v4859
        %v5994 = vpack.c.b16 %v4860, %v4860
        %v5995 = vpack.c.b16 %v4861, %v4861
        %v5996 = vpack.c.b16 %v4862, %v4862
        %v5997 = vpack.c.b16 %v4863, %v4863
        %v5998 = vpack.c.b16 %v4864, %v4864
        %v5999 = vpack.c.b16 %v4865, %v4865
        %v6000 = vpack.c.b16 %v4866, %v4866
        %vm7117 = vcmask 850944
        %v7119 = vsel %vm7117, %v1484, 0
        %vm7121 = vcmask 1043456
        %v7123 = vsel %vm7121, %v5983, 0
        %v7126 = vsel %vm7121, %v5984, 0
        %v7129 = vsel %vm7121, %v5985, 0
        %v7132 = vsel %vm7121, %v5986, 0
        %v7135 = vsel %vm7121, %v5987, 0
        %v7138 = vsel %vm7121, %v5988, 0
        %v7141 = vsel %vm7121, %v5989, 0
        %v7144 = vsel %vm7121, %v5990, 0
        %v7147 = vsel %vm7121, %v5991, 0
        %v7150 = vsel %vm7121, %v5992, 0
        %v7153 = vsel %vm7121, %v5993, 0
        %v7156 = vsel %vm7121, %v5994, 0
        %v7159 = vsel %vm7121, %v5995, 0
        %v7162 = vsel %vm7121, %v5996, 0
        %v7165 = vsel %vm7121, %v5997, 0
        %v7168 = vsel %vm7121, %v5998, 0
        %v7171 = vsel %vm7121, %v5999, 0
        %v7174 = vsel %vm7121, %v6000, 0
        %7176 = vmatprep.subr.bf16.mxu0 %v4868
        %7177 = vmatpush1.bf16.msra.mxu0 %v4867
        %7178 = vmatprep.subr.bf16.mxu0 %v4886
        %7179 = vmatpush1.bf16.msra.mxu0 %v4885
        %7180 = vmatprep.subr.bf16.mxu0 %v4904
        %7181 = vmatpush1.bf16.msra.mxu0 %v4903
        %7182 = vmatprep.subr.bf16.mxu0 %v4922
        %7183 = vmatpush1.bf16.msra.mxu0 %v4921
        %7184 = vmatprep.subr.bf16.mxu0 %v4940
        %7185 = vmatpush1.bf16.msra.mxu0 %v4939
        %7186 = vmatprep.subr.bf16.mxu0 %v4958
        %7187 = vmatpush1.bf16.msra.mxu0 %v4957
        %7188 = vmatprep.subr.bf16.mxu0 %v4976
        %7189 = vmatpush1.bf16.msra.mxu0 %v4975
        %7190 = vmatprep.subr.bf16.mxu0 %v4994
        %7191 = vmatpush1.bf16.msra.mxu0 %v4993
        %7192 = vmatprep.subr.bf16.mxu0 %v5012
        %7193 = vmatpush1.bf16.msra.mxu0 %v5011
        %7194 = vmatprep.subr.bf16.mxu0 %v5030
        %7195 = vmatpush1.bf16.msra.mxu0 %v5029
        %7196 = vmatprep.subr.bf16.mxu0 %v5048
        %7197 = vmatpush1.bf16.msra.mxu0 %v5047
        %7198 = vmatprep.subr.bf16.mxu0 %v5066
        %7199 = vmatpush1.bf16.msra.mxu0 %v5065
        %7200 = vmatprep.subr.bf16.mxu0 %v5084
        %7201 = vmatpush1.bf16.msra.mxu0 %v5083
        %7202 = vmatprep.subr.bf16.mxu0 %v5102
        %7203 = vmatpush1.bf16.msra.mxu0 %v5101
        %7204 = vmatprep.subr.bf16.mxu0 %v5120
        %7205 = vmatpush1.bf16.msra.mxu0 %v5119
        %7206 = vmatprep.subr.bf16.mxu0 %v5138
        %7207 = vmatpush1.bf16.msra.mxu0 %v5137
        %7208 = vmatprep.mubr.bf16.mxu0 %v1473
        %7209 = vmatmul.mubr.bf16.gmra.mrb[0].mxu0 %v1459
        %v7210 = vpop.f32.mrb[0].mxu0
        %v7211 = vadd.f32 %v1348, %v7210
        %v7212 = vpop.f32.mrb[0].mxu0
        %v7213 = vadd.f32 %v1352, %v7212
        %v7214 = vpop.f32.mrb[0].mxu0
        %v7215 = vpop.f32.mrb[0].mxu0
        %7216 = vdwg.mxu0
        %7217 = vmatprep.subr.bf16.mxu0 %v5156
        %7218 = vmatpush1.bf16.msra.mxu0 %v5155
        %7219 = vmatprep.subr.bf16.mxu0 %v5174
        %7220 = vmatpush1.bf16.msra.mxu0 %v5173
        %7221 = vmatprep.subr.bf16.mxu0 %v5192
        %7222 = vmatpush1.bf16.msra.mxu0 %v5191
        %7223 = vmatprep.subr.bf16.mxu0 %v5210
        %7224 = vmatpush1.bf16.msra.mxu0 %v5209
        %7225 = vmatprep.subr.bf16.mxu0 %v5228
        %7226 = vmatpush1.bf16.msra.mxu0 %v5227
        %7227 = vmatprep.subr.bf16.mxu0 %v5246
        %7228 = vmatpush1.bf16.msra.mxu0 %v5245
        %7229 = vmatprep.subr.bf16.mxu0 %v5264
        %7230 = vmatpush1.bf16.msra.mxu0 %v5263
        %7231 = vmatprep.subr.bf16.mxu0 %v5282
        %7232 = vmatpush1.bf16.msra.mxu0 %v5281
        %7233 = vmatprep.subr.bf16.mxu0 %v5300
        %7234 = vmatpush1.bf16.msra.mxu0 %v5299
        %7235 = vmatprep.subr.bf16.mxu0 %v5318
        %7236 = vmatpush1.bf16.msra.mxu0 %v5317
        %7237 = vmatprep.subr.bf16.mxu0 %v5336
        %7238 = vmatpush1.bf16.msra.mxu0 %v5335
        %7239 = vmatprep.subr.bf16.mxu0 %v5354
        %7240 = vmatpush1.bf16.msra.mxu0 %v5353
        %7241 = vmatprep.subr.bf16.mxu0 %v5372
        %7242 = vmatpush1.bf16.msra.mxu0 %v5371
        %7243 = vmatprep.subr.bf16.mxu0 %v5390
        %7244 = vmatpush1.bf16.msra.mxu0 %v5389
        %7245 = vmatprep.subr.bf16.mxu0 %v5408
        %7246 = vmatpush1.bf16.msra.mxu0 %v5407
        %7247 = vmatprep.subr.bf16.mxu0 %v5426
        %7248 = vmatpush1.bf16.msra.mxu0 %v5425
        %7249 = vmatprep.mubr.bf16.mxu0 %v1483
        %7250 = vmatmul.mubr.bf16.gmra.mrb[0].mxu0 %v1481
        %v7251 = vpop.f32.mrb[0].mxu0
        %v7252 = vadd.f32 %v7211, %v7251
        %v7253 = vpop.f32.mrb[0].mxu0
        %v7254 = vadd.f32 %v7213, %v7253
        %v7255 = vpop.f32.mrb[0].mxu0
        %v7256 = vpop.f32.mrb[0].mxu0
        %7257 = vdwg.mxu0
        %7258 = vmatprep.subr.bf16.mxu0 %v5444
        %7259 = vmatpush1.bf16.msra.mxu0 %v5443
        %7260 = vmatprep.subr.bf16.mxu0 %v5462
        %7261 = vmatpush1.bf16.msra.mxu0 %v5461
        %7262 = vmatprep.subr.bf16.mxu0 %v5480
        %7263 = vmatpush1.bf16.msra.mxu0 %v5479
        %7264 = vmatprep.subr.bf16.mxu0 %v5498
        %7265 = vmatpush1.bf16.msra.mxu0 %v5497
        %7266 = vmatprep.subr.bf16.mxu0 %v5516
        %7267 = vmatpush1.bf16.msra.mxu0 %v5515
        %7268 = vmatprep.subr.bf16.mxu0 %v5534
        %7269 = vmatpush1.bf16.msra.mxu0 %v5533
        %7270 = vmatprep.subr.bf16.mxu0 %v5552
        %7271 = vmatpush1.bf16.msra.mxu0 %v5551
        %7272 = vmatprep.subr.bf16.mxu0 %v5570
        %7273 = vmatpush1.bf16.msra.mxu0 %v5569
        %7274 = vmatprep.subr.bf16.mxu0 %v5588
        %7275 = vmatpush1.bf16.msra.mxu0 %v5587
        %7276 = vmatprep.subr.bf16.mxu0 %v5606
        %7277 = vmatpush1.bf16.msra.mxu0 %v5605
        %7278 = vmatprep.subr.bf16.mxu0 %v5624
        %7279 = vmatpush1.bf16.msra.mxu0 %v5623
        %7280 = vmatprep.subr.bf16.mxu0 %v5642
        %7281 = vmatpush1.bf16.msra.mxu0 %v5641
        %7282 = vmatprep.subr.bf16.mxu0 %v5660
        %7283 = vmatpush1.bf16.msra.mxu0 %v5659
        %7284 = vmatprep.subr.bf16.mxu0 %v5678
        %7285 = vmatpush1.bf16.msra.mxu0 %v5677
        %7286 = vmatprep.subr.bf16.mxu0 %v5696
        %7287 = vmatpush1.bf16.msra.mxu0 %v5695
        %7288 = vmatprep.subr.bf16.mxu0 %v5714
        %7289 = vmatpush1.bf16.msra.mxu0 %v5713
        %7290 = vmatprep.mubr.bf16.mxu0 %v1480
        %7291 = vmatmul.mubr.bf16.gmra.mrb[0].mxu0 %v1466
        %v7292 = vpop.f32.mrb[0].mxu0
        %v7293 = vadd.f32 %v7252, %v7292
        %v7294 = vpop.f32.mrb[0].mxu0
        %v7295 = vadd.f32 %v7254, %v7294
        %v7296 = vpop.f32.mrb[0].mxu0
        %v7297 = vpop.f32.mrb[0].mxu0
        %7298 = vdwg.mxu0
        %7299 = vmatprep.subr.bf16.mxu0 %v5732
        %7300 = vmatpush1.bf16.msra.mxu0 %v5731
        %7301 = vmatprep.subr.bf16.mxu0 %v5750
        %7302 = vmatpush1.bf16.msra.mxu0 %v5749
        %7303 = vmatprep.subr.bf16.mxu0 %v5768
        %7304 = vmatpush1.bf16.msra.mxu0 %v5767
        %7305 = vmatprep.subr.bf16.mxu0 %v5786
        %7306 = vmatpush1.bf16.msra.mxu0 %v5785
        %7307 = vmatprep.subr.bf16.mxu0 %v5804
        %7308 = vmatpush1.bf16.msra.mxu0 %v5803
        %7309 = vmatprep.subr.bf16.mxu0 %v5822
        %7310 = vmatpush1.bf16.msra.mxu0 %v5821
        %7311 = vmatprep.subr.bf16.mxu0 %v5840
        %7312 = vmatpush1.bf16.msra.mxu0 %v5839
        %7313 = vmatprep.subr.bf16.mxu0 %v5858
        %7314 = vmatpush1.bf16.msra.mxu0 %v5857
        %7315 = vmatprep.subr.bf16.mxu0 %v5876
        %7316 = vmatpush1.bf16.msra.mxu0 %v5875
        %7317 = vmatprep.subr.bf16.mxu0 %v5894
        %7318 = vmatpush1.bf16.msra.mxu0 %v5893
        %7319 = vmatprep.subr.bf16.mxu0 %v5912
        %7320 = vmatpush1.bf16.msra.mxu0 %v5911
        %7321 = vmatprep.subr.bf16.mxu0 %v5930
        %7322 = vmatpush1.bf16.msra.mxu0 %v5929
        %7323 = vmatprep.subr.bf16.mxu0 %v5948
        %7324 = vmatpush1.bf16.msra.mxu0 %v5947
        %7325 = vmatprep.subr.bf16.mxu0 %v5966
        %7326 = vmatpush1.bf16.msra.mxu0 %v5965
        %7327 = vmatprep.subr.bf16.mxu0 %v7126
        %7328 = vmatpush1.bf16.msra.mxu0 %v7123
        %7329 = vmatprep.subr.bf16.mxu0 0
        %7330 = vmatpush1.bf16.msra.mxu0 0
        %7331 = vmatprep.mubr.bf16.mxu0 %v7119
        %7332 = vmatmul.mubr.bf16.gmra.mrb[0].mxu0 %v1482
        %v7333 = vpop.f32.mrb[0].mxu0
        %v7334 = vadd.f32 %v7293, %v7333
        %v7335 = vpop.f32.mrb[0].mxu0
        %v7336 = vadd.f32 %v7295, %v7335
        %v7337 = vpop.f32.mrb[0].mxu0
        %v7338 = vpop.f32.mrb[0].mxu0
        %7339 = vdwg.mxu0
        %7340 = vmatprep.subr.bf16.mxu0 %v4870
        %7341 = vmatpush1.bf16.msra.mxu0 %v4869
        %7342 = vmatprep.subr.bf16.mxu0 %v4888
        %7343 = vmatpush1.bf16.msra.mxu0 %v4887
        %7344 = vmatprep.subr.bf16.mxu0 %v4906
        %7345 = vmatpush1.bf16.msra.mxu0 %v4905
        %7346 = vmatprep.subr.bf16.mxu0 %v4924
        %7347 = vmatpush1.bf16.msra.mxu0 %v4923
        %7348 = vmatprep.subr.bf16.mxu0 %v4942
        %7349 = vmatpush1.bf16.msra.mxu0 %v4941
        %7350 = vmatprep.subr.bf16.mxu0 %v4960
        %7351 = vmatpush1.bf16.msra.mxu0 %v4959
        %7352 = vmatprep.subr.bf16.mxu0 %v4978
        %7353 = vmatpush1.bf16.msra.mxu0 %v4977
        %7354 = vmatprep.subr.bf16.mxu0 %v4996
        %7355 = vmatpush1.bf16.msra.mxu0 %v4995
        %7356 = vmatprep.subr.bf16.mxu0 %v5014
        %7357 = vmatpush1.bf16.msra.mxu0 %v5013
        %7358 = vmatprep.subr.bf16.mxu0 %v5032
        %7359 = vmatpush1.bf16.msra.mxu0 %v5031
        %7360 = vmatprep.subr.bf16.mxu0 %v5050
        %7361 = vmatpush1.bf16.msra.mxu0 %v5049
        %7362 = vmatprep.subr.bf16.mxu0 %v5068
        %7363 = vmatpush1.bf16.msra.mxu0 %v5067
        %7364 = vmatprep.subr.bf16.mxu0 %v5086
        %7365 = vmatpush1.bf16.msra.mxu0 %v5085
        %7366 = vmatprep.subr.bf16.mxu0 %v5104
        %7367 = vmatpush1.bf16.msra.mxu0 %v5103
        %7368 = vmatprep.subr.bf16.mxu0 %v5122
        %7369 = vmatpush1.bf16.msra.mxu0 %v5121
        %7370 = vmatprep.subr.bf16.mxu0 %v5140
        %7371 = vmatpush1.bf16.msra.mxu0 %v5139
        %7372 = vmatprep.mubr.bf16.mxu0 %v1473
        %7373 = vmatmul.mubr.bf16.gmra.mrb[0].mxu0 %v1459
        %v7374 = vpop.f32.mrb[0].mxu0
        %v7375 = vadd.f32 %v1356, %v7374
        %v7376 = vpop.f32.mrb[0].mxu0
        %v7377 = vadd.f32 %v1360, %v7376
        %v7378 = vpop.f32.mrb[0].mxu0
        %v7379 = vpop.f32.mrb[0].mxu0
        %7380 = vdwg.mxu0
        %7381 = vmatprep.subr.bf16.mxu0 %v5158
        %7382 = vmatpush1.bf16.msra.mxu0 %v5157
        %7383 = vmatprep.subr.bf16.mxu0 %v5176
        %7384 = vmatpush1.bf16.msra.mxu0 %v5175
        %7385 = vmatprep.subr.bf16.mxu0 %v5194
        %7386 = vmatpush1.bf16.msra.mxu0 %v5193
        %7387 = vmatprep.subr.bf16.mxu0 %v5212
        %7388 = vmatpush1.bf16.msra.mxu0 %v5211
        %7389 = vmatprep.subr.bf16.mxu0 %v5230
        %7390 = vmatpush1.bf16.msra.mxu0 %v5229
        %7391 = vmatprep.subr.bf16.mxu0 %v5248
        %7392 = vmatpush1.bf16.msra.mxu0 %v5247
        %7393 = vmatprep.subr.bf16.mxu0 %v5266
        %7394 = vmatpush1.bf16.msra.mxu0 %v5265
        %7395 = vmatprep.subr.bf16.mxu0 %v5284
        %7396 = vmatpush1.bf16.msra.mxu0 %v5283
        %7397 = vmatprep.subr.bf16.mxu0 %v5302
        %7398 = vmatpush1.bf16.msra.mxu0 %v5301
        %7399 = vmatprep.subr.bf16.mxu0 %v5320
        %7400 = vmatpush1.bf16.msra.mxu0 %v5319
        %7401 = vmatprep.subr.bf16.mxu0 %v5338
        %7402 = vmatpush1.bf16.msra.mxu0 %v5337
        %7403 = vmatprep.subr.bf16.mxu0 %v5356
        %7404 = vmatpush1.bf16.msra.mxu0 %v5355
        %7405 = vmatprep.subr.bf16.mxu0 %v5374
        %7406 = vmatpush1.bf16.msra.mxu0 %v5373
        %7407 = vmatprep.subr.bf16.mxu0 %v5392
        %7408 = vmatpush1.bf16.msra.mxu0 %v5391
        %7409 = vmatprep.subr.bf16.mxu0 %v5410
        %7410 = vmatpush1.bf16.msra.mxu0 %v5409
        %7411 = vmatprep.subr.bf16.mxu0 %v5428
        %7412 = vmatpush1.bf16.msra.mxu0 %v5427
        %7413 = vmatprep.mubr.bf16.mxu0 %v1483
        %7414 = vmatmul.mubr.bf16.gmra.mrb[0].mxu0 %v1481
        %v7415 = vpop.f32.mrb[0].mxu0
        %v7416 = vadd.f32 %v7375, %v7415
        %v7417 = vpop.f32.mrb[0].mxu0
        %v7418 = vadd.f32 %v7377, %v7417
        %v7419 = vpop.f32.mrb[0].mxu0
        %v7420 = vpop.f32.mrb[0].mxu0
        %7421 = vdwg.mxu0
        %7422 = vmatprep.subr.bf16.mxu0 %v5446
        %7423 = vmatpush1.bf16.msra.mxu0 %v5445
        %7424 = vmatprep.subr.bf16.mxu0 %v5464
        %7425 = vmatpush1.bf16.msra.mxu0 %v5463
        %7426 = vmatprep.subr.bf16.mxu0 %v5482
        %7427 = vmatpush1.bf16.msra.mxu0 %v5481
        %7428 = vmatprep.subr.bf16.mxu0 %v5500
        %7429 = vmatpush1.bf16.msra.mxu0 %v5499
        %7430 = vmatprep.subr.bf16.mxu0 %v5518
        %7431 = vmatpush1.bf16.msra.mxu0 %v5517
        %7432 = vmatprep.subr.bf16.mxu0 %v5536
        %7433 = vmatpush1.bf16.msra.mxu0 %v5535
        %7434 = vmatprep.subr.bf16.mxu0 %v5554
        %7435 = vmatpush1.bf16.msra.mxu0 %v5553
        %7436 = vmatprep.subr.bf16.mxu0 %v5572
        %7437 = vmatpush1.bf16.msra.mxu0 %v5571
        %7438 = vmatprep.subr.bf16.mxu0 %v5590
        %7439 = vmatpush1.bf16.msra.mxu0 %v5589
        %7440 = vmatprep.subr.bf16.mxu0 %v5608
        %7441 = vmatpush1.bf16.msra.mxu0 %v5607
        %7442 = vmatprep.subr.bf16.mxu0 %v5626
        %7443 = vmatpush1.bf16.msra.mxu0 %v5625
        %7444 = vmatprep.subr.bf16.mxu0 %v5644
        %7445 = vmatpush1.bf16.msra.mxu0 %v5643
        %7446 = vmatprep.subr.bf16.mxu0 %v5662
        %7447 = vmatpush1.bf16.msra.mxu0 %v5661
        %7448 = vmatprep.subr.bf16.mxu0 %v5680
        %7449 = vmatpush1.bf16.msra.mxu0 %v5679
        %7450 = vmatprep.subr.bf16.mxu0 %v5698
        %7451 = vmatpush1.bf16.msra.mxu0 %v5697
        %7452 = vmatprep.subr.bf16.mxu0 %v5716
        %7453 = vmatpush1.bf16.msra.mxu0 %v5715
        %7454 = vmatprep.mubr.bf16.mxu0 %v1480
        %7455 = vmatmul.mubr.bf16.gmra.mrb[0].mxu0 %v1466
        %v7456 = vpop.f32.mrb[0].mxu0
        %v7457 = vadd.f32 %v7416, %v7456
        %v7458 = vpop.f32.mrb[0].mxu0
        %v7459 = vadd.f32 %v7418, %v7458
        %v7460 = vpop.f32.mrb[0].mxu0
        %v7461 = vpop.f32.mrb[0].mxu0
        %7462 = vdwg.mxu0
        %7463 = vmatprep.subr.bf16.mxu0 %v5734
        %7464 = vmatpush1.bf16.msra.mxu0 %v5733
        %7465 = vmatprep.subr.bf16.mxu0 %v5752
        %7466 = vmatpush1.bf16.msra.mxu0 %v5751
        %7467 = vmatprep.subr.bf16.mxu0 %v5770
        %7468 = vmatpush1.bf16.msra.mxu0 %v5769
        %7469 = vmatprep.subr.bf16.mxu0 %v5788
        %7470 = vmatpush1.bf16.msra.mxu0 %v5787
        %7471 = vmatprep.subr.bf16.mxu0 %v5806
        %7472 = vmatpush1.bf16.msra.mxu0 %v5805
        %7473 = vmatprep.subr.bf16.mxu0 %v5824
        %7474 = vmatpush1.bf16.msra.mxu0 %v5823
        %7475 = vmatprep.subr.bf16.mxu0 %v5842
        %7476 = vmatpush1.bf16.msra.mxu0 %v5841
        %7477 = vmatprep.subr.bf16.mxu0 %v5860
        %7478 = vmatpush1.bf16.msra.mxu0 %v5859
        %7479 = vmatprep.subr.bf16.mxu0 %v5878
        %7480 = vmatpush1.bf16.msra.mxu0 %v5877
        %7481 = vmatprep.subr.bf16.mxu0 %v5896
        %7482 = vmatpush1.bf16.msra.mxu0 %v5895
        %7483 = vmatprep.subr.bf16.mxu0 %v5914
        %7484 = vmatpush1.bf16.msra.mxu0 %v5913
        %7485 = vmatprep.subr.bf16.mxu0 %v5932
        %7486 = vmatpush1.bf16.msra.mxu0 %v5931
        %7487 = vmatprep.subr.bf16.mxu0 %v5950
        %7488 = vmatpush1.bf16.msra.mxu0 %v5949
        %7489 = vmatprep.subr.bf16.mxu0 %v5968
        %7490 = vmatpush1.bf16.msra.mxu0 %v5967
        %7491 = vmatprep.subr.bf16.mxu0 %v7132
        %7492 = vmatpush1.bf16.msra.mxu0 %v7129
        %7493 = vmatprep.subr.bf16.mxu0 0
        %7494 = vmatpush1.bf16.msra.mxu0 0
        %7495 = vmatprep.mubr.bf16.mxu0 %v7119
        %7496 = vmatmul.mubr.bf16.gmra.mrb[0].mxu0 %v1482
        %v7497 = vpop.f32.mrb[0].mxu0
        %v7498 = vadd.f32 %v7457, %v7497
        %v7499 = vpop.f32.mrb[0].mxu0
        %v7500 = vadd.f32 %v7459, %v7499
        %v7501 = vpop.f32.mrb[0].mxu0
        %v7502 = vpop.f32.mrb[0].mxu0
        %7503 = vdwg.mxu0
        %7504 = vmatprep.subr.bf16.mxu0 %v4872
        %7505 = vmatpush1.bf16.msra.mxu0 %v4871
        %7506 = vmatprep.subr.bf16.mxu0 %v4890
        %7507 = vmatpush1.bf16.msra.mxu0 %v4889
        %7508 = vmatprep.subr.bf16.mxu0 %v4908
        %7509 = vmatpush1.bf16.msra.mxu0 %v4907
        %7510 = vmatprep.subr.bf16.mxu0 %v4926
        %7511 = vmatpush1.bf16.msra.mxu0 %v4925
        %7512 = vmatprep.subr.bf16.mxu0 %v4944
        %7513 = vmatpush1.bf16.msra.mxu0 %v4943
        %7514 = vmatprep.subr.bf16.mxu0 %v4962
        %7515 = vmatpush1.bf16.msra.mxu0 %v4961
        %7516 = vmatprep.subr.bf16.mxu0 %v4980
        %7517 = vmatpush1.bf16.msra.mxu0 %v4979
        %7518 = vmatprep.subr.bf16.mxu0 %v4998
        %7519 = vmatpush1.bf16.msra.mxu0 %v4997
        %7520 = vmatprep.subr.bf16.mxu0 %v5016
        %7521 = vmatpush1.bf16.msra.mxu0 %v5015
        %7522 = vmatprep.subr.bf16.mxu0 %v5034
        %7523 = vmatpush1.bf16.msra.mxu0 %v5033
        %7524 = vmatprep.subr.bf16.mxu0 %v5052
        %7525 = vmatpush1.bf16.msra.mxu0 %v5051
        %7526 = vmatprep.subr.bf16.mxu0 %v5070
        %7527 = vmatpush1.bf16.msra.mxu0 %v5069
        %7528 = vmatprep.subr.bf16.mxu0 %v5088
        %7529 = vmatpush1.bf16.msra.mxu0 %v5087
        %7530 = vmatprep.subr.bf16.mxu0 %v5106
        %7531 = vmatpush1.bf16.msra.mxu0 %v5105
        %7532 = vmatprep.subr.bf16.mxu0 %v5124
        %7533 = vmatpush1.bf16.msra.mxu0 %v5123
        %7534 = vmatprep.subr.bf16.mxu0 %v5142
        %7535 = vmatpush1.bf16.msra.mxu0 %v5141
        %7536 = vmatprep.mubr.bf16.mxu0 %v1473
        %7537 = vmatmul.mubr.bf16.gmra.mrb[0].mxu0 %v1459
        %v7538 = vpop.f32.mrb[0].mxu0
        %v7539 = vadd.f32 %v1364, %v7538
        %v7540 = vpop.f32.mrb[0].mxu0
        %v7541 = vadd.f32 %v1368, %v7540
        %v7542 = vpop.f32.mrb[0].mxu0
        %v7543 = vpop.f32.mrb[0].mxu0
        %7544 = vdwg.mxu0
        %7545 = vmatprep.subr.bf16.mxu0 %v5160
        %7546 = vmatpush1.bf16.msra.mxu0 %v5159
        %7547 = vmatprep.subr.bf16.mxu0 %v5178
        %7548 = vmatpush1.bf16.msra.mxu0 %v5177
        %7549 = vmatprep.subr.bf16.mxu0 %v5196
        %7550 = vmatpush1.bf16.msra.mxu0 %v5195
        %7551 = vmatprep.subr.bf16.mxu0 %v5214
        %7552 = vmatpush1.bf16.msra.mxu0 %v5213
        %7553 = vmatprep.subr.bf16.mxu0 %v5232
        %7554 = vmatpush1.bf16.msra.mxu0 %v5231
        %7555 = vmatprep.subr.bf16.mxu0 %v5250
        %7556 = vmatpush1.bf16.msra.mxu0 %v5249
        %7557 = vmatprep.subr.bf16.mxu0 %v5268
        %7558 = vmatpush1.bf16.msra.mxu0 %v5267
        %7559 = vmatprep.subr.bf16.mxu0 %v5286
        %7560 = vmatpush1.bf16.msra.mxu0 %v5285
        %7561 = vmatprep.subr.bf16.mxu0 %v5304
        %7562 = vmatpush1.bf16.msra.mxu0 %v5303
        %7563 = vmatprep.subr.bf16.mxu0 %v5322
        %7564 = vmatpush1.bf16.msra.mxu0 %v5321
        %7565 = vmatprep.subr.bf16.mxu0 %v5340
        %7566 = vmatpush1.bf16.msra.mxu0 %v5339
        %7567 = vmatprep.subr.bf16.mxu0 %v5358
        %7568 = vmatpush1.bf16.msra.mxu0 %v5357
        %7569 = vmatprep.subr.bf16.mxu0 %v5376
        %7570 = vmatpush1.bf16.msra.mxu0 %v5375
        %7571 = vmatprep.subr.bf16.mxu0 %v5394
        %7572 = vmatpush1.bf16.msra.mxu0 %v5393
        %7573 = vmatprep.subr.bf16.mxu0 %v5412
        %7574 = vmatpush1.bf16.msra.mxu0 %v5411
        %7575 = vmatprep.subr.bf16.mxu0 %v5430
        %7576 = vmatpush1.bf16.msra.mxu0 %v5429
        %7577 = vmatprep.mubr.bf16.mxu0 %v1483
        %7578 = vmatmul.mubr.bf16.gmra.mrb[0].mxu0 %v1481
        %v7579 = vpop.f32.mrb[0].mxu0
        %v7580 = vadd.f32 %v7539, %v7579
        %v7581 = vpop.f32.mrb[0].mxu0
        %v7582 = vadd.f32 %v7541, %v7581
        %v7583 = vpop.f32.mrb[0].mxu0
        %v7584 = vpop.f32.mrb[0].mxu0
        %7585 = vdwg.mxu0
        %7586 = vmatprep.subr.bf16.mxu0 %v5448
        %7587 = vmatpush1.bf16.msra.mxu0 %v5447
        %7588 = vmatprep.subr.bf16.mxu0 %v5466
        %7589 = vmatpush1.bf16.msra.mxu0 %v5465
        %7590 = vmatprep.subr.bf16.mxu0 %v5484
        %7591 = vmatpush1.bf16.msra.mxu0 %v5483
        %7592 = vmatprep.subr.bf16.mxu0 %v5502
        %7593 = vmatpush1.bf16.msra.mxu0 %v5501
        %7594 = vmatprep.subr.bf16.mxu0 %v5520
        %7595 = vmatpush1.bf16.msra.mxu0 %v5519
        %7596 = vmatprep.subr.bf16.mxu0 %v5538
        %7597 = vmatpush1.bf16.msra.mxu0 %v5537
        %7598 = vmatprep.subr.bf16.mxu0 %v5556
        %7599 = vmatpush1.bf16.msra.mxu0 %v5555
        %7600 = vmatprep.subr.bf16.mxu0 %v5574
        %7601 = vmatpush1.bf16.msra.mxu0 %v5573
        %7602 = vmatprep.subr.bf16.mxu0 %v5592
        %7603 = vmatpush1.bf16.msra.mxu0 %v5591
        %7604 = vmatprep.subr.bf16.mxu0 %v5610
        %7605 = vmatpush1.bf16.msra.mxu0 %v5609
        %7606 = vmatprep.subr.bf16.mxu0 %v5628
        %7607 = vmatpush1.bf16.msra.mxu0 %v5627
        %7608 = vmatprep.subr.bf16.mxu0 %v5646
        %7609 = vmatpush1.bf16.msra.mxu0 %v5645
        %7610 = vmatprep.subr.bf16.mxu0 %v5664
        %7611 = vmatpush1.bf16.msra.mxu0 %v5663
        %7612 = vmatprep.subr.bf16.mxu0 %v5682
        %7613 = vmatpush1.bf16.msra.mxu0 %v5681
        %7614 = vmatprep.subr.bf16.mxu0 %v5700
        %7615 = vmatpush1.bf16.msra.mxu0 %v5699
        %7616 = vmatprep.subr.bf16.mxu0 %v5718
        %7617 = vmatpush1.bf16.msra.mxu0 %v5717
        %7618 = vmatprep.mubr.bf16.mxu0 %v1480
        %7619 = vmatmul.mubr.bf16.gmra.mrb[0].mxu0 %v1466
        %v7620 = vpop.f32.mrb[0].mxu0
        %v7621 = vadd.f32 %v7580, %v7620
        %v7622 = vpop.f32.mrb[0].mxu0
        %v7623 = vadd.f32 %v7582, %v7622
        %v7624 = vpop.f32.mrb[0].mxu0
        %v7625 = vpop.f32.mrb[0].mxu0
        %7626 = vdwg.mxu0
        %7627 = vmatprep.subr.bf16.mxu0 %v5736
        %7628 = vmatpush1.bf16.msra.mxu0 %v5735
        %7629 = vmatprep.subr.bf16.mxu0 %v5754
        %7630 = vmatpush1.bf16.msra.mxu0 %v5753
        %7631 = vmatprep.subr.bf16.mxu0 %v5772
        %7632 = vmatpush1.bf16.msra.mxu0 %v5771
        %7633 = vmatprep.subr.bf16.mxu0 %v5790
        %7634 = vmatpush1.bf16.msra.mxu0 %v5789
        %7635 = vmatprep.subr.bf16.mxu0 %v5808
        %7636 = vmatpush1.bf16.msra.mxu0 %v5807
        %7637 = vmatprep.subr.bf16.mxu0 %v5826
        %7638 = vmatpush1.bf16.msra.mxu0 %v5825
        %7639 = vmatprep.subr.bf16.mxu0 %v5844
        %7640 = vmatpush1.bf16.msra.mxu0 %v5843
        %7641 = vmatprep.subr.bf16.mxu0 %v5862
        %7642 = vmatpush1.bf16.msra.mxu0 %v5861
        %7643 = vmatprep.subr.bf16.mxu0 %v5880
        %7644 = vmatpush1.bf16.msra.mxu0 %v5879
        %7645 = vmatprep.subr.bf16.mxu0 %v5898
        %7646 = vmatpush1.bf16.msra.mxu0 %v5897
        %7647 = vmatprep.subr.bf16.mxu0 %v5916
        %7648 = vmatpush1.bf16.msra.mxu0 %v5915
        %7649 = vmatprep.subr.bf16.mxu0 %v5934
        %7650 = vmatpush1.bf16.msra.mxu0 %v5933
        %7651 = vmatprep.subr.bf16.mxu0 %v5952
        %7652 = vmatpush1.bf16.msra.mxu0 %v5951
        %7653 = vmatprep.subr.bf16.mxu0 %v5970
        %7654 = vmatpush1.bf16.msra.mxu0 %v5969
        %7655 = vmatprep.subr.bf16.mxu0 %v7138
        %7656 = vmatpush1.bf16.msra.mxu0 %v7135
        %7657 = vmatprep.subr.bf16.mxu0 0
        %7658 = vmatpush1.bf16.msra.mxu0 0
        %7659 = vmatprep.mubr.bf16.mxu0 %v7119
        %7660 = vmatmul.mubr.bf16.gmra.mrb[0].mxu0 %v1482
        %v7661 = vpop.f32.mrb[0].mxu0
        %v7662 = vadd.f32 %v7621, %v7661
        %v7663 = vpop.f32.mrb[0].mxu0
        %v7664 = vadd.f32 %v7623, %v7663
        %v7665 = vpop.f32.mrb[0].mxu0
        %v7666 = vpop.f32.mrb[0].mxu0
        %7667 = vdwg.mxu0
        %7668 = vmatprep.subr.bf16.mxu0 %v4874
        %7669 = vmatpush1.bf16.msra.mxu0 %v4873
        %7670 = vmatprep.subr.bf16.mxu0 %v4892
        %7671 = vmatpush1.bf16.msra.mxu0 %v4891
        %7672 = vmatprep.subr.bf16.mxu0 %v4910
        %7673 = vmatpush1.bf16.msra.mxu0 %v4909
        %7674 = vmatprep.subr.bf16.mxu0 %v4928
        %7675 = vmatpush1.bf16.msra.mxu0 %v4927
        %7676 = vmatprep.subr.bf16.mxu0 %v4946
        %7677 = vmatpush1.bf16.msra.mxu0 %v4945
        %7678 = vmatprep.subr.bf16.mxu0 %v4964
        %7679 = vmatpush1.bf16.msra.mxu0 %v4963
        %7680 = vmatprep.subr.bf16.mxu0 %v4982
        %7681 = vmatpush1.bf16.msra.mxu0 %v4981
        %7682 = vmatprep.subr.bf16.mxu0 %v5000
        %7683 = vmatpush1.bf16.msra.mxu0 %v4999
        %7684 = vmatprep.subr.bf16.mxu0 %v5018
        %7685 = vmatpush1.bf16.msra.mxu0 %v5017
        %7686 = vmatprep.subr.bf16.mxu0 %v5036
        %7687 = vmatpush1.bf16.msra.mxu0 %v5035
        %7688 = vmatprep.subr.bf16.mxu0 %v5054
        %7689 = vmatpush1.bf16.msra.mxu0 %v5053
        %7690 = vmatprep.subr.bf16.mxu0 %v5072
        %7691 = vmatpush1.bf16.msra.mxu0 %v5071
        %7692 = vmatprep.subr.bf16.mxu0 %v5090
        %7693 = vmatpush1.bf16.msra.mxu0 %v5089
        %7694 = vmatprep.subr.bf16.mxu0 %v5108
        %7695 = vmatpush1.bf16.msra.mxu0 %v5107
        %7696 = vmatprep.subr.bf16.mxu0 %v5126
        %7697 = vmatpush1.bf16.msra.mxu0 %v5125
        %7698 = vmatprep.subr.bf16.mxu0 %v5144
        %7699 = vmatpush1.bf16.msra.mxu0 %v5143
        %7700 = vmatprep.mubr.bf16.mxu0 %v1473
        %7701 = vmatmul.mubr.bf16.gmra.mrb[0].mxu0 %v1459
        %v7702 = vpop.f32.mrb[0].mxu0
        %v7703 = vadd.f32 %v1372, %v7702
        %v7704 = vpop.f32.mrb[0].mxu0
        %v7705 = vadd.f32 %v1376, %v7704
        %v7706 = vpop.f32.mrb[0].mxu0
        %v7707 = vpop.f32.mrb[0].mxu0
        %7708 = vdwg.mxu0
        %7709 = vmatprep.subr.bf16.mxu0 %v5162
        %7710 = vmatpush1.bf16.msra.mxu0 %v5161
        %7711 = vmatprep.subr.bf16.mxu0 %v5180
        %7712 = vmatpush1.bf16.msra.mxu0 %v5179
        %7713 = vmatprep.subr.bf16.mxu0 %v5198
        %7714 = vmatpush1.bf16.msra.mxu0 %v5197
        %7715 = vmatprep.subr.bf16.mxu0 %v5216
        %7716 = vmatpush1.bf16.msra.mxu0 %v5215
        %7717 = vmatprep.subr.bf16.mxu0 %v5234
        %7718 = vmatpush1.bf16.msra.mxu0 %v5233
        %7719 = vmatprep.subr.bf16.mxu0 %v5252
        %7720 = vmatpush1.bf16.msra.mxu0 %v5251
        %7721 = vmatprep.subr.bf16.mxu0 %v5270
        %7722 = vmatpush1.bf16.msra.mxu0 %v5269
        %7723 = vmatprep.subr.bf16.mxu0 %v5288
        %7724 = vmatpush1.bf16.msra.mxu0 %v5287
        %7725 = vmatprep.subr.bf16.mxu0 %v5306
        %7726 = vmatpush1.bf16.msra.mxu0 %v5305
        %7727 = vmatprep.subr.bf16.mxu0 %v5324
        %7728 = vmatpush1.bf16.msra.mxu0 %v5323
        %7729 = vmatprep.subr.bf16.mxu0 %v5342
        %7730 = vmatpush1.bf16.msra.mxu0 %v5341
        %7731 = vmatprep.subr.bf16.mxu0 %v5360
        %7732 = vmatpush1.bf16.msra.mxu0 %v5359
        %7733 = vmatprep.subr.bf16.mxu0 %v5378
        %7734 = vmatpush1.bf16.msra.mxu0 %v5377
        %7735 = vmatprep.subr.bf16.mxu0 %v5396
        %7736 = vmatpush1.bf16.msra.mxu0 %v5395
        %7737 = vmatprep.subr.bf16.mxu0 %v5414
        %7738 = vmatpush1.bf16.msra.mxu0 %v5413
        %7739 = vmatprep.subr.bf16.mxu0 %v5432
        %7740 = vmatpush1.bf16.msra.mxu0 %v5431
        %7741 = vmatprep.mubr.bf16.mxu0 %v1483
        %7742 = vmatmul.mubr.bf16.gmra.mrb[0].mxu0 %v1481
        %v7743 = vpop.f32.mrb[0].mxu0
        %v7744 = vadd.f32 %v7703, %v7743
        %v7745 = vpop.f32.mrb[0].mxu0
        %v7746 = vadd.f32 %v7705, %v7745
        %v7747 = vpop.f32.mrb[0].mxu0
        %v7748 = vpop.f32.mrb[0].mxu0
        %7749 = vdwg.mxu0
        %7750 = vmatprep.subr.bf16.mxu0 %v5450
        %7751 = vmatpush1.bf16.msra.mxu0 %v5449
        %7752 = vmatprep.subr.bf16.mxu0 %v5468
        %7753 = vmatpush1.bf16.msra.mxu0 %v5467
        %7754 = vmatprep.subr.bf16.mxu0 %v5486
        %7755 = vmatpush1.bf16.msra.mxu0 %v5485
        %7756 = vmatprep.subr.bf16.mxu0 %v5504
        %7757 = vmatpush1.bf16.msra.mxu0 %v5503
        %7758 = vmatprep.subr.bf16.mxu0 %v5522
        %7759 = vmatpush1.bf16.msra.mxu0 %v5521
        %7760 = vmatprep.subr.bf16.mxu0 %v5540
        %7761 = vmatpush1.bf16.msra.mxu0 %v5539
        %7762 = vmatprep.subr.bf16.mxu0 %v5558
        %7763 = vmatpush1.bf16.msra.mxu0 %v5557
        %7764 = vmatprep.subr.bf16.mxu0 %v5576
        %7765 = vmatpush1.bf16.msra.mxu0 %v5575
        %7766 = vmatprep.subr.bf16.mxu0 %v5594
        %7767 = vmatpush1.bf16.msra.mxu0 %v5593
        %7768 = vmatprep.subr.bf16.mxu0 %v5612
        %7769 = vmatpush1.bf16.msra.mxu0 %v5611
        %7770 = vmatprep.subr.bf16.mxu0 %v5630
        %7771 = vmatpush1.bf16.msra.mxu0 %v5629
        %7772 = vmatprep.subr.bf16.mxu0 %v5648
        %7773 = vmatpush1.bf16.msra.mxu0 %v5647
        %7774 = vmatprep.subr.bf16.mxu0 %v5666
        %7775 = vmatpush1.bf16.msra.mxu0 %v5665
        %7776 = vmatprep.subr.bf16.mxu0 %v5684
        %7777 = vmatpush1.bf16.msra.mxu0 %v5683
        %7778 = vmatprep.subr.bf16.mxu0 %v5702
        %7779 = vmatpush1.bf16.msra.mxu0 %v5701
        %7780 = vmatprep.subr.bf16.mxu0 %v5720
        %7781 = vmatpush1.bf16.msra.mxu0 %v5719
        %7782 = vmatprep.mubr.bf16.mxu0 %v1480
        %7783 = vmatmul.mubr.bf16.gmra.mrb[0].mxu0 %v1466
        %v7784 = vpop.f32.mrb[0].mxu0
        %v7785 = vadd.f32 %v7744, %v7784
        %v7786 = vpop.f32.mrb[0].mxu0
        %v7787 = vadd.f32 %v7746, %v7786
        %v7788 = vpop.f32.mrb[0].mxu0
        %v7789 = vpop.f32.mrb[0].mxu0
        %7790 = vdwg.mxu0
        %7791 = vmatprep.subr.bf16.mxu0 %v5738
        %7792 = vmatpush1.bf16.msra.mxu0 %v5737
        %7793 = vmatprep.subr.bf16.mxu0 %v5756
        %7794 = vmatpush1.bf16.msra.mxu0 %v5755
        %7795 = vmatprep.subr.bf16.mxu0 %v5774
        %7796 = vmatpush1.bf16.msra.mxu0 %v5773
        %7797 = vmatprep.subr.bf16.mxu0 %v5792
        %7798 = vmatpush1.bf16.msra.mxu0 %v5791
        %7799 = vmatprep.subr.bf16.mxu0 %v5810
        %7800 = vmatpush1.bf16.msra.mxu0 %v5809
        %7801 = vmatprep.subr.bf16.mxu0 %v5828
        %7802 = vmatpush1.bf16.msra.mxu0 %v5827
        %7803 = vmatprep.subr.bf16.mxu0 %v5846
        %7804 = vmatpush1.bf16.msra.mxu0 %v5845
        %7805 = vmatprep.subr.bf16.mxu0 %v5864
        %7806 = vmatpush1.bf16.msra.mxu0 %v5863
        %7807 = vmatprep.subr.bf16.mxu0 %v5882
        %7808 = vmatpush1.bf16.msra.mxu0 %v5881
        %7809 = vmatprep.subr.bf16.mxu0 %v5900
        %7810 = vmatpush1.bf16.msra.mxu0 %v5899
        %7811 = vmatprep.subr.bf16.mxu0 %v5918
        %7812 = vmatpush1.bf16.msra.mxu0 %v5917
        %7813 = vmatprep.subr.bf16.mxu0 %v5936
        %7814 = vmatpush1.bf16.msra.mxu0 %v5935
        %7815 = vmatprep.subr.bf16.mxu0 %v5954
        %7816 = vmatpush1.bf16.msra.mxu0 %v5953
        %7817 = vmatprep.subr.bf16.mxu0 %v5972
        %7818 = vmatpush1.bf16.msra.mxu0 %v5971
        %7819 = vmatprep.subr.bf16.mxu0 %v7144
        %7820 = vmatpush1.bf16.msra.mxu0 %v7141
        %7821 = vmatprep.subr.bf16.mxu0 0
        %7822 = vmatpush1.bf16.msra.mxu0 0
        %7823 = vmatprep.mubr.bf16.mxu0 %v7119
        %7824 = vmatmul.mubr.bf16.gmra.mrb[0].mxu0 %v1482
        %v7825 = vpop.f32.mrb[0].mxu0
        %v7826 = vadd.f32 %v7785, %v7825
        %v7827 = vpop.f32.mrb[0].mxu0
        %v7828 = vadd.f32 %v7787, %v7827
        %v7829 = vpop.f32.mrb[0].mxu0
        %v7830 = vpop.f32.mrb[0].mxu0
        %7831 = vdwg.mxu0
        %7832 = vmatprep.subr.bf16.mxu0 %v4876
        %7833 = vmatpush1.bf16.msra.mxu0 %v4875
        %7834 = vmatprep.subr.bf16.mxu0 %v4894
        %7835 = vmatpush1.bf16.msra.mxu0 %v4893
        %7836 = vmatprep.subr.bf16.mxu0 %v4912
        %7837 = vmatpush1.bf16.msra.mxu0 %v4911
        %7838 = vmatprep.subr.bf16.mxu0 %v4930
        %7839 = vmatpush1.bf16.msra.mxu0 %v4929
        %7840 = vmatprep.subr.bf16.mxu0 %v4948
        %7841 = vmatpush1.bf16.msra.mxu0 %v4947
        %7842 = vmatprep.subr.bf16.mxu0 %v4966
        %7843 = vmatpush1.bf16.msra.mxu0 %v4965
        %7844 = vmatprep.subr.bf16.mxu0 %v4984
        %7845 = vmatpush1.bf16.msra.mxu0 %v4983
        %7846 = vmatprep.subr.bf16.mxu0 %v5002
        %7847 = vmatpush1.bf16.msra.mxu0 %v5001
        %7848 = vmatprep.subr.bf16.mxu0 %v5020
        %7849 = vmatpush1.bf16.msra.mxu0 %v5019
        %7850 = vmatprep.subr.bf16.mxu0 %v5038
        %7851 = vmatpush1.bf16.msra.mxu0 %v5037
        %7852 = vmatprep.subr.bf16.mxu0 %v5056
        %7853 = vmatpush1.bf16.msra.mxu0 %v5055
        %7854 = vmatprep.subr.bf16.mxu0 %v5074
        %7855 = vmatpush1.bf16.msra.mxu0 %v5073
        %7856 = vmatprep.subr.bf16.mxu0 %v5092
        %7857 = vmatpush1.bf16.msra.mxu0 %v5091
        %7858 = vmatprep.subr.bf16.mxu0 %v5110
        %7859 = vmatpush1.bf16.msra.mxu0 %v5109
        %7860 = vmatprep.subr.bf16.mxu0 %v5128
        %7861 = vmatpush1.bf16.msra.mxu0 %v5127
        %7862 = vmatprep.subr.bf16.mxu0 %v5146
        %7863 = vmatpush1.bf16.msra.mxu0 %v5145
        %7864 = vmatprep.mubr.bf16.mxu0 %v1473
        %7865 = vmatmul.mubr.bf16.gmra.mrb[0].mxu0 %v1459
        %v7866 = vpop.f32.mrb[0].mxu0
        %v7867 = vadd.f32 %v1380, %v7866
        %v7868 = vpop.f32.mrb[0].mxu0
        %v7869 = vadd.f32 %v1384, %v7868
        %v7870 = vpop.f32.mrb[0].mxu0
        %v7871 = vpop.f32.mrb[0].mxu0
        %7872 = vdwg.mxu0
        %7873 = vmatprep.subr.bf16.mxu0 %v5164
        %7874 = vmatpush1.bf16.msra.mxu0 %v5163
        %7875 = vmatprep.subr.bf16.mxu0 %v5182
        %7876 = vmatpush1.bf16.msra.mxu0 %v5181
        %7877 = vmatprep.subr.bf16.mxu0 %v5200
        %7878 = vmatpush1.bf16.msra.mxu0 %v5199
        %7879 = vmatprep.subr.bf16.mxu0 %v5218
        %7880 = vmatpush1.bf16.msra.mxu0 %v5217
        %7881 = vmatprep.subr.bf16.mxu0 %v5236
        %7882 = vmatpush1.bf16.msra.mxu0 %v5235
        %7883 = vmatprep.subr.bf16.mxu0 %v5254
        %7884 = vmatpush1.bf16.msra.mxu0 %v5253
        %7885 = vmatprep.subr.bf16.mxu0 %v5272
        %7886 = vmatpush1.bf16.msra.mxu0 %v5271
        %7887 = vmatprep.subr.bf16.mxu0 %v5290
        %7888 = vmatpush1.bf16.msra.mxu0 %v5289
        %7889 = vmatprep.subr.bf16.mxu0 %v5308
        %7890 = vmatpush1.bf16.msra.mxu0 %v5307
        %7891 = vmatprep.subr.bf16.mxu0 %v5326
        %7892 = vmatpush1.bf16.msra.mxu0 %v5325
        %7893 = vmatprep.subr.bf16.mxu0 %v5344
        %7894 = vmatpush1.bf16.msra.mxu0 %v5343
        %7895 = vmatprep.subr.bf16.mxu0 %v5362
        %7896 = vmatpush1.bf16.msra.mxu0 %v5361
        %7897 = vmatprep.subr.bf16.mxu0 %v5380
        %7898 = vmatpush1.bf16.msra.mxu0 %v5379
        %7899 = vmatprep.subr.bf16.mxu0 %v5398
        %7900 = vmatpush1.bf16.msra.mxu0 %v5397
        %7901 = vmatprep.subr.bf16.mxu0 %v5416
        %7902 = vmatpush1.bf16.msra.mxu0 %v5415
        %7903 = vmatprep.subr.bf16.mxu0 %v5434
        %7904 = vmatpush1.bf16.msra.mxu0 %v5433
        %7905 = vmatprep.mubr.bf16.mxu0 %v1483
        %7906 = vmatmul.mubr.bf16.gmra.mrb[0].mxu0 %v1481
        %v7907 = vpop.f32.mrb[0].mxu0
        %v7908 = vadd.f32 %v7867, %v7907
        %v7909 = vpop.f32.mrb[0].mxu0
        %v7910 = vadd.f32 %v7869, %v7909
        %v7911 = vpop.f32.mrb[0].mxu0
        %v7912 = vpop.f32.mrb[0].mxu0
        %7913 = vdwg.mxu0
        %7914 = vmatprep.subr.bf16.mxu0 %v5452
        %7915 = vmatpush1.bf16.msra.mxu0 %v5451
        %7916 = vmatprep.subr.bf16.mxu0 %v5470
        %7917 = vmatpush1.bf16.msra.mxu0 %v5469
        %7918 = vmatprep.subr.bf16.mxu0 %v5488
        %7919 = vmatpush1.bf16.msra.mxu0 %v5487
        %7920 = vmatprep.subr.bf16.mxu0 %v5506
        %7921 = vmatpush1.bf16.msra.mxu0 %v5505
        %7922 = vmatprep.subr.bf16.mxu0 %v5524
        %7923 = vmatpush1.bf16.msra.mxu0 %v5523
        %7924 = vmatprep.subr.bf16.mxu0 %v5542
        %7925 = vmatpush1.bf16.msra.mxu0 %v5541
        %7926 = vmatprep.subr.bf16.mxu0 %v5560
        %7927 = vmatpush1.bf16.msra.mxu0 %v5559
        %7928 = vmatprep.subr.bf16.mxu0 %v5578
        %7929 = vmatpush1.bf16.msra.mxu0 %v5577
        %7930 = vmatprep.subr.bf16.mxu0 %v5596
        %7931 = vmatpush1.bf16.msra.mxu0 %v5595
        %7932 = vmatprep.subr.bf16.mxu0 %v5614
        %7933 = vmatpush1.bf16.msra.mxu0 %v5613
        %7934 = vmatprep.subr.bf16.mxu0 %v5632
        %7935 = vmatpush1.bf16.msra.mxu0 %v5631
        %7936 = vmatprep.subr.bf16.mxu0 %v5650
        %7937 = vmatpush1.bf16.msra.mxu0 %v5649
        %7938 = vmatprep.subr.bf16.mxu0 %v5668
        %7939 = vmatpush1.bf16.msra.mxu0 %v5667
        %7940 = vmatprep.subr.bf16.mxu0 %v5686
        %7941 = vmatpush1.bf16.msra.mxu0 %v5685
        %7942 = vmatprep.subr.bf16.mxu0 %v5704
        %7943 = vmatpush1.bf16.msra.mxu0 %v5703
        %7944 = vmatprep.subr.bf16.mxu0 %v5722
        %7945 = vmatpush1.bf16.msra.mxu0 %v5721
        %7946 = vmatprep.mubr.bf16.mxu0 %v1480
        %7947 = vmatmul.mubr.bf16.gmra.mrb[0].mxu0 %v1466
        %v7948 = vpop.f32.mrb[0].mxu0
        %v7949 = vadd.f32 %v7908, %v7948
        %v7950 = vpop.f32.mrb[0].mxu0
        %v7951 = vadd.f32 %v7910, %v7950
        %v7952 = vpop.f32.mrb[0].mxu0
        %v7953 = vpop.f32.mrb[0].mxu0
        %7954 = vdwg.mxu0
        %7955 = vmatprep.subr.bf16.mxu0 %v5740
        %7956 = vmatpush1.bf16.msra.mxu0 %v5739
        %7957 = vmatprep.subr.bf16.mxu0 %v5758
        %7958 = vmatpush1.bf16.msra.mxu0 %v5757
        %7959 = vmatprep.subr.bf16.mxu0 %v5776
        %7960 = vmatpush1.bf16.msra.mxu0 %v5775
        %7961 = vmatprep.subr.bf16.mxu0 %v5794
        %7962 = vmatpush1.bf16.msra.mxu0 %v5793
        %7963 = vmatprep.subr.bf16.mxu0 %v5812
        %7964 = vmatpush1.bf16.msra.mxu0 %v5811
        %7965 = vmatprep.subr.bf16.mxu0 %v5830
        %7966 = vmatpush1.bf16.msra.mxu0 %v5829
        %7967 = vmatprep.subr.bf16.mxu0 %v5848
        %7968 = vmatpush1.bf16.msra.mxu0 %v5847
        %7969 = vmatprep.subr.bf16.mxu0 %v5866
        %7970 = vmatpush1.bf16.msra.mxu0 %v5865
        %7971 = vmatprep.subr.bf16.mxu0 %v5884
        %7972 = vmatpush1.bf16.msra.mxu0 %v5883
        %7973 = vmatprep.subr.bf16.mxu0 %v5902
        %7974 = vmatpush1.bf16.msra.mxu0 %v5901
        %7975 = vmatprep.subr.bf16.mxu0 %v5920
        %7976 = vmatpush1.bf16.msra.mxu0 %v5919
        %7977 = vmatprep.subr.bf16.mxu0 %v5938
        %7978 = vmatpush1.bf16.msra.mxu0 %v5937
        %7979 = vmatprep.subr.bf16.mxu0 %v5956
        %7980 = vmatpush1.bf16.msra.mxu0 %v5955
        %7981 = vmatprep.subr.bf16.mxu0 %v5974
        %7982 = vmatpush1.bf16.msra.mxu0 %v5973
        %7983 = vmatprep.subr.bf16.mxu0 %v7150
        %7984 = vmatpush1.bf16.msra.mxu0 %v7147
        %7985 = vmatprep.subr.bf16.mxu0 0
        %7986 = vmatpush1.bf16.msra.mxu0 0
        %7987 = vmatprep.mubr.bf16.mxu0 %v7119
        %7988 = vmatmul.mubr.bf16.gmra.mrb[0].mxu0 %v1482
        %v7989 = vpop.f32.mrb[0].mxu0
        %v7990 = vadd.f32 %v7949, %v7989
        %v7991 = vpop.f32.mrb[0].mxu0
        %v7992 = vadd.f32 %v7951, %v7991
        %v7993 = vpop.f32.mrb[0].mxu0
        %v7994 = vpop.f32.mrb[0].mxu0
        %7995 = vdwg.mxu0
        %7996 = vmatprep.subr.bf16.mxu0 %v4878
        %7997 = vmatpush1.bf16.msra.mxu0 %v4877
        %7998 = vmatprep.subr.bf16.mxu0 %v4896
        %7999 = vmatpush1.bf16.msra.mxu0 %v4895
        %8000 = vmatprep.subr.bf16.mxu0 %v4914
        %8001 = vmatpush1.bf16.msra.mxu0 %v4913
        %8002 = vmatprep.subr.bf16.mxu0 %v4932
        %8003 = vmatpush1.bf16.msra.mxu0 %v4931
        %8004 = vmatprep.subr.bf16.mxu0 %v4950
        %8005 = vmatpush1.bf16.msra.mxu0 %v4949
        %8006 = vmatprep.subr.bf16.mxu0 %v4968
        %8007 = vmatpush1.bf16.msra.mxu0 %v4967
        %8008 = vmatprep.subr.bf16.mxu0 %v4986
        %8009 = vmatpush1.bf16.msra.mxu0 %v4985
        %8010 = vmatprep.subr.bf16.mxu0 %v5004
        %8011 = vmatpush1.bf16.msra.mxu0 %v5003
        %8012 = vmatprep.subr.bf16.mxu0 %v5022
        %8013 = vmatpush1.bf16.msra.mxu0 %v5021
        %8014 = vmatprep.subr.bf16.mxu0 %v5040
        %8015 = vmatpush1.bf16.msra.mxu0 %v5039
        %8016 = vmatprep.subr.bf16.mxu0 %v5058
        %8017 = vmatpush1.bf16.msra.mxu0 %v5057
        %8018 = vmatprep.subr.bf16.mxu0 %v5076
        %8019 = vmatpush1.bf16.msra.mxu0 %v5075
        %8020 = vmatprep.subr.bf16.mxu0 %v5094
        %8021 = vmatpush1.bf16.msra.mxu0 %v5093
        %8022 = vmatprep.subr.bf16.mxu0 %v5112
        %8023 = vmatpush1.bf16.msra.mxu0 %v5111
        %8024 = vmatprep.subr.bf16.mxu0 %v5130
        %8025 = vmatpush1.bf16.msra.mxu0 %v5129
        %8026 = vmatprep.subr.bf16.mxu0 %v5148
        %8027 = vmatpush1.bf16.msra.mxu0 %v5147
        %8028 = vmatprep.mubr.bf16.mxu0 %v1473
        %8029 = vmatmul.mubr.bf16.gmra.mrb[0].mxu0 %v1459
        %v8030 = vpop.f32.mrb[0].mxu0
        %v8031 = vadd.f32 %v1388, %v8030
        %v8032 = vpop.f32.mrb[0].mxu0
        %v8033 = vadd.f32 %v1392, %v8032
        %v8034 = vpop.f32.mrb[0].mxu0
        %v8035 = vpop.f32.mrb[0].mxu0
        %8036 = vdwg.mxu0
        %8037 = vmatprep.subr.bf16.mxu0 %v5166
        %8038 = vmatpush1.bf16.msra.mxu0 %v5165
        %8039 = vmatprep.subr.bf16.mxu0 %v5184
        %8040 = vmatpush1.bf16.msra.mxu0 %v5183
        %8041 = vmatprep.subr.bf16.mxu0 %v5202
        %8042 = vmatpush1.bf16.msra.mxu0 %v5201
        %8043 = vmatprep.subr.bf16.mxu0 %v5220
        %8044 = vmatpush1.bf16.msra.mxu0 %v5219
        %8045 = vmatprep.subr.bf16.mxu0 %v5238
        %8046 = vmatpush1.bf16.msra.mxu0 %v5237
        %8047 = vmatprep.subr.bf16.mxu0 %v5256
        %8048 = vmatpush1.bf16.msra.mxu0 %v5255
        %8049 = vmatprep.subr.bf16.mxu0 %v5274
        %8050 = vmatpush1.bf16.msra.mxu0 %v5273
        %8051 = vmatprep.subr.bf16.mxu0 %v5292
        %8052 = vmatpush1.bf16.msra.mxu0 %v5291
        %8053 = vmatprep.subr.bf16.mxu0 %v5310
        %8054 = vmatpush1.bf16.msra.mxu0 %v5309
        %8055 = vmatprep.subr.bf16.mxu0 %v5328
        %8056 = vmatpush1.bf16.msra.mxu0 %v5327
        %8057 = vmatprep.subr.bf16.mxu0 %v5346
        %8058 = vmatpush1.bf16.msra.mxu0 %v5345
        %8059 = vmatprep.subr.bf16.mxu0 %v5364
        %8060 = vmatpush1.bf16.msra.mxu0 %v5363
        %8061 = vmatprep.subr.bf16.mxu0 %v5382
        %8062 = vmatpush1.bf16.msra.mxu0 %v5381
        %8063 = vmatprep.subr.bf16.mxu0 %v5400
        %8064 = vmatpush1.bf16.msra.mxu0 %v5399
        %8065 = vmatprep.subr.bf16.mxu0 %v5418
        %8066 = vmatpush1.bf16.msra.mxu0 %v5417
        %8067 = vmatprep.subr.bf16.mxu0 %v5436
        %8068 = vmatpush1.bf16.msra.mxu0 %v5435
        %8069 = vmatprep.mubr.bf16.mxu0 %v1483
        %8070 = vmatmul.mubr.bf16.gmra.mrb[0].mxu0 %v1481
        %v8071 = vpop.f32.mrb[0].mxu0
        %v8072 = vadd.f32 %v8031, %v8071
        %v8073 = vpop.f32.mrb[0].mxu0
        %v8074 = vadd.f32 %v8033, %v8073
        %v8075 = vpop.f32.mrb[0].mxu0
        %v8076 = vpop.f32.mrb[0].mxu0
        %8077 = vdwg.mxu0
        %8078 = vmatprep.subr.bf16.mxu0 %v5454
        %8079 = vmatpush1.bf16.msra.mxu0 %v5453
        %8080 = vmatprep.subr.bf16.mxu0 %v5472
        %8081 = vmatpush1.bf16.msra.mxu0 %v5471
        %8082 = vmatprep.subr.bf16.mxu0 %v5490
        %8083 = vmatpush1.bf16.msra.mxu0 %v5489
        %8084 = vmatprep.subr.bf16.mxu0 %v5508
        %8085 = vmatpush1.bf16.msra.mxu0 %v5507
        %8086 = vmatprep.subr.bf16.mxu0 %v5526
        %8087 = vmatpush1.bf16.msra.mxu0 %v5525
        %8088 = vmatprep.subr.bf16.mxu0 %v5544
        %8089 = vmatpush1.bf16.msra.mxu0 %v5543
        %8090 = vmatprep.subr.bf16.mxu0 %v5562
        %8091 = vmatpush1.bf16.msra.mxu0 %v5561
        %8092 = vmatprep.subr.bf16.mxu0 %v5580
        %8093 = vmatpush1.bf16.msra.mxu0 %v5579
        %8094 = vmatprep.subr.bf16.mxu0 %v5598
        %8095 = vmatpush1.bf16.msra.mxu0 %v5597
        %8096 = vmatprep.subr.bf16.mxu0 %v5616
        %8097 = vmatpush1.bf16.msra.mxu0 %v5615
        %8098 = vmatprep.subr.bf16.mxu0 %v5634
        %8099 = vmatpush1.bf16.msra.mxu0 %v5633
        %8100 = vmatprep.subr.bf16.mxu0 %v5652
        %8101 = vmatpush1.bf16.msra.mxu0 %v5651
        %8102 = vmatprep.subr.bf16.mxu0 %v5670
        %8103 = vmatpush1.bf16.msra.mxu0 %v5669
        %8104 = vmatprep.subr.bf16.mxu0 %v5688
        %8105 = vmatpush1.bf16.msra.mxu0 %v5687
        %8106 = vmatprep.subr.bf16.mxu0 %v5706
        %8107 = vmatpush1.bf16.msra.mxu0 %v5705
        %8108 = vmatprep.subr.bf16.mxu0 %v5724
        %8109 = vmatpush1.bf16.msra.mxu0 %v5723
        %8110 = vmatprep.mubr.bf16.mxu0 %v1480
        %8111 = vmatmul.mubr.bf16.gmra.mrb[0].mxu0 %v1466
        %v8112 = vpop.f32.mrb[0].mxu0
        %v8113 = vadd.f32 %v8072, %v8112
        %v8114 = vpop.f32.mrb[0].mxu0
        %v8115 = vadd.f32 %v8074, %v8114
        %v8116 = vpop.f32.mrb[0].mxu0
        %v8117 = vpop.f32.mrb[0].mxu0
        %8118 = vdwg.mxu0
        %8119 = vmatprep.subr.bf16.mxu0 %v5742
        %8120 = vmatpush1.bf16.msra.mxu0 %v5741
        %8121 = vmatprep.subr.bf16.mxu0 %v5760
        %8122 = vmatpush1.bf16.msra.mxu0 %v5759
        %8123 = vmatprep.subr.bf16.mxu0 %v5778
        %8124 = vmatpush1.bf16.msra.mxu0 %v5777
        %8125 = vmatprep.subr.bf16.mxu0 %v5796
        %8126 = vmatpush1.bf16.msra.mxu0 %v5795
        %8127 = vmatprep.subr.bf16.mxu0 %v5814
        %8128 = vmatpush1.bf16.msra.mxu0 %v5813
        %8129 = vmatprep.subr.bf16.mxu0 %v5832
        %8130 = vmatpush1.bf16.msra.mxu0 %v5831
        %8131 = vmatprep.subr.bf16.mxu0 %v5850
        %8132 = vmatpush1.bf16.msra.mxu0 %v5849
        %8133 = vmatprep.subr.bf16.mxu0 %v5868
        %8134 = vmatpush1.bf16.msra.mxu0 %v5867
        %8135 = vmatprep.subr.bf16.mxu0 %v5886
        %8136 = vmatpush1.bf16.msra.mxu0 %v5885
        %8137 = vmatprep.subr.bf16.mxu0 %v5904
        %8138 = vmatpush1.bf16.msra.mxu0 %v5903
        %8139 = vmatprep.subr.bf16.mxu0 %v5922
        %8140 = vmatpush1.bf16.msra.mxu0 %v5921
        %8141 = vmatprep.subr.bf16.mxu0 %v5940
        %8142 = vmatpush1.bf16.msra.mxu0 %v5939
        %8143 = vmatprep.subr.bf16.mxu0 %v5958
        %8144 = vmatpush1.bf16.msra.mxu0 %v5957
        %8145 = vmatprep.subr.bf16.mxu0 %v5976
        %8146 = vmatpush1.bf16.msra.mxu0 %v5975
        %8147 = vmatprep.subr.bf16.mxu0 %v7156
        %8148 = vmatpush1.bf16.msra.mxu0 %v7153
        %8149 = vmatprep.subr.bf16.mxu0 0
        %8150 = vmatpush1.bf16.msra.mxu0 0
        %8151 = vmatprep.mubr.bf16.mxu0 %v7119
        %8152 = vmatmul.mubr.bf16.gmra.mrb[0].mxu0 %v1482
        %v8153 = vpop.f32.mrb[0].mxu0
        %v8154 = vadd.f32 %v8113, %v8153
        %v8155 = vpop.f32.mrb[0].mxu0
        %v8156 = vadd.f32 %v8115, %v8155
        %v8157 = vpop.f32.mrb[0].mxu0
        %v8158 = vpop.f32.mrb[0].mxu0
        %8159 = vdwg.mxu0
        %8160 = vmatprep.subr.bf16.mxu0 %v4880
        %8161 = vmatpush1.bf16.msra.mxu0 %v4879
        %8162 = vmatprep.subr.bf16.mxu0 %v4898
        %8163 = vmatpush1.bf16.msra.mxu0 %v4897
        %8164 = vmatprep.subr.bf16.mxu0 %v4916
        %8165 = vmatpush1.bf16.msra.mxu0 %v4915
        %8166 = vmatprep.subr.bf16.mxu0 %v4934
        %8167 = vmatpush1.bf16.msra.mxu0 %v4933
        %8168 = vmatprep.subr.bf16.mxu0 %v4952
        %8169 = vmatpush1.bf16.msra.mxu0 %v4951
        %8170 = vmatprep.subr.bf16.mxu0 %v4970
        %8171 = vmatpush1.bf16.msra.mxu0 %v4969
        %8172 = vmatprep.subr.bf16.mxu0 %v4988
        %8173 = vmatpush1.bf16.msra.mxu0 %v4987
        %8174 = vmatprep.subr.bf16.mxu0 %v5006
        %8175 = vmatpush1.bf16.msra.mxu0 %v5005
        %8176 = vmatprep.subr.bf16.mxu0 %v5024
        %8177 = vmatpush1.bf16.msra.mxu0 %v5023
        %8178 = vmatprep.subr.bf16.mxu0 %v5042
        %8179 = vmatpush1.bf16.msra.mxu0 %v5041
        %8180 = vmatprep.subr.bf16.mxu0 %v5060
        %8181 = vmatpush1.bf16.msra.mxu0 %v5059
        %8182 = vmatprep.subr.bf16.mxu0 %v5078
        %8183 = vmatpush1.bf16.msra.mxu0 %v5077
        %8184 = vmatprep.subr.bf16.mxu0 %v5096
        %8185 = vmatpush1.bf16.msra.mxu0 %v5095
        %8186 = vmatprep.subr.bf16.mxu0 %v5114
        %8187 = vmatpush1.bf16.msra.mxu0 %v5113
        %8188 = vmatprep.subr.bf16.mxu0 %v5132
        %8189 = vmatpush1.bf16.msra.mxu0 %v5131
        %8190 = vmatprep.subr.bf16.mxu0 %v5150
        %8191 = vmatpush1.bf16.msra.mxu0 %v5149
        %8192 = vmatprep.mubr.bf16.mxu0 %v1473
        %8193 = vmatmul.mubr.bf16.gmra.mrb[0].mxu0 %v1459
        %v8194 = vpop.f32.mrb[0].mxu0
        %v8195 = vadd.f32 %v1396, %v8194
        %v8196 = vpop.f32.mrb[0].mxu0
        %v8197 = vadd.f32 %v1400, %v8196
        %v8198 = vpop.f32.mrb[0].mxu0
        %v8199 = vpop.f32.mrb[0].mxu0
        %8200 = vdwg.mxu0
        %8201 = vmatprep.subr.bf16.mxu0 %v5168
        %8202 = vmatpush1.bf16.msra.mxu0 %v5167
        %8203 = vmatprep.subr.bf16.mxu0 %v5186
        %8204 = vmatpush1.bf16.msra.mxu0 %v5185
        %8205 = vmatprep.subr.bf16.mxu0 %v5204
        %8206 = vmatpush1.bf16.msra.mxu0 %v5203
        %8207 = vmatprep.subr.bf16.mxu0 %v5222
        %8208 = vmatpush1.bf16.msra.mxu0 %v5221
        %8209 = vmatprep.subr.bf16.mxu0 %v5240
        %8210 = vmatpush1.bf16.msra.mxu0 %v5239
        %8211 = vmatprep.subr.bf16.mxu0 %v5258
        %8212 = vmatpush1.bf16.msra.mxu0 %v5257
        %8213 = vmatprep.subr.bf16.mxu0 %v5276
        %8214 = vmatpush1.bf16.msra.mxu0 %v5275
        %8215 = vmatprep.subr.bf16.mxu0 %v5294
        %8216 = vmatpush1.bf16.msra.mxu0 %v5293
        %8217 = vmatprep.subr.bf16.mxu0 %v5312
        %8218 = vmatpush1.bf16.msra.mxu0 %v5311
        %8219 = vmatprep.subr.bf16.mxu0 %v5330
        %8220 = vmatpush1.bf16.msra.mxu0 %v5329
        %8221 = vmatprep.subr.bf16.mxu0 %v5348
        %8222 = vmatpush1.bf16.msra.mxu0 %v5347
        %8223 = vmatprep.subr.bf16.mxu0 %v5366
        %8224 = vmatpush1.bf16.msra.mxu0 %v5365
        %8225 = vmatprep.subr.bf16.mxu0 %v5384
        %8226 = vmatpush1.bf16.msra.mxu0 %v5383
        %8227 = vmatprep.subr.bf16.mxu0 %v5402
        %8228 = vmatpush1.bf16.msra.mxu0 %v5401
        %8229 = vmatprep.subr.bf16.mxu0 %v5420
        %8230 = vmatpush1.bf16.msra.mxu0 %v5419
        %8231 = vmatprep.subr.bf16.mxu0 %v5438
        %8232 = vmatpush1.bf16.msra.mxu0 %v5437
        %8233 = vmatprep.mubr.bf16.mxu0 %v1483
        %8234 = vmatmul.mubr.bf16.gmra.mrb[0].mxu0 %v1481
        %v8235 = vpop.f32.mrb[0].mxu0
        %v8236 = vadd.f32 %v8195, %v8235
        %v8237 = vpop.f32.mrb[0].mxu0
        %v8238 = vadd.f32 %v8197, %v8237
        %v8239 = vpop.f32.mrb[0].mxu0
        %v8240 = vpop.f32.mrb[0].mxu0
        %8241 = vdwg.mxu0
        %8242 = vmatprep.subr.bf16.mxu0 %v5456
        %8243 = vmatpush1.bf16.msra.mxu0 %v5455
        %8244 = vmatprep.subr.bf16.mxu0 %v5474
        %8245 = vmatpush1.bf16.msra.mxu0 %v5473
        %8246 = vmatprep.subr.bf16.mxu0 %v5492
        %8247 = vmatpush1.bf16.msra.mxu0 %v5491
        %8248 = vmatprep.subr.bf16.mxu0 %v5510
        %8249 = vmatpush1.bf16.msra.mxu0 %v5509
        %8250 = vmatprep.subr.bf16.mxu0 %v5528
        %8251 = vmatpush1.bf16.msra.mxu0 %v5527
        %8252 = vmatprep.subr.bf16.mxu0 %v5546
        %8253 = vmatpush1.bf16.msra.mxu0 %v5545
        %8254 = vmatprep.subr.bf16.mxu0 %v5564
        %8255 = vmatpush1.bf16.msra.mxu0 %v5563
        %8256 = vmatprep.subr.bf16.mxu0 %v5582
        %8257 = vmatpush1.bf16.msra.mxu0 %v5581
        %8258 = vmatprep.subr.bf16.mxu0 %v5600
        %8259 = vmatpush1.bf16.msra.mxu0 %v5599
        %8260 = vmatprep.subr.bf16.mxu0 %v5618
        %8261 = vmatpush1.bf16.msra.mxu0 %v5617
        %8262 = vmatprep.subr.bf16.mxu0 %v5636
        %8263 = vmatpush1.bf16.msra.mxu0 %v5635
        %8264 = vmatprep.subr.bf16.mxu0 %v5654
        %8265 = vmatpush1.bf16.msra.mxu0 %v5653
        %8266 = vmatprep.subr.bf16.mxu0 %v5672
        %8267 = vmatpush1.bf16.msra.mxu0 %v5671
        %8268 = vmatprep.subr.bf16.mxu0 %v5690
        %8269 = vmatpush1.bf16.msra.mxu0 %v5689
        %8270 = vmatprep.subr.bf16.mxu0 %v5708
        %8271 = vmatpush1.bf16.msra.mxu0 %v5707
        %8272 = vmatprep.subr.bf16.mxu0 %v5726
        %8273 = vmatpush1.bf16.msra.mxu0 %v5725
        %8274 = vmatprep.mubr.bf16.mxu0 %v1480
        %8275 = vmatmul.mubr.bf16.gmra.mrb[0].mxu0 %v1466
        %v8276 = vpop.f32.mrb[0].mxu0
        %v8277 = vadd.f32 %v8236, %v8276
        %v8278 = vpop.f32.mrb[0].mxu0
        %v8279 = vadd.f32 %v8238, %v8278
        %v8280 = vpop.f32.mrb[0].mxu0
        %v8281 = vpop.f32.mrb[0].mxu0
        %8282 = vdwg.mxu0
        %8283 = vmatprep.subr.bf16.mxu0 %v5744
        %8284 = vmatpush1.bf16.msra.mxu0 %v5743
        %8285 = vmatprep.subr.bf16.mxu0 %v5762
        %8286 = vmatpush1.bf16.msra.mxu0 %v5761
        %8287 = vmatprep.subr.bf16.mxu0 %v5780
        %8288 = vmatpush1.bf16.msra.mxu0 %v5779
        %8289 = vmatprep.subr.bf16.mxu0 %v5798
        %8290 = vmatpush1.bf16.msra.mxu0 %v5797
        %8291 = vmatprep.subr.bf16.mxu0 %v5816
        %8292 = vmatpush1.bf16.msra.mxu0 %v5815
        %8293 = vmatprep.subr.bf16.mxu0 %v5834
        %8294 = vmatpush1.bf16.msra.mxu0 %v5833
        %8295 = vmatprep.subr.bf16.mxu0 %v5852
        %8296 = vmatpush1.bf16.msra.mxu0 %v5851
        %8297 = vmatprep.subr.bf16.mxu0 %v5870
        %8298 = vmatpush1.bf16.msra.mxu0 %v5869
        %8299 = vmatprep.subr.bf16.mxu0 %v5888
        %8300 = vmatpush1.bf16.msra.mxu0 %v5887
        %8301 = vmatprep.subr.bf16.mxu0 %v5906
        %8302 = vmatpush1.bf16.msra.mxu0 %v5905
        %8303 = vmatprep.subr.bf16.mxu0 %v5924
        %8304 = vmatpush1.bf16.msra.mxu0 %v5923
        %8305 = vmatprep.subr.bf16.mxu0 %v5942
        %8306 = vmatpush1.bf16.msra.mxu0 %v5941
        %8307 = vmatprep.subr.bf16.mxu0 %v5960
        %8308 = vmatpush1.bf16.msra.mxu0 %v5959
        %8309 = vmatprep.subr.bf16.mxu0 %v5978
        %8310 = vmatpush1.bf16.msra.mxu0 %v5977
        %8311 = vmatprep.subr.bf16.mxu0 %v7162
        %8312 = vmatpush1.bf16.msra.mxu0 %v7159
        %8313 = vmatprep.subr.bf16.mxu0 0
        %8314 = vmatpush1.bf16.msra.mxu0 0
        %8315 = vmatprep.mubr.bf16.mxu0 %v7119
        %8316 = vmatmul.mubr.bf16.gmra.mrb[0].mxu0 %v1482
        %v8317 = vpop.f32.mrb[0].mxu0
        %v8318 = vadd.f32 %v8277, %v8317
        %v8319 = vpop.f32.mrb[0].mxu0
        %v8320 = vadd.f32 %v8279, %v8319
        %v8321 = vpop.f32.mrb[0].mxu0
        %v8322 = vpop.f32.mrb[0].mxu0
        %8323 = vdwg.mxu0
        %8324 = vmatprep.subr.bf16.mxu0 %v4882
        %8325 = vmatpush1.bf16.msra.mxu0 %v4881
        %8326 = vmatprep.subr.bf16.mxu0 %v4900
        %8327 = vmatpush1.bf16.msra.mxu0 %v4899
        %8328 = vmatprep.subr.bf16.mxu0 %v4918
        %8329 = vmatpush1.bf16.msra.mxu0 %v4917
        %8330 = vmatprep.subr.bf16.mxu0 %v4936
        %8331 = vmatpush1.bf16.msra.mxu0 %v4935
        %8332 = vmatprep.subr.bf16.mxu0 %v4954
        %8333 = vmatpush1.bf16.msra.mxu0 %v4953
        %8334 = vmatprep.subr.bf16.mxu0 %v4972
        %8335 = vmatpush1.bf16.msra.mxu0 %v4971
        %8336 = vmatprep.subr.bf16.mxu0 %v4990
        %8337 = vmatpush1.bf16.msra.mxu0 %v4989
        %8338 = vmatprep.subr.bf16.mxu0 %v5008
        %8339 = vmatpush1.bf16.msra.mxu0 %v5007
        %8340 = vmatprep.subr.bf16.mxu0 %v5026
        %8341 = vmatpush1.bf16.msra.mxu0 %v5025
        %8342 = vmatprep.subr.bf16.mxu0 %v5044
        %8343 = vmatpush1.bf16.msra.mxu0 %v5043
        %8344 = vmatprep.subr.bf16.mxu0 %v5062
        %8345 = vmatpush1.bf16.msra.mxu0 %v5061
        %8346 = vmatprep.subr.bf16.mxu0 %v5080
        %8347 = vmatpush1.bf16.msra.mxu0 %v5079
        %8348 = vmatprep.subr.bf16.mxu0 %v5098
        %8349 = vmatpush1.bf16.msra.mxu0 %v5097
        %8350 = vmatprep.subr.bf16.mxu0 %v5116
        %8351 = vmatpush1.bf16.msra.mxu0 %v5115
        %8352 = vmatprep.subr.bf16.mxu0 %v5134
        %8353 = vmatpush1.bf16.msra.mxu0 %v5133
        %8354 = vmatprep.subr.bf16.mxu0 %v5152
        %8355 = vmatpush1.bf16.msra.mxu0 %v5151
        %8356 = vmatprep.mubr.bf16.mxu0 %v1473
        %8357 = vmatmul.mubr.bf16.gmra.mrb[0].mxu0 %v1459
        %v8358 = vpop.f32.mrb[0].mxu0
        %v8359 = vadd.f32 %v1404, %v8358
        %v8360 = vpop.f32.mrb[0].mxu0
        %v8361 = vadd.f32 %v1408, %v8360
        %v8362 = vpop.f32.mrb[0].mxu0
        %v8363 = vpop.f32.mrb[0].mxu0
        %8364 = vdwg.mxu0
        %8365 = vmatprep.subr.bf16.mxu0 %v5170
        %8366 = vmatpush1.bf16.msra.mxu0 %v5169
        %8367 = vmatprep.subr.bf16.mxu0 %v5188
        %8368 = vmatpush1.bf16.msra.mxu0 %v5187
        %8369 = vmatprep.subr.bf16.mxu0 %v5206
        %8370 = vmatpush1.bf16.msra.mxu0 %v5205
        %8371 = vmatprep.subr.bf16.mxu0 %v5224
        %8372 = vmatpush1.bf16.msra.mxu0 %v5223
        %8373 = vmatprep.subr.bf16.mxu0 %v5242
        %8374 = vmatpush1.bf16.msra.mxu0 %v5241
        %8375 = vmatprep.subr.bf16.mxu0 %v5260
        %8376 = vmatpush1.bf16.msra.mxu0 %v5259
        %8377 = vmatprep.subr.bf16.mxu0 %v5278
        %8378 = vmatpush1.bf16.msra.mxu0 %v5277
        %8379 = vmatprep.subr.bf16.mxu0 %v5296
        %8380 = vmatpush1.bf16.msra.mxu0 %v5295
        %8381 = vmatprep.subr.bf16.mxu0 %v5314
        %8382 = vmatpush1.bf16.msra.mxu0 %v5313
        %8383 = vmatprep.subr.bf16.mxu0 %v5332
        %8384 = vmatpush1.bf16.msra.mxu0 %v5331
        %8385 = vmatprep.subr.bf16.mxu0 %v5350
        %8386 = vmatpush1.bf16.msra.mxu0 %v5349
        %8387 = vmatprep.subr.bf16.mxu0 %v5368
        %8388 = vmatpush1.bf16.msra.mxu0 %v5367
        %8389 = vmatprep.subr.bf16.mxu0 %v5386
        %8390 = vmatpush1.bf16.msra.mxu0 %v5385
        %8391 = vmatprep.subr.bf16.mxu0 %v5404
        %8392 = vmatpush1.bf16.msra.mxu0 %v5403
        %8393 = vmatprep.subr.bf16.mxu0 %v5422
        %8394 = vmatpush1.bf16.msra.mxu0 %v5421
        %8395 = vmatprep.subr.bf16.mxu0 %v5440
        %8396 = vmatpush1.bf16.msra.mxu0 %v5439
        %8397 = vmatprep.mubr.bf16.mxu0 %v1483
        %8398 = vmatmul.mubr.bf16.gmra.mrb[0].mxu0 %v1481
        %v8399 = vpop.f32.mrb[0].mxu0
        %v8400 = vadd.f32 %v8359, %v8399
        %v8401 = vpop.f32.mrb[0].mxu0
        %v8402 = vadd.f32 %v8361, %v8401
        %v8403 = vpop.f32.mrb[0].mxu0
        %v8404 = vpop.f32.mrb[0].mxu0
        %8405 = vdwg.mxu0
        %8406 = vmatprep.subr.bf16.mxu0 %v5458
        %8407 = vmatpush1.bf16.msra.mxu0 %v5457
        %8408 = vmatprep.subr.bf16.mxu0 %v5476
        %8409 = vmatpush1.bf16.msra.mxu0 %v5475
        %8410 = vmatprep.subr.bf16.mxu0 %v5494
        %8411 = vmatpush1.bf16.msra.mxu0 %v5493
        %8412 = vmatprep.subr.bf16.mxu0 %v5512
        %8413 = vmatpush1.bf16.msra.mxu0 %v5511
        %8414 = vmatprep.subr.bf16.mxu0 %v5530
        %8415 = vmatpush1.bf16.msra.mxu0 %v5529
        %8416 = vmatprep.subr.bf16.mxu0 %v5548
        %8417 = vmatpush1.bf16.msra.mxu0 %v5547
        %8418 = vmatprep.subr.bf16.mxu0 %v5566
        %8419 = vmatpush1.bf16.msra.mxu0 %v5565
        %8420 = vmatprep.subr.bf16.mxu0 %v5584
        %8421 = vmatpush1.bf16.msra.mxu0 %v5583
        %8422 = vmatprep.subr.bf16.mxu0 %v5602
        %8423 = vmatpush1.bf16.msra.mxu0 %v5601
        %8424 = vmatprep.subr.bf16.mxu0 %v5620
        %8425 = vmatpush1.bf16.msra.mxu0 %v5619
        %8426 = vmatprep.subr.bf16.mxu0 %v5638
        %8427 = vmatpush1.bf16.msra.mxu0 %v5637
        %8428 = vmatprep.subr.bf16.mxu0 %v5656
        %8429 = vmatpush1.bf16.msra.mxu0 %v5655
        %8430 = vmatprep.subr.bf16.mxu0 %v5674
        %8431 = vmatpush1.bf16.msra.mxu0 %v5673
        %8432 = vmatprep.subr.bf16.mxu0 %v5692
        %8433 = vmatpush1.bf16.msra.mxu0 %v5691
        %8434 = vmatprep.subr.bf16.mxu0 %v5710
        %8435 = vmatpush1.bf16.msra.mxu0 %v5709
        %8436 = vmatprep.subr.bf16.mxu0 %v5728
        %8437 = vmatpush1.bf16.msra.mxu0 %v5727
        %8438 = vmatprep.mubr.bf16.mxu0 %v1480
        %8439 = vmatmul.mubr.bf16.gmra.mrb[0].mxu0 %v1466
        %v8440 = vpop.f32.mrb[0].mxu0
        %v8441 = vadd.f32 %v8400, %v8440
        %v8442 = vpop.f32.mrb[0].mxu0
        %v8443 = vadd.f32 %v8402, %v8442
        %v8444 = vpop.f32.mrb[0].mxu0
        %v8445 = vpop.f32.mrb[0].mxu0
        %8446 = vdwg.mxu0
        %8447 = vmatprep.subr.bf16.mxu0 %v5746
        %8448 = vmatpush1.bf16.msra.mxu0 %v5745
        %8449 = vmatprep.subr.bf16.mxu0 %v5764
        %8450 = vmatpush1.bf16.msra.mxu0 %v5763
        %8451 = vmatprep.subr.bf16.mxu0 %v5782
        %8452 = vmatpush1.bf16.msra.mxu0 %v5781
        %8453 = vmatprep.subr.bf16.mxu0 %v5800
        %8454 = vmatpush1.bf16.msra.mxu0 %v5799
        %8455 = vmatprep.subr.bf16.mxu0 %v5818
        %8456 = vmatpush1.bf16.msra.mxu0 %v5817
        %8457 = vmatprep.subr.bf16.mxu0 %v5836
        %8458 = vmatpush1.bf16.msra.mxu0 %v5835
        %8459 = vmatprep.subr.bf16.mxu0 %v5854
        %8460 = vmatpush1.bf16.msra.mxu0 %v5853
        %8461 = vmatprep.subr.bf16.mxu0 %v5872
        %8462 = vmatpush1.bf16.msra.mxu0 %v5871
        %8463 = vmatprep.subr.bf16.mxu0 %v5890
        %8464 = vmatpush1.bf16.msra.mxu0 %v5889
        %8465 = vmatprep.subr.bf16.mxu0 %v5908
        %8466 = vmatpush1.bf16.msra.mxu0 %v5907
        %8467 = vmatprep.subr.bf16.mxu0 %v5926
        %8468 = vmatpush1.bf16.msra.mxu0 %v5925
        %8469 = vmatprep.subr.bf16.mxu0 %v5944
        %8470 = vmatpush1.bf16.msra.mxu0 %v5943
        %8471 = vmatprep.subr.bf16.mxu0 %v5962
        %8472 = vmatpush1.bf16.msra.mxu0 %v5961
        %8473 = vmatprep.subr.bf16.mxu0 %v5980
        %8474 = vmatpush1.bf16.msra.mxu0 %v5979
        %8475 = vmatprep.subr.bf16.mxu0 %v7168
        %8476 = vmatpush1.bf16.msra.mxu0 %v7165
        %8477 = vmatprep.subr.bf16.mxu0 0
        %8478 = vmatpush1.bf16.msra.mxu0 0
        %8479 = vmatprep.mubr.bf16.mxu0 %v7119
        %8480 = vmatmul.mubr.bf16.gmra.mrb[0].mxu0 %v1482
        %v8481 = vpop.f32.mrb[0].mxu0
        %v8482 = vadd.f32 %v8441, %v8481
        %v8483 = vpop.f32.mrb[0].mxu0
        %v8484 = vadd.f32 %v8443, %v8483
        %v8485 = vpop.f32.mrb[0].mxu0
        %v8486 = vpop.f32.mrb[0].mxu0
        %8487 = vdwg.mxu0
        %8488 = vmatprep.subr.bf16.mxu0 %v4884
        %8489 = vmatpush1.bf16.msra.mxu0 %v4883
        %8490 = vmatprep.subr.bf16.mxu0 %v4902
        %8491 = vmatpush1.bf16.msra.mxu0 %v4901
        %8492 = vmatprep.subr.bf16.mxu0 %v4920
        %8493 = vmatpush1.bf16.msra.mxu0 %v4919
        %8494 = vmatprep.subr.bf16.mxu0 %v4938
        %8495 = vmatpush1.bf16.msra.mxu0 %v4937
        %8496 = vmatprep.subr.bf16.mxu0 %v4956
        %8497 = vmatpush1.bf16.msra.mxu0 %v4955
        %8498 = vmatprep.subr.bf16.mxu0 %v4974
        %8499 = vmatpush1.bf16.msra.mxu0 %v4973
        %8500 = vmatprep.subr.bf16.mxu0 %v4992
        %8501 = vmatpush1.bf16.msra.mxu0 %v4991
        %8502 = vmatprep.subr.bf16.mxu0 %v5010
        %8503 = vmatpush1.bf16.msra.mxu0 %v5009
        %8504 = vmatprep.subr.bf16.mxu0 %v5028
        %8505 = vmatpush1.bf16.msra.mxu0 %v5027
        %8506 = vmatprep.subr.bf16.mxu0 %v5046
        %8507 = vmatpush1.bf16.msra.mxu0 %v5045
        %8508 = vmatprep.subr.bf16.mxu0 %v5064
        %8509 = vmatpush1.bf16.msra.mxu0 %v5063
        %8510 = vmatprep.subr.bf16.mxu0 %v5082
        %8511 = vmatpush1.bf16.msra.mxu0 %v5081
        %8512 = vmatprep.subr.bf16.mxu0 %v5100
        %8513 = vmatpush1.bf16.msra.mxu0 %v5099
        %8514 = vmatprep.subr.bf16.mxu0 %v5118
        %8515 = vmatpush1.bf16.msra.mxu0 %v5117
        %8516 = vmatprep.subr.bf16.mxu0 %v5136
        %8517 = vmatpush1.bf16.msra.mxu0 %v5135
        %8518 = vmatprep.subr.bf16.mxu0 %v5154
        %8519 = vmatpush1.bf16.msra.mxu0 %v5153
        %8520 = vmatprep.mubr.bf16.mxu0 %v1473
        %8521 = vmatmul.mubr.bf16.gmra.mrb[0].mxu0 %v1459
        %v8522 = vpop.f32.mrb[0].mxu0
        %v8523 = vadd.f32 %v1412, %v8522
        %v8524 = vpop.f32.mrb[0].mxu0
        %v8525 = vadd.f32 %v1416, %v8524
        %v8526 = vpop.f32.mrb[0].mxu0
        %v8527 = vpop.f32.mrb[0].mxu0
        %8528 = vdwg.mxu0
        %8529 = vmatprep.subr.bf16.mxu0 %v5172
        %8530 = vmatpush1.bf16.msra.mxu0 %v5171
        %8531 = vmatprep.subr.bf16.mxu0 %v5190
        %8532 = vmatpush1.bf16.msra.mxu0 %v5189
        %8533 = vmatprep.subr.bf16.mxu0 %v5208
        %8534 = vmatpush1.bf16.msra.mxu0 %v5207
        %8535 = vmatprep.subr.bf16.mxu0 %v5226
        %8536 = vmatpush1.bf16.msra.mxu0 %v5225
        %8537 = vmatprep.subr.bf16.mxu0 %v5244
        %8538 = vmatpush1.bf16.msra.mxu0 %v5243
        %8539 = vmatprep.subr.bf16.mxu0 %v5262
        %8540 = vmatpush1.bf16.msra.mxu0 %v5261
        %8541 = vmatprep.subr.bf16.mxu0 %v5280
        %8542 = vmatpush1.bf16.msra.mxu0 %v5279
        %8543 = vmatprep.subr.bf16.mxu0 %v5298
        %8544 = vmatpush1.bf16.msra.mxu0 %v5297
        %8545 = vmatprep.subr.bf16.mxu0 %v5316
        %8546 = vmatpush1.bf16.msra.mxu0 %v5315
        %8547 = vmatprep.subr.bf16.mxu0 %v5334
        %8548 = vmatpush1.bf16.msra.mxu0 %v5333
        %8549 = vmatprep.subr.bf16.mxu0 %v5352
        %8550 = vmatpush1.bf16.msra.mxu0 %v5351
        %8551 = vmatprep.subr.bf16.mxu0 %v5370
        %8552 = vmatpush1.bf16.msra.mxu0 %v5369
        %8553 = vmatprep.subr.bf16.mxu0 %v5388
        %8554 = vmatpush1.bf16.msra.mxu0 %v5387
        %8555 = vmatprep.subr.bf16.mxu0 %v5406
        %8556 = vmatpush1.bf16.msra.mxu0 %v5405
        %8557 = vmatprep.subr.bf16.mxu0 %v5424
        %8558 = vmatpush1.bf16.msra.mxu0 %v5423
        %8559 = vmatprep.subr.bf16.mxu0 %v5442
        %8560 = vmatpush1.bf16.msra.mxu0 %v5441
        %8561 = vmatprep.mubr.bf16.mxu0 %v1483
        %8562 = vmatmul.mubr.bf16.gmra.mrb[0].mxu0 %v1481
        %v8563 = vpop.f32.mrb[0].mxu0
        %v8564 = vadd.f32 %v8523, %v8563
        %v8565 = vpop.f32.mrb[0].mxu0
        %v8566 = vadd.f32 %v8525, %v8565
        %v8567 = vpop.f32.mrb[0].mxu0
        %v8568 = vpop.f32.mrb[0].mxu0
        %8569 = vdwg.mxu0
        %8570 = vmatprep.subr.bf16.mxu0 %v5460
        %8571 = vmatpush1.bf16.msra.mxu0 %v5459
        %8572 = vmatprep.subr.bf16.mxu0 %v5478
        %8573 = vmatpush1.bf16.msra.mxu0 %v5477
        %8574 = vmatprep.subr.bf16.mxu0 %v5496
        %8575 = vmatpush1.bf16.msra.mxu0 %v5495
        %8576 = vmatprep.subr.bf16.mxu0 %v5514
        %8577 = vmatpush1.bf16.msra.mxu0 %v5513
        %8578 = vmatprep.subr.bf16.mxu0 %v5532
        %8579 = vmatpush1.bf16.msra.mxu0 %v5531
        %8580 = vmatprep.subr.bf16.mxu0 %v5550
        %8581 = vmatpush1.bf16.msra.mxu0 %v5549
        %8582 = vmatprep.subr.bf16.mxu0 %v5568
        %8583 = vmatpush1.bf16.msra.mxu0 %v5567
        %8584 = vmatprep.subr.bf16.mxu0 %v5586
        %8585 = vmatpush1.bf16.msra.mxu0 %v5585
        %8586 = vmatprep.subr.bf16.mxu0 %v5604
        %8587 = vmatpush1.bf16.msra.mxu0 %v5603
        %8588 = vmatprep.subr.bf16.mxu0 %v5622
        %8589 = vmatpush1.bf16.msra.mxu0 %v5621
        %8590 = vmatprep.subr.bf16.mxu0 %v5640
        %8591 = vmatpush1.bf16.msra.mxu0 %v5639
        %8592 = vmatprep.subr.bf16.mxu0 %v5658
        %8593 = vmatpush1.bf16.msra.mxu0 %v5657
        %8594 = vmatprep.subr.bf16.mxu0 %v5676
        %8595 = vmatpush1.bf16.msra.mxu0 %v5675
        %8596 = vmatprep.subr.bf16.mxu0 %v5694
        %8597 = vmatpush1.bf16.msra.mxu0 %v5693
        %8598 = vmatprep.subr.bf16.mxu0 %v5712
        %8599 = vmatpush1.bf16.msra.mxu0 %v5711
        %8600 = vmatprep.subr.bf16.mxu0 %v5730
        %8601 = vmatpush1.bf16.msra.mxu0 %v5729
        %8602 = vmatprep.mubr.bf16.mxu0 %v1480
        %8603 = vmatmul.mubr.bf16.gmra.mrb[0].mxu0 %v1466
        %v8604 = vpop.f32.mrb[0].mxu0
        %v8605 = vadd.f32 %v8564, %v8604
        %v8606 = vpop.f32.mrb[0].mxu0
        %v8607 = vadd.f32 %v8566, %v8606
        %v8608 = vpop.f32.mrb[0].mxu0
        %v8609 = vpop.f32.mrb[0].mxu0
        %8610 = vdwg.mxu0
        %8611 = vmatprep.subr.bf16.mxu0 %v5748
        %8612 = vmatpush1.bf16.msra.mxu0 %v5747
        %8613 = vmatprep.subr.bf16.mxu0 %v5766
        %8614 = vmatpush1.bf16.msra.mxu0 %v5765
        %8615 = vmatprep.subr.bf16.mxu0 %v5784
        %8616 = vmatpush1.bf16.msra.mxu0 %v5783
        %8617 = vmatprep.subr.bf16.mxu0 %v5802
        %8618 = vmatpush1.bf16.msra.mxu0 %v5801
        %8619 = vmatprep.subr.bf16.mxu0 %v5820
        %8620 = vmatpush1.bf16.msra.mxu0 %v5819
        %8621 = vmatprep.subr.bf16.mxu0 %v5838
        %8622 = vmatpush1.bf16.msra.mxu0 %v5837
        %8623 = vmatprep.subr.bf16.mxu0 %v5856
        %8624 = vmatpush1.bf16.msra.mxu0 %v5855
        %8625 = vmatprep.subr.bf16.mxu0 %v5874
        %8626 = vmatpush1.bf16.msra.mxu0 %v5873
        %8627 = vmatprep.subr.bf16.mxu0 %v5892
        %8628 = vmatpush1.bf16.msra.mxu0 %v5891
        %8629 = vmatprep.subr.bf16.mxu0 %v5910
        %8630 = vmatpush1.bf16.msra.mxu0 %v5909
        %8631 = vmatprep.subr.bf16.mxu0 %v5928
        %8632 = vmatpush1.bf16.msra.mxu0 %v5927
        %8633 = vmatprep.subr.bf16.mxu0 %v5946
        %8634 = vmatpush1.bf16.msra.mxu0 %v5945
        %8635 = vmatprep.subr.bf16.mxu0 %v5964
        %8636 = vmatpush1.bf16.msra.mxu0 %v5963
        %8637 = vmatprep.subr.bf16.mxu0 %v5982
        %8638 = vmatpush1.bf16.msra.mxu0 %v5981
        %8639 = vmatprep.subr.bf16.mxu0 %v7174
        %8640 = vmatpush1.bf16.msra.mxu0 %v7171
        %8641 = vmatprep.subr.bf16.mxu0 0
        %8642 = vmatpush1.bf16.msra.mxu0 0
        %8643 = vmatprep.mubr.bf16.mxu0 %v7119
        %8644 = vmatmul.mubr.bf16.gmra.mrb[0].mxu0 %v1482
        %v8645 = vpop.f32.mrb[0].mxu0
        %v8646 = vadd.f32 %v8605, %v8645
        %v8647 = vpop.f32.mrb[0].mxu0
        %v8648 = vadd.f32 %v8607, %v8647
        %v8649 = vpop.f32.mrb[0].mxu0
        %v8650 = vpop.f32.mrb[0].mxu0
        %8651 = vdwg.mxu0
        %v8670 = vcombine.low %v7334, %v7336
        %v8671 = vcombine.low %v7498, %v7500
        %v8673 = vunpack.c.l.s4 1983009808
        %v8674 = vunpack.c.0.s8 %v8673
        %v8675 = vlaneseq
        %v8676 = vshrl.u32 %v8675, 7
        %v8677 = vsub.s32 %v8674, %v8676
        %v8678 = vrot.slane %v8670, %v8677
        %v8680 = vunpack.c.l.s4 1983009808
        %v8681 = vunpack.c.0.s8 %v8680
        %v8682 = vlaneseq
        %v8683 = vshrl.u32 %v8682, 7
        %v8684 = vsub.s32 %v8681, %v8683
        %v8685 = vrot.slane %v8671, %v8684
        %v8686 = vcombine.low %v8678, %v8685
        %v8687 = vcombine.low %v7662, %v7664
        %v8688 = vcombine.low %v7826, %v7828
        %v8690 = vunpack.c.l.s4 1983009808
        %v8691 = vunpack.c.0.s8 %v8690
        %v8692 = vlaneseq
        %v8693 = vshrl.u32 %v8692, 7
        %v8694 = vsub.s32 %v8691, %v8693
        %v8695 = vrot.slane %v8687, %v8694
        %v8697 = vunpack.c.l.s4 1983009808
        %v8698 = vunpack.c.0.s8 %v8697
        %v8699 = vlaneseq
        %v8700 = vshrl.u32 %v8699, 7
        %v8701 = vsub.s32 %v8698, %v8700
        %v8702 = vrot.slane %v8688, %v8701
        %v8703 = vcombine.low %v8695, %v8702
        %v8704 = vcombine.low %v7990, %v7992
        %v8705 = vcombine.low %v8154, %v8156
        %v8707 = vunpack.c.l.s4 1983009808
        %v8708 = vunpack.c.0.s8 %v8707
        %v8709 = vlaneseq
        %v8710 = vshrl.u32 %v8709, 7
        %v8711 = vsub.s32 %v8708, %v8710
        %v8712 = vrot.slane %v8704, %v8711
        %v8714 = vunpack.c.l.s4 1983009808
        %v8715 = vunpack.c.0.s8 %v8714
        %v8716 = vlaneseq
        %v8717 = vshrl.u32 %v8716, 7
        %v8718 = vsub.s32 %v8715, %v8717
        %v8719 = vrot.slane %v8705, %v8718
        %v8720 = vcombine.low %v8712, %v8719
        %v8721 = vcombine.low %v8318, %v8320
        %v8722 = vcombine.low %v8482, %v8484
        %v8724 = vunpack.c.l.s4 1983009808
        %v8725 = vunpack.c.0.s8 %v8724
        %v8726 = vlaneseq
        %v8727 = vshrl.u32 %v8726, 7
        %v8728 = vsub.s32 %v8725, %v8727
        %v8729 = vrot.slane %v8721, %v8728
        %v8731 = vunpack.c.l.s4 1983009808
        %v8732 = vunpack.c.0.s8 %v8731
        %v8733 = vlaneseq
        %v8734 = vshrl.u32 %v8733, 7
        %v8735 = vsub.s32 %v8732, %v8734
        %v8736 = vrot.slane %v8722, %v8735
        %v8737 = vcombine.low %v8729, %v8736
        %v8738 = vcombine.low %v8646, %v8648
        %v8740 = vunpack.c.l.s4 1983009808
        %v8741 = vunpack.c.0.s8 %v8740
        %v8742 = vlaneseq
        %v8743 = vshrl.u32 %v8742, 7
        %v8744 = vsub.s32 %v8741, %v8743
        %v8745 = vrot.slane %v8738, %v8744
        %8751 = vst [vmem:[%s210] sm:$0xff] %v8686
        %8752 = vst [vmem:[%s210 + $0x8] sm:$0xff] %v8703
        %8753 = vst [vmem:[%s210 + $0x10] sm:$0xff] %v8720
        %8754 = vst [vmem:[%s210 + $0x18] sm:$0xff] %v8737
        %8755 = vst [vmem:[%s210 + $0x20] sm:$0xf] %v8745
        %s8756 = smul.u32 18, %s17
        %p8757 = scmp.lt.s32.totalorder %s8756, 1799
        %s8758 = scalar_select %p8757, %s8756, 1799
        %s8759 = smul.addr %s8758, 2
        %s8760 = scalar_lea.vmem %s3, %s8759
        // Predicated region
        $region37: #{_lambda_.3} parent=31 // pred_check
          %p8761 = pneg %p108
        $region38: #{_lambda_.3} parent=31 // pred_check_branch
          %8763 = sbr.rel (%p8761) target = $region40
        $region39: #{_lambda_.3} parent=31 // pred_region
          %s8764 = smul.u32 18, %s17
        $region40: #{_lambda_.3} parent=31 // pred_fallthru
          _
      $region32: #{_lambda_.3} parent=5 // pred_fallthru
        _
      %p8765 = scmp.le.s32.totalorder 2, %s12
      // Predicated region
      $region41: #{_lambda_.3} parent=5 // pred_check
        %p8766 = pneg %p8765
      $region42: #{_lambda_.3} parent=5 // pred_check_branch
        %8768 = sbr.rel (%p8766) target = $region44
      $region43: #{_lambda_.3} parent=5 // pred_region
        %s8769 = ssub.s32 %s12, 2
        // Predicated region
        $region45: #{_lambda_.3} parent=43 // pred_check
          %p8770 = pneg %p114
        $region46: #{_lambda_.3} parent=43 // pred_check_branch
          %8772 = sbr.rel (%p8770) target = $region48
        $region47: #{_lambda_.3} parent=43 // pred_region
          %s8773 = smul.u32 18, %s18
          %p8774 = scmp.lt.s32.totalorder %s8773, 1799
          %s8775 = scalar_select %p8774, %s8773, 1799
          %s8776 = smul.addr %s8775, 2
          %s8777 = scalar_lea.vmem %s3, %s8776
        $region48: #{_lambda_.3} parent=43 // pred_fallthru
          _
      $region44: #{_lambda_.3} parent=5 // pred_fallthru
        _
    $region6: #{_lambda_.3} parent=1 // loop_footer
      %s16 = sadd.s32 1, %s12
    $region7: #{_lambda_.3} parent=1 // loop_footer_branch
      %11 = sbr.rel target = $region3
    $region8: #{_lambda_.3} parent=1 // loop_exit
      _
    %8778 = vsyncpa [#allocation3], 1
    %s8779 = scalar_lea.sflag [#allocation3], 1
    %8780 = vsyncpa %s8779, 1

</llo_original>
